<compile_context>
chip_gen: v7x
topology: tpu7x:2x2x1
jax: 0.10.0
libtpu: 0.0.40
codegen_flags: <defaults>
</compile_context>

<pallas_src>
import jax
import jax.numpy as jnp
from jax.experimental import pallas as pl
from jax.experimental.pallas import tpu as pltpu

VMEM = pltpu.MemorySpace.VMEM


# ---------------------------------------------------------------------------
# Fused forward kernel
# ---------------------------------------------------------------------------
def _seq2seq_kernel(
    x_pre_ref, x_post_ref, x_dec_ref,          # embedded inputs, time-major flattened
    wih_ref, whh_ref, bih_ref, bhh_ref,        # (3 GRUs, 3 gates, ...) stacked weights
    fcw_pre_ref, fcw_post_ref, fcb_ref,        # encoder fc split at the concat boundary
    we_ref, wd_ref, ob_ref,                    # pointer head (fc_out) columns + bias
    out_pre_ref, out_post_ref,                 # (B, T, L) outputs, written once
):
    B, T, L = out_pre_ref.shape
    H = whh_ref.shape[-1]
    f32 = jnp.float32

    # ---- prologue: hoisted whole-sequence input projections (one matmul per gate per GRU) ----
    x_pre = x_pre_ref[...]                     # (L*B, E)
    x_post = x_post_ref[...]                   # (L*B, E)
    x_dec = x_dec_ref[...]                     # (T*B, E)

    def in_proj(x, gru):
        return [
            jnp.dot(x, wih_ref[gru, g], preferred_element_type=f32) + bih_ref[gru, g]
            for g in range(3)                  # gate order [r, z, n], leading-axis => no lane slicing
        ]

    gi_pre = in_proj(x_pre, 0)                 # 3 x (L*B, H)
    gi_post = in_proj(x_post, 1)
    gi_dec = in_proj(x_dec, 2)

    def gru_step(gi, t, h, gru):
        lo = t * B                             # static (loops are unrolled) -> static sublane slice
        gh_r = jnp.dot(h, whh_ref[gru, 0], preferred_element_type=f32) + bhh_ref[gru, 0]
        gh_z = jnp.dot(h, whh_ref[gru, 1], preferred_element_type=f32) + bhh_ref[gru, 1]
        gh_n = jnp.dot(h, whh_ref[gru, 2], preferred_element_type=f32) + bhh_ref[gru, 2]
        r = jax.nn.sigmoid(gi[0][lo:lo + B, :] + gh_r)
        z = jax.nn.sigmoid(gi[1][lo:lo + B, :] + gh_z)
        n = jnp.tanh(gi[2][lo:lo + B, :] + r * gh_n)
        return n + z * (h - n)                 # == (1 - z) * n + z * h

    we = we_ref[...]                           # (H, 1): fc_out cols for enc_out features
    wd = wd_ref[...]                           # (H, 1): fc_out cols for decoder features
    iota_l = jax.lax.broadcasted_iota(jnp.int32, (1, L), 1)   # hoisted out of the loops
    iota_t = jax.lax.broadcasted_iota(jnp.int32, (1, T), 1)

    # ---- encoder: both GRUs advanced per step (L sequential steps total) --------------------
    h_pre = jnp.zeros((B, H), f32)
    h_post = jnp.zeros((B, H), f32)
    se_pre = jnp.zeros((B, L), f32)            # sum_h relu(pre_out[:, l]) * we  per position l
    se_post = jnp.zeros((B, L), f32)
    for t in range(L):                         # statically unrolled in-kernel time loop
        h_pre = gru_step(gi_pre, t, h_pre, 0)
        h_post = gru_step(gi_post, t, h_post, 1)
        onehot = (iota_l == t).astype(f32)     # (1, L): one-hot time mask (no dyn lane stores)
        se_pre = se_pre + jnp.dot(jnp.maximum(h_pre, 0.0), we,
                                  preferred_element_type=f32) * onehot
        se_post = se_post + jnp.dot(jnp.maximum(h_post, 0.0), we,
                                    preferred_element_type=f32) * onehot

    # ---- encoder fc: tanh(cat(pre_h, post_h) @ W + b), split exactly at the row boundary ----
    h_dec = jnp.tanh(
        jnp.dot(h_pre, fcw_pre_ref[...], preferred_element_type=f32)
        + jnp.dot(h_post, fcw_post_ref[...], preferred_element_type=f32)
        + fcb_ref[...]
    )

    # ---- decoder (unconditional teacher forcing), score column accumulated per step ---------
    sd = jnp.zeros((B, T), f32)                # sum_h relu(dec_h at step t) * wd
    for t in range(T):
        h_dec = gru_step(gi_dec, t, h_dec, 2)
        onehot = (iota_t == t).astype(f32)     # (1, T)
        sd = sd + jnp.dot(jnp.maximum(h_dec, 0.0), wd,
                          preferred_element_type=f32) * onehot

    # ---- pointer scores: relu-linearity split of fc_out(relu(cat([enc_out, dec_rep]))) ------
    # out[b, t, l] = relu(dec_h_t[b])@wd + relu(enc_out[b, l])@we + bias  (exact decomposition)
    bias = ob_ref[...]                         # (1, 1)
    out_pre_ref[...] = sd[:, :, None] + se_pre[:, None, :] + bias
    out_post_ref[...] = sd[:, :, None] + se_post[:, None, :] + bias


# ---------------------------------------------------------------------------
# Host-side param repacking (once, outside jit)
# ---------------------------------------------------------------------------
def prepare_params(params):
    # Stack the three GRUs (pre-enc, post-enc, dec) on a leading axis; gates stay on their own
    # leading axis too, so the kernel never lane-slices a packed 3H gate vector.
    wih = jnp.stack([params["pre_gru"][0], params["post_gru"][0], params["dec_gru"][0]])  # (3,3,E,H)
    whh = jnp.stack([params["pre_gru"][1], params["post_gru"][1], params["dec_gru"][1]])  # (3,3,H,H)
    bih = jnp.stack([params["pre_gru"][2], params["post_gru"][2], params["dec_gru"][2]])  # (3,3,1,H)
    bhh = jnp.stack([params["pre_gru"][3], params["post_gru"][3], params["dec_gru"][3]])  # (3,3,1,H)
    H = whh.shape[-1]
    return {
        "embedding": params["embedding"],
        "wih": wih, "whh": whh, "bih": bih, "bhh": bhh,
        "fc_w_pre": params["fc_w"][:H],              # rows multiplying pre_hidden
        "fc_w_post": params["fc_w"][H:],             # rows multiplying post_hidden
        "fc_b": params["fc_b"],                      # (1, H)
        "out_we_col": jnp.transpose(params["out_we"]),   # (H, 1)
        "out_wd_col": jnp.transpose(params["out_wd"]),   # (H, 1)
        "out_b": params["out_b"],                    # (1, 1)
    }


# ---------------------------------------------------------------------------
# Forward pass wrapper (single pallas_call)
# ---------------------------------------------------------------------------
def seq2seq_point_ce_forward(packed, pre_seq, post_seq, trg):
    B, L = pre_seq.shape
    T = trg.shape[1]
    emb = packed["embedding"]
    E = emb.shape[1]

    # time-major token ids; teacher-forced decoder inputs [pre_seq[:, -1], trg[:, :-1]]
    pre_t = jnp.transpose(pre_seq)                                             # (L, B)
    post_t = jnp.transpose(post_seq)                                           # (L, B)
    dec_t = jnp.transpose(jnp.concatenate([pre_seq[:, -1:], trg[:, :-1]], 1))  # (T, B)

    # TODO(synk): the embedding gather stays in XLA; could move into the kernel via scalar
    # prefetch of token ids, but call-count/grid-count were the dominant costs.
    x_pre = emb[pre_t].reshape(L * B, E)       # dropout = identity (eval mode)
    x_post = emb[post_t].reshape(L * B, E)
    x_dec = emb[dec_t].reshape(T * B, E)

    vspec = pl.BlockSpec(memory_space=VMEM)
    out_pre, out_post = pl.pallas_call(
        _seq2seq_kernel,
        out_shape=(
            jax.ShapeDtypeStruct((B, T, L), jnp.float32),
            jax.ShapeDtypeStruct((B, T, L), jnp.float32),
        ),
        in_specs=[vspec] * 13,
        out_specs=(vspec, vspec),
    )(
        x_pre, x_post, x_dec,
        packed["wih"], packed["whh"], packed["bih"], packed["bhh"],
        packed["fc_w_pre"], packed["fc_w_post"], packed["fc_b"],
        packed["out_we_col"], packed["out_wd_col"], packed["out_b"],
    )
    return out_pre, out_post


# ---------------------------------------------------------------------------
# Pure-JAX reference (mirrors the PyTorch forward op-by-op, eval mode)
# ---------------------------------------------------------------------------
def _gru_cell_ref(x, h, wih, whh, bih, bhh):
    gi = [x @ wih[g] + bih[g] for g in range(3)]
    gh = [h @ whh[g] + bhh[g] for g in range(3)]
    r = jax.nn.sigmoid(gi[0] + gh[0])
    z = jax.nn.sigmoid(gi[1] + gh[1])
    n = jnp.tanh(gi[2] + r * gh[2])
    return (1.0 - z) * n + z * h


def _run_gru_ref(x_seq, h0, wih, whh, bih, bhh):
    outs, h = [], h0
    for t in range(x_seq.shape[1]):
        h = _gru_cell_ref(x_seq[:, t], h, wih, whh, bih, bhh)
        outs.append(h)
    return jnp.stack(outs, axis=1), h


def _forward_ref(params, pre_seq, post_seq, trg):
    B, L = pre_seq.shape
    T = trg.shape[1]
    H = params["fc_w"].shape[1]
    emb = params["embedding"]
    h0 = jnp.zeros((B, H), jnp.float32)
    pre_out, pre_h = _run_gru_ref(emb[pre_seq], h0, *params["pre_gru"])
    post_out, post_h = _run_gru_ref(emb[post_seq], h0, *params["post_gru"])
    enc_out = jnp.concatenate([pre_out, post_out], axis=1)
    enc_hidden = jnp.tanh(
        jnp.concatenate([pre_h, post_h], -1) @ params["fc_w"] + params["fc_b"]
    )
    w_full = jnp.concatenate([params["out_we"], params["out_wd"]], axis=1)[0]  # (2H,)
    bias = params["out_b"][0, 0]
    hidden = enc_hidden
    inp = pre_seq[:, -1]
    outs_pre, outs_post = [], []
    for t in range(T):
        hidden = _gru_cell_ref(emb[inp], hidden, *params["dec_gru"])
        dec_rep = jnp.broadcast_to(hidden[:, None, :], (B, enc_out.shape[1], H))
        cat = jnp.concatenate([enc_out, dec_rep], axis=-1)
        score = jax.nn.relu(cat) @ w_full + bias  # (B, 2L)
        outs_pre.append(score[:, :L])
        outs_post.append(score[:, L:])
        inp = trg[:, t]
    return jnp.stack(outs_pre, 1), jnp.stack(outs_post, 1)


# ---------------------------------------------------------------------------
if __name__ == "__main__":
    V, E, H = 50, 16, 32   # vocab_size, embedding_dim, hidden_dim
    B, L, T = 2, 8, 4      # batch, len_seq (pre == post), len_label

    key = jax.random.PRNGKey(0)
    keys = jax.random.split(key, 16)

    def init(k, shape, scale=0.1):
        return jax.random.uniform(k, shape, jnp.float32, -1.0, 1.0) * scale

    def gru_params(k):
        k1, k2, k3, k4 = jax.random.split(k, 4)
        return (
            init(k1, (3, E, H)),   # W_ih per gate [r, z, n], stored (in, hid)
            init(k2, (3, H, H)),   # W_hh
            init(k3, (3, 1, H)),   # b_ih
            init(k4, (3, 1, H)),   # b_hh
        )

    params = {
        "embedding": init(keys[0], (V, E), 1.0),
        "pre_gru": gru_params(keys[1]),
        "post_gru": gru_params(keys[2]),
        "dec_gru": gru_params(keys[3]),
        "fc_w": init(keys[4], (2 * H, H)),   # encoder fc: (2H -> H), stored (in, out)
        "fc_b": init(keys[5], (1, H)),
        "out_we": init(keys[6], (1, H)),     # fc_out weight cols for enc_out half
        "out_wd": init(keys[7], (1, H)),     # fc_out weight cols for decoder half
        "out_b": init(keys[8], (1, 1)),
    }

    pre_seq = jax.random.randint(keys[9], (B, L), 0, V, dtype=jnp.int32)
    post_seq = jax.random.randint(keys[10], (B, L), 0, V, dtype=jnp.int32)
    trg = jax.random.randint(keys[11], (B, T), 0, V, dtype=jnp.int32)

    packed = jax.tree_util.tree_map(jax.device_put, prepare_params(params))

    fwd = jax.jit(seq2seq_point_ce_forward)
    out_pre, out_post = fwd(packed, pre_seq, post_seq, trg)
    jax.block_until_ready((out_pre, out_post))

    ref_pre, ref_post = _forward_ref(params, pre_seq, post_seq, trg)
    assert out_pre.shape == (B, T, L) and out_post.shape == (B, T, L)
    assert jnp.allclose(out_pre, ref_pre, atol=1e-4, rtol=1e-4)
    assert jnp.allclose(out_post, ref_post, atol=1e-4, rtol=1e-4)

    print("KERNEL_OK")
</pallas_src>

<mosaic_0001>
module attributes {stable_mosaic.version = 11 : i64} {
  func.func @_seq2seq_kernel(%arg0: memref<16x16xf32, #tpu.memory_space<vmem>>, %arg1: memref<16x16xf32, #tpu.memory_space<vmem>>, %arg2: memref<8x16xf32, #tpu.memory_space<vmem>>, %arg3: memref<3x3x16x32xf32, #tpu.memory_space<vmem>>, %arg4: memref<3x3x32x32xf32, #tpu.memory_space<vmem>>, %arg5: memref<3x3x1x32xf32, #tpu.memory_space<vmem>>, %arg6: memref<3x3x1x32xf32, #tpu.memory_space<vmem>>, %arg7: memref<32x32xf32, #tpu.memory_space<vmem>>, %arg8: memref<32x32xf32, #tpu.memory_space<vmem>>, %arg9: memref<1x32xf32, #tpu.memory_space<vmem>>, %arg10: memref<32x1xf32, #tpu.memory_space<vmem>>, %arg11: memref<32x1xf32, #tpu.memory_space<vmem>>, %arg12: memref<1x1xf32, #tpu.memory_space<vmem>>, %arg13: memref<2x4x8xf32, #tpu.memory_space<vmem>>, %arg14: memref<2x4x8xf32, #tpu.memory_space<vmem>>) attributes {dimension_semantics = [], scalar_prefetch = 0 : i64, scratch_operands = 0 : i64, tpu.core_type = #tpu.core_type<tc>} {
    %c0 = arith.constant 0 : index
    %c0_0 = arith.constant 0 : index
    %0 = vector.load %arg0[%c0, %c0_0] : memref<16x16xf32, #tpu.memory_space<vmem>>, vector<16x16xf32>
    %c0_1 = arith.constant 0 : index
    %c0_2 = arith.constant 0 : index
    %1 = vector.load %arg1[%c0_1, %c0_2] : memref<16x16xf32, #tpu.memory_space<vmem>>, vector<16x16xf32>
    %c0_3 = arith.constant 0 : index
    %c0_4 = arith.constant 0 : index
    %2 = vector.load %arg2[%c0_3, %c0_4] : memref<8x16xf32, #tpu.memory_space<vmem>>, vector<8x16xf32>
    %c0_5 = arith.constant 0 : index
    %c0_6 = arith.constant 0 : index
    %c0_7 = arith.constant 0 : index
    %c0_8 = arith.constant 0 : index
    %3 = vector.load %arg3[%c0_5, %c0_6, %c0_7, %c0_8] : memref<3x3x16x32xf32, #tpu.memory_space<vmem>>, vector<1x1x16x32xf32>
    %4 = vector.shape_cast %3 : vector<1x1x16x32xf32> to vector<16x32xf32>
    %cst = arith.constant dense<0.000000e+00> : vector<16x32xf32>
    %5 = tpu.matmul %0, %4, %cst {dimension_numbers = #tpu.dot_dimension_numbers<[1], [0], [0], [1], [0, 0, 1, 1], [], []>} : vector<16x16xf32>, vector<16x32xf32>, vector<16x32xf32> -> vector<16x32xf32>
    %c0_9 = arith.constant 0 : index
    %c0_10 = arith.constant 0 : index
    %c0_11 = arith.constant 0 : index
    %c0_12 = arith.constant 0 : index
    %6 = vector.load %arg5[%c0_9, %c0_10, %c0_11, %c0_12] : memref<3x3x1x32xf32, #tpu.memory_space<vmem>>, vector<1x1x1x32xf32>
    %7 = vector.shape_cast %6 : vector<1x1x1x32xf32> to vector<1x32xf32>
    %8 = vector.broadcast %7 : vector<1x32xf32> to vector<16x32xf32>
    %9 = arith.addf %5, %8 : vector<16x32xf32>
    %c0_13 = arith.constant 0 : index
    %c1 = arith.constant 1 : index
    %c0_14 = arith.constant 0 : index
    %c0_15 = arith.constant 0 : index
    %10 = vector.load %arg3[%c0_13, %c1, %c0_14, %c0_15] : memref<3x3x16x32xf32, #tpu.memory_space<vmem>>, vector<1x1x16x32xf32>
    %11 = vector.shape_cast %10 : vector<1x1x16x32xf32> to vector<16x32xf32>
    %cst_16 = arith.constant dense<0.000000e+00> : vector<16x32xf32>
    %12 = tpu.matmul %0, %11, %cst_16 {dimension_numbers = #tpu.dot_dimension_numbers<[1], [0], [0], [1], [0, 0, 1, 1], [], []>} : vector<16x16xf32>, vector<16x32xf32>, vector<16x32xf32> -> vector<16x32xf32>
    %c0_17 = arith.constant 0 : index
    %c1_18 = arith.constant 1 : index
    %c0_19 = arith.constant 0 : index
    %c0_20 = arith.constant 0 : index
    %13 = vector.load %arg5[%c0_17, %c1_18, %c0_19, %c0_20] : memref<3x3x1x32xf32, #tpu.memory_space<vmem>>, vector<1x1x1x32xf32>
    %14 = vector.shape_cast %13 : vector<1x1x1x32xf32> to vector<1x32xf32>
    %15 = vector.broadcast %14 : vector<1x32xf32> to vector<16x32xf32>
    %16 = arith.addf %12, %15 : vector<16x32xf32>
    %c0_21 = arith.constant 0 : index
    %c2 = arith.constant 2 : index
    %c0_22 = arith.constant 0 : index
    %c0_23 = arith.constant 0 : index
    %17 = vector.load %arg3[%c0_21, %c2, %c0_22, %c0_23] : memref<3x3x16x32xf32, #tpu.memory_space<vmem>>, vector<1x1x16x32xf32>
    %18 = vector.shape_cast %17 : vector<1x1x16x32xf32> to vector<16x32xf32>
    %cst_24 = arith.constant dense<0.000000e+00> : vector<16x32xf32>
    %19 = tpu.matmul %0, %18, %cst_24 {dimension_numbers = #tpu.dot_dimension_numbers<[1], [0], [0], [1], [0, 0, 1, 1], [], []>} : vector<16x16xf32>, vector<16x32xf32>, vector<16x32xf32> -> vector<16x32xf32>
    %c0_25 = arith.constant 0 : index
    %c2_26 = arith.constant 2 : index
    %c0_27 = arith.constant 0 : index
    %c0_28 = arith.constant 0 : index
    %20 = vector.load %arg5[%c0_25, %c2_26, %c0_27, %c0_28] : memref<3x3x1x32xf32, #tpu.memory_space<vmem>>, vector<1x1x1x32xf32>
    %21 = vector.shape_cast %20 : vector<1x1x1x32xf32> to vector<1x32xf32>
    %22 = vector.broadcast %21 : vector<1x32xf32> to vector<16x32xf32>
    %23 = arith.addf %19, %22 : vector<16x32xf32>
    %c1_29 = arith.constant 1 : index
    %c0_30 = arith.constant 0 : index
    %c0_31 = arith.constant 0 : index
    %c0_32 = arith.constant 0 : index
    %24 = vector.load %arg3[%c1_29, %c0_30, %c0_31, %c0_32] : memref<3x3x16x32xf32, #tpu.memory_space<vmem>>, vector<1x1x16x32xf32>
    %25 = vector.shape_cast %24 : vector<1x1x16x32xf32> to vector<16x32xf32>
    %cst_33 = arith.constant dense<0.000000e+00> : vector<16x32xf32>
    %26 = tpu.matmul %1, %25, %cst_33 {dimension_numbers = #tpu.dot_dimension_numbers<[1], [0], [0], [1], [0, 0, 1, 1], [], []>} : vector<16x16xf32>, vector<16x32xf32>, vector<16x32xf32> -> vector<16x32xf32>
    %c1_34 = arith.constant 1 : index
    %c0_35 = arith.constant 0 : index
    %c0_36 = arith.constant 0 : index
    %c0_37 = arith.constant 0 : index
    %27 = vector.load %arg5[%c1_34, %c0_35, %c0_36, %c0_37] : memref<3x3x1x32xf32, #tpu.memory_space<vmem>>, vector<1x1x1x32xf32>
    %28 = vector.shape_cast %27 : vector<1x1x1x32xf32> to vector<1x32xf32>
    %29 = vector.broadcast %28 : vector<1x32xf32> to vector<16x32xf32>
    %30 = arith.addf %26, %29 : vector<16x32xf32>
    %c1_38 = arith.constant 1 : index
    %c1_39 = arith.constant 1 : index
    %c0_40 = arith.constant 0 : index
    %c0_41 = arith.constant 0 : index
    %31 = vector.load %arg3[%c1_38, %c1_39, %c0_40, %c0_41] : memref<3x3x16x32xf32, #tpu.memory_space<vmem>>, vector<1x1x16x32xf32>
    %32 = vector.shape_cast %31 : vector<1x1x16x32xf32> to vector<16x32xf32>
    %cst_42 = arith.constant dense<0.000000e+00> : vector<16x32xf32>
    %33 = tpu.matmul %1, %32, %cst_42 {dimension_numbers = #tpu.dot_dimension_numbers<[1], [0], [0], [1], [0, 0, 1, 1], [], []>} : vector<16x16xf32>, vector<16x32xf32>, vector<16x32xf32> -> vector<16x32xf32>
    %c1_43 = arith.constant 1 : index
    %c1_44 = arith.constant 1 : index
    %c0_45 = arith.constant 0 : index
    %c0_46 = arith.constant 0 : index
    %34 = vector.load %arg5[%c1_43, %c1_44, %c0_45, %c0_46] : memref<3x3x1x32xf32, #tpu.memory_space<vmem>>, vector<1x1x1x32xf32>
    %35 = vector.shape_cast %34 : vector<1x1x1x32xf32> to vector<1x32xf32>
    %36 = vector.broadcast %35 : vector<1x32xf32> to vector<16x32xf32>
    %37 = arith.addf %33, %36 : vector<16x32xf32>
    %c1_47 = arith.constant 1 : index
    %c2_48 = arith.constant 2 : index
    %c0_49 = arith.constant 0 : index
    %c0_50 = arith.constant 0 : index
    %38 = vector.load %arg3[%c1_47, %c2_48, %c0_49, %c0_50] : memref<3x3x16x32xf32, #tpu.memory_space<vmem>>, vector<1x1x16x32xf32>
    %39 = vector.shape_cast %38 : vector<1x1x16x32xf32> to vector<16x32xf32>
    %cst_51 = arith.constant dense<0.000000e+00> : vector<16x32xf32>
    %40 = tpu.matmul %1, %39, %cst_51 {dimension_numbers = #tpu.dot_dimension_numbers<[1], [0], [0], [1], [0, 0, 1, 1], [], []>} : vector<16x16xf32>, vector<16x32xf32>, vector<16x32xf32> -> vector<16x32xf32>
    %c1_52 = arith.constant 1 : index
    %c2_53 = arith.constant 2 : index
    %c0_54 = arith.constant 0 : index
    %c0_55 = arith.constant 0 : index
    %41 = vector.load %arg5[%c1_52, %c2_53, %c0_54, %c0_55] : memref<3x3x1x32xf32, #tpu.memory_space<vmem>>, vector<1x1x1x32xf32>
    %42 = vector.shape_cast %41 : vector<1x1x1x32xf32> to vector<1x32xf32>
    %43 = vector.broadcast %42 : vector<1x32xf32> to vector<16x32xf32>
    %44 = arith.addf %40, %43 : vector<16x32xf32>
    %c2_56 = arith.constant 2 : index
    %c0_57 = arith.constant 0 : index
    %c0_58 = arith.constant 0 : index
    %c0_59 = arith.constant 0 : index
    %45 = vector.load %arg3[%c2_56, %c0_57, %c0_58, %c0_59] : memref<3x3x16x32xf32, #tpu.memory_space<vmem>>, vector<1x1x16x32xf32>
    %46 = vector.shape_cast %45 : vector<1x1x16x32xf32> to vector<16x32xf32>
    %cst_60 = arith.constant dense<0.000000e+00> : vector<8x32xf32>
    %47 = tpu.matmul %2, %46, %cst_60 {dimension_numbers = #tpu.dot_dimension_numbers<[1], [0], [0], [1], [0, 0, 1, 1], [], []>} : vector<8x16xf32>, vector<16x32xf32>, vector<8x32xf32> -> vector<8x32xf32>
    %c2_61 = arith.constant 2 : index
    %c0_62 = arith.constant 0 : index
    %c0_63 = arith.constant 0 : index
    %c0_64 = arith.constant 0 : index
    %48 = vector.load %arg5[%c2_61, %c0_62, %c0_63, %c0_64] : memref<3x3x1x32xf32, #tpu.memory_space<vmem>>, vector<1x1x1x32xf32>
    %49 = vector.shape_cast %48 : vector<1x1x1x32xf32> to vector<1x32xf32>
    %50 = vector.broadcast %49 : vector<1x32xf32> to vector<8x32xf32>
    %51 = arith.addf %47, %50 : vector<8x32xf32>
    %c2_65 = arith.constant 2 : index
    %c1_66 = arith.constant 1 : index
    %c0_67 = arith.constant 0 : index
    %c0_68 = arith.constant 0 : index
    %52 = vector.load %arg3[%c2_65, %c1_66, %c0_67, %c0_68] : memref<3x3x16x32xf32, #tpu.memory_space<vmem>>, vector<1x1x16x32xf32>
    %53 = vector.shape_cast %52 : vector<1x1x16x32xf32> to vector<16x32xf32>
    %cst_69 = arith.constant dense<0.000000e+00> : vector<8x32xf32>
    %54 = tpu.matmul %2, %53, %cst_69 {dimension_numbers = #tpu.dot_dimension_numbers<[1], [0], [0], [1], [0, 0, 1, 1], [], []>} : vector<8x16xf32>, vector<16x32xf32>, vector<8x32xf32> -> vector<8x32xf32>
    %c2_70 = arith.constant 2 : index
    %c1_71 = arith.constant 1 : index
    %c0_72 = arith.constant 0 : index
    %c0_73 = arith.constant 0 : index
    %55 = vector.load %arg5[%c2_70, %c1_71, %c0_72, %c0_73] : memref<3x3x1x32xf32, #tpu.memory_space<vmem>>, vector<1x1x1x32xf32>
    %56 = vector.shape_cast %55 : vector<1x1x1x32xf32> to vector<1x32xf32>
    %57 = vector.broadcast %56 : vector<1x32xf32> to vector<8x32xf32>
    %58 = arith.addf %54, %57 : vector<8x32xf32>
    %c2_74 = arith.constant 2 : index
    %c2_75 = arith.constant 2 : index
    %c0_76 = arith.constant 0 : index
    %c0_77 = arith.constant 0 : index
    %59 = vector.load %arg3[%c2_74, %c2_75, %c0_76, %c0_77] : memref<3x3x16x32xf32, #tpu.memory_space<vmem>>, vector<1x1x16x32xf32>
    %60 = vector.shape_cast %59 : vector<1x1x16x32xf32> to vector<16x32xf32>
    %cst_78 = arith.constant dense<0.000000e+00> : vector<8x32xf32>
    %61 = tpu.matmul %2, %60, %cst_78 {dimension_numbers = #tpu.dot_dimension_numbers<[1], [0], [0], [1], [0, 0, 1, 1], [], []>} : vector<8x16xf32>, vector<16x32xf32>, vector<8x32xf32> -> vector<8x32xf32>
    %c2_79 = arith.constant 2 : index
    %c2_80 = arith.constant 2 : index
    %c0_81 = arith.constant 0 : index
    %c0_82 = arith.constant 0 : index
    %62 = vector.load %arg5[%c2_79, %c2_80, %c0_81, %c0_82] : memref<3x3x1x32xf32, #tpu.memory_space<vmem>>, vector<1x1x1x32xf32>
    %63 = vector.shape_cast %62 : vector<1x1x1x32xf32> to vector<1x32xf32>
    %64 = vector.broadcast %63 : vector<1x32xf32> to vector<8x32xf32>
    %65 = arith.addf %61, %64 : vector<8x32xf32>
    %c0_83 = arith.constant 0 : index
    %c0_84 = arith.constant 0 : index
    %66 = vector.load %arg10[%c0_83, %c0_84] : memref<32x1xf32, #tpu.memory_space<vmem>>, vector<32x1xf32>
    %c0_85 = arith.constant 0 : index
    %c0_86 = arith.constant 0 : index
    %67 = vector.load %arg11[%c0_85, %c0_86] : memref<32x1xf32, #tpu.memory_space<vmem>>, vector<32x1xf32>
    %68 = tpu.iota {dimensions = array<i32: 1>} : vector<1x8xi32>
    %69 = tpu.iota {dimensions = array<i32: 1>} : vector<1x4xi32>
    %cst_87 = arith.constant 0.000000e+00 : f32
    %70 = vector.broadcast %cst_87 : f32 to vector<2x32xf32>
    %cst_88 = arith.constant 0.000000e+00 : f32
    %71 = vector.broadcast %cst_88 : f32 to vector<2x32xf32>
    %cst_89 = arith.constant 0.000000e+00 : f32
    %72 = vector.broadcast %cst_89 : f32 to vector<2x8xf32>
    %cst_90 = arith.constant 0.000000e+00 : f32
    %73 = vector.broadcast %cst_90 : f32 to vector<2x8xf32>
    %c0_91 = arith.constant 0 : index
    %c0_92 = arith.constant 0 : index
    %c0_93 = arith.constant 0 : index
    %c0_94 = arith.constant 0 : index
    %74 = vector.load %arg4[%c0_91, %c0_92, %c0_93, %c0_94] : memref<3x3x32x32xf32, #tpu.memory_space<vmem>>, vector<1x1x32x32xf32>
    %75 = vector.shape_cast %74 : vector<1x1x32x32xf32> to vector<32x32xf32>
    %cst_95 = arith.constant dense<0.000000e+00> : vector<2x32xf32>
    %76 = tpu.matmul %70, %75, %cst_95 {dimension_numbers = #tpu.dot_dimension_numbers<[1], [0], [0], [1], [0, 0, 1, 1], [], []>} : vector<2x32xf32>, vector<32x32xf32>, vector<2x32xf32> -> vector<2x32xf32>
    %c0_96 = arith.constant 0 : index
    %c0_97 = arith.constant 0 : index
    %c0_98 = arith.constant 0 : index
    %c0_99 = arith.constant 0 : index
    %77 = vector.load %arg6[%c0_96, %c0_97, %c0_98, %c0_99] : memref<3x3x1x32xf32, #tpu.memory_space<vmem>>, vector<1x1x1x32xf32>
    %78 = vector.shape_cast %77 : vector<1x1x1x32xf32> to vector<1x32xf32>
    %79 = vector.broadcast %78 : vector<1x32xf32> to vector<2x32xf32>
    %80 = arith.addf %76, %79 : vector<2x32xf32>
    %c0_100 = arith.constant 0 : index
    %c1_101 = arith.constant 1 : index
    %c0_102 = arith.constant 0 : index
    %c0_103 = arith.constant 0 : index
    %81 = vector.load %arg4[%c0_100, %c1_101, %c0_102, %c0_103] : memref<3x3x32x32xf32, #tpu.memory_space<vmem>>, vector<1x1x32x32xf32>
    %82 = vector.shape_cast %81 : vector<1x1x32x32xf32> to vector<32x32xf32>
    %cst_104 = arith.constant dense<0.000000e+00> : vector<2x32xf32>
    %83 = tpu.matmul %70, %82, %cst_104 {dimension_numbers = #tpu.dot_dimension_numbers<[1], [0], [0], [1], [0, 0, 1, 1], [], []>} : vector<2x32xf32>, vector<32x32xf32>, vector<2x32xf32> -> vector<2x32xf32>
    %c0_105 = arith.constant 0 : index
    %c1_106 = arith.constant 1 : index
    %c0_107 = arith.constant 0 : index
    %c0_108 = arith.constant 0 : index
    %84 = vector.load %arg6[%c0_105, %c1_106, %c0_107, %c0_108] : memref<3x3x1x32xf32, #tpu.memory_space<vmem>>, vector<1x1x1x32xf32>
    %85 = vector.shape_cast %84 : vector<1x1x1x32xf32> to vector<1x32xf32>
    %86 = vector.broadcast %85 : vector<1x32xf32> to vector<2x32xf32>
    %87 = arith.addf %83, %86 : vector<2x32xf32>
    %c0_109 = arith.constant 0 : index
    %c2_110 = arith.constant 2 : index
    %c0_111 = arith.constant 0 : index
    %c0_112 = arith.constant 0 : index
    %88 = vector.load %arg4[%c0_109, %c2_110, %c0_111, %c0_112] : memref<3x3x32x32xf32, #tpu.memory_space<vmem>>, vector<1x1x32x32xf32>
    %89 = vector.shape_cast %88 : vector<1x1x32x32xf32> to vector<32x32xf32>
    %cst_113 = arith.constant dense<0.000000e+00> : vector<2x32xf32>
    %90 = tpu.matmul %70, %89, %cst_113 {dimension_numbers = #tpu.dot_dimension_numbers<[1], [0], [0], [1], [0, 0, 1, 1], [], []>} : vector<2x32xf32>, vector<32x32xf32>, vector<2x32xf32> -> vector<2x32xf32>
    %c0_114 = arith.constant 0 : index
    %c2_115 = arith.constant 2 : index
    %c0_116 = arith.constant 0 : index
    %c0_117 = arith.constant 0 : index
    %91 = vector.load %arg6[%c0_114, %c2_115, %c0_116, %c0_117] : memref<3x3x1x32xf32, #tpu.memory_space<vmem>>, vector<1x1x1x32xf32>
    %92 = vector.shape_cast %91 : vector<1x1x1x32xf32> to vector<1x32xf32>
    %93 = vector.broadcast %92 : vector<1x32xf32> to vector<2x32xf32>
    %94 = arith.addf %90, %93 : vector<2x32xf32>
    %95 = vector.extract_strided_slice %9 {offsets = [0, 0], sizes = [2, 32], strides = [1, 1]} : vector<16x32xf32> to vector<2x32xf32>
    %96 = arith.addf %95, %80 : vector<2x32xf32>
    %97 = arith.negf %96 : vector<2x32xf32>
    %98 = math.exp %97 : vector<2x32xf32>
    %cst_118 = arith.constant 1.000000e+00 : f32
    %99 = vector.broadcast %cst_118 : f32 to vector<2x32xf32>
    %100 = arith.addf %99, %98 : vector<2x32xf32>
    %101 = arith.divf %99, %100 : vector<2x32xf32>
    %102 = vector.extract_strided_slice %16 {offsets = [0, 0], sizes = [2, 32], strides = [1, 1]} : vector<16x32xf32> to vector<2x32xf32>
    %103 = arith.addf %102, %87 : vector<2x32xf32>
    %104 = arith.negf %103 : vector<2x32xf32>
    %105 = math.exp %104 : vector<2x32xf32>
    %cst_119 = arith.constant 1.000000e+00 : f32
    %106 = vector.broadcast %cst_119 : f32 to vector<2x32xf32>
    %107 = arith.addf %106, %105 : vector<2x32xf32>
    %108 = arith.divf %106, %107 : vector<2x32xf32>
    %109 = vector.extract_strided_slice %23 {offsets = [0, 0], sizes = [2, 32], strides = [1, 1]} : vector<16x32xf32> to vector<2x32xf32>
    %110 = arith.mulf %101, %94 : vector<2x32xf32>
    %111 = arith.addf %109, %110 : vector<2x32xf32>
    %112 = math.tanh %111 : vector<2x32xf32>
    %113 = arith.subf %70, %112 : vector<2x32xf32>
    %114 = arith.mulf %108, %113 : vector<2x32xf32>
    %115 = arith.addf %112, %114 : vector<2x32xf32>
    %c1_120 = arith.constant 1 : index
    %c0_121 = arith.constant 0 : index
    %c0_122 = arith.constant 0 : index
    %c0_123 = arith.constant 0 : index
    %116 = vector.load %arg4[%c1_120, %c0_121, %c0_122, %c0_123] : memref<3x3x32x32xf32, #tpu.memory_space<vmem>>, vector<1x1x32x32xf32>
    %117 = vector.shape_cast %116 : vector<1x1x32x32xf32> to vector<32x32xf32>
    %cst_124 = arith.constant dense<0.000000e+00> : vector<2x32xf32>
    %118 = tpu.matmul %71, %117, %cst_124 {dimension_numbers = #tpu.dot_dimension_numbers<[1], [0], [0], [1], [0, 0, 1, 1], [], []>} : vector<2x32xf32>, vector<32x32xf32>, vector<2x32xf32> -> vector<2x32xf32>
    %c1_125 = arith.constant 1 : index
    %c0_126 = arith.constant 0 : index
    %c0_127 = arith.constant 0 : index
    %c0_128 = arith.constant 0 : index
    %119 = vector.load %arg6[%c1_125, %c0_126, %c0_127, %c0_128] : memref<3x3x1x32xf32, #tpu.memory_space<vmem>>, vector<1x1x1x32xf32>
    %120 = vector.shape_cast %119 : vector<1x1x1x32xf32> to vector<1x32xf32>
    %121 = vector.broadcast %120 : vector<1x32xf32> to vector<2x32xf32>
    %122 = arith.addf %118, %121 : vector<2x32xf32>
    %c1_129 = arith.constant 1 : index
    %c1_130 = arith.constant 1 : index
    %c0_131 = arith.constant 0 : index
    %c0_132 = arith.constant 0 : index
    %123 = vector.load %arg4[%c1_129, %c1_130, %c0_131, %c0_132] : memref<3x3x32x32xf32, #tpu.memory_space<vmem>>, vector<1x1x32x32xf32>
    %124 = vector.shape_cast %123 : vector<1x1x32x32xf32> to vector<32x32xf32>
    %cst_133 = arith.constant dense<0.000000e+00> : vector<2x32xf32>
    %125 = tpu.matmul %71, %124, %cst_133 {dimension_numbers = #tpu.dot_dimension_numbers<[1], [0], [0], [1], [0, 0, 1, 1], [], []>} : vector<2x32xf32>, vector<32x32xf32>, vector<2x32xf32> -> vector<2x32xf32>
    %c1_134 = arith.constant 1 : index
    %c1_135 = arith.constant 1 : index
    %c0_136 = arith.constant 0 : index
    %c0_137 = arith.constant 0 : index
    %126 = vector.load %arg6[%c1_134, %c1_135, %c0_136, %c0_137] : memref<3x3x1x32xf32, #tpu.memory_space<vmem>>, vector<1x1x1x32xf32>
    %127 = vector.shape_cast %126 : vector<1x1x1x32xf32> to vector<1x32xf32>
    %128 = vector.broadcast %127 : vector<1x32xf32> to vector<2x32xf32>
    %129 = arith.addf %125, %128 : vector<2x32xf32>
    %c1_138 = arith.constant 1 : index
    %c2_139 = arith.constant 2 : index
    %c0_140 = arith.constant 0 : index
    %c0_141 = arith.constant 0 : index
    %130 = vector.load %arg4[%c1_138, %c2_139, %c0_140, %c0_141] : memref<3x3x32x32xf32, #tpu.memory_space<vmem>>, vector<1x1x32x32xf32>
    %131 = vector.shape_cast %130 : vector<1x1x32x32xf32> to vector<32x32xf32>
    %cst_142 = arith.constant dense<0.000000e+00> : vector<2x32xf32>
    %132 = tpu.matmul %71, %131, %cst_142 {dimension_numbers = #tpu.dot_dimension_numbers<[1], [0], [0], [1], [0, 0, 1, 1], [], []>} : vector<2x32xf32>, vector<32x32xf32>, vector<2x32xf32> -> vector<2x32xf32>
    %c1_143 = arith.constant 1 : index
    %c2_144 = arith.constant 2 : index
    %c0_145 = arith.constant 0 : index
    %c0_146 = arith.constant 0 : index
    %133 = vector.load %arg6[%c1_143, %c2_144, %c0_145, %c0_146] : memref<3x3x1x32xf32, #tpu.memory_space<vmem>>, vector<1x1x1x32xf32>
    %134 = vector.shape_cast %133 : vector<1x1x1x32xf32> to vector<1x32xf32>
    %135 = vector.broadcast %134 : vector<1x32xf32> to vector<2x32xf32>
    %136 = arith.addf %132, %135 : vector<2x32xf32>
    %137 = vector.extract_strided_slice %30 {offsets = [0, 0], sizes = [2, 32], strides = [1, 1]} : vector<16x32xf32> to vector<2x32xf32>
    %138 = arith.addf %137, %122 : vector<2x32xf32>
    %139 = arith.negf %138 : vector<2x32xf32>
    %140 = math.exp %139 : vector<2x32xf32>
    %cst_147 = arith.constant 1.000000e+00 : f32
    %141 = vector.broadcast %cst_147 : f32 to vector<2x32xf32>
    %142 = arith.addf %141, %140 : vector<2x32xf32>
    %143 = arith.divf %141, %142 : vector<2x32xf32>
    %144 = vector.extract_strided_slice %37 {offsets = [0, 0], sizes = [2, 32], strides = [1, 1]} : vector<16x32xf32> to vector<2x32xf32>
    %145 = arith.addf %144, %129 : vector<2x32xf32>
    %146 = arith.negf %145 : vector<2x32xf32>
    %147 = math.exp %146 : vector<2x32xf32>
    %cst_148 = arith.constant 1.000000e+00 : f32
    %148 = vector.broadcast %cst_148 : f32 to vector<2x32xf32>
    %149 = arith.addf %148, %147 : vector<2x32xf32>
    %150 = arith.divf %148, %149 : vector<2x32xf32>
    %151 = vector.extract_strided_slice %44 {offsets = [0, 0], sizes = [2, 32], strides = [1, 1]} : vector<16x32xf32> to vector<2x32xf32>
    %152 = arith.mulf %143, %136 : vector<2x32xf32>
    %153 = arith.addf %151, %152 : vector<2x32xf32>
    %154 = math.tanh %153 : vector<2x32xf32>
    %155 = arith.subf %71, %154 : vector<2x32xf32>
    %156 = arith.mulf %150, %155 : vector<2x32xf32>
    %157 = arith.addf %154, %156 : vector<2x32xf32>
    %c0_i32 = arith.constant 0 : i32
    %158 = vector.broadcast %c0_i32 : i32 to vector<1x8xi32>
    %159 = arith.cmpi eq, %68, %158 : vector<1x8xi32>
    %160 = arith.extui %159 : vector<1x8xi1> to vector<1x8xi32>
    %161 = arith.sitofp %160 : vector<1x8xi32> to vector<1x8xf32>
    %cst_149 = arith.constant 0.000000e+00 : f32
    %162 = vector.broadcast %cst_149 : f32 to vector<2x32xf32>
    %163 = arith.maximumf %115, %162 : vector<2x32xf32>
    %cst_150 = arith.constant dense<0.000000e+00> : vector<2x1xf32>
    %164 = tpu.matmul %163, %66, %cst_150 {dimension_numbers = #tpu.dot_dimension_numbers<[1], [0], [0], [1], [0, 0, 1, 1], [], []>} : vector<2x32xf32>, vector<32x1xf32>, vector<2x1xf32> -> vector<2x1xf32>
    %165 = vector.broadcast %164 : vector<2x1xf32> to vector<2x8xf32>
    %166 = vector.broadcast %161 : vector<1x8xf32> to vector<2x8xf32>
    %167 = arith.mulf %165, %166 : vector<2x8xf32>
    %168 = arith.addf %72, %167 : vector<2x8xf32>
    %cst_151 = arith.constant 0.000000e+00 : f32
    %169 = vector.broadcast %cst_151 : f32 to vector<2x32xf32>
    %170 = arith.maximumf %157, %169 : vector<2x32xf32>
    %cst_152 = arith.constant dense<0.000000e+00> : vector<2x1xf32>
    %171 = tpu.matmul %170, %66, %cst_152 {dimension_numbers = #tpu.dot_dimension_numbers<[1], [0], [0], [1], [0, 0, 1, 1], [], []>} : vector<2x32xf32>, vector<32x1xf32>, vector<2x1xf32> -> vector<2x1xf32>
    %172 = vector.broadcast %171 : vector<2x1xf32> to vector<2x8xf32>
    %173 = vector.broadcast %161 : vector<1x8xf32> to vector<2x8xf32>
    %174 = arith.mulf %172, %173 : vector<2x8xf32>
    %175 = arith.addf %73, %174 : vector<2x8xf32>
    %c0_153 = arith.constant 0 : index
    %c0_154 = arith.constant 0 : index
    %c0_155 = arith.constant 0 : index
    %c0_156 = arith.constant 0 : index
    %176 = vector.load %arg4[%c0_153, %c0_154, %c0_155, %c0_156] : memref<3x3x32x32xf32, #tpu.memory_space<vmem>>, vector<1x1x32x32xf32>
    %177 = vector.shape_cast %176 : vector<1x1x32x32xf32> to vector<32x32xf32>
    %cst_157 = arith.constant dense<0.000000e+00> : vector<2x32xf32>
    %178 = tpu.matmul %115, %177, %cst_157 {dimension_numbers = #tpu.dot_dimension_numbers<[1], [0], [0], [1], [0, 0, 1, 1], [], []>} : vector<2x32xf32>, vector<32x32xf32>, vector<2x32xf32> -> vector<2x32xf32>
    %c0_158 = arith.constant 0 : index
    %c0_159 = arith.constant 0 : index
    %c0_160 = arith.constant 0 : index
    %c0_161 = arith.constant 0 : index
    %179 = vector.load %arg6[%c0_158, %c0_159, %c0_160, %c0_161] : memref<3x3x1x32xf32, #tpu.memory_space<vmem>>, vector<1x1x1x32xf32>
    %180 = vector.shape_cast %179 : vector<1x1x1x32xf32> to vector<1x32xf32>
    %181 = vector.broadcast %180 : vector<1x32xf32> to vector<2x32xf32>
    %182 = arith.addf %178, %181 : vector<2x32xf32>
    %c0_162 = arith.constant 0 : index
    %c1_163 = arith.constant 1 : index
    %c0_164 = arith.constant 0 : index
    %c0_165 = arith.constant 0 : index
    %183 = vector.load %arg4[%c0_162, %c1_163, %c0_164, %c0_165] : memref<3x3x32x32xf32, #tpu.memory_space<vmem>>, vector<1x1x32x32xf32>
    %184 = vector.shape_cast %183 : vector<1x1x32x32xf32> to vector<32x32xf32>
    %cst_166 = arith.constant dense<0.000000e+00> : vector<2x32xf32>
    %185 = tpu.matmul %115, %184, %cst_166 {dimension_numbers = #tpu.dot_dimension_numbers<[1], [0], [0], [1], [0, 0, 1, 1], [], []>} : vector<2x32xf32>, vector<32x32xf32>, vector<2x32xf32> -> vector<2x32xf32>
    %c0_167 = arith.constant 0 : index
    %c1_168 = arith.constant 1 : index
    %c0_169 = arith.constant 0 : index
    %c0_170 = arith.constant 0 : index
    %186 = vector.load %arg6[%c0_167, %c1_168, %c0_169, %c0_170] : memref<3x3x1x32xf32, #tpu.memory_space<vmem>>, vector<1x1x1x32xf32>
    %187 = vector.shape_cast %186 : vector<1x1x1x32xf32> to vector<1x32xf32>
    %188 = vector.broadcast %187 : vector<1x32xf32> to vector<2x32xf32>
    %189 = arith.addf %185, %188 : vector<2x32xf32>
    %c0_171 = arith.constant 0 : index
    %c2_172 = arith.constant 2 : index
    %c0_173 = arith.constant 0 : index
    %c0_174 = arith.constant 0 : index
    %190 = vector.load %arg4[%c0_171, %c2_172, %c0_173, %c0_174] : memref<3x3x32x32xf32, #tpu.memory_space<vmem>>, vector<1x1x32x32xf32>
    %191 = vector.shape_cast %190 : vector<1x1x32x32xf32> to vector<32x32xf32>
    %cst_175 = arith.constant dense<0.000000e+00> : vector<2x32xf32>
    %192 = tpu.matmul %115, %191, %cst_175 {dimension_numbers = #tpu.dot_dimension_numbers<[1], [0], [0], [1], [0, 0, 1, 1], [], []>} : vector<2x32xf32>, vector<32x32xf32>, vector<2x32xf32> -> vector<2x32xf32>
    %c0_176 = arith.constant 0 : index
    %c2_177 = arith.constant 2 : index
    %c0_178 = arith.constant 0 : index
    %c0_179 = arith.constant 0 : index
    %193 = vector.load %arg6[%c0_176, %c2_177, %c0_178, %c0_179] : memref<3x3x1x32xf32, #tpu.memory_space<vmem>>, vector<1x1x1x32xf32>
    %194 = vector.shape_cast %193 : vector<1x1x1x32xf32> to vector<1x32xf32>
    %195 = vector.broadcast %194 : vector<1x32xf32> to vector<2x32xf32>
    %196 = arith.addf %192, %195 : vector<2x32xf32>
    %197 = vector.extract_strided_slice %9 {offsets = [2, 0], sizes = [2, 32], strides = [1, 1]} : vector<16x32xf32> to vector<2x32xf32>
    %198 = arith.addf %197, %182 : vector<2x32xf32>
    %199 = arith.negf %198 : vector<2x32xf32>
    %200 = math.exp %199 : vector<2x32xf32>
    %cst_180 = arith.constant 1.000000e+00 : f32
    %201 = vector.broadcast %cst_180 : f32 to vector<2x32xf32>
    %202 = arith.addf %201, %200 : vector<2x32xf32>
    %203 = arith.divf %201, %202 : vector<2x32xf32>
    %204 = vector.extract_strided_slice %16 {offsets = [2, 0], sizes = [2, 32], strides = [1, 1]} : vector<16x32xf32> to vector<2x32xf32>
    %205 = arith.addf %204, %189 : vector<2x32xf32>
    %206 = arith.negf %205 : vector<2x32xf32>
    %207 = math.exp %206 : vector<2x32xf32>
    %cst_181 = arith.constant 1.000000e+00 : f32
    %208 = vector.broadcast %cst_181 : f32 to vector<2x32xf32>
    %209 = arith.addf %208, %207 : vector<2x32xf32>
    %210 = arith.divf %208, %209 : vector<2x32xf32>
    %211 = vector.extract_strided_slice %23 {offsets = [2, 0], sizes = [2, 32], strides = [1, 1]} : vector<16x32xf32> to vector<2x32xf32>
    %212 = arith.mulf %203, %196 : vector<2x32xf32>
    %213 = arith.addf %211, %212 : vector<2x32xf32>
    %214 = math.tanh %213 : vector<2x32xf32>
    %215 = arith.subf %115, %214 : vector<2x32xf32>
    %216 = arith.mulf %210, %215 : vector<2x32xf32>
    %217 = arith.addf %214, %216 : vector<2x32xf32>
    %c1_182 = arith.constant 1 : index
    %c0_183 = arith.constant 0 : index
    %c0_184 = arith.constant 0 : index
    %c0_185 = arith.constant 0 : index
    %218 = vector.load %arg4[%c1_182, %c0_183, %c0_184, %c0_185] : memref<3x3x32x32xf32, #tpu.memory_space<vmem>>, vector<1x1x32x32xf32>
    %219 = vector.shape_cast %218 : vector<1x1x32x32xf32> to vector<32x32xf32>
    %cst_186 = arith.constant dense<0.000000e+00> : vector<2x32xf32>
    %220 = tpu.matmul %157, %219, %cst_186 {dimension_numbers = #tpu.dot_dimension_numbers<[1], [0], [0], [1], [0, 0, 1, 1], [], []>} : vector<2x32xf32>, vector<32x32xf32>, vector<2x32xf32> -> vector<2x32xf32>
    %c1_187 = arith.constant 1 : index
    %c0_188 = arith.constant 0 : index
    %c0_189 = arith.constant 0 : index
    %c0_190 = arith.constant 0 : index
    %221 = vector.load %arg6[%c1_187, %c0_188, %c0_189, %c0_190] : memref<3x3x1x32xf32, #tpu.memory_space<vmem>>, vector<1x1x1x32xf32>
    %222 = vector.shape_cast %221 : vector<1x1x1x32xf32> to vector<1x32xf32>
    %223 = vector.broadcast %222 : vector<1x32xf32> to vector<2x32xf32>
    %224 = arith.addf %220, %223 : vector<2x32xf32>
    %c1_191 = arith.constant 1 : index
    %c1_192 = arith.constant 1 : index
    %c0_193 = arith.constant 0 : index
    %c0_194 = arith.constant 0 : index
    %225 = vector.load %arg4[%c1_191, %c1_192, %c0_193, %c0_194] : memref<3x3x32x32xf32, #tpu.memory_space<vmem>>, vector<1x1x32x32xf32>
    %226 = vector.shape_cast %225 : vector<1x1x32x32xf32> to vector<32x32xf32>
    %cst_195 = arith.constant dense<0.000000e+00> : vector<2x32xf32>
    %227 = tpu.matmul %157, %226, %cst_195 {dimension_numbers = #tpu.dot_dimension_numbers<[1], [0], [0], [1], [0, 0, 1, 1], [], []>} : vector<2x32xf32>, vector<32x32xf32>, vector<2x32xf32> -> vector<2x32xf32>
    %c1_196 = arith.constant 1 : index
    %c1_197 = arith.constant 1 : index
    %c0_198 = arith.constant 0 : index
    %c0_199 = arith.constant 0 : index
    %228 = vector.load %arg6[%c1_196, %c1_197, %c0_198, %c0_199] : memref<3x3x1x32xf32, #tpu.memory_space<vmem>>, vector<1x1x1x32xf32>
    %229 = vector.shape_cast %228 : vector<1x1x1x32xf32> to vector<1x32xf32>
    %230 = vector.broadcast %229 : vector<1x32xf32> to vector<2x32xf32>
    %231 = arith.addf %227, %230 : vector<2x32xf32>
    %c1_200 = arith.constant 1 : index
    %c2_201 = arith.constant 2 : index
    %c0_202 = arith.constant 0 : index
    %c0_203 = arith.constant 0 : index
    %232 = vector.load %arg4[%c1_200, %c2_201, %c0_202, %c0_203] : memref<3x3x32x32xf32, #tpu.memory_space<vmem>>, vector<1x1x32x32xf32>
    %233 = vector.shape_cast %232 : vector<1x1x32x32xf32> to vector<32x32xf32>
    %cst_204 = arith.constant dense<0.000000e+00> : vector<2x32xf32>
    %234 = tpu.matmul %157, %233, %cst_204 {dimension_numbers = #tpu.dot_dimension_numbers<[1], [0], [0], [1], [0, 0, 1, 1], [], []>} : vector<2x32xf32>, vector<32x32xf32>, vector<2x32xf32> -> vector<2x32xf32>
    %c1_205 = arith.constant 1 : index
    %c2_206 = arith.constant 2 : index
    %c0_207 = arith.constant 0 : index
    %c0_208 = arith.constant 0 : index
    %235 = vector.load %arg6[%c1_205, %c2_206, %c0_207, %c0_208] : memref<3x3x1x32xf32, #tpu.memory_space<vmem>>, vector<1x1x1x32xf32>
    %236 = vector.shape_cast %235 : vector<1x1x1x32xf32> to vector<1x32xf32>
    %237 = vector.broadcast %236 : vector<1x32xf32> to vector<2x32xf32>
    %238 = arith.addf %234, %237 : vector<2x32xf32>
    %239 = vector.extract_strided_slice %30 {offsets = [2, 0], sizes = [2, 32], strides = [1, 1]} : vector<16x32xf32> to vector<2x32xf32>
    %240 = arith.addf %239, %224 : vector<2x32xf32>
    %241 = arith.negf %240 : vector<2x32xf32>
    %242 = math.exp %241 : vector<2x32xf32>
    %cst_209 = arith.constant 1.000000e+00 : f32
    %243 = vector.broadcast %cst_209 : f32 to vector<2x32xf32>
    %244 = arith.addf %243, %242 : vector<2x32xf32>
    %245 = arith.divf %243, %244 : vector<2x32xf32>
    %246 = vector.extract_strided_slice %37 {offsets = [2, 0], sizes = [2, 32], strides = [1, 1]} : vector<16x32xf32> to vector<2x32xf32>
    %247 = arith.addf %246, %231 : vector<2x32xf32>
    %248 = arith.negf %247 : vector<2x32xf32>
    %249 = math.exp %248 : vector<2x32xf32>
    %cst_210 = arith.constant 1.000000e+00 : f32
    %250 = vector.broadcast %cst_210 : f32 to vector<2x32xf32>
    %251 = arith.addf %250, %249 : vector<2x32xf32>
    %252 = arith.divf %250, %251 : vector<2x32xf32>
    %253 = vector.extract_strided_slice %44 {offsets = [2, 0], sizes = [2, 32], strides = [1, 1]} : vector<16x32xf32> to vector<2x32xf32>
    %254 = arith.mulf %245, %238 : vector<2x32xf32>
    %255 = arith.addf %253, %254 : vector<2x32xf32>
    %256 = math.tanh %255 : vector<2x32xf32>
    %257 = arith.subf %157, %256 : vector<2x32xf32>
    %258 = arith.mulf %252, %257 : vector<2x32xf32>
    %259 = arith.addf %256, %258 : vector<2x32xf32>
    %c1_i32 = arith.constant 1 : i32
    %260 = vector.broadcast %c1_i32 : i32 to vector<1x8xi32>
    %261 = arith.cmpi eq, %68, %260 : vector<1x8xi32>
    %262 = arith.extui %261 : vector<1x8xi1> to vector<1x8xi32>
    %263 = arith.sitofp %262 : vector<1x8xi32> to vector<1x8xf32>
    %cst_211 = arith.constant 0.000000e+00 : f32
    %264 = vector.broadcast %cst_211 : f32 to vector<2x32xf32>
    %265 = arith.maximumf %217, %264 : vector<2x32xf32>
    %cst_212 = arith.constant dense<0.000000e+00> : vector<2x1xf32>
    %266 = tpu.matmul %265, %66, %cst_212 {dimension_numbers = #tpu.dot_dimension_numbers<[1], [0], [0], [1], [0, 0, 1, 1], [], []>} : vector<2x32xf32>, vector<32x1xf32>, vector<2x1xf32> -> vector<2x1xf32>
    %267 = vector.broadcast %266 : vector<2x1xf32> to vector<2x8xf32>
    %268 = vector.broadcast %263 : vector<1x8xf32> to vector<2x8xf32>
    %269 = arith.mulf %267, %268 : vector<2x8xf32>
    %270 = arith.addf %168, %269 : vector<2x8xf32>
    %cst_213 = arith.constant 0.000000e+00 : f32
    %271 = vector.broadcast %cst_213 : f32 to vector<2x32xf32>
    %272 = arith.maximumf %259, %271 : vector<2x32xf32>
    %cst_214 = arith.constant dense<0.000000e+00> : vector<2x1xf32>
    %273 = tpu.matmul %272, %66, %cst_214 {dimension_numbers = #tpu.dot_dimension_numbers<[1], [0], [0], [1], [0, 0, 1, 1], [], []>} : vector<2x32xf32>, vector<32x1xf32>, vector<2x1xf32> -> vector<2x1xf32>
    %274 = vector.broadcast %273 : vector<2x1xf32> to vector<2x8xf32>
    %275 = vector.broadcast %263 : vector<1x8xf32> to vector<2x8xf32>
    %276 = arith.mulf %274, %275 : vector<2x8xf32>
    %277 = arith.addf %175, %276 : vector<2x8xf32>
    %c0_215 = arith.constant 0 : index
    %c0_216 = arith.constant 0 : index
    %c0_217 = arith.constant 0 : index
    %c0_218 = arith.constant 0 : index
    %278 = vector.load %arg4[%c0_215, %c0_216, %c0_217, %c0_218] : memref<3x3x32x32xf32, #tpu.memory_space<vmem>>, vector<1x1x32x32xf32>
    %279 = vector.shape_cast %278 : vector<1x1x32x32xf32> to vector<32x32xf32>
    %cst_219 = arith.constant dense<0.000000e+00> : vector<2x32xf32>
    %280 = tpu.matmul %217, %279, %cst_219 {dimension_numbers = #tpu.dot_dimension_numbers<[1], [0], [0], [1], [0, 0, 1, 1], [], []>} : vector<2x32xf32>, vector<32x32xf32>, vector<2x32xf32> -> vector<2x32xf32>
    %c0_220 = arith.constant 0 : index
    %c0_221 = arith.constant 0 : index
    %c0_222 = arith.constant 0 : index
    %c0_223 = arith.constant 0 : index
    %281 = vector.load %arg6[%c0_220, %c0_221, %c0_222, %c0_223] : memref<3x3x1x32xf32, #tpu.memory_space<vmem>>, vector<1x1x1x32xf32>
    %282 = vector.shape_cast %281 : vector<1x1x1x32xf32> to vector<1x32xf32>
    %283 = vector.broadcast %282 : vector<1x32xf32> to vector<2x32xf32>
    %284 = arith.addf %280, %283 : vector<2x32xf32>
    %c0_224 = arith.constant 0 : index
    %c1_225 = arith.constant 1 : index
    %c0_226 = arith.constant 0 : index
    %c0_227 = arith.constant 0 : index
    %285 = vector.load %arg4[%c0_224, %c1_225, %c0_226, %c0_227] : memref<3x3x32x32xf32, #tpu.memory_space<vmem>>, vector<1x1x32x32xf32>
    %286 = vector.shape_cast %285 : vector<1x1x32x32xf32> to vector<32x32xf32>
    %cst_228 = arith.constant dense<0.000000e+00> : vector<2x32xf32>
    %287 = tpu.matmul %217, %286, %cst_228 {dimension_numbers = #tpu.dot_dimension_numbers<[1], [0], [0], [1], [0, 0, 1, 1], [], []>} : vector<2x32xf32>, vector<32x32xf32>, vector<2x32xf32> -> vector<2x32xf32>
    %c0_229 = arith.constant 0 : index
    %c1_230 = arith.constant 1 : index
    %c0_231 = arith.constant 0 : index
    %c0_232 = arith.constant 0 : index
    %288 = vector.load %arg6[%c0_229, %c1_230, %c0_231, %c0_232] : memref<3x3x1x32xf32, #tpu.memory_space<vmem>>, vector<1x1x1x32xf32>
    %289 = vector.shape_cast %288 : vector<1x1x1x32xf32> to vector<1x32xf32>
    %290 = vector.broadcast %289 : vector<1x32xf32> to vector<2x32xf32>
    %291 = arith.addf %287, %290 : vector<2x32xf32>
    %c0_233 = arith.constant 0 : index
    %c2_234 = arith.constant 2 : index
    %c0_235 = arith.constant 0 : index
    %c0_236 = arith.constant 0 : index
    %292 = vector.load %arg4[%c0_233, %c2_234, %c0_235, %c0_236] : memref<3x3x32x32xf32, #tpu.memory_space<vmem>>, vector<1x1x32x32xf32>
    %293 = vector.shape_cast %292 : vector<1x1x32x32xf32> to vector<32x32xf32>
    %cst_237 = arith.constant dense<0.000000e+00> : vector<2x32xf32>
    %294 = tpu.matmul %217, %293, %cst_237 {dimension_numbers = #tpu.dot_dimension_numbers<[1], [0], [0], [1], [0, 0, 1, 1], [], []>} : vector<2x32xf32>, vector<32x32xf32>, vector<2x32xf32> -> vector<2x32xf32>
    %c0_238 = arith.constant 0 : index
    %c2_239 = arith.constant 2 : index
    %c0_240 = arith.constant 0 : index
    %c0_241 = arith.constant 0 : index
    %295 = vector.load %arg6[%c0_238, %c2_239, %c0_240, %c0_241] : memref<3x3x1x32xf32, #tpu.memory_space<vmem>>, vector<1x1x1x32xf32>
    %296 = vector.shape_cast %295 : vector<1x1x1x32xf32> to vector<1x32xf32>
    %297 = vector.broadcast %296 : vector<1x32xf32> to vector<2x32xf32>
    %298 = arith.addf %294, %297 : vector<2x32xf32>
    %299 = vector.extract_strided_slice %9 {offsets = [4, 0], sizes = [2, 32], strides = [1, 1]} : vector<16x32xf32> to vector<2x32xf32>
    %300 = arith.addf %299, %284 : vector<2x32xf32>
    %301 = arith.negf %300 : vector<2x32xf32>
    %302 = math.exp %301 : vector<2x32xf32>
    %cst_242 = arith.constant 1.000000e+00 : f32
    %303 = vector.broadcast %cst_242 : f32 to vector<2x32xf32>
    %304 = arith.addf %303, %302 : vector<2x32xf32>
    %305 = arith.divf %303, %304 : vector<2x32xf32>
    %306 = vector.extract_strided_slice %16 {offsets = [4, 0], sizes = [2, 32], strides = [1, 1]} : vector<16x32xf32> to vector<2x32xf32>
    %307 = arith.addf %306, %291 : vector<2x32xf32>
    %308 = arith.negf %307 : vector<2x32xf32>
    %309 = math.exp %308 : vector<2x32xf32>
    %cst_243 = arith.constant 1.000000e+00 : f32
    %310 = vector.broadcast %cst_243 : f32 to vector<2x32xf32>
    %311 = arith.addf %310, %309 : vector<2x32xf32>
    %312 = arith.divf %310, %311 : vector<2x32xf32>
    %313 = vector.extract_strided_slice %23 {offsets = [4, 0], sizes = [2, 32], strides = [1, 1]} : vector<16x32xf32> to vector<2x32xf32>
    %314 = arith.mulf %305, %298 : vector<2x32xf32>
    %315 = arith.addf %313, %314 : vector<2x32xf32>
    %316 = math.tanh %315 : vector<2x32xf32>
    %317 = arith.subf %217, %316 : vector<2x32xf32>
    %318 = arith.mulf %312, %317 : vector<2x32xf32>
    %319 = arith.addf %316, %318 : vector<2x32xf32>
    %c1_244 = arith.constant 1 : index
    %c0_245 = arith.constant 0 : index
    %c0_246 = arith.constant 0 : index
    %c0_247 = arith.constant 0 : index
    %320 = vector.load %arg4[%c1_244, %c0_245, %c0_246, %c0_247] : memref<3x3x32x32xf32, #tpu.memory_space<vmem>>, vector<1x1x32x32xf32>
    %321 = vector.shape_cast %320 : vector<1x1x32x32xf32> to vector<32x32xf32>
    %cst_248 = arith.constant dense<0.000000e+00> : vector<2x32xf32>
    %322 = tpu.matmul %259, %321, %cst_248 {dimension_numbers = #tpu.dot_dimension_numbers<[1], [0], [0], [1], [0, 0, 1, 1], [], []>} : vector<2x32xf32>, vector<32x32xf32>, vector<2x32xf32> -> vector<2x32xf32>
    %c1_249 = arith.constant 1 : index
    %c0_250 = arith.constant 0 : index
    %c0_251 = arith.constant 0 : index
    %c0_252 = arith.constant 0 : index
    %323 = vector.load %arg6[%c1_249, %c0_250, %c0_251, %c0_252] : memref<3x3x1x32xf32, #tpu.memory_space<vmem>>, vector<1x1x1x32xf32>
    %324 = vector.shape_cast %323 : vector<1x1x1x32xf32> to vector<1x32xf32>
    %325 = vector.broadcast %324 : vector<1x32xf32> to vector<2x32xf32>
    %326 = arith.addf %322, %325 : vector<2x32xf32>
    %c1_253 = arith.constant 1 : index
    %c1_254 = arith.constant 1 : index
    %c0_255 = arith.constant 0 : index
    %c0_256 = arith.constant 0 : index
    %327 = vector.load %arg4[%c1_253, %c1_254, %c0_255, %c0_256] : memref<3x3x32x32xf32, #tpu.memory_space<vmem>>, vector<1x1x32x32xf32>
    %328 = vector.shape_cast %327 : vector<1x1x32x32xf32> to vector<32x32xf32>
    %cst_257 = arith.constant dense<0.000000e+00> : vector<2x32xf32>
    %329 = tpu.matmul %259, %328, %cst_257 {dimension_numbers = #tpu.dot_dimension_numbers<[1], [0], [0], [1], [0, 0, 1, 1], [], []>} : vector<2x32xf32>, vector<32x32xf32>, vector<2x32xf32> -> vector<2x32xf32>
    %c1_258 = arith.constant 1 : index
    %c1_259 = arith.constant 1 : index
    %c0_260 = arith.constant 0 : index
    %c0_261 = arith.constant 0 : index
    %330 = vector.load %arg6[%c1_258, %c1_259, %c0_260, %c0_261] : memref<3x3x1x32xf32, #tpu.memory_space<vmem>>, vector<1x1x1x32xf32>
    %331 = vector.shape_cast %330 : vector<1x1x1x32xf32> to vector<1x32xf32>
    %332 = vector.broadcast %331 : vector<1x32xf32> to vector<2x32xf32>
    %333 = arith.addf %329, %332 : vector<2x32xf32>
    %c1_262 = arith.constant 1 : index
    %c2_263 = arith.constant 2 : index
    %c0_264 = arith.constant 0 : index
    %c0_265 = arith.constant 0 : index
    %334 = vector.load %arg4[%c1_262, %c2_263, %c0_264, %c0_265] : memref<3x3x32x32xf32, #tpu.memory_space<vmem>>, vector<1x1x32x32xf32>
    %335 = vector.shape_cast %334 : vector<1x1x32x32xf32> to vector<32x32xf32>
    %cst_266 = arith.constant dense<0.000000e+00> : vector<2x32xf32>
    %336 = tpu.matmul %259, %335, %cst_266 {dimension_numbers = #tpu.dot_dimension_numbers<[1], [0], [0], [1], [0, 0, 1, 1], [], []>} : vector<2x32xf32>, vector<32x32xf32>, vector<2x32xf32> -> vector<2x32xf32>
    %c1_267 = arith.constant 1 : index
    %c2_268 = arith.constant 2 : index
    %c0_269 = arith.constant 0 : index
    %c0_270 = arith.constant 0 : index
    %337 = vector.load %arg6[%c1_267, %c2_268, %c0_269, %c0_270] : memref<3x3x1x32xf32, #tpu.memory_space<vmem>>, vector<1x1x1x32xf32>
    %338 = vector.shape_cast %337 : vector<1x1x1x32xf32> to vector<1x32xf32>
    %339 = vector.broadcast %338 : vector<1x32xf32> to vector<2x32xf32>
    %340 = arith.addf %336, %339 : vector<2x32xf32>
    %341 = vector.extract_strided_slice %30 {offsets = [4, 0], sizes = [2, 32], strides = [1, 1]} : vector<16x32xf32> to vector<2x32xf32>
    %342 = arith.addf %341, %326 : vector<2x32xf32>
    %343 = arith.negf %342 : vector<2x32xf32>
    %344 = math.exp %343 : vector<2x32xf32>
    %cst_271 = arith.constant 1.000000e+00 : f32
    %345 = vector.broadcast %cst_271 : f32 to vector<2x32xf32>
    %346 = arith.addf %345, %344 : vector<2x32xf32>
    %347 = arith.divf %345, %346 : vector<2x32xf32>
    %348 = vector.extract_strided_slice %37 {offsets = [4, 0], sizes = [2, 32], strides = [1, 1]} : vector<16x32xf32> to vector<2x32xf32>
    %349 = arith.addf %348, %333 : vector<2x32xf32>
    %350 = arith.negf %349 : vector<2x32xf32>
    %351 = math.exp %350 : vector<2x32xf32>
    %cst_272 = arith.constant 1.000000e+00 : f32
    %352 = vector.broadcast %cst_272 : f32 to vector<2x32xf32>
    %353 = arith.addf %352, %351 : vector<2x32xf32>
    %354 = arith.divf %352, %353 : vector<2x32xf32>
    %355 = vector.extract_strided_slice %44 {offsets = [4, 0], sizes = [2, 32], strides = [1, 1]} : vector<16x32xf32> to vector<2x32xf32>
    %356 = arith.mulf %347, %340 : vector<2x32xf32>
    %357 = arith.addf %355, %356 : vector<2x32xf32>
    %358 = math.tanh %357 : vector<2x32xf32>
    %359 = arith.subf %259, %358 : vector<2x32xf32>
    %360 = arith.mulf %354, %359 : vector<2x32xf32>
    %361 = arith.addf %358, %360 : vector<2x32xf32>
    %c2_i32 = arith.constant 2 : i32
    %362 = vector.broadcast %c2_i32 : i32 to vector<1x8xi32>
    %363 = arith.cmpi eq, %68, %362 : vector<1x8xi32>
    %364 = arith.extui %363 : vector<1x8xi1> to vector<1x8xi32>
    %365 = arith.sitofp %364 : vector<1x8xi32> to vector<1x8xf32>
    %cst_273 = arith.constant 0.000000e+00 : f32
    %366 = vector.broadcast %cst_273 : f32 to vector<2x32xf32>
    %367 = arith.maximumf %319, %366 : vector<2x32xf32>
    %cst_274 = arith.constant dense<0.000000e+00> : vector<2x1xf32>
    %368 = tpu.matmul %367, %66, %cst_274 {dimension_numbers = #tpu.dot_dimension_numbers<[1], [0], [0], [1], [0, 0, 1, 1], [], []>} : vector<2x32xf32>, vector<32x1xf32>, vector<2x1xf32> -> vector<2x1xf32>
    %369 = vector.broadcast %368 : vector<2x1xf32> to vector<2x8xf32>
    %370 = vector.broadcast %365 : vector<1x8xf32> to vector<2x8xf32>
    %371 = arith.mulf %369, %370 : vector<2x8xf32>
    %372 = arith.addf %270, %371 : vector<2x8xf32>
    %cst_275 = arith.constant 0.000000e+00 : f32
    %373 = vector.broadcast %cst_275 : f32 to vector<2x32xf32>
    %374 = arith.maximumf %361, %373 : vector<2x32xf32>
    %cst_276 = arith.constant dense<0.000000e+00> : vector<2x1xf32>
    %375 = tpu.matmul %374, %66, %cst_276 {dimension_numbers = #tpu.dot_dimension_numbers<[1], [0], [0], [1], [0, 0, 1, 1], [], []>} : vector<2x32xf32>, vector<32x1xf32>, vector<2x1xf32> -> vector<2x1xf32>
    %376 = vector.broadcast %375 : vector<2x1xf32> to vector<2x8xf32>
    %377 = vector.broadcast %365 : vector<1x8xf32> to vector<2x8xf32>
    %378 = arith.mulf %376, %377 : vector<2x8xf32>
    %379 = arith.addf %277, %378 : vector<2x8xf32>
    %c0_277 = arith.constant 0 : index
    %c0_278 = arith.constant 0 : index
    %c0_279 = arith.constant 0 : index
    %c0_280 = arith.constant 0 : index
    %380 = vector.load %arg4[%c0_277, %c0_278, %c0_279, %c0_280] : memref<3x3x32x32xf32, #tpu.memory_space<vmem>>, vector<1x1x32x32xf32>
    %381 = vector.shape_cast %380 : vector<1x1x32x32xf32> to vector<32x32xf32>
    %cst_281 = arith.constant dense<0.000000e+00> : vector<2x32xf32>
    %382 = tpu.matmul %319, %381, %cst_281 {dimension_numbers = #tpu.dot_dimension_numbers<[1], [0], [0], [1], [0, 0, 1, 1], [], []>} : vector<2x32xf32>, vector<32x32xf32>, vector<2x32xf32> -> vector<2x32xf32>
    %c0_282 = arith.constant 0 : index
    %c0_283 = arith.constant 0 : index
    %c0_284 = arith.constant 0 : index
    %c0_285 = arith.constant 0 : index
    %383 = vector.load %arg6[%c0_282, %c0_283, %c0_284, %c0_285] : memref<3x3x1x32xf32, #tpu.memory_space<vmem>>, vector<1x1x1x32xf32>
    %384 = vector.shape_cast %383 : vector<1x1x1x32xf32> to vector<1x32xf32>
    %385 = vector.broadcast %384 : vector<1x32xf32> to vector<2x32xf32>
    %386 = arith.addf %382, %385 : vector<2x32xf32>
    %c0_286 = arith.constant 0 : index
    %c1_287 = arith.constant 1 : index
    %c0_288 = arith.constant 0 : index
    %c0_289 = arith.constant 0 : index
    %387 = vector.load %arg4[%c0_286, %c1_287, %c0_288, %c0_289] : memref<3x3x32x32xf32, #tpu.memory_space<vmem>>, vector<1x1x32x32xf32>
    %388 = vector.shape_cast %387 : vector<1x1x32x32xf32> to vector<32x32xf32>
    %cst_290 = arith.constant dense<0.000000e+00> : vector<2x32xf32>
    %389 = tpu.matmul %319, %388, %cst_290 {dimension_numbers = #tpu.dot_dimension_numbers<[1], [0], [0], [1], [0, 0, 1, 1], [], []>} : vector<2x32xf32>, vector<32x32xf32>, vector<2x32xf32> -> vector<2x32xf32>
    %c0_291 = arith.constant 0 : index
    %c1_292 = arith.constant 1 : index
    %c0_293 = arith.constant 0 : index
    %c0_294 = arith.constant 0 : index
    %390 = vector.load %arg6[%c0_291, %c1_292, %c0_293, %c0_294] : memref<3x3x1x32xf32, #tpu.memory_space<vmem>>, vector<1x1x1x32xf32>
    %391 = vector.shape_cast %390 : vector<1x1x1x32xf32> to vector<1x32xf32>
    %392 = vector.broadcast %391 : vector<1x32xf32> to vector<2x32xf32>
    %393 = arith.addf %389, %392 : vector<2x32xf32>
    %c0_295 = arith.constant 0 : index
    %c2_296 = arith.constant 2 : index
    %c0_297 = arith.constant 0 : index
    %c0_298 = arith.constant 0 : index
    %394 = vector.load %arg4[%c0_295, %c2_296, %c0_297, %c0_298] : memref<3x3x32x32xf32, #tpu.memory_space<vmem>>, vector<1x1x32x32xf32>
    %395 = vector.shape_cast %394 : vector<1x1x32x32xf32> to vector<32x32xf32>
    %cst_299 = arith.constant dense<0.000000e+00> : vector<2x32xf32>
    %396 = tpu.matmul %319, %395, %cst_299 {dimension_numbers = #tpu.dot_dimension_numbers<[1], [0], [0], [1], [0, 0, 1, 1], [], []>} : vector<2x32xf32>, vector<32x32xf32>, vector<2x32xf32> -> vector<2x32xf32>
    %c0_300 = arith.constant 0 : index
    %c2_301 = arith.constant 2 : index
    %c0_302 = arith.constant 0 : index
    %c0_303 = arith.constant 0 : index
    %397 = vector.load %arg6[%c0_300, %c2_301, %c0_302, %c0_303] : memref<3x3x1x32xf32, #tpu.memory_space<vmem>>, vector<1x1x1x32xf32>
    %398 = vector.shape_cast %397 : vector<1x1x1x32xf32> to vector<1x32xf32>
    %399 = vector.broadcast %398 : vector<1x32xf32> to vector<2x32xf32>
    %400 = arith.addf %396, %399 : vector<2x32xf32>
    %401 = vector.extract_strided_slice %9 {offsets = [6, 0], sizes = [2, 32], strides = [1, 1]} : vector<16x32xf32> to vector<2x32xf32>
    %402 = arith.addf %401, %386 : vector<2x32xf32>
    %403 = arith.negf %402 : vector<2x32xf32>
    %404 = math.exp %403 : vector<2x32xf32>
    %cst_304 = arith.constant 1.000000e+00 : f32
    %405 = vector.broadcast %cst_304 : f32 to vector<2x32xf32>
    %406 = arith.addf %405, %404 : vector<2x32xf32>
    %407 = arith.divf %405, %406 : vector<2x32xf32>
    %408 = vector.extract_strided_slice %16 {offsets = [6, 0], sizes = [2, 32], strides = [1, 1]} : vector<16x32xf32> to vector<2x32xf32>
    %409 = arith.addf %408, %393 : vector<2x32xf32>
    %410 = arith.negf %409 : vector<2x32xf32>
    %411 = math.exp %410 : vector<2x32xf32>
    %cst_305 = arith.constant 1.000000e+00 : f32
    %412 = vector.broadcast %cst_305 : f32 to vector<2x32xf32>
    %413 = arith.addf %412, %411 : vector<2x32xf32>
    %414 = arith.divf %412, %413 : vector<2x32xf32>
    %415 = vector.extract_strided_slice %23 {offsets = [6, 0], sizes = [2, 32], strides = [1, 1]} : vector<16x32xf32> to vector<2x32xf32>
    %416 = arith.mulf %407, %400 : vector<2x32xf32>
    %417 = arith.addf %415, %416 : vector<2x32xf32>
    %418 = math.tanh %417 : vector<2x32xf32>
    %419 = arith.subf %319, %418 : vector<2x32xf32>
    %420 = arith.mulf %414, %419 : vector<2x32xf32>
    %421 = arith.addf %418, %420 : vector<2x32xf32>
    %c1_306 = arith.constant 1 : index
    %c0_307 = arith.constant 0 : index
    %c0_308 = arith.constant 0 : index
    %c0_309 = arith.constant 0 : index
    %422 = vector.load %arg4[%c1_306, %c0_307, %c0_308, %c0_309] : memref<3x3x32x32xf32, #tpu.memory_space<vmem>>, vector<1x1x32x32xf32>
    %423 = vector.shape_cast %422 : vector<1x1x32x32xf32> to vector<32x32xf32>
    %cst_310 = arith.constant dense<0.000000e+00> : vector<2x32xf32>
    %424 = tpu.matmul %361, %423, %cst_310 {dimension_numbers = #tpu.dot_dimension_numbers<[1], [0], [0], [1], [0, 0, 1, 1], [], []>} : vector<2x32xf32>, vector<32x32xf32>, vector<2x32xf32> -> vector<2x32xf32>
    %c1_311 = arith.constant 1 : index
    %c0_312 = arith.constant 0 : index
    %c0_313 = arith.constant 0 : index
    %c0_314 = arith.constant 0 : index
    %425 = vector.load %arg6[%c1_311, %c0_312, %c0_313, %c0_314] : memref<3x3x1x32xf32, #tpu.memory_space<vmem>>, vector<1x1x1x32xf32>
    %426 = vector.shape_cast %425 : vector<1x1x1x32xf32> to vector<1x32xf32>
    %427 = vector.broadcast %426 : vector<1x32xf32> to vector<2x32xf32>
    %428 = arith.addf %424, %427 : vector<2x32xf32>
    %c1_315 = arith.constant 1 : index
    %c1_316 = arith.constant 1 : index
    %c0_317 = arith.constant 0 : index
    %c0_318 = arith.constant 0 : index
    %429 = vector.load %arg4[%c1_315, %c1_316, %c0_317, %c0_318] : memref<3x3x32x32xf32, #tpu.memory_space<vmem>>, vector<1x1x32x32xf32>
    %430 = vector.shape_cast %429 : vector<1x1x32x32xf32> to vector<32x32xf32>
    %cst_319 = arith.constant dense<0.000000e+00> : vector<2x32xf32>
    %431 = tpu.matmul %361, %430, %cst_319 {dimension_numbers = #tpu.dot_dimension_numbers<[1], [0], [0], [1], [0, 0, 1, 1], [], []>} : vector<2x32xf32>, vector<32x32xf32>, vector<2x32xf32> -> vector<2x32xf32>
    %c1_320 = arith.constant 1 : index
    %c1_321 = arith.constant 1 : index
    %c0_322 = arith.constant 0 : index
    %c0_323 = arith.constant 0 : index
    %432 = vector.load %arg6[%c1_320, %c1_321, %c0_322, %c0_323] : memref<3x3x1x32xf32, #tpu.memory_space<vmem>>, vector<1x1x1x32xf32>
    %433 = vector.shape_cast %432 : vector<1x1x1x32xf32> to vector<1x32xf32>
    %434 = vector.broadcast %433 : vector<1x32xf32> to vector<2x32xf32>
    %435 = arith.addf %431, %434 : vector<2x32xf32>
    %c1_324 = arith.constant 1 : index
    %c2_325 = arith.constant 2 : index
    %c0_326 = arith.constant 0 : index
    %c0_327 = arith.constant 0 : index
    %436 = vector.load %arg4[%c1_324, %c2_325, %c0_326, %c0_327] : memref<3x3x32x32xf32, #tpu.memory_space<vmem>>, vector<1x1x32x32xf32>
    %437 = vector.shape_cast %436 : vector<1x1x32x32xf32> to vector<32x32xf32>
    %cst_328 = arith.constant dense<0.000000e+00> : vector<2x32xf32>
    %438 = tpu.matmul %361, %437, %cst_328 {dimension_numbers = #tpu.dot_dimension_numbers<[1], [0], [0], [1], [0, 0, 1, 1], [], []>} : vector<2x32xf32>, vector<32x32xf32>, vector<2x32xf32> -> vector<2x32xf32>
    %c1_329 = arith.constant 1 : index
    %c2_330 = arith.constant 2 : index
    %c0_331 = arith.constant 0 : index
    %c0_332 = arith.constant 0 : index
    %439 = vector.load %arg6[%c1_329, %c2_330, %c0_331, %c0_332] : memref<3x3x1x32xf32, #tpu.memory_space<vmem>>, vector<1x1x1x32xf32>
    %440 = vector.shape_cast %439 : vector<1x1x1x32xf32> to vector<1x32xf32>
    %441 = vector.broadcast %440 : vector<1x32xf32> to vector<2x32xf32>
    %442 = arith.addf %438, %441 : vector<2x32xf32>
    %443 = vector.extract_strided_slice %30 {offsets = [6, 0], sizes = [2, 32], strides = [1, 1]} : vector<16x32xf32> to vector<2x32xf32>
    %444 = arith.addf %443, %428 : vector<2x32xf32>
    %445 = arith.negf %444 : vector<2x32xf32>
    %446 = math.exp %445 : vector<2x32xf32>
    %cst_333 = arith.constant 1.000000e+00 : f32
    %447 = vector.broadcast %cst_333 : f32 to vector<2x32xf32>
    %448 = arith.addf %447, %446 : vector<2x32xf32>
    %449 = arith.divf %447, %448 : vector<2x32xf32>
    %450 = vector.extract_strided_slice %37 {offsets = [6, 0], sizes = [2, 32], strides = [1, 1]} : vector<16x32xf32> to vector<2x32xf32>
    %451 = arith.addf %450, %435 : vector<2x32xf32>
    %452 = arith.negf %451 : vector<2x32xf32>
    %453 = math.exp %452 : vector<2x32xf32>
    %cst_334 = arith.constant 1.000000e+00 : f32
    %454 = vector.broadcast %cst_334 : f32 to vector<2x32xf32>
    %455 = arith.addf %454, %453 : vector<2x32xf32>
    %456 = arith.divf %454, %455 : vector<2x32xf32>
    %457 = vector.extract_strided_slice %44 {offsets = [6, 0], sizes = [2, 32], strides = [1, 1]} : vector<16x32xf32> to vector<2x32xf32>
    %458 = arith.mulf %449, %442 : vector<2x32xf32>
    %459 = arith.addf %457, %458 : vector<2x32xf32>
    %460 = math.tanh %459 : vector<2x32xf32>
    %461 = arith.subf %361, %460 : vector<2x32xf32>
    %462 = arith.mulf %456, %461 : vector<2x32xf32>
    %463 = arith.addf %460, %462 : vector<2x32xf32>
    %c3_i32 = arith.constant 3 : i32
    %464 = vector.broadcast %c3_i32 : i32 to vector<1x8xi32>
    %465 = arith.cmpi eq, %68, %464 : vector<1x8xi32>
    %466 = arith.extui %465 : vector<1x8xi1> to vector<1x8xi32>
    %467 = arith.sitofp %466 : vector<1x8xi32> to vector<1x8xf32>
    %cst_335 = arith.constant 0.000000e+00 : f32
    %468 = vector.broadcast %cst_335 : f32 to vector<2x32xf32>
    %469 = arith.maximumf %421, %468 : vector<2x32xf32>
    %cst_336 = arith.constant dense<0.000000e+00> : vector<2x1xf32>
    %470 = tpu.matmul %469, %66, %cst_336 {dimension_numbers = #tpu.dot_dimension_numbers<[1], [0], [0], [1], [0, 0, 1, 1], [], []>} : vector<2x32xf32>, vector<32x1xf32>, vector<2x1xf32> -> vector<2x1xf32>
    %471 = vector.broadcast %470 : vector<2x1xf32> to vector<2x8xf32>
    %472 = vector.broadcast %467 : vector<1x8xf32> to vector<2x8xf32>
    %473 = arith.mulf %471, %472 : vector<2x8xf32>
    %474 = arith.addf %372, %473 : vector<2x8xf32>
    %cst_337 = arith.constant 0.000000e+00 : f32
    %475 = vector.broadcast %cst_337 : f32 to vector<2x32xf32>
    %476 = arith.maximumf %463, %475 : vector<2x32xf32>
    %cst_338 = arith.constant dense<0.000000e+00> : vector<2x1xf32>
    %477 = tpu.matmul %476, %66, %cst_338 {dimension_numbers = #tpu.dot_dimension_numbers<[1], [0], [0], [1], [0, 0, 1, 1], [], []>} : vector<2x32xf32>, vector<32x1xf32>, vector<2x1xf32> -> vector<2x1xf32>
    %478 = vector.broadcast %477 : vector<2x1xf32> to vector<2x8xf32>
    %479 = vector.broadcast %467 : vector<1x8xf32> to vector<2x8xf32>
    %480 = arith.mulf %478, %479 : vector<2x8xf32>
    %481 = arith.addf %379, %480 : vector<2x8xf32>
    %c0_339 = arith.constant 0 : index
    %c0_340 = arith.constant 0 : index
    %c0_341 = arith.constant 0 : index
    %c0_342 = arith.constant 0 : index
    %482 = vector.load %arg4[%c0_339, %c0_340, %c0_341, %c0_342] : memref<3x3x32x32xf32, #tpu.memory_space<vmem>>, vector<1x1x32x32xf32>
    %483 = vector.shape_cast %482 : vector<1x1x32x32xf32> to vector<32x32xf32>
    %cst_343 = arith.constant dense<0.000000e+00> : vector<2x32xf32>
    %484 = tpu.matmul %421, %483, %cst_343 {dimension_numbers = #tpu.dot_dimension_numbers<[1], [0], [0], [1], [0, 0, 1, 1], [], []>} : vector<2x32xf32>, vector<32x32xf32>, vector<2x32xf32> -> vector<2x32xf32>
    %c0_344 = arith.constant 0 : index
    %c0_345 = arith.constant 0 : index
    %c0_346 = arith.constant 0 : index
    %c0_347 = arith.constant 0 : index
    %485 = vector.load %arg6[%c0_344, %c0_345, %c0_346, %c0_347] : memref<3x3x1x32xf32, #tpu.memory_space<vmem>>, vector<1x1x1x32xf32>
    %486 = vector.shape_cast %485 : vector<1x1x1x32xf32> to vector<1x32xf32>
    %487 = vector.broadcast %486 : vector<1x32xf32> to vector<2x32xf32>
    %488 = arith.addf %484, %487 : vector<2x32xf32>
    %c0_348 = arith.constant 0 : index
    %c1_349 = arith.constant 1 : index
    %c0_350 = arith.constant 0 : index
    %c0_351 = arith.constant 0 : index
    %489 = vector.load %arg4[%c0_348, %c1_349, %c0_350, %c0_351] : memref<3x3x32x32xf32, #tpu.memory_space<vmem>>, vector<1x1x32x32xf32>
    %490 = vector.shape_cast %489 : vector<1x1x32x32xf32> to vector<32x32xf32>
    %cst_352 = arith.constant dense<0.000000e+00> : vector<2x32xf32>
    %491 = tpu.matmul %421, %490, %cst_352 {dimension_numbers = #tpu.dot_dimension_numbers<[1], [0], [0], [1], [0, 0, 1, 1], [], []>} : vector<2x32xf32>, vector<32x32xf32>, vector<2x32xf32> -> vector<2x32xf32>
    %c0_353 = arith.constant 0 : index
    %c1_354 = arith.constant 1 : index
    %c0_355 = arith.constant 0 : index
    %c0_356 = arith.constant 0 : index
    %492 = vector.load %arg6[%c0_353, %c1_354, %c0_355, %c0_356] : memref<3x3x1x32xf32, #tpu.memory_space<vmem>>, vector<1x1x1x32xf32>
    %493 = vector.shape_cast %492 : vector<1x1x1x32xf32> to vector<1x32xf32>
    %494 = vector.broadcast %493 : vector<1x32xf32> to vector<2x32xf32>
    %495 = arith.addf %491, %494 : vector<2x32xf32>
    %c0_357 = arith.constant 0 : index
    %c2_358 = arith.constant 2 : index
    %c0_359 = arith.constant 0 : index
    %c0_360 = arith.constant 0 : index
    %496 = vector.load %arg4[%c0_357, %c2_358, %c0_359, %c0_360] : memref<3x3x32x32xf32, #tpu.memory_space<vmem>>, vector<1x1x32x32xf32>
    %497 = vector.shape_cast %496 : vector<1x1x32x32xf32> to vector<32x32xf32>
    %cst_361 = arith.constant dense<0.000000e+00> : vector<2x32xf32>
    %498 = tpu.matmul %421, %497, %cst_361 {dimension_numbers = #tpu.dot_dimension_numbers<[1], [0], [0], [1], [0, 0, 1, 1], [], []>} : vector<2x32xf32>, vector<32x32xf32>, vector<2x32xf32> -> vector<2x32xf32>
    %c0_362 = arith.constant 0 : index
    %c2_363 = arith.constant 2 : index
    %c0_364 = arith.constant 0 : index
    %c0_365 = arith.constant 0 : index
    %499 = vector.load %arg6[%c0_362, %c2_363, %c0_364, %c0_365] : memref<3x3x1x32xf32, #tpu.memory_space<vmem>>, vector<1x1x1x32xf32>
    %500 = vector.shape_cast %499 : vector<1x1x1x32xf32> to vector<1x32xf32>
    %501 = vector.broadcast %500 : vector<1x32xf32> to vector<2x32xf32>
    %502 = arith.addf %498, %501 : vector<2x32xf32>
    %503 = vector.extract_strided_slice %9 {offsets = [8, 0], sizes = [2, 32], strides = [1, 1]} : vector<16x32xf32> to vector<2x32xf32>
    %504 = arith.addf %503, %488 : vector<2x32xf32>
    %505 = arith.negf %504 : vector<2x32xf32>
    %506 = math.exp %505 : vector<2x32xf32>
    %cst_366 = arith.constant 1.000000e+00 : f32
    %507 = vector.broadcast %cst_366 : f32 to vector<2x32xf32>
    %508 = arith.addf %507, %506 : vector<2x32xf32>
    %509 = arith.divf %507, %508 : vector<2x32xf32>
    %510 = vector.extract_strided_slice %16 {offsets = [8, 0], sizes = [2, 32], strides = [1, 1]} : vector<16x32xf32> to vector<2x32xf32>
    %511 = arith.addf %510, %495 : vector<2x32xf32>
    %512 = arith.negf %511 : vector<2x32xf32>
    %513 = math.exp %512 : vector<2x32xf32>
    %cst_367 = arith.constant 1.000000e+00 : f32
    %514 = vector.broadcast %cst_367 : f32 to vector<2x32xf32>
    %515 = arith.addf %514, %513 : vector<2x32xf32>
    %516 = arith.divf %514, %515 : vector<2x32xf32>
    %517 = vector.extract_strided_slice %23 {offsets = [8, 0], sizes = [2, 32], strides = [1, 1]} : vector<16x32xf32> to vector<2x32xf32>
    %518 = arith.mulf %509, %502 : vector<2x32xf32>
    %519 = arith.addf %517, %518 : vector<2x32xf32>
    %520 = math.tanh %519 : vector<2x32xf32>
    %521 = arith.subf %421, %520 : vector<2x32xf32>
    %522 = arith.mulf %516, %521 : vector<2x32xf32>
    %523 = arith.addf %520, %522 : vector<2x32xf32>
    %c1_368 = arith.constant 1 : index
    %c0_369 = arith.constant 0 : index
    %c0_370 = arith.constant 0 : index
    %c0_371 = arith.constant 0 : index
    %524 = vector.load %arg4[%c1_368, %c0_369, %c0_370, %c0_371] : memref<3x3x32x32xf32, #tpu.memory_space<vmem>>, vector<1x1x32x32xf32>
    %525 = vector.shape_cast %524 : vector<1x1x32x32xf32> to vector<32x32xf32>
    %cst_372 = arith.constant dense<0.000000e+00> : vector<2x32xf32>
    %526 = tpu.matmul %463, %525, %cst_372 {dimension_numbers = #tpu.dot_dimension_numbers<[1], [0], [0], [1], [0, 0, 1, 1], [], []>} : vector<2x32xf32>, vector<32x32xf32>, vector<2x32xf32> -> vector<2x32xf32>
    %c1_373 = arith.constant 1 : index
    %c0_374 = arith.constant 0 : index
    %c0_375 = arith.constant 0 : index
    %c0_376 = arith.constant 0 : index
    %527 = vector.load %arg6[%c1_373, %c0_374, %c0_375, %c0_376] : memref<3x3x1x32xf32, #tpu.memory_space<vmem>>, vector<1x1x1x32xf32>
    %528 = vector.shape_cast %527 : vector<1x1x1x32xf32> to vector<1x32xf32>
    %529 = vector.broadcast %528 : vector<1x32xf32> to vector<2x32xf32>
    %530 = arith.addf %526, %529 : vector<2x32xf32>
    %c1_377 = arith.constant 1 : index
    %c1_378 = arith.constant 1 : index
    %c0_379 = arith.constant 0 : index
    %c0_380 = arith.constant 0 : index
    %531 = vector.load %arg4[%c1_377, %c1_378, %c0_379, %c0_380] : memref<3x3x32x32xf32, #tpu.memory_space<vmem>>, vector<1x1x32x32xf32>
    %532 = vector.shape_cast %531 : vector<1x1x32x32xf32> to vector<32x32xf32>
    %cst_381 = arith.constant dense<0.000000e+00> : vector<2x32xf32>
    %533 = tpu.matmul %463, %532, %cst_381 {dimension_numbers = #tpu.dot_dimension_numbers<[1], [0], [0], [1], [0, 0, 1, 1], [], []>} : vector<2x32xf32>, vector<32x32xf32>, vector<2x32xf32> -> vector<2x32xf32>
    %c1_382 = arith.constant 1 : index
    %c1_383 = arith.constant 1 : index
    %c0_384 = arith.constant 0 : index
    %c0_385 = arith.constant 0 : index
    %534 = vector.load %arg6[%c1_382, %c1_383, %c0_384, %c0_385] : memref<3x3x1x32xf32, #tpu.memory_space<vmem>>, vector<1x1x1x32xf32>
    %535 = vector.shape_cast %534 : vector<1x1x1x32xf32> to vector<1x32xf32>
    %536 = vector.broadcast %535 : vector<1x32xf32> to vector<2x32xf32>
    %537 = arith.addf %533, %536 : vector<2x32xf32>
    %c1_386 = arith.constant 1 : index
    %c2_387 = arith.constant 2 : index
    %c0_388 = arith.constant 0 : index
    %c0_389 = arith.constant 0 : index
    %538 = vector.load %arg4[%c1_386, %c2_387, %c0_388, %c0_389] : memref<3x3x32x32xf32, #tpu.memory_space<vmem>>, vector<1x1x32x32xf32>
    %539 = vector.shape_cast %538 : vector<1x1x32x32xf32> to vector<32x32xf32>
    %cst_390 = arith.constant dense<0.000000e+00> : vector<2x32xf32>
    %540 = tpu.matmul %463, %539, %cst_390 {dimension_numbers = #tpu.dot_dimension_numbers<[1], [0], [0], [1], [0, 0, 1, 1], [], []>} : vector<2x32xf32>, vector<32x32xf32>, vector<2x32xf32> -> vector<2x32xf32>
    %c1_391 = arith.constant 1 : index
    %c2_392 = arith.constant 2 : index
    %c0_393 = arith.constant 0 : index
    %c0_394 = arith.constant 0 : index
    %541 = vector.load %arg6[%c1_391, %c2_392, %c0_393, %c0_394] : memref<3x3x1x32xf32, #tpu.memory_space<vmem>>, vector<1x1x1x32xf32>
    %542 = vector.shape_cast %541 : vector<1x1x1x32xf32> to vector<1x32xf32>
    %543 = vector.broadcast %542 : vector<1x32xf32> to vector<2x32xf32>
    %544 = arith.addf %540, %543 : vector<2x32xf32>
    %545 = vector.extract_strided_slice %30 {offsets = [8, 0], sizes = [2, 32], strides = [1, 1]} : vector<16x32xf32> to vector<2x32xf32>
    %546 = arith.addf %545, %530 : vector<2x32xf32>
    %547 = arith.negf %546 : vector<2x32xf32>
    %548 = math.exp %547 : vector<2x32xf32>
    %cst_395 = arith.constant 1.000000e+00 : f32
    %549 = vector.broadcast %cst_395 : f32 to vector<2x32xf32>
    %550 = arith.addf %549, %548 : vector<2x32xf32>
    %551 = arith.divf %549, %550 : vector<2x32xf32>
    %552 = vector.extract_strided_slice %37 {offsets = [8, 0], sizes = [2, 32], strides = [1, 1]} : vector<16x32xf32> to vector<2x32xf32>
    %553 = arith.addf %552, %537 : vector<2x32xf32>
    %554 = arith.negf %553 : vector<2x32xf32>
    %555 = math.exp %554 : vector<2x32xf32>
    %cst_396 = arith.constant 1.000000e+00 : f32
    %556 = vector.broadcast %cst_396 : f32 to vector<2x32xf32>
    %557 = arith.addf %556, %555 : vector<2x32xf32>
    %558 = arith.divf %556, %557 : vector<2x32xf32>
    %559 = vector.extract_strided_slice %44 {offsets = [8, 0], sizes = [2, 32], strides = [1, 1]} : vector<16x32xf32> to vector<2x32xf32>
    %560 = arith.mulf %551, %544 : vector<2x32xf32>
    %561 = arith.addf %559, %560 : vector<2x32xf32>
    %562 = math.tanh %561 : vector<2x32xf32>
    %563 = arith.subf %463, %562 : vector<2x32xf32>
    %564 = arith.mulf %558, %563 : vector<2x32xf32>
    %565 = arith.addf %562, %564 : vector<2x32xf32>
    %c4_i32 = arith.constant 4 : i32
    %566 = vector.broadcast %c4_i32 : i32 to vector<1x8xi32>
    %567 = arith.cmpi eq, %68, %566 : vector<1x8xi32>
    %568 = arith.extui %567 : vector<1x8xi1> to vector<1x8xi32>
    %569 = arith.sitofp %568 : vector<1x8xi32> to vector<1x8xf32>
    %cst_397 = arith.constant 0.000000e+00 : f32
    %570 = vector.broadcast %cst_397 : f32 to vector<2x32xf32>
    %571 = arith.maximumf %523, %570 : vector<2x32xf32>
    %cst_398 = arith.constant dense<0.000000e+00> : vector<2x1xf32>
    %572 = tpu.matmul %571, %66, %cst_398 {dimension_numbers = #tpu.dot_dimension_numbers<[1], [0], [0], [1], [0, 0, 1, 1], [], []>} : vector<2x32xf32>, vector<32x1xf32>, vector<2x1xf32> -> vector<2x1xf32>
    %573 = vector.broadcast %572 : vector<2x1xf32> to vector<2x8xf32>
    %574 = vector.broadcast %569 : vector<1x8xf32> to vector<2x8xf32>
    %575 = arith.mulf %573, %574 : vector<2x8xf32>
    %576 = arith.addf %474, %575 : vector<2x8xf32>
    %cst_399 = arith.constant 0.000000e+00 : f32
    %577 = vector.broadcast %cst_399 : f32 to vector<2x32xf32>
    %578 = arith.maximumf %565, %577 : vector<2x32xf32>
    %cst_400 = arith.constant dense<0.000000e+00> : vector<2x1xf32>
    %579 = tpu.matmul %578, %66, %cst_400 {dimension_numbers = #tpu.dot_dimension_numbers<[1], [0], [0], [1], [0, 0, 1, 1], [], []>} : vector<2x32xf32>, vector<32x1xf32>, vector<2x1xf32> -> vector<2x1xf32>
    %580 = vector.broadcast %579 : vector<2x1xf32> to vector<2x8xf32>
    %581 = vector.broadcast %569 : vector<1x8xf32> to vector<2x8xf32>
    %582 = arith.mulf %580, %581 : vector<2x8xf32>
    %583 = arith.addf %481, %582 : vector<2x8xf32>
    %c0_401 = arith.constant 0 : index
    %c0_402 = arith.constant 0 : index
    %c0_403 = arith.constant 0 : index
    %c0_404 = arith.constant 0 : index
    %584 = vector.load %arg4[%c0_401, %c0_402, %c0_403, %c0_404] : memref<3x3x32x32xf32, #tpu.memory_space<vmem>>, vector<1x1x32x32xf32>
    %585 = vector.shape_cast %584 : vector<1x1x32x32xf32> to vector<32x32xf32>
    %cst_405 = arith.constant dense<0.000000e+00> : vector<2x32xf32>
    %586 = tpu.matmul %523, %585, %cst_405 {dimension_numbers = #tpu.dot_dimension_numbers<[1], [0], [0], [1], [0, 0, 1, 1], [], []>} : vector<2x32xf32>, vector<32x32xf32>, vector<2x32xf32> -> vector<2x32xf32>
    %c0_406 = arith.constant 0 : index
    %c0_407 = arith.constant 0 : index
    %c0_408 = arith.constant 0 : index
    %c0_409 = arith.constant 0 : index
    %587 = vector.load %arg6[%c0_406, %c0_407, %c0_408, %c0_409] : memref<3x3x1x32xf32, #tpu.memory_space<vmem>>, vector<1x1x1x32xf32>
    %588 = vector.shape_cast %587 : vector<1x1x1x32xf32> to vector<1x32xf32>
    %589 = vector.broadcast %588 : vector<1x32xf32> to vector<2x32xf32>
    %590 = arith.addf %586, %589 : vector<2x32xf32>
    %c0_410 = arith.constant 0 : index
    %c1_411 = arith.constant 1 : index
    %c0_412 = arith.constant 0 : index
    %c0_413 = arith.constant 0 : index
    %591 = vector.load %arg4[%c0_410, %c1_411, %c0_412, %c0_413] : memref<3x3x32x32xf32, #tpu.memory_space<vmem>>, vector<1x1x32x32xf32>
    %592 = vector.shape_cast %591 : vector<1x1x32x32xf32> to vector<32x32xf32>
    %cst_414 = arith.constant dense<0.000000e+00> : vector<2x32xf32>
    %593 = tpu.matmul %523, %592, %cst_414 {dimension_numbers = #tpu.dot_dimension_numbers<[1], [0], [0], [1], [0, 0, 1, 1], [], []>} : vector<2x32xf32>, vector<32x32xf32>, vector<2x32xf32> -> vector<2x32xf32>
    %c0_415 = arith.constant 0 : index
    %c1_416 = arith.constant 1 : index
    %c0_417 = arith.constant 0 : index
    %c0_418 = arith.constant 0 : index
    %594 = vector.load %arg6[%c0_415, %c1_416, %c0_417, %c0_418] : memref<3x3x1x32xf32, #tpu.memory_space<vmem>>, vector<1x1x1x32xf32>
    %595 = vector.shape_cast %594 : vector<1x1x1x32xf32> to vector<1x32xf32>
    %596 = vector.broadcast %595 : vector<1x32xf32> to vector<2x32xf32>
    %597 = arith.addf %593, %596 : vector<2x32xf32>
    %c0_419 = arith.constant 0 : index
    %c2_420 = arith.constant 2 : index
    %c0_421 = arith.constant 0 : index
    %c0_422 = arith.constant 0 : index
    %598 = vector.load %arg4[%c0_419, %c2_420, %c0_421, %c0_422] : memref<3x3x32x32xf32, #tpu.memory_space<vmem>>, vector<1x1x32x32xf32>
    %599 = vector.shape_cast %598 : vector<1x1x32x32xf32> to vector<32x32xf32>
    %cst_423 = arith.constant dense<0.000000e+00> : vector<2x32xf32>
    %600 = tpu.matmul %523, %599, %cst_423 {dimension_numbers = #tpu.dot_dimension_numbers<[1], [0], [0], [1], [0, 0, 1, 1], [], []>} : vector<2x32xf32>, vector<32x32xf32>, vector<2x32xf32> -> vector<2x32xf32>
    %c0_424 = arith.constant 0 : index
    %c2_425 = arith.constant 2 : index
    %c0_426 = arith.constant 0 : index
    %c0_427 = arith.constant 0 : index
    %601 = vector.load %arg6[%c0_424, %c2_425, %c0_426, %c0_427] : memref<3x3x1x32xf32, #tpu.memory_space<vmem>>, vector<1x1x1x32xf32>
    %602 = vector.shape_cast %601 : vector<1x1x1x32xf32> to vector<1x32xf32>
    %603 = vector.broadcast %602 : vector<1x32xf32> to vector<2x32xf32>
    %604 = arith.addf %600, %603 : vector<2x32xf32>
    %605 = vector.extract_strided_slice %9 {offsets = [10, 0], sizes = [2, 32], strides = [1, 1]} : vector<16x32xf32> to vector<2x32xf32>
    %606 = arith.addf %605, %590 : vector<2x32xf32>
    %607 = arith.negf %606 : vector<2x32xf32>
    %608 = math.exp %607 : vector<2x32xf32>
    %cst_428 = arith.constant 1.000000e+00 : f32
    %609 = vector.broadcast %cst_428 : f32 to vector<2x32xf32>
    %610 = arith.addf %609, %608 : vector<2x32xf32>
    %611 = arith.divf %609, %610 : vector<2x32xf32>
    %612 = vector.extract_strided_slice %16 {offsets = [10, 0], sizes = [2, 32], strides = [1, 1]} : vector<16x32xf32> to vector<2x32xf32>
    %613 = arith.addf %612, %597 : vector<2x32xf32>
    %614 = arith.negf %613 : vector<2x32xf32>
    %615 = math.exp %614 : vector<2x32xf32>
    %cst_429 = arith.constant 1.000000e+00 : f32
    %616 = vector.broadcast %cst_429 : f32 to vector<2x32xf32>
    %617 = arith.addf %616, %615 : vector<2x32xf32>
    %618 = arith.divf %616, %617 : vector<2x32xf32>
    %619 = vector.extract_strided_slice %23 {offsets = [10, 0], sizes = [2, 32], strides = [1, 1]} : vector<16x32xf32> to vector<2x32xf32>
    %620 = arith.mulf %611, %604 : vector<2x32xf32>
    %621 = arith.addf %619, %620 : vector<2x32xf32>
    %622 = math.tanh %621 : vector<2x32xf32>
    %623 = arith.subf %523, %622 : vector<2x32xf32>
    %624 = arith.mulf %618, %623 : vector<2x32xf32>
    %625 = arith.addf %622, %624 : vector<2x32xf32>
    %c1_430 = arith.constant 1 : index
    %c0_431 = arith.constant 0 : index
    %c0_432 = arith.constant 0 : index
    %c0_433 = arith.constant 0 : index
    %626 = vector.load %arg4[%c1_430, %c0_431, %c0_432, %c0_433] : memref<3x3x32x32xf32, #tpu.memory_space<vmem>>, vector<1x1x32x32xf32>
    %627 = vector.shape_cast %626 : vector<1x1x32x32xf32> to vector<32x32xf32>
    %cst_434 = arith.constant dense<0.000000e+00> : vector<2x32xf32>
    %628 = tpu.matmul %565, %627, %cst_434 {dimension_numbers = #tpu.dot_dimension_numbers<[1], [0], [0], [1], [0, 0, 1, 1], [], []>} : vector<2x32xf32>, vector<32x32xf32>, vector<2x32xf32> -> vector<2x32xf32>
    %c1_435 = arith.constant 1 : index
    %c0_436 = arith.constant 0 : index
    %c0_437 = arith.constant 0 : index
    %c0_438 = arith.constant 0 : index
    %629 = vector.load %arg6[%c1_435, %c0_436, %c0_437, %c0_438] : memref<3x3x1x32xf32, #tpu.memory_space<vmem>>, vector<1x1x1x32xf32>
    %630 = vector.shape_cast %629 : vector<1x1x1x32xf32> to vector<1x32xf32>
    %631 = vector.broadcast %630 : vector<1x32xf32> to vector<2x32xf32>
    %632 = arith.addf %628, %631 : vector<2x32xf32>
    %c1_439 = arith.constant 1 : index
    %c1_440 = arith.constant 1 : index
    %c0_441 = arith.constant 0 : index
    %c0_442 = arith.constant 0 : index
    %633 = vector.load %arg4[%c1_439, %c1_440, %c0_441, %c0_442] : memref<3x3x32x32xf32, #tpu.memory_space<vmem>>, vector<1x1x32x32xf32>
    %634 = vector.shape_cast %633 : vector<1x1x32x32xf32> to vector<32x32xf32>
    %cst_443 = arith.constant dense<0.000000e+00> : vector<2x32xf32>
    %635 = tpu.matmul %565, %634, %cst_443 {dimension_numbers = #tpu.dot_dimension_numbers<[1], [0], [0], [1], [0, 0, 1, 1], [], []>} : vector<2x32xf32>, vector<32x32xf32>, vector<2x32xf32> -> vector<2x32xf32>
    %c1_444 = arith.constant 1 : index
    %c1_445 = arith.constant 1 : index
    %c0_446 = arith.constant 0 : index
    %c0_447 = arith.constant 0 : index
    %636 = vector.load %arg6[%c1_444, %c1_445, %c0_446, %c0_447] : memref<3x3x1x32xf32, #tpu.memory_space<vmem>>, vector<1x1x1x32xf32>
    %637 = vector.shape_cast %636 : vector<1x1x1x32xf32> to vector<1x32xf32>
    %638 = vector.broadcast %637 : vector<1x32xf32> to vector<2x32xf32>
    %639 = arith.addf %635, %638 : vector<2x32xf32>
    %c1_448 = arith.constant 1 : index
    %c2_449 = arith.constant 2 : index
    %c0_450 = arith.constant 0 : index
    %c0_451 = arith.constant 0 : index
    %640 = vector.load %arg4[%c1_448, %c2_449, %c0_450, %c0_451] : memref<3x3x32x32xf32, #tpu.memory_space<vmem>>, vector<1x1x32x32xf32>
    %641 = vector.shape_cast %640 : vector<1x1x32x32xf32> to vector<32x32xf32>
    %cst_452 = arith.constant dense<0.000000e+00> : vector<2x32xf32>
    %642 = tpu.matmul %565, %641, %cst_452 {dimension_numbers = #tpu.dot_dimension_numbers<[1], [0], [0], [1], [0, 0, 1, 1], [], []>} : vector<2x32xf32>, vector<32x32xf32>, vector<2x32xf32> -> vector<2x32xf32>
    %c1_453 = arith.constant 1 : index
    %c2_454 = arith.constant 2 : index
    %c0_455 = arith.constant 0 : index
    %c0_456 = arith.constant 0 : index
    %643 = vector.load %arg6[%c1_453, %c2_454, %c0_455, %c0_456] : memref<3x3x1x32xf32, #tpu.memory_space<vmem>>, vector<1x1x1x32xf32>
    %644 = vector.shape_cast %643 : vector<1x1x1x32xf32> to vector<1x32xf32>
    %645 = vector.broadcast %644 : vector<1x32xf32> to vector<2x32xf32>
    %646 = arith.addf %642, %645 : vector<2x32xf32>
    %647 = vector.extract_strided_slice %30 {offsets = [10, 0], sizes = [2, 32], strides = [1, 1]} : vector<16x32xf32> to vector<2x32xf32>
    %648 = arith.addf %647, %632 : vector<2x32xf32>
    %649 = arith.negf %648 : vector<2x32xf32>
    %650 = math.exp %649 : vector<2x32xf32>
    %cst_457 = arith.constant 1.000000e+00 : f32
    %651 = vector.broadcast %cst_457 : f32 to vector<2x32xf32>
    %652 = arith.addf %651, %650 : vector<2x32xf32>
    %653 = arith.divf %651, %652 : vector<2x32xf32>
    %654 = vector.extract_strided_slice %37 {offsets = [10, 0], sizes = [2, 32], strides = [1, 1]} : vector<16x32xf32> to vector<2x32xf32>
    %655 = arith.addf %654, %639 : vector<2x32xf32>
    %656 = arith.negf %655 : vector<2x32xf32>
    %657 = math.exp %656 : vector<2x32xf32>
    %cst_458 = arith.constant 1.000000e+00 : f32
    %658 = vector.broadcast %cst_458 : f32 to vector<2x32xf32>
    %659 = arith.addf %658, %657 : vector<2x32xf32>
    %660 = arith.divf %658, %659 : vector<2x32xf32>
    %661 = vector.extract_strided_slice %44 {offsets = [10, 0], sizes = [2, 32], strides = [1, 1]} : vector<16x32xf32> to vector<2x32xf32>
    %662 = arith.mulf %653, %646 : vector<2x32xf32>
    %663 = arith.addf %661, %662 : vector<2x32xf32>
    %664 = math.tanh %663 : vector<2x32xf32>
    %665 = arith.subf %565, %664 : vector<2x32xf32>
    %666 = arith.mulf %660, %665 : vector<2x32xf32>
    %667 = arith.addf %664, %666 : vector<2x32xf32>
    %c5_i32 = arith.constant 5 : i32
    %668 = vector.broadcast %c5_i32 : i32 to vector<1x8xi32>
    %669 = arith.cmpi eq, %68, %668 : vector<1x8xi32>
    %670 = arith.extui %669 : vector<1x8xi1> to vector<1x8xi32>
    %671 = arith.sitofp %670 : vector<1x8xi32> to vector<1x8xf32>
    %cst_459 = arith.constant 0.000000e+00 : f32
    %672 = vector.broadcast %cst_459 : f32 to vector<2x32xf32>
    %673 = arith.maximumf %625, %672 : vector<2x32xf32>
    %cst_460 = arith.constant dense<0.000000e+00> : vector<2x1xf32>
    %674 = tpu.matmul %673, %66, %cst_460 {dimension_numbers = #tpu.dot_dimension_numbers<[1], [0], [0], [1], [0, 0, 1, 1], [], []>} : vector<2x32xf32>, vector<32x1xf32>, vector<2x1xf32> -> vector<2x1xf32>
    %675 = vector.broadcast %674 : vector<2x1xf32> to vector<2x8xf32>
    %676 = vector.broadcast %671 : vector<1x8xf32> to vector<2x8xf32>
    %677 = arith.mulf %675, %676 : vector<2x8xf32>
    %678 = arith.addf %576, %677 : vector<2x8xf32>
    %cst_461 = arith.constant 0.000000e+00 : f32
    %679 = vector.broadcast %cst_461 : f32 to vector<2x32xf32>
    %680 = arith.maximumf %667, %679 : vector<2x32xf32>
    %cst_462 = arith.constant dense<0.000000e+00> : vector<2x1xf32>
    %681 = tpu.matmul %680, %66, %cst_462 {dimension_numbers = #tpu.dot_dimension_numbers<[1], [0], [0], [1], [0, 0, 1, 1], [], []>} : vector<2x32xf32>, vector<32x1xf32>, vector<2x1xf32> -> vector<2x1xf32>
    %682 = vector.broadcast %681 : vector<2x1xf32> to vector<2x8xf32>
    %683 = vector.broadcast %671 : vector<1x8xf32> to vector<2x8xf32>
    %684 = arith.mulf %682, %683 : vector<2x8xf32>
    %685 = arith.addf %583, %684 : vector<2x8xf32>
    %c0_463 = arith.constant 0 : index
    %c0_464 = arith.constant 0 : index
    %c0_465 = arith.constant 0 : index
    %c0_466 = arith.constant 0 : index
    %686 = vector.load %arg4[%c0_463, %c0_464, %c0_465, %c0_466] : memref<3x3x32x32xf32, #tpu.memory_space<vmem>>, vector<1x1x32x32xf32>
    %687 = vector.shape_cast %686 : vector<1x1x32x32xf32> to vector<32x32xf32>
    %cst_467 = arith.constant dense<0.000000e+00> : vector<2x32xf32>
    %688 = tpu.matmul %625, %687, %cst_467 {dimension_numbers = #tpu.dot_dimension_numbers<[1], [0], [0], [1], [0, 0, 1, 1], [], []>} : vector<2x32xf32>, vector<32x32xf32>, vector<2x32xf32> -> vector<2x32xf32>
    %c0_468 = arith.constant 0 : index
    %c0_469 = arith.constant 0 : index
    %c0_470 = arith.constant 0 : index
    %c0_471 = arith.constant 0 : index
    %689 = vector.load %arg6[%c0_468, %c0_469, %c0_470, %c0_471] : memref<3x3x1x32xf32, #tpu.memory_space<vmem>>, vector<1x1x1x32xf32>
    %690 = vector.shape_cast %689 : vector<1x1x1x32xf32> to vector<1x32xf32>
    %691 = vector.broadcast %690 : vector<1x32xf32> to vector<2x32xf32>
    %692 = arith.addf %688, %691 : vector<2x32xf32>
    %c0_472 = arith.constant 0 : index
    %c1_473 = arith.constant 1 : index
    %c0_474 = arith.constant 0 : index
    %c0_475 = arith.constant 0 : index
    %693 = vector.load %arg4[%c0_472, %c1_473, %c0_474, %c0_475] : memref<3x3x32x32xf32, #tpu.memory_space<vmem>>, vector<1x1x32x32xf32>
    %694 = vector.shape_cast %693 : vector<1x1x32x32xf32> to vector<32x32xf32>
    %cst_476 = arith.constant dense<0.000000e+00> : vector<2x32xf32>
    %695 = tpu.matmul %625, %694, %cst_476 {dimension_numbers = #tpu.dot_dimension_numbers<[1], [0], [0], [1], [0, 0, 1, 1], [], []>} : vector<2x32xf32>, vector<32x32xf32>, vector<2x32xf32> -> vector<2x32xf32>
    %c0_477 = arith.constant 0 : index
    %c1_478 = arith.constant 1 : index
    %c0_479 = arith.constant 0 : index
    %c0_480 = arith.constant 0 : index
    %696 = vector.load %arg6[%c0_477, %c1_478, %c0_479, %c0_480] : memref<3x3x1x32xf32, #tpu.memory_space<vmem>>, vector<1x1x1x32xf32>
    %697 = vector.shape_cast %696 : vector<1x1x1x32xf32> to vector<1x32xf32>
    %698 = vector.broadcast %697 : vector<1x32xf32> to vector<2x32xf32>
    %699 = arith.addf %695, %698 : vector<2x32xf32>
    %c0_481 = arith.constant 0 : index
    %c2_482 = arith.constant 2 : index
    %c0_483 = arith.constant 0 : index
    %c0_484 = arith.constant 0 : index
    %700 = vector.load %arg4[%c0_481, %c2_482, %c0_483, %c0_484] : memref<3x3x32x32xf32, #tpu.memory_space<vmem>>, vector<1x1x32x32xf32>
    %701 = vector.shape_cast %700 : vector<1x1x32x32xf32> to vector<32x32xf32>
    %cst_485 = arith.constant dense<0.000000e+00> : vector<2x32xf32>
    %702 = tpu.matmul %625, %701, %cst_485 {dimension_numbers = #tpu.dot_dimension_numbers<[1], [0], [0], [1], [0, 0, 1, 1], [], []>} : vector<2x32xf32>, vector<32x32xf32>, vector<2x32xf32> -> vector<2x32xf32>
    %c0_486 = arith.constant 0 : index
    %c2_487 = arith.constant 2 : index
    %c0_488 = arith.constant 0 : index
    %c0_489 = arith.constant 0 : index
    %703 = vector.load %arg6[%c0_486, %c2_487, %c0_488, %c0_489] : memref<3x3x1x32xf32, #tpu.memory_space<vmem>>, vector<1x1x1x32xf32>
    %704 = vector.shape_cast %703 : vector<1x1x1x32xf32> to vector<1x32xf32>
    %705 = vector.broadcast %704 : vector<1x32xf32> to vector<2x32xf32>
    %706 = arith.addf %702, %705 : vector<2x32xf32>
    %707 = vector.extract_strided_slice %9 {offsets = [12, 0], sizes = [2, 32], strides = [1, 1]} : vector<16x32xf32> to vector<2x32xf32>
    %708 = arith.addf %707, %692 : vector<2x32xf32>
    %709 = arith.negf %708 : vector<2x32xf32>
    %710 = math.exp %709 : vector<2x32xf32>
    %cst_490 = arith.constant 1.000000e+00 : f32
    %711 = vector.broadcast %cst_490 : f32 to vector<2x32xf32>
    %712 = arith.addf %711, %710 : vector<2x32xf32>
    %713 = arith.divf %711, %712 : vector<2x32xf32>
    %714 = vector.extract_strided_slice %16 {offsets = [12, 0], sizes = [2, 32], strides = [1, 1]} : vector<16x32xf32> to vector<2x32xf32>
    %715 = arith.addf %714, %699 : vector<2x32xf32>
    %716 = arith.negf %715 : vector<2x32xf32>
    %717 = math.exp %716 : vector<2x32xf32>
    %cst_491 = arith.constant 1.000000e+00 : f32
    %718 = vector.broadcast %cst_491 : f32 to vector<2x32xf32>
    %719 = arith.addf %718, %717 : vector<2x32xf32>
    %720 = arith.divf %718, %719 : vector<2x32xf32>
    %721 = vector.extract_strided_slice %23 {offsets = [12, 0], sizes = [2, 32], strides = [1, 1]} : vector<16x32xf32> to vector<2x32xf32>
    %722 = arith.mulf %713, %706 : vector<2x32xf32>
    %723 = arith.addf %721, %722 : vector<2x32xf32>
    %724 = math.tanh %723 : vector<2x32xf32>
    %725 = arith.subf %625, %724 : vector<2x32xf32>
    %726 = arith.mulf %720, %725 : vector<2x32xf32>
    %727 = arith.addf %724, %726 : vector<2x32xf32>
    %c1_492 = arith.constant 1 : index
    %c0_493 = arith.constant 0 : index
    %c0_494 = arith.constant 0 : index
    %c0_495 = arith.constant 0 : index
    %728 = vector.load %arg4[%c1_492, %c0_493, %c0_494, %c0_495] : memref<3x3x32x32xf32, #tpu.memory_space<vmem>>, vector<1x1x32x32xf32>
    %729 = vector.shape_cast %728 : vector<1x1x32x32xf32> to vector<32x32xf32>
    %cst_496 = arith.constant dense<0.000000e+00> : vector<2x32xf32>
    %730 = tpu.matmul %667, %729, %cst_496 {dimension_numbers = #tpu.dot_dimension_numbers<[1], [0], [0], [1], [0, 0, 1, 1], [], []>} : vector<2x32xf32>, vector<32x32xf32>, vector<2x32xf32> -> vector<2x32xf32>
    %c1_497 = arith.constant 1 : index
    %c0_498 = arith.constant 0 : index
    %c0_499 = arith.constant 0 : index
    %c0_500 = arith.constant 0 : index
    %731 = vector.load %arg6[%c1_497, %c0_498, %c0_499, %c0_500] : memref<3x3x1x32xf32, #tpu.memory_space<vmem>>, vector<1x1x1x32xf32>
    %732 = vector.shape_cast %731 : vector<1x1x1x32xf32> to vector<1x32xf32>
    %733 = vector.broadcast %732 : vector<1x32xf32> to vector<2x32xf32>
    %734 = arith.addf %730, %733 : vector<2x32xf32>
    %c1_501 = arith.constant 1 : index
    %c1_502 = arith.constant 1 : index
    %c0_503 = arith.constant 0 : index
    %c0_504 = arith.constant 0 : index
    %735 = vector.load %arg4[%c1_501, %c1_502, %c0_503, %c0_504] : memref<3x3x32x32xf32, #tpu.memory_space<vmem>>, vector<1x1x32x32xf32>
    %736 = vector.shape_cast %735 : vector<1x1x32x32xf32> to vector<32x32xf32>
    %cst_505 = arith.constant dense<0.000000e+00> : vector<2x32xf32>
    %737 = tpu.matmul %667, %736, %cst_505 {dimension_numbers = #tpu.dot_dimension_numbers<[1], [0], [0], [1], [0, 0, 1, 1], [], []>} : vector<2x32xf32>, vector<32x32xf32>, vector<2x32xf32> -> vector<2x32xf32>
    %c1_506 = arith.constant 1 : index
    %c1_507 = arith.constant 1 : index
    %c0_508 = arith.constant 0 : index
    %c0_509 = arith.constant 0 : index
    %738 = vector.load %arg6[%c1_506, %c1_507, %c0_508, %c0_509] : memref<3x3x1x32xf32, #tpu.memory_space<vmem>>, vector<1x1x1x32xf32>
    %739 = vector.shape_cast %738 : vector<1x1x1x32xf32> to vector<1x32xf32>
    %740 = vector.broadcast %739 : vector<1x32xf32> to vector<2x32xf32>
    %741 = arith.addf %737, %740 : vector<2x32xf32>
    %c1_510 = arith.constant 1 : index
    %c2_511 = arith.constant 2 : index
    %c0_512 = arith.constant 0 : index
    %c0_513 = arith.constant 0 : index
    %742 = vector.load %arg4[%c1_510, %c2_511, %c0_512, %c0_513] : memref<3x3x32x32xf32, #tpu.memory_space<vmem>>, vector<1x1x32x32xf32>
    %743 = vector.shape_cast %742 : vector<1x1x32x32xf32> to vector<32x32xf32>
    %cst_514 = arith.constant dense<0.000000e+00> : vector<2x32xf32>
    %744 = tpu.matmul %667, %743, %cst_514 {dimension_numbers = #tpu.dot_dimension_numbers<[1], [0], [0], [1], [0, 0, 1, 1], [], []>} : vector<2x32xf32>, vector<32x32xf32>, vector<2x32xf32> -> vector<2x32xf32>
    %c1_515 = arith.constant 1 : index
    %c2_516 = arith.constant 2 : index
    %c0_517 = arith.constant 0 : index
    %c0_518 = arith.constant 0 : index
    %745 = vector.load %arg6[%c1_515, %c2_516, %c0_517, %c0_518] : memref<3x3x1x32xf32, #tpu.memory_space<vmem>>, vector<1x1x1x32xf32>
    %746 = vector.shape_cast %745 : vector<1x1x1x32xf32> to vector<1x32xf32>
    %747 = vector.broadcast %746 : vector<1x32xf32> to vector<2x32xf32>
    %748 = arith.addf %744, %747 : vector<2x32xf32>
    %749 = vector.extract_strided_slice %30 {offsets = [12, 0], sizes = [2, 32], strides = [1, 1]} : vector<16x32xf32> to vector<2x32xf32>
    %750 = arith.addf %749, %734 : vector<2x32xf32>
    %751 = arith.negf %750 : vector<2x32xf32>
    %752 = math.exp %751 : vector<2x32xf32>
    %cst_519 = arith.constant 1.000000e+00 : f32
    %753 = vector.broadcast %cst_519 : f32 to vector<2x32xf32>
    %754 = arith.addf %753, %752 : vector<2x32xf32>
    %755 = arith.divf %753, %754 : vector<2x32xf32>
    %756 = vector.extract_strided_slice %37 {offsets = [12, 0], sizes = [2, 32], strides = [1, 1]} : vector<16x32xf32> to vector<2x32xf32>
    %757 = arith.addf %756, %741 : vector<2x32xf32>
    %758 = arith.negf %757 : vector<2x32xf32>
    %759 = math.exp %758 : vector<2x32xf32>
    %cst_520 = arith.constant 1.000000e+00 : f32
    %760 = vector.broadcast %cst_520 : f32 to vector<2x32xf32>
    %761 = arith.addf %760, %759 : vector<2x32xf32>
    %762 = arith.divf %760, %761 : vector<2x32xf32>
    %763 = vector.extract_strided_slice %44 {offsets = [12, 0], sizes = [2, 32], strides = [1, 1]} : vector<16x32xf32> to vector<2x32xf32>
    %764 = arith.mulf %755, %748 : vector<2x32xf32>
    %765 = arith.addf %763, %764 : vector<2x32xf32>
    %766 = math.tanh %765 : vector<2x32xf32>
    %767 = arith.subf %667, %766 : vector<2x32xf32>
    %768 = arith.mulf %762, %767 : vector<2x32xf32>
    %769 = arith.addf %766, %768 : vector<2x32xf32>
    %c6_i32 = arith.constant 6 : i32
    %770 = vector.broadcast %c6_i32 : i32 to vector<1x8xi32>
    %771 = arith.cmpi eq, %68, %770 : vector<1x8xi32>
    %772 = arith.extui %771 : vector<1x8xi1> to vector<1x8xi32>
    %773 = arith.sitofp %772 : vector<1x8xi32> to vector<1x8xf32>
    %cst_521 = arith.constant 0.000000e+00 : f32
    %774 = vector.broadcast %cst_521 : f32 to vector<2x32xf32>
    %775 = arith.maximumf %727, %774 : vector<2x32xf32>
    %cst_522 = arith.constant dense<0.000000e+00> : vector<2x1xf32>
    %776 = tpu.matmul %775, %66, %cst_522 {dimension_numbers = #tpu.dot_dimension_numbers<[1], [0], [0], [1], [0, 0, 1, 1], [], []>} : vector<2x32xf32>, vector<32x1xf32>, vector<2x1xf32> -> vector<2x1xf32>
    %777 = vector.broadcast %776 : vector<2x1xf32> to vector<2x8xf32>
    %778 = vector.broadcast %773 : vector<1x8xf32> to vector<2x8xf32>
    %779 = arith.mulf %777, %778 : vector<2x8xf32>
    %780 = arith.addf %678, %779 : vector<2x8xf32>
    %cst_523 = arith.constant 0.000000e+00 : f32
    %781 = vector.broadcast %cst_523 : f32 to vector<2x32xf32>
    %782 = arith.maximumf %769, %781 : vector<2x32xf32>
    %cst_524 = arith.constant dense<0.000000e+00> : vector<2x1xf32>
    %783 = tpu.matmul %782, %66, %cst_524 {dimension_numbers = #tpu.dot_dimension_numbers<[1], [0], [0], [1], [0, 0, 1, 1], [], []>} : vector<2x32xf32>, vector<32x1xf32>, vector<2x1xf32> -> vector<2x1xf32>
    %784 = vector.broadcast %783 : vector<2x1xf32> to vector<2x8xf32>
    %785 = vector.broadcast %773 : vector<1x8xf32> to vector<2x8xf32>
    %786 = arith.mulf %784, %785 : vector<2x8xf32>
    %787 = arith.addf %685, %786 : vector<2x8xf32>
    %c0_525 = arith.constant 0 : index
    %c0_526 = arith.constant 0 : index
    %c0_527 = arith.constant 0 : index
    %c0_528 = arith.constant 0 : index
    %788 = vector.load %arg4[%c0_525, %c0_526, %c0_527, %c0_528] : memref<3x3x32x32xf32, #tpu.memory_space<vmem>>, vector<1x1x32x32xf32>
    %789 = vector.shape_cast %788 : vector<1x1x32x32xf32> to vector<32x32xf32>
    %cst_529 = arith.constant dense<0.000000e+00> : vector<2x32xf32>
    %790 = tpu.matmul %727, %789, %cst_529 {dimension_numbers = #tpu.dot_dimension_numbers<[1], [0], [0], [1], [0, 0, 1, 1], [], []>} : vector<2x32xf32>, vector<32x32xf32>, vector<2x32xf32> -> vector<2x32xf32>
    %c0_530 = arith.constant 0 : index
    %c0_531 = arith.constant 0 : index
    %c0_532 = arith.constant 0 : index
    %c0_533 = arith.constant 0 : index
    %791 = vector.load %arg6[%c0_530, %c0_531, %c0_532, %c0_533] : memref<3x3x1x32xf32, #tpu.memory_space<vmem>>, vector<1x1x1x32xf32>
    %792 = vector.shape_cast %791 : vector<1x1x1x32xf32> to vector<1x32xf32>
    %793 = vector.broadcast %792 : vector<1x32xf32> to vector<2x32xf32>
    %794 = arith.addf %790, %793 : vector<2x32xf32>
    %c0_534 = arith.constant 0 : index
    %c1_535 = arith.constant 1 : index
    %c0_536 = arith.constant 0 : index
    %c0_537 = arith.constant 0 : index
    %795 = vector.load %arg4[%c0_534, %c1_535, %c0_536, %c0_537] : memref<3x3x32x32xf32, #tpu.memory_space<vmem>>, vector<1x1x32x32xf32>
    %796 = vector.shape_cast %795 : vector<1x1x32x32xf32> to vector<32x32xf32>
    %cst_538 = arith.constant dense<0.000000e+00> : vector<2x32xf32>
    %797 = tpu.matmul %727, %796, %cst_538 {dimension_numbers = #tpu.dot_dimension_numbers<[1], [0], [0], [1], [0, 0, 1, 1], [], []>} : vector<2x32xf32>, vector<32x32xf32>, vector<2x32xf32> -> vector<2x32xf32>
    %c0_539 = arith.constant 0 : index
    %c1_540 = arith.constant 1 : index
    %c0_541 = arith.constant 0 : index
    %c0_542 = arith.constant 0 : index
    %798 = vector.load %arg6[%c0_539, %c1_540, %c0_541, %c0_542] : memref<3x3x1x32xf32, #tpu.memory_space<vmem>>, vector<1x1x1x32xf32>
    %799 = vector.shape_cast %798 : vector<1x1x1x32xf32> to vector<1x32xf32>
    %800 = vector.broadcast %799 : vector<1x32xf32> to vector<2x32xf32>
    %801 = arith.addf %797, %800 : vector<2x32xf32>
    %c0_543 = arith.constant 0 : index
    %c2_544 = arith.constant 2 : index
    %c0_545 = arith.constant 0 : index
    %c0_546 = arith.constant 0 : index
    %802 = vector.load %arg4[%c0_543, %c2_544, %c0_545, %c0_546] : memref<3x3x32x32xf32, #tpu.memory_space<vmem>>, vector<1x1x32x32xf32>
    %803 = vector.shape_cast %802 : vector<1x1x32x32xf32> to vector<32x32xf32>
    %cst_547 = arith.constant dense<0.000000e+00> : vector<2x32xf32>
    %804 = tpu.matmul %727, %803, %cst_547 {dimension_numbers = #tpu.dot_dimension_numbers<[1], [0], [0], [1], [0, 0, 1, 1], [], []>} : vector<2x32xf32>, vector<32x32xf32>, vector<2x32xf32> -> vector<2x32xf32>
    %c0_548 = arith.constant 0 : index
    %c2_549 = arith.constant 2 : index
    %c0_550 = arith.constant 0 : index
    %c0_551 = arith.constant 0 : index
    %805 = vector.load %arg6[%c0_548, %c2_549, %c0_550, %c0_551] : memref<3x3x1x32xf32, #tpu.memory_space<vmem>>, vector<1x1x1x32xf32>
    %806 = vector.shape_cast %805 : vector<1x1x1x32xf32> to vector<1x32xf32>
    %807 = vector.broadcast %806 : vector<1x32xf32> to vector<2x32xf32>
    %808 = arith.addf %804, %807 : vector<2x32xf32>
    %809 = vector.extract_strided_slice %9 {offsets = [14, 0], sizes = [2, 32], strides = [1, 1]} : vector<16x32xf32> to vector<2x32xf32>
    %810 = arith.addf %809, %794 : vector<2x32xf32>
    %811 = arith.negf %810 : vector<2x32xf32>
    %812 = math.exp %811 : vector<2x32xf32>
    %cst_552 = arith.constant 1.000000e+00 : f32
    %813 = vector.broadcast %cst_552 : f32 to vector<2x32xf32>
    %814 = arith.addf %813, %812 : vector<2x32xf32>
    %815 = arith.divf %813, %814 : vector<2x32xf32>
    %816 = vector.extract_strided_slice %16 {offsets = [14, 0], sizes = [2, 32], strides = [1, 1]} : vector<16x32xf32> to vector<2x32xf32>
    %817 = arith.addf %816, %801 : vector<2x32xf32>
    %818 = arith.negf %817 : vector<2x32xf32>
    %819 = math.exp %818 : vector<2x32xf32>
    %cst_553 = arith.constant 1.000000e+00 : f32
    %820 = vector.broadcast %cst_553 : f32 to vector<2x32xf32>
    %821 = arith.addf %820, %819 : vector<2x32xf32>
    %822 = arith.divf %820, %821 : vector<2x32xf32>
    %823 = vector.extract_strided_slice %23 {offsets = [14, 0], sizes = [2, 32], strides = [1, 1]} : vector<16x32xf32> to vector<2x32xf32>
    %824 = arith.mulf %815, %808 : vector<2x32xf32>
    %825 = arith.addf %823, %824 : vector<2x32xf32>
    %826 = math.tanh %825 : vector<2x32xf32>
    %827 = arith.subf %727, %826 : vector<2x32xf32>
    %828 = arith.mulf %822, %827 : vector<2x32xf32>
    %829 = arith.addf %826, %828 : vector<2x32xf32>
    %c1_554 = arith.constant 1 : index
    %c0_555 = arith.constant 0 : index
    %c0_556 = arith.constant 0 : index
    %c0_557 = arith.constant 0 : index
    %830 = vector.load %arg4[%c1_554, %c0_555, %c0_556, %c0_557] : memref<3x3x32x32xf32, #tpu.memory_space<vmem>>, vector<1x1x32x32xf32>
    %831 = vector.shape_cast %830 : vector<1x1x32x32xf32> to vector<32x32xf32>
    %cst_558 = arith.constant dense<0.000000e+00> : vector<2x32xf32>
    %832 = tpu.matmul %769, %831, %cst_558 {dimension_numbers = #tpu.dot_dimension_numbers<[1], [0], [0], [1], [0, 0, 1, 1], [], []>} : vector<2x32xf32>, vector<32x32xf32>, vector<2x32xf32> -> vector<2x32xf32>
    %c1_559 = arith.constant 1 : index
    %c0_560 = arith.constant 0 : index
    %c0_561 = arith.constant 0 : index
    %c0_562 = arith.constant 0 : index
    %833 = vector.load %arg6[%c1_559, %c0_560, %c0_561, %c0_562] : memref<3x3x1x32xf32, #tpu.memory_space<vmem>>, vector<1x1x1x32xf32>
    %834 = vector.shape_cast %833 : vector<1x1x1x32xf32> to vector<1x32xf32>
    %835 = vector.broadcast %834 : vector<1x32xf32> to vector<2x32xf32>
    %836 = arith.addf %832, %835 : vector<2x32xf32>
    %c1_563 = arith.constant 1 : index
    %c1_564 = arith.constant 1 : index
    %c0_565 = arith.constant 0 : index
    %c0_566 = arith.constant 0 : index
    %837 = vector.load %arg4[%c1_563, %c1_564, %c0_565, %c0_566] : memref<3x3x32x32xf32, #tpu.memory_space<vmem>>, vector<1x1x32x32xf32>
    %838 = vector.shape_cast %837 : vector<1x1x32x32xf32> to vector<32x32xf32>
    %cst_567 = arith.constant dense<0.000000e+00> : vector<2x32xf32>
    %839 = tpu.matmul %769, %838, %cst_567 {dimension_numbers = #tpu.dot_dimension_numbers<[1], [0], [0], [1], [0, 0, 1, 1], [], []>} : vector<2x32xf32>, vector<32x32xf32>, vector<2x32xf32> -> vector<2x32xf32>
    %c1_568 = arith.constant 1 : index
    %c1_569 = arith.constant 1 : index
    %c0_570 = arith.constant 0 : index
    %c0_571 = arith.constant 0 : index
    %840 = vector.load %arg6[%c1_568, %c1_569, %c0_570, %c0_571] : memref<3x3x1x32xf32, #tpu.memory_space<vmem>>, vector<1x1x1x32xf32>
    %841 = vector.shape_cast %840 : vector<1x1x1x32xf32> to vector<1x32xf32>
    %842 = vector.broadcast %841 : vector<1x32xf32> to vector<2x32xf32>
    %843 = arith.addf %839, %842 : vector<2x32xf32>
    %c1_572 = arith.constant 1 : index
    %c2_573 = arith.constant 2 : index
    %c0_574 = arith.constant 0 : index
    %c0_575 = arith.constant 0 : index
    %844 = vector.load %arg4[%c1_572, %c2_573, %c0_574, %c0_575] : memref<3x3x32x32xf32, #tpu.memory_space<vmem>>, vector<1x1x32x32xf32>
    %845 = vector.shape_cast %844 : vector<1x1x32x32xf32> to vector<32x32xf32>
    %cst_576 = arith.constant dense<0.000000e+00> : vector<2x32xf32>
    %846 = tpu.matmul %769, %845, %cst_576 {dimension_numbers = #tpu.dot_dimension_numbers<[1], [0], [0], [1], [0, 0, 1, 1], [], []>} : vector<2x32xf32>, vector<32x32xf32>, vector<2x32xf32> -> vector<2x32xf32>
    %c1_577 = arith.constant 1 : index
    %c2_578 = arith.constant 2 : index
    %c0_579 = arith.constant 0 : index
    %c0_580 = arith.constant 0 : index
    %847 = vector.load %arg6[%c1_577, %c2_578, %c0_579, %c0_580] : memref<3x3x1x32xf32, #tpu.memory_space<vmem>>, vector<1x1x1x32xf32>
    %848 = vector.shape_cast %847 : vector<1x1x1x32xf32> to vector<1x32xf32>
    %849 = vector.broadcast %848 : vector<1x32xf32> to vector<2x32xf32>
    %850 = arith.addf %846, %849 : vector<2x32xf32>
    %851 = vector.extract_strided_slice %30 {offsets = [14, 0], sizes = [2, 32], strides = [1, 1]} : vector<16x32xf32> to vector<2x32xf32>
    %852 = arith.addf %851, %836 : vector<2x32xf32>
    %853 = arith.negf %852 : vector<2x32xf32>
    %854 = math.exp %853 : vector<2x32xf32>
    %cst_581 = arith.constant 1.000000e+00 : f32
    %855 = vector.broadcast %cst_581 : f32 to vector<2x32xf32>
    %856 = arith.addf %855, %854 : vector<2x32xf32>
    %857 = arith.divf %855, %856 : vector<2x32xf32>
    %858 = vector.extract_strided_slice %37 {offsets = [14, 0], sizes = [2, 32], strides = [1, 1]} : vector<16x32xf32> to vector<2x32xf32>
    %859 = arith.addf %858, %843 : vector<2x32xf32>
    %860 = arith.negf %859 : vector<2x32xf32>
    %861 = math.exp %860 : vector<2x32xf32>
    %cst_582 = arith.constant 1.000000e+00 : f32
    %862 = vector.broadcast %cst_582 : f32 to vector<2x32xf32>
    %863 = arith.addf %862, %861 : vector<2x32xf32>
    %864 = arith.divf %862, %863 : vector<2x32xf32>
    %865 = vector.extract_strided_slice %44 {offsets = [14, 0], sizes = [2, 32], strides = [1, 1]} : vector<16x32xf32> to vector<2x32xf32>
    %866 = arith.mulf %857, %850 : vector<2x32xf32>
    %867 = arith.addf %865, %866 : vector<2x32xf32>
    %868 = math.tanh %867 : vector<2x32xf32>
    %869 = arith.subf %769, %868 : vector<2x32xf32>
    %870 = arith.mulf %864, %869 : vector<2x32xf32>
    %871 = arith.addf %868, %870 : vector<2x32xf32>
    %c7_i32 = arith.constant 7 : i32
    %872 = vector.broadcast %c7_i32 : i32 to vector<1x8xi32>
    %873 = arith.cmpi eq, %68, %872 : vector<1x8xi32>
    %874 = arith.extui %873 : vector<1x8xi1> to vector<1x8xi32>
    %875 = arith.sitofp %874 : vector<1x8xi32> to vector<1x8xf32>
    %cst_583 = arith.constant 0.000000e+00 : f32
    %876 = vector.broadcast %cst_583 : f32 to vector<2x32xf32>
    %877 = arith.maximumf %829, %876 : vector<2x32xf32>
    %cst_584 = arith.constant dense<0.000000e+00> : vector<2x1xf32>
    %878 = tpu.matmul %877, %66, %cst_584 {dimension_numbers = #tpu.dot_dimension_numbers<[1], [0], [0], [1], [0, 0, 1, 1], [], []>} : vector<2x32xf32>, vector<32x1xf32>, vector<2x1xf32> -> vector<2x1xf32>
    %879 = vector.broadcast %878 : vector<2x1xf32> to vector<2x8xf32>
    %880 = vector.broadcast %875 : vector<1x8xf32> to vector<2x8xf32>
    %881 = arith.mulf %879, %880 : vector<2x8xf32>
    %882 = arith.addf %780, %881 : vector<2x8xf32>
    %cst_585 = arith.constant 0.000000e+00 : f32
    %883 = vector.broadcast %cst_585 : f32 to vector<2x32xf32>
    %884 = arith.maximumf %871, %883 : vector<2x32xf32>
    %cst_586 = arith.constant dense<0.000000e+00> : vector<2x1xf32>
    %885 = tpu.matmul %884, %66, %cst_586 {dimension_numbers = #tpu.dot_dimension_numbers<[1], [0], [0], [1], [0, 0, 1, 1], [], []>} : vector<2x32xf32>, vector<32x1xf32>, vector<2x1xf32> -> vector<2x1xf32>
    %886 = vector.broadcast %885 : vector<2x1xf32> to vector<2x8xf32>
    %887 = vector.broadcast %875 : vector<1x8xf32> to vector<2x8xf32>
    %888 = arith.mulf %886, %887 : vector<2x8xf32>
    %889 = arith.addf %787, %888 : vector<2x8xf32>
    %c0_587 = arith.constant 0 : index
    %c0_588 = arith.constant 0 : index
    %890 = vector.load %arg7[%c0_587, %c0_588] : memref<32x32xf32, #tpu.memory_space<vmem>>, vector<32x32xf32>
    %cst_589 = arith.constant dense<0.000000e+00> : vector<2x32xf32>
    %891 = tpu.matmul %829, %890, %cst_589 {dimension_numbers = #tpu.dot_dimension_numbers<[1], [0], [0], [1], [0, 0, 1, 1], [], []>} : vector<2x32xf32>, vector<32x32xf32>, vector<2x32xf32> -> vector<2x32xf32>
    %c0_590 = arith.constant 0 : index
    %c0_591 = arith.constant 0 : index
    %892 = vector.load %arg8[%c0_590, %c0_591] : memref<32x32xf32, #tpu.memory_space<vmem>>, vector<32x32xf32>
    %cst_592 = arith.constant dense<0.000000e+00> : vector<2x32xf32>
    %893 = tpu.matmul %871, %892, %cst_592 {dimension_numbers = #tpu.dot_dimension_numbers<[1], [0], [0], [1], [0, 0, 1, 1], [], []>} : vector<2x32xf32>, vector<32x32xf32>, vector<2x32xf32> -> vector<2x32xf32>
    %894 = arith.addf %891, %893 : vector<2x32xf32>
    %c0_593 = arith.constant 0 : index
    %c0_594 = arith.constant 0 : index
    %895 = vector.load %arg9[%c0_593, %c0_594] : memref<1x32xf32, #tpu.memory_space<vmem>>, vector<1x32xf32>
    %896 = vector.broadcast %895 : vector<1x32xf32> to vector<2x32xf32>
    %897 = arith.addf %894, %896 : vector<2x32xf32>
    %898 = math.tanh %897 : vector<2x32xf32>
    %cst_595 = arith.constant 0.000000e+00 : f32
    %899 = vector.broadcast %cst_595 : f32 to vector<2x4xf32>
    %c2_596 = arith.constant 2 : index
    %c0_597 = arith.constant 0 : index
    %c0_598 = arith.constant 0 : index
    %c0_599 = arith.constant 0 : index
    %900 = vector.load %arg4[%c2_596, %c0_597, %c0_598, %c0_599] : memref<3x3x32x32xf32, #tpu.memory_space<vmem>>, vector<1x1x32x32xf32>
    %901 = vector.shape_cast %900 : vector<1x1x32x32xf32> to vector<32x32xf32>
    %cst_600 = arith.constant dense<0.000000e+00> : vector<2x32xf32>
    %902 = tpu.matmul %898, %901, %cst_600 {dimension_numbers = #tpu.dot_dimension_numbers<[1], [0], [0], [1], [0, 0, 1, 1], [], []>} : vector<2x32xf32>, vector<32x32xf32>, vector<2x32xf32> -> vector<2x32xf32>
    %c2_601 = arith.constant 2 : index
    %c0_602 = arith.constant 0 : index
    %c0_603 = arith.constant 0 : index
    %c0_604 = arith.constant 0 : index
    %903 = vector.load %arg6[%c2_601, %c0_602, %c0_603, %c0_604] : memref<3x3x1x32xf32, #tpu.memory_space<vmem>>, vector<1x1x1x32xf32>
    %904 = vector.shape_cast %903 : vector<1x1x1x32xf32> to vector<1x32xf32>
    %905 = vector.broadcast %904 : vector<1x32xf32> to vector<2x32xf32>
    %906 = arith.addf %902, %905 : vector<2x32xf32>
    %c2_605 = arith.constant 2 : index
    %c1_606 = arith.constant 1 : index
    %c0_607 = arith.constant 0 : index
    %c0_608 = arith.constant 0 : index
    %907 = vector.load %arg4[%c2_605, %c1_606, %c0_607, %c0_608] : memref<3x3x32x32xf32, #tpu.memory_space<vmem>>, vector<1x1x32x32xf32>
    %908 = vector.shape_cast %907 : vector<1x1x32x32xf32> to vector<32x32xf32>
    %cst_609 = arith.constant dense<0.000000e+00> : vector<2x32xf32>
    %909 = tpu.matmul %898, %908, %cst_609 {dimension_numbers = #tpu.dot_dimension_numbers<[1], [0], [0], [1], [0, 0, 1, 1], [], []>} : vector<2x32xf32>, vector<32x32xf32>, vector<2x32xf32> -> vector<2x32xf32>
    %c2_610 = arith.constant 2 : index
    %c1_611 = arith.constant 1 : index
    %c0_612 = arith.constant 0 : index
    %c0_613 = arith.constant 0 : index
    %910 = vector.load %arg6[%c2_610, %c1_611, %c0_612, %c0_613] : memref<3x3x1x32xf32, #tpu.memory_space<vmem>>, vector<1x1x1x32xf32>
    %911 = vector.shape_cast %910 : vector<1x1x1x32xf32> to vector<1x32xf32>
    %912 = vector.broadcast %911 : vector<1x32xf32> to vector<2x32xf32>
    %913 = arith.addf %909, %912 : vector<2x32xf32>
    %c2_614 = arith.constant 2 : index
    %c2_615 = arith.constant 2 : index
    %c0_616 = arith.constant 0 : index
    %c0_617 = arith.constant 0 : index
    %914 = vector.load %arg4[%c2_614, %c2_615, %c0_616, %c0_617] : memref<3x3x32x32xf32, #tpu.memory_space<vmem>>, vector<1x1x32x32xf32>
    %915 = vector.shape_cast %914 : vector<1x1x32x32xf32> to vector<32x32xf32>
    %cst_618 = arith.constant dense<0.000000e+00> : vector<2x32xf32>
    %916 = tpu.matmul %898, %915, %cst_618 {dimension_numbers = #tpu.dot_dimension_numbers<[1], [0], [0], [1], [0, 0, 1, 1], [], []>} : vector<2x32xf32>, vector<32x32xf32>, vector<2x32xf32> -> vector<2x32xf32>
    %c2_619 = arith.constant 2 : index
    %c2_620 = arith.constant 2 : index
    %c0_621 = arith.constant 0 : index
    %c0_622 = arith.constant 0 : index
    %917 = vector.load %arg6[%c2_619, %c2_620, %c0_621, %c0_622] : memref<3x3x1x32xf32, #tpu.memory_space<vmem>>, vector<1x1x1x32xf32>
    %918 = vector.shape_cast %917 : vector<1x1x1x32xf32> to vector<1x32xf32>
    %919 = vector.broadcast %918 : vector<1x32xf32> to vector<2x32xf32>
    %920 = arith.addf %916, %919 : vector<2x32xf32>
    %921 = vector.extract_strided_slice %51 {offsets = [0, 0], sizes = [2, 32], strides = [1, 1]} : vector<8x32xf32> to vector<2x32xf32>
    %922 = arith.addf %921, %906 : vector<2x32xf32>
    %923 = arith.negf %922 : vector<2x32xf32>
    %924 = math.exp %923 : vector<2x32xf32>
    %cst_623 = arith.constant 1.000000e+00 : f32
    %925 = vector.broadcast %cst_623 : f32 to vector<2x32xf32>
    %926 = arith.addf %925, %924 : vector<2x32xf32>
    %927 = arith.divf %925, %926 : vector<2x32xf32>
    %928 = vector.extract_strided_slice %58 {offsets = [0, 0], sizes = [2, 32], strides = [1, 1]} : vector<8x32xf32> to vector<2x32xf32>
    %929 = arith.addf %928, %913 : vector<2x32xf32>
    %930 = arith.negf %929 : vector<2x32xf32>
    %931 = math.exp %930 : vector<2x32xf32>
    %cst_624 = arith.constant 1.000000e+00 : f32
    %932 = vector.broadcast %cst_624 : f32 to vector<2x32xf32>
    %933 = arith.addf %932, %931 : vector<2x32xf32>
    %934 = arith.divf %932, %933 : vector<2x32xf32>
    %935 = vector.extract_strided_slice %65 {offsets = [0, 0], sizes = [2, 32], strides = [1, 1]} : vector<8x32xf32> to vector<2x32xf32>
    %936 = arith.mulf %927, %920 : vector<2x32xf32>
    %937 = arith.addf %935, %936 : vector<2x32xf32>
    %938 = math.tanh %937 : vector<2x32xf32>
    %939 = arith.subf %898, %938 : vector<2x32xf32>
    %940 = arith.mulf %934, %939 : vector<2x32xf32>
    %941 = arith.addf %938, %940 : vector<2x32xf32>
    %c0_i32_625 = arith.constant 0 : i32
    %942 = vector.broadcast %c0_i32_625 : i32 to vector<1x4xi32>
    %943 = arith.cmpi eq, %69, %942 : vector<1x4xi32>
    %944 = arith.extui %943 : vector<1x4xi1> to vector<1x4xi32>
    %945 = arith.sitofp %944 : vector<1x4xi32> to vector<1x4xf32>
    %cst_626 = arith.constant 0.000000e+00 : f32
    %946 = vector.broadcast %cst_626 : f32 to vector<2x32xf32>
    %947 = arith.maximumf %941, %946 : vector<2x32xf32>
    %cst_627 = arith.constant dense<0.000000e+00> : vector<2x1xf32>
    %948 = tpu.matmul %947, %67, %cst_627 {dimension_numbers = #tpu.dot_dimension_numbers<[1], [0], [0], [1], [0, 0, 1, 1], [], []>} : vector<2x32xf32>, vector<32x1xf32>, vector<2x1xf32> -> vector<2x1xf32>
    %949 = vector.broadcast %948 : vector<2x1xf32> to vector<2x4xf32>
    %950 = vector.broadcast %945 : vector<1x4xf32> to vector<2x4xf32>
    %951 = arith.mulf %949, %950 : vector<2x4xf32>
    %952 = arith.addf %899, %951 : vector<2x4xf32>
    %c2_628 = arith.constant 2 : index
    %c0_629 = arith.constant 0 : index
    %c0_630 = arith.constant 0 : index
    %c0_631 = arith.constant 0 : index
    %953 = vector.load %arg4[%c2_628, %c0_629, %c0_630, %c0_631] : memref<3x3x32x32xf32, #tpu.memory_space<vmem>>, vector<1x1x32x32xf32>
    %954 = vector.shape_cast %953 : vector<1x1x32x32xf32> to vector<32x32xf32>
    %cst_632 = arith.constant dense<0.000000e+00> : vector<2x32xf32>
    %955 = tpu.matmul %941, %954, %cst_632 {dimension_numbers = #tpu.dot_dimension_numbers<[1], [0], [0], [1], [0, 0, 1, 1], [], []>} : vector<2x32xf32>, vector<32x32xf32>, vector<2x32xf32> -> vector<2x32xf32>
    %c2_633 = arith.constant 2 : index
    %c0_634 = arith.constant 0 : index
    %c0_635 = arith.constant 0 : index
    %c0_636 = arith.constant 0 : index
    %956 = vector.load %arg6[%c2_633, %c0_634, %c0_635, %c0_636] : memref<3x3x1x32xf32, #tpu.memory_space<vmem>>, vector<1x1x1x32xf32>
    %957 = vector.shape_cast %956 : vector<1x1x1x32xf32> to vector<1x32xf32>
    %958 = vector.broadcast %957 : vector<1x32xf32> to vector<2x32xf32>
    %959 = arith.addf %955, %958 : vector<2x32xf32>
    %c2_637 = arith.constant 2 : index
    %c1_638 = arith.constant 1 : index
    %c0_639 = arith.constant 0 : index
    %c0_640 = arith.constant 0 : index
    %960 = vector.load %arg4[%c2_637, %c1_638, %c0_639, %c0_640] : memref<3x3x32x32xf32, #tpu.memory_space<vmem>>, vector<1x1x32x32xf32>
    %961 = vector.shape_cast %960 : vector<1x1x32x32xf32> to vector<32x32xf32>
    %cst_641 = arith.constant dense<0.000000e+00> : vector<2x32xf32>
    %962 = tpu.matmul %941, %961, %cst_641 {dimension_numbers = #tpu.dot_dimension_numbers<[1], [0], [0], [1], [0, 0, 1, 1], [], []>} : vector<2x32xf32>, vector<32x32xf32>, vector<2x32xf32> -> vector<2x32xf32>
    %c2_642 = arith.constant 2 : index
    %c1_643 = arith.constant 1 : index
    %c0_644 = arith.constant 0 : index
    %c0_645 = arith.constant 0 : index
    %963 = vector.load %arg6[%c2_642, %c1_643, %c0_644, %c0_645] : memref<3x3x1x32xf32, #tpu.memory_space<vmem>>, vector<1x1x1x32xf32>
    %964 = vector.shape_cast %963 : vector<1x1x1x32xf32> to vector<1x32xf32>
    %965 = vector.broadcast %964 : vector<1x32xf32> to vector<2x32xf32>
    %966 = arith.addf %962, %965 : vector<2x32xf32>
    %c2_646 = arith.constant 2 : index
    %c2_647 = arith.constant 2 : index
    %c0_648 = arith.constant 0 : index
    %c0_649 = arith.constant 0 : index
    %967 = vector.load %arg4[%c2_646, %c2_647, %c0_648, %c0_649] : memref<3x3x32x32xf32, #tpu.memory_space<vmem>>, vector<1x1x32x32xf32>
    %968 = vector.shape_cast %967 : vector<1x1x32x32xf32> to vector<32x32xf32>
    %cst_650 = arith.constant dense<0.000000e+00> : vector<2x32xf32>
    %969 = tpu.matmul %941, %968, %cst_650 {dimension_numbers = #tpu.dot_dimension_numbers<[1], [0], [0], [1], [0, 0, 1, 1], [], []>} : vector<2x32xf32>, vector<32x32xf32>, vector<2x32xf32> -> vector<2x32xf32>
    %c2_651 = arith.constant 2 : index
    %c2_652 = arith.constant 2 : index
    %c0_653 = arith.constant 0 : index
    %c0_654 = arith.constant 0 : index
    %970 = vector.load %arg6[%c2_651, %c2_652, %c0_653, %c0_654] : memref<3x3x1x32xf32, #tpu.memory_space<vmem>>, vector<1x1x1x32xf32>
    %971 = vector.shape_cast %970 : vector<1x1x1x32xf32> to vector<1x32xf32>
    %972 = vector.broadcast %971 : vector<1x32xf32> to vector<2x32xf32>
    %973 = arith.addf %969, %972 : vector<2x32xf32>
    %974 = vector.extract_strided_slice %51 {offsets = [2, 0], sizes = [2, 32], strides = [1, 1]} : vector<8x32xf32> to vector<2x32xf32>
    %975 = arith.addf %974, %959 : vector<2x32xf32>
    %976 = arith.negf %975 : vector<2x32xf32>
    %977 = math.exp %976 : vector<2x32xf32>
    %cst_655 = arith.constant 1.000000e+00 : f32
    %978 = vector.broadcast %cst_655 : f32 to vector<2x32xf32>
    %979 = arith.addf %978, %977 : vector<2x32xf32>
    %980 = arith.divf %978, %979 : vector<2x32xf32>
    %981 = vector.extract_strided_slice %58 {offsets = [2, 0], sizes = [2, 32], strides = [1, 1]} : vector<8x32xf32> to vector<2x32xf32>
    %982 = arith.addf %981, %966 : vector<2x32xf32>
    %983 = arith.negf %982 : vector<2x32xf32>
    %984 = math.exp %983 : vector<2x32xf32>
    %cst_656 = arith.constant 1.000000e+00 : f32
    %985 = vector.broadcast %cst_656 : f32 to vector<2x32xf32>
    %986 = arith.addf %985, %984 : vector<2x32xf32>
    %987 = arith.divf %985, %986 : vector<2x32xf32>
    %988 = vector.extract_strided_slice %65 {offsets = [2, 0], sizes = [2, 32], strides = [1, 1]} : vector<8x32xf32> to vector<2x32xf32>
    %989 = arith.mulf %980, %973 : vector<2x32xf32>
    %990 = arith.addf %988, %989 : vector<2x32xf32>
    %991 = math.tanh %990 : vector<2x32xf32>
    %992 = arith.subf %941, %991 : vector<2x32xf32>
    %993 = arith.mulf %987, %992 : vector<2x32xf32>
    %994 = arith.addf %991, %993 : vector<2x32xf32>
    %c1_i32_657 = arith.constant 1 : i32
    %995 = vector.broadcast %c1_i32_657 : i32 to vector<1x4xi32>
    %996 = arith.cmpi eq, %69, %995 : vector<1x4xi32>
    %997 = arith.extui %996 : vector<1x4xi1> to vector<1x4xi32>
    %998 = arith.sitofp %997 : vector<1x4xi32> to vector<1x4xf32>
    %cst_658 = arith.constant 0.000000e+00 : f32
    %999 = vector.broadcast %cst_658 : f32 to vector<2x32xf32>
    %1000 = arith.maximumf %994, %999 : vector<2x32xf32>
    %cst_659 = arith.constant dense<0.000000e+00> : vector<2x1xf32>
    %1001 = tpu.matmul %1000, %67, %cst_659 {dimension_numbers = #tpu.dot_dimension_numbers<[1], [0], [0], [1], [0, 0, 1, 1], [], []>} : vector<2x32xf32>, vector<32x1xf32>, vector<2x1xf32> -> vector<2x1xf32>
    %1002 = vector.broadcast %1001 : vector<2x1xf32> to vector<2x4xf32>
    %1003 = vector.broadcast %998 : vector<1x4xf32> to vector<2x4xf32>
    %1004 = arith.mulf %1002, %1003 : vector<2x4xf32>
    %1005 = arith.addf %952, %1004 : vector<2x4xf32>
    %c2_660 = arith.constant 2 : index
    %c0_661 = arith.constant 0 : index
    %c0_662 = arith.constant 0 : index
    %c0_663 = arith.constant 0 : index
    %1006 = vector.load %arg4[%c2_660, %c0_661, %c0_662, %c0_663] : memref<3x3x32x32xf32, #tpu.memory_space<vmem>>, vector<1x1x32x32xf32>
    %1007 = vector.shape_cast %1006 : vector<1x1x32x32xf32> to vector<32x32xf32>
    %cst_664 = arith.constant dense<0.000000e+00> : vector<2x32xf32>
    %1008 = tpu.matmul %994, %1007, %cst_664 {dimension_numbers = #tpu.dot_dimension_numbers<[1], [0], [0], [1], [0, 0, 1, 1], [], []>} : vector<2x32xf32>, vector<32x32xf32>, vector<2x32xf32> -> vector<2x32xf32>
    %c2_665 = arith.constant 2 : index
    %c0_666 = arith.constant 0 : index
    %c0_667 = arith.constant 0 : index
    %c0_668 = arith.constant 0 : index
    %1009 = vector.load %arg6[%c2_665, %c0_666, %c0_667, %c0_668] : memref<3x3x1x32xf32, #tpu.memory_space<vmem>>, vector<1x1x1x32xf32>
    %1010 = vector.shape_cast %1009 : vector<1x1x1x32xf32> to vector<1x32xf32>
    %1011 = vector.broadcast %1010 : vector<1x32xf32> to vector<2x32xf32>
    %1012 = arith.addf %1008, %1011 : vector<2x32xf32>
    %c2_669 = arith.constant 2 : index
    %c1_670 = arith.constant 1 : index
    %c0_671 = arith.constant 0 : index
    %c0_672 = arith.constant 0 : index
    %1013 = vector.load %arg4[%c2_669, %c1_670, %c0_671, %c0_672] : memref<3x3x32x32xf32, #tpu.memory_space<vmem>>, vector<1x1x32x32xf32>
    %1014 = vector.shape_cast %1013 : vector<1x1x32x32xf32> to vector<32x32xf32>
    %cst_673 = arith.constant dense<0.000000e+00> : vector<2x32xf32>
    %1015 = tpu.matmul %994, %1014, %cst_673 {dimension_numbers = #tpu.dot_dimension_numbers<[1], [0], [0], [1], [0, 0, 1, 1], [], []>} : vector<2x32xf32>, vector<32x32xf32>, vector<2x32xf32> -> vector<2x32xf32>
    %c2_674 = arith.constant 2 : index
    %c1_675 = arith.constant 1 : index
    %c0_676 = arith.constant 0 : index
    %c0_677 = arith.constant 0 : index
    %1016 = vector.load %arg6[%c2_674, %c1_675, %c0_676, %c0_677] : memref<3x3x1x32xf32, #tpu.memory_space<vmem>>, vector<1x1x1x32xf32>
    %1017 = vector.shape_cast %1016 : vector<1x1x1x32xf32> to vector<1x32xf32>
    %1018 = vector.broadcast %1017 : vector<1x32xf32> to vector<2x32xf32>
    %1019 = arith.addf %1015, %1018 : vector<2x32xf32>
    %c2_678 = arith.constant 2 : index
    %c2_679 = arith.constant 2 : index
    %c0_680 = arith.constant 0 : index
    %c0_681 = arith.constant 0 : index
    %1020 = vector.load %arg4[%c2_678, %c2_679, %c0_680, %c0_681] : memref<3x3x32x32xf32, #tpu.memory_space<vmem>>, vector<1x1x32x32xf32>
    %1021 = vector.shape_cast %1020 : vector<1x1x32x32xf32> to vector<32x32xf32>
    %cst_682 = arith.constant dense<0.000000e+00> : vector<2x32xf32>
    %1022 = tpu.matmul %994, %1021, %cst_682 {dimension_numbers = #tpu.dot_dimension_numbers<[1], [0], [0], [1], [0, 0, 1, 1], [], []>} : vector<2x32xf32>, vector<32x32xf32>, vector<2x32xf32> -> vector<2x32xf32>
    %c2_683 = arith.constant 2 : index
    %c2_684 = arith.constant 2 : index
    %c0_685 = arith.constant 0 : index
    %c0_686 = arith.constant 0 : index
    %1023 = vector.load %arg6[%c2_683, %c2_684, %c0_685, %c0_686] : memref<3x3x1x32xf32, #tpu.memory_space<vmem>>, vector<1x1x1x32xf32>
    %1024 = vector.shape_cast %1023 : vector<1x1x1x32xf32> to vector<1x32xf32>
    %1025 = vector.broadcast %1024 : vector<1x32xf32> to vector<2x32xf32>
    %1026 = arith.addf %1022, %1025 : vector<2x32xf32>
    %1027 = vector.extract_strided_slice %51 {offsets = [4, 0], sizes = [2, 32], strides = [1, 1]} : vector<8x32xf32> to vector<2x32xf32>
    %1028 = arith.addf %1027, %1012 : vector<2x32xf32>
    %1029 = arith.negf %1028 : vector<2x32xf32>
    %1030 = math.exp %1029 : vector<2x32xf32>
    %cst_687 = arith.constant 1.000000e+00 : f32
    %1031 = vector.broadcast %cst_687 : f32 to vector<2x32xf32>
    %1032 = arith.addf %1031, %1030 : vector<2x32xf32>
    %1033 = arith.divf %1031, %1032 : vector<2x32xf32>
    %1034 = vector.extract_strided_slice %58 {offsets = [4, 0], sizes = [2, 32], strides = [1, 1]} : vector<8x32xf32> to vector<2x32xf32>
    %1035 = arith.addf %1034, %1019 : vector<2x32xf32>
    %1036 = arith.negf %1035 : vector<2x32xf32>
    %1037 = math.exp %1036 : vector<2x32xf32>
    %cst_688 = arith.constant 1.000000e+00 : f32
    %1038 = vector.broadcast %cst_688 : f32 to vector<2x32xf32>
    %1039 = arith.addf %1038, %1037 : vector<2x32xf32>
    %1040 = arith.divf %1038, %1039 : vector<2x32xf32>
    %1041 = vector.extract_strided_slice %65 {offsets = [4, 0], sizes = [2, 32], strides = [1, 1]} : vector<8x32xf32> to vector<2x32xf32>
    %1042 = arith.mulf %1033, %1026 : vector<2x32xf32>
    %1043 = arith.addf %1041, %1042 : vector<2x32xf32>
    %1044 = math.tanh %1043 : vector<2x32xf32>
    %1045 = arith.subf %994, %1044 : vector<2x32xf32>
    %1046 = arith.mulf %1040, %1045 : vector<2x32xf32>
    %1047 = arith.addf %1044, %1046 : vector<2x32xf32>
    %c2_i32_689 = arith.constant 2 : i32
    %1048 = vector.broadcast %c2_i32_689 : i32 to vector<1x4xi32>
    %1049 = arith.cmpi eq, %69, %1048 : vector<1x4xi32>
    %1050 = arith.extui %1049 : vector<1x4xi1> to vector<1x4xi32>
    %1051 = arith.sitofp %1050 : vector<1x4xi32> to vector<1x4xf32>
    %cst_690 = arith.constant 0.000000e+00 : f32
    %1052 = vector.broadcast %cst_690 : f32 to vector<2x32xf32>
    %1053 = arith.maximumf %1047, %1052 : vector<2x32xf32>
    %cst_691 = arith.constant dense<0.000000e+00> : vector<2x1xf32>
    %1054 = tpu.matmul %1053, %67, %cst_691 {dimension_numbers = #tpu.dot_dimension_numbers<[1], [0], [0], [1], [0, 0, 1, 1], [], []>} : vector<2x32xf32>, vector<32x1xf32>, vector<2x1xf32> -> vector<2x1xf32>
    %1055 = vector.broadcast %1054 : vector<2x1xf32> to vector<2x4xf32>
    %1056 = vector.broadcast %1051 : vector<1x4xf32> to vector<2x4xf32>
    %1057 = arith.mulf %1055, %1056 : vector<2x4xf32>
    %1058 = arith.addf %1005, %1057 : vector<2x4xf32>
    %c2_692 = arith.constant 2 : index
    %c0_693 = arith.constant 0 : index
    %c0_694 = arith.constant 0 : index
    %c0_695 = arith.constant 0 : index
    %1059 = vector.load %arg4[%c2_692, %c0_693, %c0_694, %c0_695] : memref<3x3x32x32xf32, #tpu.memory_space<vmem>>, vector<1x1x32x32xf32>
    %1060 = vector.shape_cast %1059 : vector<1x1x32x32xf32> to vector<32x32xf32>
    %cst_696 = arith.constant dense<0.000000e+00> : vector<2x32xf32>
    %1061 = tpu.matmul %1047, %1060, %cst_696 {dimension_numbers = #tpu.dot_dimension_numbers<[1], [0], [0], [1], [0, 0, 1, 1], [], []>} : vector<2x32xf32>, vector<32x32xf32>, vector<2x32xf32> -> vector<2x32xf32>
    %c2_697 = arith.constant 2 : index
    %c0_698 = arith.constant 0 : index
    %c0_699 = arith.constant 0 : index
    %c0_700 = arith.constant 0 : index
    %1062 = vector.load %arg6[%c2_697, %c0_698, %c0_699, %c0_700] : memref<3x3x1x32xf32, #tpu.memory_space<vmem>>, vector<1x1x1x32xf32>
    %1063 = vector.shape_cast %1062 : vector<1x1x1x32xf32> to vector<1x32xf32>
    %1064 = vector.broadcast %1063 : vector<1x32xf32> to vector<2x32xf32>
    %1065 = arith.addf %1061, %1064 : vector<2x32xf32>
    %c2_701 = arith.constant 2 : index
    %c1_702 = arith.constant 1 : index
    %c0_703 = arith.constant 0 : index
    %c0_704 = arith.constant 0 : index
    %1066 = vector.load %arg4[%c2_701, %c1_702, %c0_703, %c0_704] : memref<3x3x32x32xf32, #tpu.memory_space<vmem>>, vector<1x1x32x32xf32>
    %1067 = vector.shape_cast %1066 : vector<1x1x32x32xf32> to vector<32x32xf32>
    %cst_705 = arith.constant dense<0.000000e+00> : vector<2x32xf32>
    %1068 = tpu.matmul %1047, %1067, %cst_705 {dimension_numbers = #tpu.dot_dimension_numbers<[1], [0], [0], [1], [0, 0, 1, 1], [], []>} : vector<2x32xf32>, vector<32x32xf32>, vector<2x32xf32> -> vector<2x32xf32>
    %c2_706 = arith.constant 2 : index
    %c1_707 = arith.constant 1 : index
    %c0_708 = arith.constant 0 : index
    %c0_709 = arith.constant 0 : index
    %1069 = vector.load %arg6[%c2_706, %c1_707, %c0_708, %c0_709] : memref<3x3x1x32xf32, #tpu.memory_space<vmem>>, vector<1x1x1x32xf32>
    %1070 = vector.shape_cast %1069 : vector<1x1x1x32xf32> to vector<1x32xf32>
    %1071 = vector.broadcast %1070 : vector<1x32xf32> to vector<2x32xf32>
    %1072 = arith.addf %1068, %1071 : vector<2x32xf32>
    %c2_710 = arith.constant 2 : index
    %c2_711 = arith.constant 2 : index
    %c0_712 = arith.constant 0 : index
    %c0_713 = arith.constant 0 : index
    %1073 = vector.load %arg4[%c2_710, %c2_711, %c0_712, %c0_713] : memref<3x3x32x32xf32, #tpu.memory_space<vmem>>, vector<1x1x32x32xf32>
    %1074 = vector.shape_cast %1073 : vector<1x1x32x32xf32> to vector<32x32xf32>
    %cst_714 = arith.constant dense<0.000000e+00> : vector<2x32xf32>
    %1075 = tpu.matmul %1047, %1074, %cst_714 {dimension_numbers = #tpu.dot_dimension_numbers<[1], [0], [0], [1], [0, 0, 1, 1], [], []>} : vector<2x32xf32>, vector<32x32xf32>, vector<2x32xf32> -> vector<2x32xf32>
    %c2_715 = arith.constant 2 : index
    %c2_716 = arith.constant 2 : index
    %c0_717 = arith.constant 0 : index
    %c0_718 = arith.constant 0 : index
    %1076 = vector.load %arg6[%c2_715, %c2_716, %c0_717, %c0_718] : memref<3x3x1x32xf32, #tpu.memory_space<vmem>>, vector<1x1x1x32xf32>
    %1077 = vector.shape_cast %1076 : vector<1x1x1x32xf32> to vector<1x32xf32>
    %1078 = vector.broadcast %1077 : vector<1x32xf32> to vector<2x32xf32>
    %1079 = arith.addf %1075, %1078 : vector<2x32xf32>
    %1080 = vector.extract_strided_slice %51 {offsets = [6, 0], sizes = [2, 32], strides = [1, 1]} : vector<8x32xf32> to vector<2x32xf32>
    %1081 = arith.addf %1080, %1065 : vector<2x32xf32>
    %1082 = arith.negf %1081 : vector<2x32xf32>
    %1083 = math.exp %1082 : vector<2x32xf32>
    %cst_719 = arith.constant 1.000000e+00 : f32
    %1084 = vector.broadcast %cst_719 : f32 to vector<2x32xf32>
    %1085 = arith.addf %1084, %1083 : vector<2x32xf32>
    %1086 = arith.divf %1084, %1085 : vector<2x32xf32>
    %1087 = vector.extract_strided_slice %58 {offsets = [6, 0], sizes = [2, 32], strides = [1, 1]} : vector<8x32xf32> to vector<2x32xf32>
    %1088 = arith.addf %1087, %1072 : vector<2x32xf32>
    %1089 = arith.negf %1088 : vector<2x32xf32>
    %1090 = math.exp %1089 : vector<2x32xf32>
    %cst_720 = arith.constant 1.000000e+00 : f32
    %1091 = vector.broadcast %cst_720 : f32 to vector<2x32xf32>
    %1092 = arith.addf %1091, %1090 : vector<2x32xf32>
    %1093 = arith.divf %1091, %1092 : vector<2x32xf32>
    %1094 = vector.extract_strided_slice %65 {offsets = [6, 0], sizes = [2, 32], strides = [1, 1]} : vector<8x32xf32> to vector<2x32xf32>
    %1095 = arith.mulf %1086, %1079 : vector<2x32xf32>
    %1096 = arith.addf %1094, %1095 : vector<2x32xf32>
    %1097 = math.tanh %1096 : vector<2x32xf32>
    %1098 = arith.subf %1047, %1097 : vector<2x32xf32>
    %1099 = arith.mulf %1093, %1098 : vector<2x32xf32>
    %1100 = arith.addf %1097, %1099 : vector<2x32xf32>
    %c3_i32_721 = arith.constant 3 : i32
    %1101 = vector.broadcast %c3_i32_721 : i32 to vector<1x4xi32>
    %1102 = arith.cmpi eq, %69, %1101 : vector<1x4xi32>
    %1103 = arith.extui %1102 : vector<1x4xi1> to vector<1x4xi32>
    %1104 = arith.sitofp %1103 : vector<1x4xi32> to vector<1x4xf32>
    %cst_722 = arith.constant 0.000000e+00 : f32
    %1105 = vector.broadcast %cst_722 : f32 to vector<2x32xf32>
    %1106 = arith.maximumf %1100, %1105 : vector<2x32xf32>
    %cst_723 = arith.constant dense<0.000000e+00> : vector<2x1xf32>
    %1107 = tpu.matmul %1106, %67, %cst_723 {dimension_numbers = #tpu.dot_dimension_numbers<[1], [0], [0], [1], [0, 0, 1, 1], [], []>} : vector<2x32xf32>, vector<32x1xf32>, vector<2x1xf32> -> vector<2x1xf32>
    %1108 = vector.broadcast %1107 : vector<2x1xf32> to vector<2x4xf32>
    %1109 = vector.broadcast %1104 : vector<1x4xf32> to vector<2x4xf32>
    %1110 = arith.mulf %1108, %1109 : vector<2x4xf32>
    %1111 = arith.addf %1058, %1110 : vector<2x4xf32>
    %c0_724 = arith.constant 0 : index
    %c0_725 = arith.constant 0 : index
    %1112 = vector.load %arg12[%c0_724, %c0_725] : memref<1x1xf32, #tpu.memory_space<vmem>>, vector<1x1xf32>
    %1113 = vector.shape_cast %1111 : vector<2x4xf32> to vector<2x4x1xf32>
    %1114 = vector.shape_cast %882 : vector<2x8xf32> to vector<2x1x8xf32>
    %1115 = vector.broadcast %1113 : vector<2x4x1xf32> to vector<2x4x8xf32>
    %1116 = vector.broadcast %1114 : vector<2x1x8xf32> to vector<2x4x8xf32>
    %1117 = arith.addf %1115, %1116 : vector<2x4x8xf32>
    %1118 = vector.shape_cast %1112 : vector<1x1xf32> to vector<1x1x1xf32>
    %1119 = vector.broadcast %1118 : vector<1x1x1xf32> to vector<2x4x8xf32>
    %1120 = arith.addf %1117, %1119 : vector<2x4x8xf32>
    %c0_726 = arith.constant 0 : index
    %c0_727 = arith.constant 0 : index
    %c0_728 = arith.constant 0 : index
    %1121 = vector.load %arg13[%c0_726, %c0_727, %c0_728] : memref<2x4x8xf32, #tpu.memory_space<vmem>>, vector<2x4x8xf32>
    tpu.vector_store %arg13[%c0_726, %c0_727, %c0_728], %1120 {strides = array<i32>} : memref<2x4x8xf32, #tpu.memory_space<vmem>>, vector<2x4x8xf32>,
    %1122 = vector.shape_cast %1111 : vector<2x4xf32> to vector<2x4x1xf32>
    %1123 = vector.shape_cast %889 : vector<2x8xf32> to vector<2x1x8xf32>
    %1124 = vector.broadcast %1122 : vector<2x4x1xf32> to vector<2x4x8xf32>
    %1125 = vector.broadcast %1123 : vector<2x1x8xf32> to vector<2x4x8xf32>
    %1126 = arith.addf %1124, %1125 : vector<2x4x8xf32>
    %1127 = vector.shape_cast %1112 : vector<1x1xf32> to vector<1x1x1xf32>
    %1128 = vector.broadcast %1127 : vector<1x1x1xf32> to vector<2x4x8xf32>
    %1129 = arith.addf %1126, %1128 : vector<2x4x8xf32>
    %c0_729 = arith.constant 0 : index
    %c0_730 = arith.constant 0 : index
    %c0_731 = arith.constant 0 : index
    %1130 = vector.load %arg14[%c0_729, %c0_730, %c0_731] : memref<2x4x8xf32, #tpu.memory_space<vmem>>, vector<2x4x8xf32>
    tpu.vector_store %arg14[%c0_729, %c0_730, %c0_731], %1129 {strides = array<i32>} : memref<2x4x8xf32, #tpu.memory_space<vmem>>, vector<2x4x8xf32>,
    return
  }
}

</mosaic_0001>

<llo_original>
// kernel: seq2seq_point_ce_forward.1
$region0: #{seq2seq_point_ce_forward.1}
  #allocation0 [shape = 'u32[]', space=smem, size = 0x4, offset = 0x4, fixed_abs, tag = 'smem constant byte address 0x4 - core index']
  #allocation1 [shape = 'u32[144,128]{1,0:T(1,128)}', space=vmem, size = 0x12000, scoped, tag = 'internal scratch']
  #allocation2 [shape = 'f32[1,1]{1,0:T(1,128)S(1)}', space=vmem, size = 0x200, scoped, tag = 'scoped memory for seq2seq_point_ce_forward.1']
  %s0 = inlined_call_operand.vmem [shape: f32[16,16], index: 0, kind: input, shape index: {}]
  %s1 = inlined_call_operand.vmem [shape: f32[16,16], index: 1, kind: input, shape index: {}]
  %s2 = inlined_call_operand.vmem [shape: f32[8,16], index: 2, kind: input, shape index: {}]
  %s3 = inlined_call_operand.vmem [shape: f32[3,3,16,32], index: 3, kind: input, shape index: {}]
  %s4 = inlined_call_operand.vmem [shape: f32[3,3,32,32], index: 4, kind: input, shape index: {}]
  %s5 = inlined_call_operand.vmem [shape: f32[3,3,1,32], index: 5, kind: input, shape index: {}]
  %s6 = inlined_call_operand.vmem [shape: f32[3,3,1,32], index: 6, kind: input, shape index: {}]
  %s7 = inlined_call_operand.vmem [shape: f32[32,32], index: 7, kind: input, shape index: {}]
  %s8 = inlined_call_operand.vmem [shape: f32[32,32], index: 8, kind: input, shape index: {}]
  %s9 = inlined_call_operand.vmem [shape: f32[1,32], index: 9, kind: input, shape index: {}]
  %s10 = inlined_call_operand.vmem [shape: f32[32,1], index: 10, kind: input, shape index: {}]
  %s11 = inlined_call_operand.vmem [shape: f32[32,1], index: 11, kind: input, shape index: {}]
  %s12 = inlined_call_operand.<no memory space> [shape: f32[1,1], index: 12, kind: input, shape index: {}]
  %s13 = inlined_call_operand.hbm [shape: f32[2,4,8], index: 13, kind: output, shape index: {0}]
  %s14 = inlined_call_operand.hbm [shape: f32[2,4,8], index: 14, kind: output, shape index: {1}]
  %15 = xla_tuple %s13, %s14
  %s16 = sld [smem:[#allocation0]]
  $region70: #{seq2seq_point_ce_forward.1} parent=0
    _
  %s18 = ssub.s32 1, %s16
  %s19 = scalar_select 0, %s18, %s16
  %v20 = vstv %s12
  %21 = vst [vmem:[#allocation2] sm:$0x1] %v20
  $region1: #{seq2seq_point_ce_forward.1} parent=0
    #allocation3 [shape = 'u8[4096]{0}', space=vmem, size = 0x1000, scoped, tag = 'output window, operand 0, single buffered']
    #allocation4 [shape = 's32[1]{0}', space=sflag, size = 0x4, scoped, tag = 'scoped memory for seq2seq_point_ce_forward.1']
    #allocation5 [shape = 'u8[4096]{0}', space=vmem, size = 0x1000, scoped, tag = 'output window, operand 1, single buffered']
    #allocation6 [shape = 's32[1]{0}', space=sflag, size = 0x4, scoped, tag = 'scoped memory for seq2seq_point_ce_forward.1']
    %22 = vsyncpa [#allocation4], 0
    %23 = vsyncpa [#allocation6], 0
    // Predicated region
    $region2: #{seq2seq_point_ce_forward.1} parent=1 // pred_check
      _
    $region3: #{seq2seq_point_ce_forward.1} parent=1 // pred_check_branch
      %25 = sbr.rel (0) target = $region5
    $region4: #{seq2seq_point_ce_forward.1} parent=1 // pred_region
      _
    $region5: #{seq2seq_point_ce_forward.1} parent=1 // pred_fallthru
      _
    // Predicated region
    $region6: #{seq2seq_point_ce_forward.1} parent=1 // pred_check
      _
    $region7: #{seq2seq_point_ce_forward.1} parent=1 // pred_check_branch
      %27 = sbr.rel (0) target = $region9
    $region8: #{seq2seq_point_ce_forward.1} parent=1 // pred_region
      _
    $region9: #{seq2seq_point_ce_forward.1} parent=1 // pred_fallthru
      _
    // Predicated region
    $region10: #{seq2seq_point_ce_forward.1} parent=1 // pred_check
      _
    $region11: #{seq2seq_point_ce_forward.1} parent=1 // pred_check_branch
      %29 = sbr.rel (0) target = $region13
    $region12: #{seq2seq_point_ce_forward.1} parent=1 // pred_region
      _
    $region13: #{seq2seq_point_ce_forward.1} parent=1 // pred_fallthru
      _
    // Predicated region
    $region14: #{seq2seq_point_ce_forward.1} parent=1 // pred_check
      _
    $region15: #{seq2seq_point_ce_forward.1} parent=1 // pred_check_branch
      %31 = sbr.rel (0) target = $region17
    $region16: #{seq2seq_point_ce_forward.1} parent=1 // pred_region
      _
    $region17: #{seq2seq_point_ce_forward.1} parent=1 // pred_fallthru
      _
    // Predicated region
    $region18: #{seq2seq_point_ce_forward.1} parent=1 // pred_check
      _
    $region19: #{seq2seq_point_ce_forward.1} parent=1 // pred_check_branch
      %33 = sbr.rel (0) target = $region21
    $region20: #{seq2seq_point_ce_forward.1} parent=1 // pred_region
      _
    $region21: #{seq2seq_point_ce_forward.1} parent=1 // pred_fallthru
      _
    // Predicated region
    $region22: #{seq2seq_point_ce_forward.1} parent=1 // pred_check
      _
    $region23: #{seq2seq_point_ce_forward.1} parent=1 // pred_check_branch
      %35 = sbr.rel (0) target = $region25
    $region24: #{seq2seq_point_ce_forward.1} parent=1 // pred_region
      _
    $region25: #{seq2seq_point_ce_forward.1} parent=1 // pred_fallthru
      _
    // Predicated region
    $region26: #{seq2seq_point_ce_forward.1} parent=1 // pred_check
      _
    $region27: #{seq2seq_point_ce_forward.1} parent=1 // pred_check_branch
      %37 = sbr.rel (0) target = $region29
    $region28: #{seq2seq_point_ce_forward.1} parent=1 // pred_region
      _
    $region29: #{seq2seq_point_ce_forward.1} parent=1 // pred_fallthru
      _
    // Predicated region
    $region30: #{seq2seq_point_ce_forward.1} parent=1 // pred_check
      _
    $region31: #{seq2seq_point_ce_forward.1} parent=1 // pred_check_branch
      %39 = sbr.rel (0) target = $region33
    $region32: #{seq2seq_point_ce_forward.1} parent=1 // pred_region
      _
    $region33: #{seq2seq_point_ce_forward.1} parent=1 // pred_fallthru
      _
    // Predicated region
    $region34: #{seq2seq_point_ce_forward.1} parent=1 // pred_check
      _
    $region35: #{seq2seq_point_ce_forward.1} parent=1 // pred_check_branch
      %41 = sbr.rel (0) target = $region37
    $region36: #{seq2seq_point_ce_forward.1} parent=1 // pred_region
      _
    $region37: #{seq2seq_point_ce_forward.1} parent=1 // pred_fallthru
      _
    // Predicated region
    $region38: #{seq2seq_point_ce_forward.1} parent=1 // pred_check
      _
    $region39: #{seq2seq_point_ce_forward.1} parent=1 // pred_check_branch
      %43 = sbr.rel (0) target = $region41
    $region40: #{seq2seq_point_ce_forward.1} parent=1 // pred_region
      _
    $region41: #{seq2seq_point_ce_forward.1} parent=1 // pred_fallthru
      _
    // Predicated region
    $region42: #{seq2seq_point_ce_forward.1} parent=1 // pred_check
      _
    $region43: #{seq2seq_point_ce_forward.1} parent=1 // pred_check_branch
      %45 = sbr.rel (0) target = $region45
    $region44: #{seq2seq_point_ce_forward.1} parent=1 // pred_region
      _
    $region45: #{seq2seq_point_ce_forward.1} parent=1 // pred_fallthru
      _
    // Predicated region
    $region46: #{seq2seq_point_ce_forward.1} parent=1 // pred_check
      _
    $region47: #{seq2seq_point_ce_forward.1} parent=1 // pred_check_branch
      %47 = sbr.rel (0) target = $region49
    $region48: #{seq2seq_point_ce_forward.1} parent=1 // pred_region
      _
    $region49: #{seq2seq_point_ce_forward.1} parent=1 // pred_fallthru
      _
    // Predicated region
    $region50: #{seq2seq_point_ce_forward.1} parent=1 // pred_check
      _
    $region51: #{seq2seq_point_ce_forward.1} parent=1 // pred_check_branch
      %49 = sbr.rel (0) target = $region53
    $region52: #{seq2seq_point_ce_forward.1} parent=1 // pred_region
      _
    $region53: #{seq2seq_point_ce_forward.1} parent=1 // pred_fallthru
      _
    %v50 = vld [vmem:[%s0] sm:$0xff]
    %v51 = vld [vmem:[%s0 + $0x8] sm:$0xff]
    %v52 = vld [vmem:[%s1] sm:$0xff]
    %v53 = vld [vmem:[%s1 + $0x8] sm:$0xff]
    %v54 = vld [vmem:[%s2] sm:$0xff]
    %v55 = vld [vmem:[%s3] sm:$0xff]
    %v56 = vld [vmem:[%s3 + $0x8] sm:$0xff]
    %v57 = vld [vmem:[%s5] sm:$0x1]
    %v59 = vlaneseq
    %v60 = vshrl.u32 %v59, 7
    %v61 = vsub.s32 0, %v60
    %v62 = vrot.slane %v57, %v61
    %vm64 = vcmask 130048
    %v66 = vsel %vm64, %v50, 0
    %v69 = vsel %vm64, %v51, 0
    %71 = vmatprep.subr.mxu0 0.0
    %72 = vmatpush1.msra.mxu0 %v55
    %73 = vmatprep.subr.mxu0 0.0
    %74 = vmatpush1.msra.mxu0 %v56
    %75 = vmatprep.subr.mxu0 0.0
    %76 = vmatpush1.msra.mxu0 0.0
    %77 = vmatprep.subr.mxu0 0.0
    %78 = vmatpush1.msra.mxu0 0.0
    %79 = vmatprep.subr.mxu0 0.0
    %80 = vmatpush1.msra.mxu0 0.0
    %81 = vmatprep.subr.mxu0 0.0
    %82 = vmatpush1.msra.mxu0 0.0
    %83 = vmatprep.subr.mxu0 0.0
    %84 = vmatpush1.msra.mxu0 0.0
    %85 = vmatprep.subr.mxu0 0.0
    %86 = vmatpush1.msra.mxu0 0.0
    %87 = vmatprep.subr.mxu0 0.0
    %88 = vmatpush1.msra.mxu0 0.0
    %89 = vmatprep.subr.mxu0 0.0
    %90 = vmatpush1.msra.mxu0 0.0
    %91 = vmatprep.subr.mxu0 0.0
    %92 = vmatpush1.msra.mxu0 0.0
    %93 = vmatprep.subr.mxu0 0.0
    %94 = vmatpush1.msra.mxu0 0.0
    %95 = vmatprep.subr.mxu0 0.0
    %96 = vmatpush1.msra.mxu0 0.0
    %97 = vmatprep.subr.mxu0 0.0
    %98 = vmatpush1.msra.mxu0 0.0
    %99 = vmatprep.subr.mxu0 0.0
    %100 = vmatpush1.msra.mxu0 0.0
    %101 = vmatprep.subr.mxu0 0.0
    %102 = vmatpush1.msra.mxu0 0.0
    %103 = vmatprep.subr.mxu0 0.0
    %104 = vmatpush1.msra.mxu0 0.0
    %105 = vmatprep.subr.mxu0 0.0
    %106 = vmatpush1.msra.mxu0 0.0
    %107 = vmatprep.subr.mxu0 0.0
    %108 = vmatpush1.msra.mxu0 0.0
    %109 = vmatprep.subr.mxu0 0.0
    %110 = vmatpush1.msra.mxu0 0.0
    %111 = vmatprep.subr.mxu0 0.0
    %112 = vmatpush1.msra.mxu0 0.0
    %113 = vmatprep.subr.mxu0 0.0
    %114 = vmatpush1.msra.mxu0 0.0
    %115 = vmatprep.subr.mxu0 0.0
    %116 = vmatpush1.msra.mxu0 0.0
    %117 = vmatprep.subr.mxu0 0.0
    %118 = vmatpush1.msra.mxu0 0.0
    %119 = vmatprep.subr.mxu0 0.0
    %120 = vmatpush1.msra.mxu0 0.0
    %121 = vmatprep.subr.mxu0 0.0
    %122 = vmatpush1.msra.mxu0 0.0
    %123 = vmatprep.subr.mxu0 0.0
    %124 = vmatpush1.msra.mxu0 0.0
    %125 = vmatprep.subr.mxu0 0.0
    %126 = vmatpush1.msra.mxu0 0.0
    %127 = vmatprep.subr.mxu0 0.0
    %128 = vmatpush1.msra.mxu0 0.0
    %129 = vmatprep.subr.mxu0 0.0
    %130 = vmatpush1.msra.mxu0 0.0
    %131 = vmatprep.subr.mxu0 0.0
    %132 = vmatpush1.msra.mxu0 0.0
    %133 = vmatprep.subr.mxu0 0.0
    %134 = vmatpush1.msra.mxu0 0.0
    %135 = vmatprep.mubr.f32.mxu0 0.0
    %136 = vmatmul.mubr.f32.gmra.mrb[0].mxu0 %v66
    %v137 = vpop.f32.mrb[0].mxu0
    %v138 = vadd.f32 %v62, %v137
    %v139 = vpop.f32.mrb[0].mxu0
    %140 = vmatprep.mubr.f32.mxu0 0.0
    %141 = vmatmul.mubr.f32.gmra.mrb[0].mxu0 %v69
    %v142 = vpop.f32.mrb[0].mxu0
    %v143 = vadd.f32 %v62, %v142
    %v144 = vpop.f32.mrb[0].mxu0
    %145 = vdwg.mxu0
    %s146 = scalar_lea.vmem %s3, 16
    %v147 = vld [vmem:[%s146] sm:$0xff]
    %v148 = vld [vmem:[%s146 + $0x8] sm:$0xff]
    %s149 = scalar_lea.vmem %s5, 1
    %v150 = vld [vmem:[%s149] sm:$0x1]
    %v152 = vlaneseq
    %v153 = vshrl.u32 %v152, 7
    %v154 = vsub.s32 0, %v153
    %v155 = vrot.slane %v150, %v154
    %157 = vmatprep.subr.mxu0 0.0
    %158 = vmatpush1.msra.mxu0 %v147
    %159 = vmatprep.subr.mxu0 0.0
    %160 = vmatpush1.msra.mxu0 %v148
    %161 = vmatprep.subr.mxu0 0.0
    %162 = vmatpush1.msra.mxu0 0.0
    %163 = vmatprep.subr.mxu0 0.0
    %164 = vmatpush1.msra.mxu0 0.0
    %165 = vmatprep.subr.mxu0 0.0
    %166 = vmatpush1.msra.mxu0 0.0
    %167 = vmatprep.subr.mxu0 0.0
    %168 = vmatpush1.msra.mxu0 0.0
    %169 = vmatprep.subr.mxu0 0.0
    %170 = vmatpush1.msra.mxu0 0.0
    %171 = vmatprep.subr.mxu0 0.0
    %172 = vmatpush1.msra.mxu0 0.0
    %173 = vmatprep.subr.mxu0 0.0
    %174 = vmatpush1.msra.mxu0 0.0
    %175 = vmatprep.subr.mxu0 0.0
    %176 = vmatpush1.msra.mxu0 0.0
    %177 = vmatprep.subr.mxu0 0.0
    %178 = vmatpush1.msra.mxu0 0.0
    %179 = vmatprep.subr.mxu0 0.0
    %180 = vmatpush1.msra.mxu0 0.0
    %181 = vmatprep.subr.mxu0 0.0
    %182 = vmatpush1.msra.mxu0 0.0
    %183 = vmatprep.subr.mxu0 0.0
    %184 = vmatpush1.msra.mxu0 0.0
    %185 = vmatprep.subr.mxu0 0.0
    %186 = vmatpush1.msra.mxu0 0.0
    %187 = vmatprep.subr.mxu0 0.0
    %188 = vmatpush1.msra.mxu0 0.0
    %189 = vmatprep.subr.mxu0 0.0
    %190 = vmatpush1.msra.mxu0 0.0
    %191 = vmatprep.subr.mxu0 0.0
    %192 = vmatpush1.msra.mxu0 0.0
    %193 = vmatprep.subr.mxu0 0.0
    %194 = vmatpush1.msra.mxu0 0.0
    %195 = vmatprep.subr.mxu0 0.0
    %196 = vmatpush1.msra.mxu0 0.0
    %197 = vmatprep.subr.mxu0 0.0
    %198 = vmatpush1.msra.mxu0 0.0
    %199 = vmatprep.subr.mxu0 0.0
    %200 = vmatpush1.msra.mxu0 0.0
    %201 = vmatprep.subr.mxu0 0.0
    %202 = vmatpush1.msra.mxu0 0.0
    %203 = vmatprep.subr.mxu0 0.0
    %204 = vmatpush1.msra.mxu0 0.0
    %205 = vmatprep.subr.mxu0 0.0
    %206 = vmatpush1.msra.mxu0 0.0
    %207 = vmatprep.subr.mxu0 0.0
    %208 = vmatpush1.msra.mxu0 0.0
    %209 = vmatprep.subr.mxu0 0.0
    %210 = vmatpush1.msra.mxu0 0.0
    %211 = vmatprep.subr.mxu0 0.0
    %212 = vmatpush1.msra.mxu0 0.0
    %213 = vmatprep.subr.mxu0 0.0
    %214 = vmatpush1.msra.mxu0 0.0
    %215 = vmatprep.subr.mxu0 0.0
    %216 = vmatpush1.msra.mxu0 0.0
    %217 = vmatprep.subr.mxu0 0.0
    %218 = vmatpush1.msra.mxu0 0.0
    %219 = vmatprep.subr.mxu0 0.0
    %220 = vmatpush1.msra.mxu0 0.0
    %221 = vmatprep.mubr.f32.mxu0 0.0
    %222 = vmatmul.mubr.f32.gmra.mrb[0].mxu0 %v66
    %v223 = vpop.f32.mrb[0].mxu0
    %v224 = vadd.f32 %v155, %v223
    %v225 = vpop.f32.mrb[0].mxu0
    %226 = vmatprep.mubr.f32.mxu0 0.0
    %227 = vmatmul.mubr.f32.gmra.mrb[0].mxu0 %v69
    %v228 = vpop.f32.mrb[0].mxu0
    %v229 = vadd.f32 %v155, %v228
    %v230 = vpop.f32.mrb[0].mxu0
    %231 = vdwg.mxu0
    %s232 = scalar_lea.vmem %s3, 32
    %v233 = vld [vmem:[%s232] sm:$0xff]
    %v234 = vld [vmem:[%s232 + $0x8] sm:$0xff]
    %s235 = scalar_lea.vmem %s5, 2
    %v236 = vld [vmem:[%s235] sm:$0x1]
    %v238 = vlaneseq
    %v239 = vshrl.u32 %v238, 7
    %v240 = vsub.s32 0, %v239
    %v241 = vrot.slane %v236, %v240
    %243 = vmatprep.subr.mxu0 0.0
    %244 = vmatpush1.msra.mxu0 %v233
    %245 = vmatprep.subr.mxu0 0.0
    %246 = vmatpush1.msra.mxu0 %v234
    %247 = vmatprep.subr.mxu0 0.0
    %248 = vmatpush1.msra.mxu0 0.0
    %249 = vmatprep.subr.mxu0 0.0
    %250 = vmatpush1.msra.mxu0 0.0
    %251 = vmatprep.subr.mxu0 0.0
    %252 = vmatpush1.msra.mxu0 0.0
    %253 = vmatprep.subr.mxu0 0.0
    %254 = vmatpush1.msra.mxu0 0.0
    %255 = vmatprep.subr.mxu0 0.0
    %256 = vmatpush1.msra.mxu0 0.0
    %257 = vmatprep.subr.mxu0 0.0
    %258 = vmatpush1.msra.mxu0 0.0
    %259 = vmatprep.subr.mxu0 0.0
    %260 = vmatpush1.msra.mxu0 0.0
    %261 = vmatprep.subr.mxu0 0.0
    %262 = vmatpush1.msra.mxu0 0.0
    %263 = vmatprep.subr.mxu0 0.0
    %264 = vmatpush1.msra.mxu0 0.0
    %265 = vmatprep.subr.mxu0 0.0
    %266 = vmatpush1.msra.mxu0 0.0
    %267 = vmatprep.subr.mxu0 0.0
    %268 = vmatpush1.msra.mxu0 0.0
    %269 = vmatprep.subr.mxu0 0.0
    %270 = vmatpush1.msra.mxu0 0.0
    %271 = vmatprep.subr.mxu0 0.0
    %272 = vmatpush1.msra.mxu0 0.0
    %273 = vmatprep.subr.mxu0 0.0
    %274 = vmatpush1.msra.mxu0 0.0
    %275 = vmatprep.subr.mxu0 0.0
    %276 = vmatpush1.msra.mxu0 0.0
    %277 = vmatprep.subr.mxu0 0.0
    %278 = vmatpush1.msra.mxu0 0.0
    %279 = vmatprep.subr.mxu0 0.0
    %280 = vmatpush1.msra.mxu0 0.0
    %281 = vmatprep.subr.mxu0 0.0
    %282 = vmatpush1.msra.mxu0 0.0
    %283 = vmatprep.subr.mxu0 0.0
    %284 = vmatpush1.msra.mxu0 0.0
    %285 = vmatprep.subr.mxu0 0.0
    %286 = vmatpush1.msra.mxu0 0.0
    %287 = vmatprep.subr.mxu0 0.0
    %288 = vmatpush1.msra.mxu0 0.0
    %289 = vmatprep.subr.mxu0 0.0
    %290 = vmatpush1.msra.mxu0 0.0
    %291 = vmatprep.subr.mxu0 0.0
    %292 = vmatpush1.msra.mxu0 0.0
    %293 = vmatprep.subr.mxu0 0.0
    %294 = vmatpush1.msra.mxu0 0.0
    %295 = vmatprep.subr.mxu0 0.0
    %296 = vmatpush1.msra.mxu0 0.0
    %297 = vmatprep.subr.mxu0 0.0
    %298 = vmatpush1.msra.mxu0 0.0
    %299 = vmatprep.subr.mxu0 0.0
    %300 = vmatpush1.msra.mxu0 0.0
    %301 = vmatprep.subr.mxu0 0.0
    %302 = vmatpush1.msra.mxu0 0.0
    %303 = vmatprep.subr.mxu0 0.0
    %304 = vmatpush1.msra.mxu0 0.0
    %305 = vmatprep.subr.mxu0 0.0
    %306 = vmatpush1.msra.mxu0 0.0
    %307 = vmatprep.mubr.f32.mxu0 0.0
    %308 = vmatmul.mubr.f32.gmra.mrb[0].mxu0 %v66
    %v309 = vpop.f32.mrb[0].mxu0
    %v310 = vadd.f32 %v241, %v309
    %v311 = vpop.f32.mrb[0].mxu0
    %312 = vmatprep.mubr.f32.mxu0 0.0
    %313 = vmatmul.mubr.f32.gmra.mrb[0].mxu0 %v69
    %v314 = vpop.f32.mrb[0].mxu0
    %v315 = vadd.f32 %v241, %v314
    %v316 = vpop.f32.mrb[0].mxu0
    %317 = vdwg.mxu0
    %s318 = scalar_lea.vmem %s3, 48
    %v319 = vld [vmem:[%s318] sm:$0xff]
    %v320 = vld [vmem:[%s318 + $0x8] sm:$0xff]
    %s321 = scalar_lea.vmem %s5, 3
    %v322 = vld [vmem:[%s321] sm:$0x1]
    %v324 = vlaneseq
    %v325 = vshrl.u32 %v324, 7
    %v326 = vsub.s32 0, %v325
    %v327 = vrot.slane %v322, %v326
    %v330 = vsel %vm64, %v52, 0
    %v333 = vsel %vm64, %v53, 0
    %335 = vmatprep.subr.mxu0 0.0
    %336 = vmatpush1.msra.mxu0 %v319
    %337 = vmatprep.subr.mxu0 0.0
    %338 = vmatpush1.msra.mxu0 %v320
    %339 = vmatprep.subr.mxu0 0.0
    %340 = vmatpush1.msra.mxu0 0.0
    %341 = vmatprep.subr.mxu0 0.0
    %342 = vmatpush1.msra.mxu0 0.0
    %343 = vmatprep.subr.mxu0 0.0
    %344 = vmatpush1.msra.mxu0 0.0
    %345 = vmatprep.subr.mxu0 0.0
    %346 = vmatpush1.msra.mxu0 0.0
    %347 = vmatprep.subr.mxu0 0.0
    %348 = vmatpush1.msra.mxu0 0.0
    %349 = vmatprep.subr.mxu0 0.0
    %350 = vmatpush1.msra.mxu0 0.0
    %351 = vmatprep.subr.mxu0 0.0
    %352 = vmatpush1.msra.mxu0 0.0
    %353 = vmatprep.subr.mxu0 0.0
    %354 = vmatpush1.msra.mxu0 0.0
    %355 = vmatprep.subr.mxu0 0.0
    %356 = vmatpush1.msra.mxu0 0.0
    %357 = vmatprep.subr.mxu0 0.0
    %358 = vmatpush1.msra.mxu0 0.0
    %359 = vmatprep.subr.mxu0 0.0
    %360 = vmatpush1.msra.mxu0 0.0
    %361 = vmatprep.subr.mxu0 0.0
    %362 = vmatpush1.msra.mxu0 0.0
    %363 = vmatprep.subr.mxu0 0.0
    %364 = vmatpush1.msra.mxu0 0.0
    %365 = vmatprep.subr.mxu0 0.0
    %366 = vmatpush1.msra.mxu0 0.0
    %367 = vmatprep.subr.mxu0 0.0
    %368 = vmatpush1.msra.mxu0 0.0
    %369 = vmatprep.subr.mxu0 0.0
    %370 = vmatpush1.msra.mxu0 0.0
    %371 = vmatprep.subr.mxu0 0.0
    %372 = vmatpush1.msra.mxu0 0.0
    %373 = vmatprep.subr.mxu0 0.0
    %374 = vmatpush1.msra.mxu0 0.0
    %375 = vmatprep.subr.mxu0 0.0
    %376 = vmatpush1.msra.mxu0 0.0
    %377 = vmatprep.subr.mxu0 0.0
    %378 = vmatpush1.msra.mxu0 0.0
    %379 = vmatprep.subr.mxu0 0.0
    %380 = vmatpush1.msra.mxu0 0.0
    %381 = vmatprep.subr.mxu0 0.0
    %382 = vmatpush1.msra.mxu0 0.0
    %383 = vmatprep.subr.mxu0 0.0
    %384 = vmatpush1.msra.mxu0 0.0
    %385 = vmatprep.subr.mxu0 0.0
    %386 = vmatpush1.msra.mxu0 0.0
    %387 = vmatprep.subr.mxu0 0.0
    %388 = vmatpush1.msra.mxu0 0.0
    %389 = vmatprep.subr.mxu0 0.0
    %390 = vmatpush1.msra.mxu0 0.0
    %391 = vmatprep.subr.mxu0 0.0
    %392 = vmatpush1.msra.mxu0 0.0
    %393 = vmatprep.subr.mxu0 0.0
    %394 = vmatpush1.msra.mxu0 0.0
    %395 = vmatprep.subr.mxu0 0.0
    %396 = vmatpush1.msra.mxu0 0.0
    %397 = vmatprep.subr.mxu0 0.0
    %398 = vmatpush1.msra.mxu0 0.0
    %399 = vmatprep.mubr.f32.mxu0 0.0
    %400 = vmatmul.mubr.f32.gmra.mrb[0].mxu0 %v330
    %v401 = vpop.f32.mrb[0].mxu0
    %v402 = vadd.f32 %v327, %v401
    %v403 = vpop.f32.mrb[0].mxu0
    %404 = vmatprep.mubr.f32.mxu0 0.0
    %405 = vmatmul.mubr.f32.gmra.mrb[0].mxu0 %v333
    %v406 = vpop.f32.mrb[0].mxu0
    %v407 = vadd.f32 %v327, %v406
    %v408 = vpop.f32.mrb[0].mxu0
    %409 = vdwg.mxu0
    %s410 = scalar_lea.vmem %s3, 64
    %v411 = vld [vmem:[%s410] sm:$0xff]
    %v412 = vld [vmem:[%s410 + $0x8] sm:$0xff]
    %s413 = scalar_lea.vmem %s5, 4
    %v414 = vld [vmem:[%s413] sm:$0x1]
    %v416 = vlaneseq
    %v417 = vshrl.u32 %v416, 7
    %v418 = vsub.s32 0, %v417
    %v419 = vrot.slane %v414, %v418
    %421 = vmatprep.subr.mxu0 0.0
    %422 = vmatpush1.msra.mxu0 %v411
    %423 = vmatprep.subr.mxu0 0.0
    %424 = vmatpush1.msra.mxu0 %v412
    %425 = vmatprep.subr.mxu0 0.0
    %426 = vmatpush1.msra.mxu0 0.0
    %427 = vmatprep.subr.mxu0 0.0
    %428 = vmatpush1.msra.mxu0 0.0
    %429 = vmatprep.subr.mxu0 0.0
    %430 = vmatpush1.msra.mxu0 0.0
    %431 = vmatprep.subr.mxu0 0.0
    %432 = vmatpush1.msra.mxu0 0.0
    %433 = vmatprep.subr.mxu0 0.0
    %434 = vmatpush1.msra.mxu0 0.0
    %435 = vmatprep.subr.mxu0 0.0
    %436 = vmatpush1.msra.mxu0 0.0
    %437 = vmatprep.subr.mxu0 0.0
    %438 = vmatpush1.msra.mxu0 0.0
    %439 = vmatprep.subr.mxu0 0.0
    %440 = vmatpush1.msra.mxu0 0.0
    %441 = vmatprep.subr.mxu0 0.0
    %442 = vmatpush1.msra.mxu0 0.0
    %443 = vmatprep.subr.mxu0 0.0
    %444 = vmatpush1.msra.mxu0 0.0
    %445 = vmatprep.subr.mxu0 0.0
    %446 = vmatpush1.msra.mxu0 0.0
    %447 = vmatprep.subr.mxu0 0.0
    %448 = vmatpush1.msra.mxu0 0.0
    %449 = vmatprep.subr.mxu0 0.0
    %450 = vmatpush1.msra.mxu0 0.0
    %451 = vmatprep.subr.mxu0 0.0
    %452 = vmatpush1.msra.mxu0 0.0
    %453 = vmatprep.subr.mxu0 0.0
    %454 = vmatpush1.msra.mxu0 0.0
    %455 = vmatprep.subr.mxu0 0.0
    %456 = vmatpush1.msra.mxu0 0.0
    %457 = vmatprep.subr.mxu0 0.0
    %458 = vmatpush1.msra.mxu0 0.0
    %459 = vmatprep.subr.mxu0 0.0
    %460 = vmatpush1.msra.mxu0 0.0
    %461 = vmatprep.subr.mxu0 0.0
    %462 = vmatpush1.msra.mxu0 0.0
    %463 = vmatprep.subr.mxu0 0.0
    %464 = vmatpush1.msra.mxu0 0.0
    %465 = vmatprep.subr.mxu0 0.0
    %466 = vmatpush1.msra.mxu0 0.0
    %467 = vmatprep.subr.mxu0 0.0
    %468 = vmatpush1.msra.mxu0 0.0
    %469 = vmatprep.subr.mxu0 0.0
    %470 = vmatpush1.msra.mxu0 0.0
    %471 = vmatprep.subr.mxu0 0.0
    %472 = vmatpush1.msra.mxu0 0.0
    %473 = vmatprep.subr.mxu0 0.0
    %474 = vmatpush1.msra.mxu0 0.0
    %475 = vmatprep.subr.mxu0 0.0
    %476 = vmatpush1.msra.mxu0 0.0
    %477 = vmatprep.subr.mxu0 0.0
    %478 = vmatpush1.msra.mxu0 0.0
    %479 = vmatprep.subr.mxu0 0.0
    %480 = vmatpush1.msra.mxu0 0.0
    %481 = vmatprep.subr.mxu0 0.0
    %482 = vmatpush1.msra.mxu0 0.0
    %483 = vmatprep.subr.mxu0 0.0
    %484 = vmatpush1.msra.mxu0 0.0
    %485 = vmatprep.mubr.f32.mxu0 0.0
    %486 = vmatmul.mubr.f32.gmra.mrb[0].mxu0 %v330
    %v487 = vpop.f32.mrb[0].mxu0
    %v488 = vadd.f32 %v419, %v487
    %v489 = vpop.f32.mrb[0].mxu0
    %490 = vmatprep.mubr.f32.mxu0 0.0
    %491 = vmatmul.mubr.f32.gmra.mrb[0].mxu0 %v333
    %v492 = vpop.f32.mrb[0].mxu0
    %v493 = vadd.f32 %v419, %v492
    %v494 = vpop.f32.mrb[0].mxu0
    %495 = vdwg.mxu0
    %s496 = scalar_lea.vmem %s3, 80
    %v497 = vld [vmem:[%s496] sm:$0xff]
    %v498 = vld [vmem:[%s496 + $0x8] sm:$0xff]
    %s499 = scalar_lea.vmem %s5, 5
    %v500 = vld [vmem:[%s499] sm:$0x1]
    %v502 = vlaneseq
    %v503 = vshrl.u32 %v502, 7
    %v504 = vsub.s32 0, %v503
    %v505 = vrot.slane %v500, %v504
    %507 = vmatprep.subr.mxu0 0.0
    %508 = vmatpush1.msra.mxu0 %v497
    %509 = vmatprep.subr.mxu0 0.0
    %510 = vmatpush1.msra.mxu0 %v498
    %511 = vmatprep.subr.mxu0 0.0
    %512 = vmatpush1.msra.mxu0 0.0
    %513 = vmatprep.subr.mxu0 0.0
    %514 = vmatpush1.msra.mxu0 0.0
    %515 = vmatprep.subr.mxu0 0.0
    %516 = vmatpush1.msra.mxu0 0.0
    %517 = vmatprep.subr.mxu0 0.0
    %518 = vmatpush1.msra.mxu0 0.0
    %519 = vmatprep.subr.mxu0 0.0
    %520 = vmatpush1.msra.mxu0 0.0
    %521 = vmatprep.subr.mxu0 0.0
    %522 = vmatpush1.msra.mxu0 0.0
    %523 = vmatprep.subr.mxu0 0.0
    %524 = vmatpush1.msra.mxu0 0.0
    %525 = vmatprep.subr.mxu0 0.0
    %526 = vmatpush1.msra.mxu0 0.0
    %527 = vmatprep.subr.mxu0 0.0
    %528 = vmatpush1.msra.mxu0 0.0
    %529 = vmatprep.subr.mxu0 0.0
    %530 = vmatpush1.msra.mxu0 0.0
    %531 = vmatprep.subr.mxu0 0.0
    %532 = vmatpush1.msra.mxu0 0.0
    %533 = vmatprep.subr.mxu0 0.0
    %534 = vmatpush1.msra.mxu0 0.0
    %535 = vmatprep.subr.mxu0 0.0
    %536 = vmatpush1.msra.mxu0 0.0
    %537 = vmatprep.subr.mxu0 0.0
    %538 = vmatpush1.msra.mxu0 0.0
    %539 = vmatprep.subr.mxu0 0.0
    %540 = vmatpush1.msra.mxu0 0.0
    %541 = vmatprep.subr.mxu0 0.0
    %542 = vmatpush1.msra.mxu0 0.0
    %543 = vmatprep.subr.mxu0 0.0
    %544 = vmatpush1.msra.mxu0 0.0
    %545 = vmatprep.subr.mxu0 0.0
    %546 = vmatpush1.msra.mxu0 0.0
    %547 = vmatprep.subr.mxu0 0.0
    %548 = vmatpush1.msra.mxu0 0.0
    %549 = vmatprep.subr.mxu0 0.0
    %550 = vmatpush1.msra.mxu0 0.0
    %551 = vmatprep.subr.mxu0 0.0
    %552 = vmatpush1.msra.mxu0 0.0
    %553 = vmatprep.subr.mxu0 0.0
    %554 = vmatpush1.msra.mxu0 0.0
    %555 = vmatprep.subr.mxu0 0.0
    %556 = vmatpush1.msra.mxu0 0.0
    %557 = vmatprep.subr.mxu0 0.0
    %558 = vmatpush1.msra.mxu0 0.0
    %559 = vmatprep.subr.mxu0 0.0
    %560 = vmatpush1.msra.mxu0 0.0
    %561 = vmatprep.subr.mxu0 0.0
    %562 = vmatpush1.msra.mxu0 0.0
    %563 = vmatprep.subr.mxu0 0.0
    %564 = vmatpush1.msra.mxu0 0.0
    %565 = vmatprep.subr.mxu0 0.0
    %566 = vmatpush1.msra.mxu0 0.0
    %567 = vmatprep.subr.mxu0 0.0
    %568 = vmatpush1.msra.mxu0 0.0
    %569 = vmatprep.subr.mxu0 0.0
    %570 = vmatpush1.msra.mxu0 0.0
    %571 = vmatprep.mubr.f32.mxu0 0.0
    %572 = vmatmul.mubr.f32.gmra.mrb[0].mxu0 %v330
    %v573 = vpop.f32.mrb[0].mxu0
    %v574 = vadd.f32 %v505, %v573
    %v575 = vpop.f32.mrb[0].mxu0
    %576 = vmatprep.mubr.f32.mxu0 0.0
    %577 = vmatmul.mubr.f32.gmra.mrb[0].mxu0 %v333
    %v578 = vpop.f32.mrb[0].mxu0
    %v579 = vadd.f32 %v505, %v578
    %v580 = vpop.f32.mrb[0].mxu0
    %581 = vdwg.mxu0
    %s582 = scalar_lea.vmem %s3, 96
    %v583 = vld [vmem:[%s582] sm:$0xff]
    %v584 = vld [vmem:[%s582 + $0x8] sm:$0xff]
    %s585 = scalar_lea.vmem %s5, 6
    %v586 = vld [vmem:[%s585] sm:$0x1]
    %v588 = vlaneseq
    %v589 = vshrl.u32 %v588, 7
    %v590 = vsub.s32 0, %v589
    %v591 = vrot.slane %v586, %v590
    %v594 = vsel %vm64, %v54, 0
    %596 = vmatprep.subr.mxu0 0.0
    %597 = vmatpush1.msra.mxu0 %v583
    %598 = vmatprep.subr.mxu0 0.0
    %599 = vmatpush1.msra.mxu0 %v584
    %600 = vmatprep.subr.mxu0 0.0
    %601 = vmatpush1.msra.mxu0 0.0
    %602 = vmatprep.subr.mxu0 0.0
    %603 = vmatpush1.msra.mxu0 0.0
    %604 = vmatprep.subr.mxu0 0.0
    %605 = vmatpush1.msra.mxu0 0.0
    %606 = vmatprep.subr.mxu0 0.0
    %607 = vmatpush1.msra.mxu0 0.0
    %608 = vmatprep.subr.mxu0 0.0
    %609 = vmatpush1.msra.mxu0 0.0
    %610 = vmatprep.subr.mxu0 0.0
    %611 = vmatpush1.msra.mxu0 0.0
    %612 = vmatprep.subr.mxu0 0.0
    %613 = vmatpush1.msra.mxu0 0.0
    %614 = vmatprep.subr.mxu0 0.0
    %615 = vmatpush1.msra.mxu0 0.0
    %616 = vmatprep.subr.mxu0 0.0
    %617 = vmatpush1.msra.mxu0 0.0
    %618 = vmatprep.subr.mxu0 0.0
    %619 = vmatpush1.msra.mxu0 0.0
    %620 = vmatprep.subr.mxu0 0.0
    %621 = vmatpush1.msra.mxu0 0.0
    %622 = vmatprep.subr.mxu0 0.0
    %623 = vmatpush1.msra.mxu0 0.0
    %624 = vmatprep.subr.mxu0 0.0
    %625 = vmatpush1.msra.mxu0 0.0
    %626 = vmatprep.subr.mxu0 0.0
    %627 = vmatpush1.msra.mxu0 0.0
    %628 = vmatprep.subr.mxu0 0.0
    %629 = vmatpush1.msra.mxu0 0.0
    %630 = vmatprep.subr.mxu0 0.0
    %631 = vmatpush1.msra.mxu0 0.0
    %632 = vmatprep.subr.mxu0 0.0
    %633 = vmatpush1.msra.mxu0 0.0
    %634 = vmatprep.subr.mxu0 0.0
    %635 = vmatpush1.msra.mxu0 0.0
    %636 = vmatprep.subr.mxu0 0.0
    %637 = vmatpush1.msra.mxu0 0.0
    %638 = vmatprep.subr.mxu0 0.0
    %639 = vmatpush1.msra.mxu0 0.0
    %640 = vmatprep.subr.mxu0 0.0
    %641 = vmatpush1.msra.mxu0 0.0
    %642 = vmatprep.subr.mxu0 0.0
    %643 = vmatpush1.msra.mxu0 0.0
    %644 = vmatprep.subr.mxu0 0.0
    %645 = vmatpush1.msra.mxu0 0.0
    %646 = vmatprep.subr.mxu0 0.0
    %647 = vmatpush1.msra.mxu0 0.0
    %648 = vmatprep.subr.mxu0 0.0
    %649 = vmatpush1.msra.mxu0 0.0
    %650 = vmatprep.subr.mxu0 0.0
    %651 = vmatpush1.msra.mxu0 0.0
    %652 = vmatprep.subr.mxu0 0.0
    %653 = vmatpush1.msra.mxu0 0.0
    %654 = vmatprep.subr.mxu0 0.0
    %655 = vmatpush1.msra.mxu0 0.0
    %656 = vmatprep.subr.mxu0 0.0
    %657 = vmatpush1.msra.mxu0 0.0
    %658 = vmatprep.subr.mxu0 0.0
    %659 = vmatpush1.msra.mxu0 0.0
    %660 = vmatprep.mubr.f32.mxu0 0.0
    %661 = vmatmul.mubr.f32.gmra.mrb[0].mxu0 %v594
    %v662 = vpop.f32.mrb[0].mxu0
    %v663 = vadd.f32 %v591, %v662
    %v664 = vpop.f32.mrb[0].mxu0
    %665 = vdwg.mxu0
    %s666 = scalar_lea.vmem %s3, 112
    %v667 = vld [vmem:[%s666] sm:$0xff]
    %v668 = vld [vmem:[%s666 + $0x8] sm:$0xff]
    %s669 = scalar_lea.vmem %s5, 7
    %v670 = vld [vmem:[%s669] sm:$0x1]
    %v672 = vlaneseq
    %v673 = vshrl.u32 %v672, 7
    %v674 = vsub.s32 0, %v673
    %v675 = vrot.slane %v670, %v674
    %677 = vmatprep.subr.mxu0 0.0
    %678 = vmatpush1.msra.mxu0 %v667
    %679 = vmatprep.subr.mxu0 0.0
    %680 = vmatpush1.msra.mxu0 %v668
    %681 = vmatprep.subr.mxu0 0.0
    %682 = vmatpush1.msra.mxu0 0.0
    %683 = vmatprep.subr.mxu0 0.0
    %684 = vmatpush1.msra.mxu0 0.0
    %685 = vmatprep.subr.mxu0 0.0
    %686 = vmatpush1.msra.mxu0 0.0
    %687 = vmatprep.subr.mxu0 0.0
    %688 = vmatpush1.msra.mxu0 0.0
    %689 = vmatprep.subr.mxu0 0.0
    %690 = vmatpush1.msra.mxu0 0.0
    %691 = vmatprep.subr.mxu0 0.0
    %692 = vmatpush1.msra.mxu0 0.0
    %693 = vmatprep.subr.mxu0 0.0
    %694 = vmatpush1.msra.mxu0 0.0
    %695 = vmatprep.subr.mxu0 0.0
    %696 = vmatpush1.msra.mxu0 0.0
    %697 = vmatprep.subr.mxu0 0.0
    %698 = vmatpush1.msra.mxu0 0.0
    %699 = vmatprep.subr.mxu0 0.0
    %700 = vmatpush1.msra.mxu0 0.0
    %701 = vmatprep.subr.mxu0 0.0
    %702 = vmatpush1.msra.mxu0 0.0
    %703 = vmatprep.subr.mxu0 0.0
    %704 = vmatpush1.msra.mxu0 0.0
    %705 = vmatprep.subr.mxu0 0.0
    %706 = vmatpush1.msra.mxu0 0.0
    %707 = vmatprep.subr.mxu0 0.0
    %708 = vmatpush1.msra.mxu0 0.0
    %709 = vmatprep.subr.mxu0 0.0
    %710 = vmatpush1.msra.mxu0 0.0
    %711 = vmatprep.subr.mxu0 0.0
    %712 = vmatpush1.msra.mxu0 0.0
    %713 = vmatprep.subr.mxu0 0.0
    %714 = vmatpush1.msra.mxu0 0.0
    %715 = vmatprep.subr.mxu0 0.0
    %716 = vmatpush1.msra.mxu0 0.0
    %717 = vmatprep.subr.mxu0 0.0
    %718 = vmatpush1.msra.mxu0 0.0
    %719 = vmatprep.subr.mxu0 0.0
    %720 = vmatpush1.msra.mxu0 0.0
    %721 = vmatprep.subr.mxu0 0.0
    %722 = vmatpush1.msra.mxu0 0.0
    %723 = vmatprep.subr.mxu0 0.0
    %724 = vmatpush1.msra.mxu0 0.0
    %725 = vmatprep.subr.mxu0 0.0
    %726 = vmatpush1.msra.mxu0 0.0
    %727 = vmatprep.subr.mxu0 0.0
    %728 = vmatpush1.msra.mxu0 0.0
    %729 = vmatprep.subr.mxu0 0.0
    %730 = vmatpush1.msra.mxu0 0.0
    %731 = vmatprep.subr.mxu0 0.0
    %732 = vmatpush1.msra.mxu0 0.0
    %733 = vmatprep.subr.mxu0 0.0
    %734 = vmatpush1.msra.mxu0 0.0
    %735 = vmatprep.subr.mxu0 0.0
    %736 = vmatpush1.msra.mxu0 0.0
    %737 = vmatprep.subr.mxu0 0.0
    %738 = vmatpush1.msra.mxu0 0.0
    %739 = vmatprep.subr.mxu0 0.0
    %740 = vmatpush1.msra.mxu0 0.0
    %741 = vmatprep.mubr.f32.mxu0 0.0
    %742 = vmatmul.mubr.f32.gmra.mrb[0].mxu0 %v594
    %v743 = vpop.f32.mrb[0].mxu0
    %v744 = vadd.f32 %v675, %v743
    %v745 = vpop.f32.mrb[0].mxu0
    %746 = vdwg.mxu0
    %s747 = scalar_lea.vmem %s3, 128
    %v748 = vld [vmem:[%s747] sm:$0xff]
    %v749 = vld [vmem:[%s747 + $0x8] sm:$0xff]
    %s750 = scalar_lea.vmem %s5, 8
    %v751 = vld [vmem:[%s750] sm:$0x1]
    %v753 = vlaneseq
    %v754 = vshrl.u32 %v753, 7
    %v755 = vsub.s32 0, %v754
    %v756 = vrot.slane %v751, %v755
    %758 = vmatprep.subr.mxu0 0.0
    %759 = vmatpush1.msra.mxu0 %v748
    %760 = vmatprep.subr.mxu0 0.0
    %761 = vmatpush1.msra.mxu0 %v749
    %762 = vmatprep.subr.mxu0 0.0
    %763 = vmatpush1.msra.mxu0 0.0
    %764 = vmatprep.subr.mxu0 0.0
    %765 = vmatpush1.msra.mxu0 0.0
    %766 = vmatprep.subr.mxu0 0.0
    %767 = vmatpush1.msra.mxu0 0.0
    %768 = vmatprep.subr.mxu0 0.0
    %769 = vmatpush1.msra.mxu0 0.0
    %770 = vmatprep.subr.mxu0 0.0
    %771 = vmatpush1.msra.mxu0 0.0
    %772 = vmatprep.subr.mxu0 0.0
    %773 = vmatpush1.msra.mxu0 0.0
    %774 = vmatprep.subr.mxu0 0.0
    %775 = vmatpush1.msra.mxu0 0.0
    %776 = vmatprep.subr.mxu0 0.0
    %777 = vmatpush1.msra.mxu0 0.0
    %778 = vmatprep.subr.mxu0 0.0
    %779 = vmatpush1.msra.mxu0 0.0
    %780 = vmatprep.subr.mxu0 0.0
    %781 = vmatpush1.msra.mxu0 0.0
    %782 = vmatprep.subr.mxu0 0.0
    %783 = vmatpush1.msra.mxu0 0.0
    %784 = vmatprep.subr.mxu0 0.0
    %785 = vmatpush1.msra.mxu0 0.0
    %786 = vmatprep.subr.mxu0 0.0
    %787 = vmatpush1.msra.mxu0 0.0
    %788 = vmatprep.subr.mxu0 0.0
    %789 = vmatpush1.msra.mxu0 0.0
    %790 = vmatprep.subr.mxu0 0.0
    %791 = vmatpush1.msra.mxu0 0.0
    %792 = vmatprep.subr.mxu0 0.0
    %793 = vmatpush1.msra.mxu0 0.0
    %794 = vmatprep.subr.mxu0 0.0
    %795 = vmatpush1.msra.mxu0 0.0
    %796 = vmatprep.subr.mxu0 0.0
    %797 = vmatpush1.msra.mxu0 0.0
    %798 = vmatprep.subr.mxu0 0.0
    %799 = vmatpush1.msra.mxu0 0.0
    %800 = vmatprep.subr.mxu0 0.0
    %801 = vmatpush1.msra.mxu0 0.0
    %802 = vmatprep.subr.mxu0 0.0
    %803 = vmatpush1.msra.mxu0 0.0
    %804 = vmatprep.subr.mxu0 0.0
    %805 = vmatpush1.msra.mxu0 0.0
    %806 = vmatprep.subr.mxu0 0.0
    %807 = vmatpush1.msra.mxu0 0.0
    %808 = vmatprep.subr.mxu0 0.0
    %809 = vmatpush1.msra.mxu0 0.0
    %810 = vmatprep.subr.mxu0 0.0
    %811 = vmatpush1.msra.mxu0 0.0
    %812 = vmatprep.subr.mxu0 0.0
    %813 = vmatpush1.msra.mxu0 0.0
    %814 = vmatprep.subr.mxu0 0.0
    %815 = vmatpush1.msra.mxu0 0.0
    %816 = vmatprep.subr.mxu0 0.0
    %817 = vmatpush1.msra.mxu0 0.0
    %818 = vmatprep.subr.mxu0 0.0
    %819 = vmatpush1.msra.mxu0 0.0
    %820 = vmatprep.subr.mxu0 0.0
    %821 = vmatpush1.msra.mxu0 0.0
    %822 = vmatprep.mubr.f32.mxu0 0.0
    %823 = vmatmul.mubr.f32.gmra.mrb[0].mxu0 %v594
    %v824 = vpop.f32.mrb[0].mxu0
    %v825 = vadd.f32 %v756, %v824
    %v826 = vpop.f32.mrb[0].mxu0
    %827 = vdwg.mxu0
    %v828 = vld [vmem:[%s10] sm:$0xff]
    %v829 = vld [vmem:[%s10 + $0x8] sm:$0xff]
    %v830 = vld [vmem:[%s10 + $0x10] sm:$0xff]
    %v831 = vld [vmem:[%s10 + $0x18] sm:$0xff]
    %v832 = vld [vmem:[%s11] sm:$0xff]
    %v833 = vld [vmem:[%s11 + $0x8] sm:$0xff]
    %v834 = vld [vmem:[%s11 + $0x10] sm:$0xff]
    %v835 = vld [vmem:[%s11 + $0x18] sm:$0xff]
    %v836 = vlaneseq
    %v837 = vand.u32 %v836, 127
    %v838 = vld [vmem:[%s4] sm:$0xff]
    %v839 = vld [vmem:[%s4 + $0x8] sm:$0xff]
    %v840 = vld [vmem:[%s4 + $0x10] sm:$0xff]
    %v841 = vld [vmem:[%s4 + $0x18] sm:$0xff]
    %v842 = vld [vmem:[%s6] sm:$0x1]
    %v844 = vlaneseq
    %v845 = vshrl.u32 %v844, 7
    %v846 = vsub.s32 0, %v845
    %v847 = vrot.slane %v842, %v846
    %vm849 = vcmask 261120
    %v851 = vsel %vm849, 0.0, 0
    %853 = vmatprep.subr.mxu0 0.0
    %854 = vmatpush1.msra.mxu0 %v838
    %855 = vmatprep.subr.mxu0 0.0
    %856 = vmatpush1.msra.mxu0 %v839
    %857 = vmatprep.subr.mxu0 0.0
    %858 = vmatpush1.msra.mxu0 %v840
    %859 = vmatprep.subr.mxu0 0.0
    %860 = vmatpush1.msra.mxu0 %v841
    %861 = vmatprep.subr.mxu0 0.0
    %862 = vmatpush1.msra.mxu0 0.0
    %863 = vmatprep.subr.mxu0 0.0
    %864 = vmatpush1.msra.mxu0 0.0
    %865 = vmatprep.subr.mxu0 0.0
    %866 = vmatpush1.msra.mxu0 0.0
    %867 = vmatprep.subr.mxu0 0.0
    %868 = vmatpush1.msra.mxu0 0.0
    %869 = vmatprep.subr.mxu0 0.0
    %870 = vmatpush1.msra.mxu0 0.0
    %871 = vmatprep.subr.mxu0 0.0
    %872 = vmatpush1.msra.mxu0 0.0
    %873 = vmatprep.subr.mxu0 0.0
    %874 = vmatpush1.msra.mxu0 0.0
    %875 = vmatprep.subr.mxu0 0.0
    %876 = vmatpush1.msra.mxu0 0.0
    %877 = vmatprep.subr.mxu0 0.0
    %878 = vmatpush1.msra.mxu0 0.0
    %879 = vmatprep.subr.mxu0 0.0
    %880 = vmatpush1.msra.mxu0 0.0
    %881 = vmatprep.subr.mxu0 0.0
    %882 = vmatpush1.msra.mxu0 0.0
    %883 = vmatprep.subr.mxu0 0.0
    %884 = vmatpush1.msra.mxu0 0.0
    %885 = vmatprep.subr.mxu0 0.0
    %886 = vmatpush1.msra.mxu0 0.0
    %887 = vmatprep.subr.mxu0 0.0
    %888 = vmatpush1.msra.mxu0 0.0
    %889 = vmatprep.subr.mxu0 0.0
    %890 = vmatpush1.msra.mxu0 0.0
    %891 = vmatprep.subr.mxu0 0.0
    %892 = vmatpush1.msra.mxu0 0.0
    %893 = vmatprep.subr.mxu0 0.0
    %894 = vmatpush1.msra.mxu0 0.0
    %895 = vmatprep.subr.mxu0 0.0
    %896 = vmatpush1.msra.mxu0 0.0
    %897 = vmatprep.subr.mxu0 0.0
    %898 = vmatpush1.msra.mxu0 0.0
    %899 = vmatprep.subr.mxu0 0.0
    %900 = vmatpush1.msra.mxu0 0.0
    %901 = vmatprep.subr.mxu0 0.0
    %902 = vmatpush1.msra.mxu0 0.0
    %903 = vmatprep.subr.mxu0 0.0
    %904 = vmatpush1.msra.mxu0 0.0
    %905 = vmatprep.subr.mxu0 0.0
    %906 = vmatpush1.msra.mxu0 0.0
    %907 = vmatprep.subr.mxu0 0.0
    %908 = vmatpush1.msra.mxu0 0.0
    %909 = vmatprep.subr.mxu0 0.0
    %910 = vmatpush1.msra.mxu0 0.0
    %911 = vmatprep.subr.mxu0 0.0
    %912 = vmatpush1.msra.mxu0 0.0
    %913 = vmatprep.subr.mxu0 0.0
    %914 = vmatpush1.msra.mxu0 0.0
    %915 = vmatprep.subr.mxu0 0.0
    %916 = vmatpush1.msra.mxu0 0.0
    %917 = vmatprep.mubr.f32.mxu0 0.0
    %918 = vmatmul.mubr.f32.gmra.mrb[0].mxu0 %v851
    %v919 = vpop.f32.mrb[0].mxu0
    %v920 = vadd.f32 %v847, %v919
    %v921 = vpop.f32.mrb[0].mxu0
    %922 = vdwg.mxu0
    %s923 = scalar_lea.vmem %s4, 32
    %v924 = vld [vmem:[%s923] sm:$0xff]
    %v925 = vld [vmem:[%s923 + $0x8] sm:$0xff]
    %v926 = vld [vmem:[%s923 + $0x10] sm:$0xff]
    %v927 = vld [vmem:[%s923 + $0x18] sm:$0xff]
    %s928 = scalar_lea.vmem %s6, 1
    %v929 = vld [vmem:[%s928] sm:$0x1]
    %v931 = vlaneseq
    %v932 = vshrl.u32 %v931, 7
    %v933 = vsub.s32 0, %v932
    %v934 = vrot.slane %v929, %v933
    %936 = vmatprep.subr.mxu0 0.0
    %937 = vmatpush1.msra.mxu0 %v924
    %938 = vmatprep.subr.mxu0 0.0
    %939 = vmatpush1.msra.mxu0 %v925
    %940 = vmatprep.subr.mxu0 0.0
    %941 = vmatpush1.msra.mxu0 %v926
    %942 = vmatprep.subr.mxu0 0.0
    %943 = vmatpush1.msra.mxu0 %v927
    %944 = vmatprep.subr.mxu0 0.0
    %945 = vmatpush1.msra.mxu0 0.0
    %946 = vmatprep.subr.mxu0 0.0
    %947 = vmatpush1.msra.mxu0 0.0
    %948 = vmatprep.subr.mxu0 0.0
    %949 = vmatpush1.msra.mxu0 0.0
    %950 = vmatprep.subr.mxu0 0.0
    %951 = vmatpush1.msra.mxu0 0.0
    %952 = vmatprep.subr.mxu0 0.0
    %953 = vmatpush1.msra.mxu0 0.0
    %954 = vmatprep.subr.mxu0 0.0
    %955 = vmatpush1.msra.mxu0 0.0
    %956 = vmatprep.subr.mxu0 0.0
    %957 = vmatpush1.msra.mxu0 0.0
    %958 = vmatprep.subr.mxu0 0.0
    %959 = vmatpush1.msra.mxu0 0.0
    %960 = vmatprep.subr.mxu0 0.0
    %961 = vmatpush1.msra.mxu0 0.0
    %962 = vmatprep.subr.mxu0 0.0
    %963 = vmatpush1.msra.mxu0 0.0
    %964 = vmatprep.subr.mxu0 0.0
    %965 = vmatpush1.msra.mxu0 0.0
    %966 = vmatprep.subr.mxu0 0.0
    %967 = vmatpush1.msra.mxu0 0.0
    %968 = vmatprep.subr.mxu0 0.0
    %969 = vmatpush1.msra.mxu0 0.0
    %970 = vmatprep.subr.mxu0 0.0
    %971 = vmatpush1.msra.mxu0 0.0
    %972 = vmatprep.subr.mxu0 0.0
    %973 = vmatpush1.msra.mxu0 0.0
    %974 = vmatprep.subr.mxu0 0.0
    %975 = vmatpush1.msra.mxu0 0.0
    %976 = vmatprep.subr.mxu0 0.0
    %977 = vmatpush1.msra.mxu0 0.0
    %978 = vmatprep.subr.mxu0 0.0
    %979 = vmatpush1.msra.mxu0 0.0
    %980 = vmatprep.subr.mxu0 0.0
    %981 = vmatpush1.msra.mxu0 0.0
    %982 = vmatprep.subr.mxu0 0.0
    %983 = vmatpush1.msra.mxu0 0.0
    %984 = vmatprep.subr.mxu0 0.0
    %985 = vmatpush1.msra.mxu0 0.0
    %986 = vmatprep.subr.mxu0 0.0
    %987 = vmatpush1.msra.mxu0 0.0
    %988 = vmatprep.subr.mxu0 0.0
    %989 = vmatpush1.msra.mxu0 0.0
    %990 = vmatprep.subr.mxu0 0.0
    %991 = vmatpush1.msra.mxu0 0.0
    %992 = vmatprep.subr.mxu0 0.0
    %993 = vmatpush1.msra.mxu0 0.0
    %994 = vmatprep.subr.mxu0 0.0
    %995 = vmatpush1.msra.mxu0 0.0
    %996 = vmatprep.subr.mxu0 0.0
    %997 = vmatpush1.msra.mxu0 0.0
    %998 = vmatprep.subr.mxu0 0.0
    %999 = vmatpush1.msra.mxu0 0.0
    %1000 = vmatprep.mubr.f32.mxu0 0.0
    %1001 = vmatmul.mubr.f32.gmra.mrb[0].mxu0 %v851
    %v1002 = vpop.f32.mrb[0].mxu0
    %v1003 = vadd.f32 %v934, %v1002
    %v1004 = vpop.f32.mrb[0].mxu0
    %1005 = vdwg.mxu0
    %s1006 = scalar_lea.vmem %s4, 64
    %v1007 = vld [vmem:[%s1006] sm:$0xff]
    %v1008 = vld [vmem:[%s1006 + $0x8] sm:$0xff]
    %v1009 = vld [vmem:[%s1006 + $0x10] sm:$0xff]
    %v1010 = vld [vmem:[%s1006 + $0x18] sm:$0xff]
    %s1011 = scalar_lea.vmem %s6, 2
    %v1012 = vld [vmem:[%s1011] sm:$0x1]
    %v1014 = vlaneseq
    %v1015 = vshrl.u32 %v1014, 7
    %v1016 = vsub.s32 0, %v1015
    %v1017 = vrot.slane %v1012, %v1016
    %1019 = vmatprep.subr.mxu0 0.0
    %1020 = vmatpush1.msra.mxu0 %v1007
    %1021 = vmatprep.subr.mxu0 0.0
    %1022 = vmatpush1.msra.mxu0 %v1008
    %1023 = vmatprep.subr.mxu0 0.0
    %1024 = vmatpush1.msra.mxu0 %v1009
    %1025 = vmatprep.subr.mxu0 0.0
    %1026 = vmatpush1.msra.mxu0 %v1010
    %1027 = vmatprep.subr.mxu0 0.0
    %1028 = vmatpush1.msra.mxu0 0.0
    %1029 = vmatprep.subr.mxu0 0.0
    %1030 = vmatpush1.msra.mxu0 0.0
    %1031 = vmatprep.subr.mxu0 0.0
    %1032 = vmatpush1.msra.mxu0 0.0
    %1033 = vmatprep.subr.mxu0 0.0
    %1034 = vmatpush1.msra.mxu0 0.0
    %1035 = vmatprep.subr.mxu0 0.0
    %1036 = vmatpush1.msra.mxu0 0.0
    %1037 = vmatprep.subr.mxu0 0.0
    %1038 = vmatpush1.msra.mxu0 0.0
    %1039 = vmatprep.subr.mxu0 0.0
    %1040 = vmatpush1.msra.mxu0 0.0
    %1041 = vmatprep.subr.mxu0 0.0
    %1042 = vmatpush1.msra.mxu0 0.0
    %1043 = vmatprep.subr.mxu0 0.0
    %1044 = vmatpush1.msra.mxu0 0.0
    %1045 = vmatprep.subr.mxu0 0.0
    %1046 = vmatpush1.msra.mxu0 0.0
    %1047 = vmatprep.subr.mxu0 0.0
    %1048 = vmatpush1.msra.mxu0 0.0
    %1049 = vmatprep.subr.mxu0 0.0
    %1050 = vmatpush1.msra.mxu0 0.0
    %1051 = vmatprep.subr.mxu0 0.0
    %1052 = vmatpush1.msra.mxu0 0.0
    %1053 = vmatprep.subr.mxu0 0.0
    %1054 = vmatpush1.msra.mxu0 0.0
    %1055 = vmatprep.subr.mxu0 0.0
    %1056 = vmatpush1.msra.mxu0 0.0
    %1057 = vmatprep.subr.mxu0 0.0
    %1058 = vmatpush1.msra.mxu0 0.0
    %1059 = vmatprep.subr.mxu0 0.0
    %1060 = vmatpush1.msra.mxu0 0.0
    %1061 = vmatprep.subr.mxu0 0.0
    %1062 = vmatpush1.msra.mxu0 0.0
    %1063 = vmatprep.subr.mxu0 0.0
    %1064 = vmatpush1.msra.mxu0 0.0
    %1065 = vmatprep.subr.mxu0 0.0
    %1066 = vmatpush1.msra.mxu0 0.0
    %1067 = vmatprep.subr.mxu0 0.0
    %1068 = vmatpush1.msra.mxu0 0.0
    %1069 = vmatprep.subr.mxu0 0.0
    %1070 = vmatpush1.msra.mxu0 0.0
    %1071 = vmatprep.subr.mxu0 0.0
    %1072 = vmatpush1.msra.mxu0 0.0
    %1073 = vmatprep.subr.mxu0 0.0
    %1074 = vmatpush1.msra.mxu0 0.0
    %1075 = vmatprep.subr.mxu0 0.0
    %1076 = vmatpush1.msra.mxu0 0.0
    %1077 = vmatprep.subr.mxu0 0.0
    %1078 = vmatpush1.msra.mxu0 0.0
    %1079 = vmatprep.subr.mxu0 0.0
    %1080 = vmatpush1.msra.mxu0 0.0
    %1081 = vmatprep.subr.mxu0 0.0
    %1082 = vmatpush1.msra.mxu0 0.0
    %1083 = vmatprep.mubr.f32.mxu0 0.0
    %1084 = vmatmul.mubr.f32.gmra.mrb[0].mxu0 %v851
    %v1085 = vpop.f32.mrb[0].mxu0
    %v1086 = vadd.f32 %v1017, %v1085
    %v1087 = vpop.f32.mrb[0].mxu0
    %1088 = vdwg.mxu0
    %v1089 = vadd.f32 %v138, %v920
    %v1090 = vxor.u32 %v1089, 2147483648
    %v1091 = vmul.f32 %v1090, 1.442695
    %v1092 = vpow.pop %v1091
    %v1093 = vadd.f32 %v1092, 1.0
    %v1094 = vrcp.pop %v1093
    %v1095 = vmul.f32 1.0, %v1094
    %v1096 = vadd.f32 %v224, %v1003
    %v1097 = vxor.u32 %v1096, 2147483648
    %v1098 = vmul.f32 %v1097, 1.442695
    %v1099 = vpow.pop %v1098
    %v1100 = vadd.f32 %v1099, 1.0
    %v1101 = vrcp.pop %v1100
    %v1102 = vmul.f32 1.0, %v1101
    %v1103 = vmul.f32 %v1095, %v1086
    %v1104 = vadd.f32 %v310, %v1103
    %v1105 = vtanh.pop %v1104
    %v1106 = vsub.f32 0.0, %v1105
    %v1107 = vmul.f32 %v1102, %v1106
    %v1108 = vadd.f32 %v1105, %v1107
    %s1109 = scalar_lea.vmem %s4, 96
    %v1110 = vld [vmem:[%s1109] sm:$0xff]
    %v1111 = vld [vmem:[%s1109 + $0x8] sm:$0xff]
    %v1112 = vld [vmem:[%s1109 + $0x10] sm:$0xff]
    %v1113 = vld [vmem:[%s1109 + $0x18] sm:$0xff]
    %s1114 = scalar_lea.vmem %s6, 3
    %v1115 = vld [vmem:[%s1114] sm:$0x1]
    %v1117 = vlaneseq
    %v1118 = vshrl.u32 %v1117, 7
    %v1119 = vsub.s32 0, %v1118
    %v1120 = vrot.slane %v1115, %v1119
    %1122 = vmatprep.subr.mxu0 0.0
    %1123 = vmatpush1.msra.mxu0 %v1110
    %1124 = vmatprep.subr.mxu0 0.0
    %1125 = vmatpush1.msra.mxu0 %v1111
    %1126 = vmatprep.subr.mxu0 0.0
    %1127 = vmatpush1.msra.mxu0 %v1112
    %1128 = vmatprep.subr.mxu0 0.0
    %1129 = vmatpush1.msra.mxu0 %v1113
    %1130 = vmatprep.subr.mxu0 0.0
    %1131 = vmatpush1.msra.mxu0 0.0
    %1132 = vmatprep.subr.mxu0 0.0
    %1133 = vmatpush1.msra.mxu0 0.0
    %1134 = vmatprep.subr.mxu0 0.0
    %1135 = vmatpush1.msra.mxu0 0.0
    %1136 = vmatprep.subr.mxu0 0.0
    %1137 = vmatpush1.msra.mxu0 0.0
    %1138 = vmatprep.subr.mxu0 0.0
    %1139 = vmatpush1.msra.mxu0 0.0
    %1140 = vmatprep.subr.mxu0 0.0
    %1141 = vmatpush1.msra.mxu0 0.0
    %1142 = vmatprep.subr.mxu0 0.0
    %1143 = vmatpush1.msra.mxu0 0.0
    %1144 = vmatprep.subr.mxu0 0.0
    %1145 = vmatpush1.msra.mxu0 0.0
    %1146 = vmatprep.subr.mxu0 0.0
    %1147 = vmatpush1.msra.mxu0 0.0
    %1148 = vmatprep.subr.mxu0 0.0
    %1149 = vmatpush1.msra.mxu0 0.0
    %1150 = vmatprep.subr.mxu0 0.0
    %1151 = vmatpush1.msra.mxu0 0.0
    %1152 = vmatprep.subr.mxu0 0.0
    %1153 = vmatpush1.msra.mxu0 0.0
    %1154 = vmatprep.subr.mxu0 0.0
    %1155 = vmatpush1.msra.mxu0 0.0
    %1156 = vmatprep.subr.mxu0 0.0
    %1157 = vmatpush1.msra.mxu0 0.0
    %1158 = vmatprep.subr.mxu0 0.0
    %1159 = vmatpush1.msra.mxu0 0.0
    %1160 = vmatprep.subr.mxu0 0.0
    %1161 = vmatpush1.msra.mxu0 0.0
    %1162 = vmatprep.subr.mxu0 0.0
    %1163 = vmatpush1.msra.mxu0 0.0
    %1164 = vmatprep.subr.mxu0 0.0
    %1165 = vmatpush1.msra.mxu0 0.0
    %1166 = vmatprep.subr.mxu0 0.0
    %1167 = vmatpush1.msra.mxu0 0.0
    %1168 = vmatprep.subr.mxu0 0.0
    %1169 = vmatpush1.msra.mxu0 0.0
    %1170 = vmatprep.subr.mxu0 0.0
    %1171 = vmatpush1.msra.mxu0 0.0
    %1172 = vmatprep.subr.mxu0 0.0
    %1173 = vmatpush1.msra.mxu0 0.0
    %1174 = vmatprep.subr.mxu0 0.0
    %1175 = vmatpush1.msra.mxu0 0.0
    %1176 = vmatprep.subr.mxu0 0.0
    %1177 = vmatpush1.msra.mxu0 0.0
    %1178 = vmatprep.subr.mxu0 0.0
    %1179 = vmatpush1.msra.mxu0 0.0
    %1180 = vmatprep.subr.mxu0 0.0
    %1181 = vmatpush1.msra.mxu0 0.0
    %1182 = vmatprep.subr.mxu0 0.0
    %1183 = vmatpush1.msra.mxu0 0.0
    %1184 = vmatprep.subr.mxu0 0.0
    %1185 = vmatpush1.msra.mxu0 0.0
    %1186 = vmatprep.mubr.f32.mxu0 0.0
    %1187 = vmatmul.mubr.f32.gmra.mrb[0].mxu0 %v851
    %v1188 = vpop.f32.mrb[0].mxu0
    %v1189 = vadd.f32 %v1120, %v1188
    %v1190 = vpop.f32.mrb[0].mxu0
    %1191 = vdwg.mxu0
    %s1192 = scalar_lea.vmem %s4, 128
    %v1193 = vld [vmem:[%s1192] sm:$0xff]
    %v1194 = vld [vmem:[%s1192 + $0x8] sm:$0xff]
    %v1195 = vld [vmem:[%s1192 + $0x10] sm:$0xff]
    %v1196 = vld [vmem:[%s1192 + $0x18] sm:$0xff]
    %s1197 = scalar_lea.vmem %s6, 4
    %v1198 = vld [vmem:[%s1197] sm:$0x1]
    %v1200 = vlaneseq
    %v1201 = vshrl.u32 %v1200, 7
    %v1202 = vsub.s32 0, %v1201
    %v1203 = vrot.slane %v1198, %v1202
    %1205 = vmatprep.subr.mxu0 0.0
    %1206 = vmatpush1.msra.mxu0 %v1193
    %1207 = vmatprep.subr.mxu0 0.0
    %1208 = vmatpush1.msra.mxu0 %v1194
    %1209 = vmatprep.subr.mxu0 0.0
    %1210 = vmatpush1.msra.mxu0 %v1195
    %1211 = vmatprep.subr.mxu0 0.0
    %1212 = vmatpush1.msra.mxu0 %v1196
    %1213 = vmatprep.subr.mxu0 0.0
    %1214 = vmatpush1.msra.mxu0 0.0
    %1215 = vmatprep.subr.mxu0 0.0
    %1216 = vmatpush1.msra.mxu0 0.0
    %1217 = vmatprep.subr.mxu0 0.0
    %1218 = vmatpush1.msra.mxu0 0.0
    %1219 = vmatprep.subr.mxu0 0.0
    %1220 = vmatpush1.msra.mxu0 0.0
    %1221 = vmatprep.subr.mxu0 0.0
    %1222 = vmatpush1.msra.mxu0 0.0
    %1223 = vmatprep.subr.mxu0 0.0
    %1224 = vmatpush1.msra.mxu0 0.0
    %1225 = vmatprep.subr.mxu0 0.0
    %1226 = vmatpush1.msra.mxu0 0.0
    %1227 = vmatprep.subr.mxu0 0.0
    %1228 = vmatpush1.msra.mxu0 0.0
    %1229 = vmatprep.subr.mxu0 0.0
    %1230 = vmatpush1.msra.mxu0 0.0
    %1231 = vmatprep.subr.mxu0 0.0
    %1232 = vmatpush1.msra.mxu0 0.0
    %1233 = vmatprep.subr.mxu0 0.0
    %1234 = vmatpush1.msra.mxu0 0.0
    %1235 = vmatprep.subr.mxu0 0.0
    %1236 = vmatpush1.msra.mxu0 0.0
    %1237 = vmatprep.subr.mxu0 0.0
    %1238 = vmatpush1.msra.mxu0 0.0
    %1239 = vmatprep.subr.mxu0 0.0
    %1240 = vmatpush1.msra.mxu0 0.0
    %1241 = vmatprep.subr.mxu0 0.0
    %1242 = vmatpush1.msra.mxu0 0.0
    %1243 = vmatprep.subr.mxu0 0.0
    %1244 = vmatpush1.msra.mxu0 0.0
    %1245 = vmatprep.subr.mxu0 0.0
    %1246 = vmatpush1.msra.mxu0 0.0
    %1247 = vmatprep.subr.mxu0 0.0
    %1248 = vmatpush1.msra.mxu0 0.0
    %1249 = vmatprep.subr.mxu0 0.0
    %1250 = vmatpush1.msra.mxu0 0.0
    %1251 = vmatprep.subr.mxu0 0.0
    %1252 = vmatpush1.msra.mxu0 0.0
    %1253 = vmatprep.subr.mxu0 0.0
    %1254 = vmatpush1.msra.mxu0 0.0
    %1255 = vmatprep.subr.mxu0 0.0
    %1256 = vmatpush1.msra.mxu0 0.0
    %1257 = vmatprep.subr.mxu0 0.0
    %1258 = vmatpush1.msra.mxu0 0.0
    %1259 = vmatprep.subr.mxu0 0.0
    %1260 = vmatpush1.msra.mxu0 0.0
    %1261 = vmatprep.subr.mxu0 0.0
    %1262 = vmatpush1.msra.mxu0 0.0
    %1263 = vmatprep.subr.mxu0 0.0
    %1264 = vmatpush1.msra.mxu0 0.0
    %1265 = vmatprep.subr.mxu0 0.0
    %1266 = vmatpush1.msra.mxu0 0.0
    %1267 = vmatprep.subr.mxu0 0.0
    %1268 = vmatpush1.msra.mxu0 0.0
    %1269 = vmatprep.mubr.f32.mxu0 0.0
    %1270 = vmatmul.mubr.f32.gmra.mrb[0].mxu0 %v851
    %v1271 = vpop.f32.mrb[0].mxu0
    %v1272 = vadd.f32 %v1203, %v1271
    %v1273 = vpop.f32.mrb[0].mxu0
    %1274 = vdwg.mxu0
    %s1275 = scalar_lea.vmem %s4, 160
    %v1276 = vld [vmem:[%s1275] sm:$0xff]
    %v1277 = vld [vmem:[%s1275 + $0x8] sm:$0xff]
    %v1278 = vld [vmem:[%s1275 + $0x10] sm:$0xff]
    %v1279 = vld [vmem:[%s1275 + $0x18] sm:$0xff]
    %s1280 = scalar_lea.vmem %s6, 5
    %v1281 = vld [vmem:[%s1280] sm:$0x1]
    %v1283 = vlaneseq
    %v1284 = vshrl.u32 %v1283, 7
    %v1285 = vsub.s32 0, %v1284
    %v1286 = vrot.slane %v1281, %v1285
    %1288 = vmatprep.subr.mxu0 0.0
    %1289 = vmatpush1.msra.mxu0 %v1276
    %1290 = vmatprep.subr.mxu0 0.0
    %1291 = vmatpush1.msra.mxu0 %v1277
    %1292 = vmatprep.subr.mxu0 0.0
    %1293 = vmatpush1.msra.mxu0 %v1278
    %1294 = vmatprep.subr.mxu0 0.0
    %1295 = vmatpush1.msra.mxu0 %v1279
    %1296 = vmatprep.subr.mxu0 0.0
    %1297 = vmatpush1.msra.mxu0 0.0
    %1298 = vmatprep.subr.mxu0 0.0
    %1299 = vmatpush1.msra.mxu0 0.0
    %1300 = vmatprep.subr.mxu0 0.0
    %1301 = vmatpush1.msra.mxu0 0.0
    %1302 = vmatprep.subr.mxu0 0.0
    %1303 = vmatpush1.msra.mxu0 0.0
    %1304 = vmatprep.subr.mxu0 0.0
    %1305 = vmatpush1.msra.mxu0 0.0
    %1306 = vmatprep.subr.mxu0 0.0
    %1307 = vmatpush1.msra.mxu0 0.0
    %1308 = vmatprep.subr.mxu0 0.0
    %1309 = vmatpush1.msra.mxu0 0.0
    %1310 = vmatprep.subr.mxu0 0.0
    %1311 = vmatpush1.msra.mxu0 0.0
    %1312 = vmatprep.subr.mxu0 0.0
    %1313 = vmatpush1.msra.mxu0 0.0
    %1314 = vmatprep.subr.mxu0 0.0
    %1315 = vmatpush1.msra.mxu0 0.0
    %1316 = vmatprep.subr.mxu0 0.0
    %1317 = vmatpush1.msra.mxu0 0.0
    %1318 = vmatprep.subr.mxu0 0.0
    %1319 = vmatpush1.msra.mxu0 0.0
    %1320 = vmatprep.subr.mxu0 0.0
    %1321 = vmatpush1.msra.mxu0 0.0
    %1322 = vmatprep.subr.mxu0 0.0
    %1323 = vmatpush1.msra.mxu0 0.0
    %1324 = vmatprep.subr.mxu0 0.0
    %1325 = vmatpush1.msra.mxu0 0.0
    %1326 = vmatprep.subr.mxu0 0.0
    %1327 = vmatpush1.msra.mxu0 0.0
    %1328 = vmatprep.subr.mxu0 0.0
    %1329 = vmatpush1.msra.mxu0 0.0
    %1330 = vmatprep.subr.mxu0 0.0
    %1331 = vmatpush1.msra.mxu0 0.0
    %1332 = vmatprep.subr.mxu0 0.0
    %1333 = vmatpush1.msra.mxu0 0.0
    %1334 = vmatprep.subr.mxu0 0.0
    %1335 = vmatpush1.msra.mxu0 0.0
    %1336 = vmatprep.subr.mxu0 0.0
    %1337 = vmatpush1.msra.mxu0 0.0
    %1338 = vmatprep.subr.mxu0 0.0
    %1339 = vmatpush1.msra.mxu0 0.0
    %1340 = vmatprep.subr.mxu0 0.0
    %1341 = vmatpush1.msra.mxu0 0.0
    %1342 = vmatprep.subr.mxu0 0.0
    %1343 = vmatpush1.msra.mxu0 0.0
    %1344 = vmatprep.subr.mxu0 0.0
    %1345 = vmatpush1.msra.mxu0 0.0
    %1346 = vmatprep.subr.mxu0 0.0
    %1347 = vmatpush1.msra.mxu0 0.0
    %1348 = vmatprep.subr.mxu0 0.0
    %1349 = vmatpush1.msra.mxu0 0.0
    %1350 = vmatprep.subr.mxu0 0.0
    %1351 = vmatpush1.msra.mxu0 0.0
    %1352 = vmatprep.mubr.f32.mxu0 0.0
    %1353 = vmatmul.mubr.f32.gmra.mrb[0].mxu0 %v851
    %v1354 = vpop.f32.mrb[0].mxu0
    %v1355 = vadd.f32 %v1286, %v1354
    %v1356 = vpop.f32.mrb[0].mxu0
    %1357 = vdwg.mxu0
    %v1358 = vadd.f32 %v402, %v1189
    %v1359 = vxor.u32 %v1358, 2147483648
    %v1360 = vmul.f32 %v1359, 1.442695
    %v1361 = vpow.pop %v1360
    %v1362 = vadd.f32 %v1361, 1.0
    %v1363 = vrcp.pop %v1362
    %v1364 = vmul.f32 1.0, %v1363
    %v1365 = vadd.f32 %v488, %v1272
    %v1366 = vxor.u32 %v1365, 2147483648
    %v1367 = vmul.f32 %v1366, 1.442695
    %v1368 = vpow.pop %v1367
    %v1369 = vadd.f32 %v1368, 1.0
    %v1370 = vrcp.pop %v1369
    %v1371 = vmul.f32 1.0, %v1370
    %v1372 = vmul.f32 %v1364, %v1355
    %v1373 = vadd.f32 %v574, %v1372
    %v1374 = vtanh.pop %v1373
    %v1375 = vsub.f32 0.0, %v1374
    %v1376 = vmul.f32 %v1371, %v1375
    %v1377 = vadd.f32 %v1374, %v1376
    %vm1378 = vcmp.eq.s32.totalorder %v837, 0
    %v1379 = vsel %vm1378, 1, 0
    %v1380 = vcvt.s32.f32 %v1379
    %v1381 = vmax.f32 %v1108, 0.0
    %v1383 = vsel %vm849, %v1381, 0
    %1385 = vmatprep.subr.mxu0 0.0
    %1386 = vmatpush1.msra.mxu0 %v828
    %1387 = vmatprep.subr.mxu0 0.0
    %1388 = vmatpush1.msra.mxu0 %v829
    %1389 = vmatprep.subr.mxu0 0.0
    %1390 = vmatpush1.msra.mxu0 %v830
    %1391 = vmatprep.subr.mxu0 0.0
    %1392 = vmatpush1.msra.mxu0 %v831
    %1393 = vmatprep.subr.mxu0 0.0
    %1394 = vmatpush1.msra.mxu0 0.0
    %1395 = vmatprep.subr.mxu0 0.0
    %1396 = vmatpush1.msra.mxu0 0.0
    %1397 = vmatprep.subr.mxu0 0.0
    %1398 = vmatpush1.msra.mxu0 0.0
    %1399 = vmatprep.subr.mxu0 0.0
    %1400 = vmatpush1.msra.mxu0 0.0
    %1401 = vmatprep.subr.mxu0 0.0
    %1402 = vmatpush1.msra.mxu0 0.0
    %1403 = vmatprep.subr.mxu0 0.0
    %1404 = vmatpush1.msra.mxu0 0.0
    %1405 = vmatprep.subr.mxu0 0.0
    %1406 = vmatpush1.msra.mxu0 0.0
    %1407 = vmatprep.subr.mxu0 0.0
    %1408 = vmatpush1.msra.mxu0 0.0
    %1409 = vmatprep.subr.mxu0 0.0
    %1410 = vmatpush1.msra.mxu0 0.0
    %1411 = vmatprep.subr.mxu0 0.0
    %1412 = vmatpush1.msra.mxu0 0.0
    %1413 = vmatprep.subr.mxu0 0.0
    %1414 = vmatpush1.msra.mxu0 0.0
    %1415 = vmatprep.subr.mxu0 0.0
    %1416 = vmatpush1.msra.mxu0 0.0
    %1417 = vmatprep.subr.mxu0 0.0
    %1418 = vmatpush1.msra.mxu0 0.0
    %1419 = vmatprep.subr.mxu0 0.0
    %1420 = vmatpush1.msra.mxu0 0.0
    %1421 = vmatprep.subr.mxu0 0.0
    %1422 = vmatpush1.msra.mxu0 0.0
    %1423 = vmatprep.subr.mxu0 0.0
    %1424 = vmatpush1.msra.mxu0 0.0
    %1425 = vmatprep.subr.mxu0 0.0
    %1426 = vmatpush1.msra.mxu0 0.0
    %1427 = vmatprep.subr.mxu0 0.0
    %1428 = vmatpush1.msra.mxu0 0.0
    %1429 = vmatprep.subr.mxu0 0.0
    %1430 = vmatpush1.msra.mxu0 0.0
    %1431 = vmatprep.subr.mxu0 0.0
    %1432 = vmatpush1.msra.mxu0 0.0
    %1433 = vmatprep.subr.mxu0 0.0
    %1434 = vmatpush1.msra.mxu0 0.0
    %1435 = vmatprep.subr.mxu0 0.0
    %1436 = vmatpush1.msra.mxu0 0.0
    %1437 = vmatprep.subr.mxu0 0.0
    %1438 = vmatpush1.msra.mxu0 0.0
    %1439 = vmatprep.subr.mxu0 0.0
    %1440 = vmatpush1.msra.mxu0 0.0
    %1441 = vmatprep.subr.mxu0 0.0
    %1442 = vmatpush1.msra.mxu0 0.0
    %1443 = vmatprep.subr.mxu0 0.0
    %1444 = vmatpush1.msra.mxu0 0.0
    %1445 = vmatprep.subr.mxu0 0.0
    %1446 = vmatpush1.msra.mxu0 0.0
    %1447 = vmatprep.subr.mxu0 0.0
    %1448 = vmatpush1.msra.mxu0 0.0
    %1449 = vmatprep.mubr.f32.mxu0 0.0
    %1450 = vmatmul.mubr.f32.gmra.mrb[0].mxu0 %v1383
    %v1451 = vpop.f32.mrb[0].mxu0
    %v1452 = vadd.f32 0.0, %v1451
    %v1453 = vpop.f32.mrb[0].mxu0
    %1454 = vdwg.mxu0
    %1456 = vset.pattern.permute.xlu0 0
    %1457 = vperm.xlu0 %1456, %v1452
    %v1458 = vpop.permute.xlu0 %1457
    %v1460 = vmul.f32 %v1458, %v1380
    %v1461 = vadd.f32 %v1460, 0.0
    %v1462 = vmax.f32 %v1377, 0.0
    %v1464 = vsel %vm849, %v1462, 0
    %1466 = vmatprep.subr.mxu0 0.0
    %1467 = vmatpush1.msra.mxu0 %v828
    %1468 = vmatprep.subr.mxu0 0.0
    %1469 = vmatpush1.msra.mxu0 %v829
    %1470 = vmatprep.subr.mxu0 0.0
    %1471 = vmatpush1.msra.mxu0 %v830
    %1472 = vmatprep.subr.mxu0 0.0
    %1473 = vmatpush1.msra.mxu0 %v831
    %1474 = vmatprep.subr.mxu0 0.0
    %1475 = vmatpush1.msra.mxu0 0.0
    %1476 = vmatprep.subr.mxu0 0.0
    %1477 = vmatpush1.msra.mxu0 0.0
    %1478 = vmatprep.subr.mxu0 0.0
    %1479 = vmatpush1.msra.mxu0 0.0
    %1480 = vmatprep.subr.mxu0 0.0
    %1481 = vmatpush1.msra.mxu0 0.0
    %1482 = vmatprep.subr.mxu0 0.0
    %1483 = vmatpush1.msra.mxu0 0.0
    %1484 = vmatprep.subr.mxu0 0.0
    %1485 = vmatpush1.msra.mxu0 0.0
    %1486 = vmatprep.subr.mxu0 0.0
    %1487 = vmatpush1.msra.mxu0 0.0
    %1488 = vmatprep.subr.mxu0 0.0
    %1489 = vmatpush1.msra.mxu0 0.0
    %1490 = vmatprep.subr.mxu0 0.0
    %1491 = vmatpush1.msra.mxu0 0.0
    %1492 = vmatprep.subr.mxu0 0.0
    %1493 = vmatpush1.msra.mxu0 0.0
    %1494 = vmatprep.subr.mxu0 0.0
    %1495 = vmatpush1.msra.mxu0 0.0
    %1496 = vmatprep.subr.mxu0 0.0
    %1497 = vmatpush1.msra.mxu0 0.0
    %1498 = vmatprep.subr.mxu0 0.0
    %1499 = vmatpush1.msra.mxu0 0.0
    %1500 = vmatprep.subr.mxu0 0.0
    %1501 = vmatpush1.msra.mxu0 0.0
    %1502 = vmatprep.subr.mxu0 0.0
    %1503 = vmatpush1.msra.mxu0 0.0
    %1504 = vmatprep.subr.mxu0 0.0
    %1505 = vmatpush1.msra.mxu0 0.0
    %1506 = vmatprep.subr.mxu0 0.0
    %1507 = vmatpush1.msra.mxu0 0.0
    %1508 = vmatprep.subr.mxu0 0.0
    %1509 = vmatpush1.msra.mxu0 0.0
    %1510 = vmatprep.subr.mxu0 0.0
    %1511 = vmatpush1.msra.mxu0 0.0
    %1512 = vmatprep.subr.mxu0 0.0
    %1513 = vmatpush1.msra.mxu0 0.0
    %1514 = vmatprep.subr.mxu0 0.0
    %1515 = vmatpush1.msra.mxu0 0.0
    %1516 = vmatprep.subr.mxu0 0.0
    %1517 = vmatpush1.msra.mxu0 0.0
    %1518 = vmatprep.subr.mxu0 0.0
    %1519 = vmatpush1.msra.mxu0 0.0
    %1520 = vmatprep.subr.mxu0 0.0
    %1521 = vmatpush1.msra.mxu0 0.0
    %1522 = vmatprep.subr.mxu0 0.0
    %1523 = vmatpush1.msra.mxu0 0.0
    %1524 = vmatprep.subr.mxu0 0.0
    %1525 = vmatpush1.msra.mxu0 0.0
    %1526 = vmatprep.subr.mxu0 0.0
    %1527 = vmatpush1.msra.mxu0 0.0
    %1528 = vmatprep.subr.mxu0 0.0
    %1529 = vmatpush1.msra.mxu0 0.0
    %1530 = vmatprep.mubr.f32.mxu0 0.0
    %1531 = vmatmul.mubr.f32.gmra.mrb[0].mxu0 %v1464
    %v1532 = vpop.f32.mrb[0].mxu0
    %v1533 = vadd.f32 0.0, %v1532
    %v1534 = vpop.f32.mrb[0].mxu0
    %1535 = vdwg.mxu0
    %1537 = vset.pattern.permute.xlu0 0
    %1538 = vperm.xlu0 %1537, %v1533
    %v1539 = vpop.permute.xlu0 %1538
    %v1541 = vmul.f32 %v1539, %v1380
    %v1542 = vadd.f32 %v1541, 0.0
    %v1544 = vsel %vm849, %v1108, 0
    %1546 = vmatprep.subr.mxu0 0.0
    %1547 = vmatpush1.msra.mxu0 %v838
    %1548 = vmatprep.subr.mxu0 0.0
    %1549 = vmatpush1.msra.mxu0 %v839
    %1550 = vmatprep.subr.mxu0 0.0
    %1551 = vmatpush1.msra.mxu0 %v840
    %1552 = vmatprep.subr.mxu0 0.0
    %1553 = vmatpush1.msra.mxu0 %v841
    %1554 = vmatprep.subr.mxu0 0.0
    %1555 = vmatpush1.msra.mxu0 0.0
    %1556 = vmatprep.subr.mxu0 0.0
    %1557 = vmatpush1.msra.mxu0 0.0
    %1558 = vmatprep.subr.mxu0 0.0
    %1559 = vmatpush1.msra.mxu0 0.0
    %1560 = vmatprep.subr.mxu0 0.0
    %1561 = vmatpush1.msra.mxu0 0.0
    %1562 = vmatprep.subr.mxu0 0.0
    %1563 = vmatpush1.msra.mxu0 0.0
    %1564 = vmatprep.subr.mxu0 0.0
    %1565 = vmatpush1.msra.mxu0 0.0
    %1566 = vmatprep.subr.mxu0 0.0
    %1567 = vmatpush1.msra.mxu0 0.0
    %1568 = vmatprep.subr.mxu0 0.0
    %1569 = vmatpush1.msra.mxu0 0.0
    %1570 = vmatprep.subr.mxu0 0.0
    %1571 = vmatpush1.msra.mxu0 0.0
    %1572 = vmatprep.subr.mxu0 0.0
    %1573 = vmatpush1.msra.mxu0 0.0
    %1574 = vmatprep.subr.mxu0 0.0
    %1575 = vmatpush1.msra.mxu0 0.0
    %1576 = vmatprep.subr.mxu0 0.0
    %1577 = vmatpush1.msra.mxu0 0.0
    %1578 = vmatprep.subr.mxu0 0.0
    %1579 = vmatpush1.msra.mxu0 0.0
    %1580 = vmatprep.subr.mxu0 0.0
    %1581 = vmatpush1.msra.mxu0 0.0
    %1582 = vmatprep.subr.mxu0 0.0
    %1583 = vmatpush1.msra.mxu0 0.0
    %1584 = vmatprep.subr.mxu0 0.0
    %1585 = vmatpush1.msra.mxu0 0.0
    %1586 = vmatprep.subr.mxu0 0.0
    %1587 = vmatpush1.msra.mxu0 0.0
    %1588 = vmatprep.subr.mxu0 0.0
    %1589 = vmatpush1.msra.mxu0 0.0
    %1590 = vmatprep.subr.mxu0 0.0
    %1591 = vmatpush1.msra.mxu0 0.0
    %1592 = vmatprep.subr.mxu0 0.0
    %1593 = vmatpush1.msra.mxu0 0.0
    %1594 = vmatprep.subr.mxu0 0.0
    %1595 = vmatpush1.msra.mxu0 0.0
    %1596 = vmatprep.subr.mxu0 0.0
    %1597 = vmatpush1.msra.mxu0 0.0
    %1598 = vmatprep.subr.mxu0 0.0
    %1599 = vmatpush1.msra.mxu0 0.0
    %1600 = vmatprep.subr.mxu0 0.0
    %1601 = vmatpush1.msra.mxu0 0.0
    %1602 = vmatprep.subr.mxu0 0.0
    %1603 = vmatpush1.msra.mxu0 0.0
    %1604 = vmatprep.subr.mxu0 0.0
    %1605 = vmatpush1.msra.mxu0 0.0
    %1606 = vmatprep.subr.mxu0 0.0
    %1607 = vmatpush1.msra.mxu0 0.0
    %1608 = vmatprep.subr.mxu0 0.0
    %1609 = vmatpush1.msra.mxu0 0.0
    %1610 = vmatprep.mubr.f32.mxu0 0.0
    %1611 = vmatmul.mubr.f32.gmra.mrb[0].mxu0 %v1544
    %v1612 = vpop.f32.mrb[0].mxu0
    %v1613 = vadd.f32 %v847, %v1612
    %v1614 = vpop.f32.mrb[0].mxu0
    %1615 = vdwg.mxu0
    %1616 = vmatprep.subr.mxu0 0.0
    %1617 = vmatpush1.msra.mxu0 %v924
    %1618 = vmatprep.subr.mxu0 0.0
    %1619 = vmatpush1.msra.mxu0 %v925
    %1620 = vmatprep.subr.mxu0 0.0
    %1621 = vmatpush1.msra.mxu0 %v926
    %1622 = vmatprep.subr.mxu0 0.0
    %1623 = vmatpush1.msra.mxu0 %v927
    %1624 = vmatprep.subr.mxu0 0.0
    %1625 = vmatpush1.msra.mxu0 0.0
    %1626 = vmatprep.subr.mxu0 0.0
    %1627 = vmatpush1.msra.mxu0 0.0
    %1628 = vmatprep.subr.mxu0 0.0
    %1629 = vmatpush1.msra.mxu0 0.0
    %1630 = vmatprep.subr.mxu0 0.0
    %1631 = vmatpush1.msra.mxu0 0.0
    %1632 = vmatprep.subr.mxu0 0.0
    %1633 = vmatpush1.msra.mxu0 0.0
    %1634 = vmatprep.subr.mxu0 0.0
    %1635 = vmatpush1.msra.mxu0 0.0
    %1636 = vmatprep.subr.mxu0 0.0
    %1637 = vmatpush1.msra.mxu0 0.0
    %1638 = vmatprep.subr.mxu0 0.0
    %1639 = vmatpush1.msra.mxu0 0.0
    %1640 = vmatprep.subr.mxu0 0.0
    %1641 = vmatpush1.msra.mxu0 0.0
    %1642 = vmatprep.subr.mxu0 0.0
    %1643 = vmatpush1.msra.mxu0 0.0
    %1644 = vmatprep.subr.mxu0 0.0
    %1645 = vmatpush1.msra.mxu0 0.0
    %1646 = vmatprep.subr.mxu0 0.0
    %1647 = vmatpush1.msra.mxu0 0.0
    %1648 = vmatprep.subr.mxu0 0.0
    %1649 = vmatpush1.msra.mxu0 0.0
    %1650 = vmatprep.subr.mxu0 0.0
    %1651 = vmatpush1.msra.mxu0 0.0
    %1652 = vmatprep.subr.mxu0 0.0
    %1653 = vmatpush1.msra.mxu0 0.0
    %1654 = vmatprep.subr.mxu0 0.0
    %1655 = vmatpush1.msra.mxu0 0.0
    %1656 = vmatprep.subr.mxu0 0.0
    %1657 = vmatpush1.msra.mxu0 0.0
    %1658 = vmatprep.subr.mxu0 0.0
    %1659 = vmatpush1.msra.mxu0 0.0
    %1660 = vmatprep.subr.mxu0 0.0
    %1661 = vmatpush1.msra.mxu0 0.0
    %1662 = vmatprep.subr.mxu0 0.0
    %1663 = vmatpush1.msra.mxu0 0.0
    %1664 = vmatprep.subr.mxu0 0.0
    %1665 = vmatpush1.msra.mxu0 0.0
    %1666 = vmatprep.subr.mxu0 0.0
    %1667 = vmatpush1.msra.mxu0 0.0
    %1668 = vmatprep.subr.mxu0 0.0
    %1669 = vmatpush1.msra.mxu0 0.0
    %1670 = vmatprep.subr.mxu0 0.0
    %1671 = vmatpush1.msra.mxu0 0.0
    %1672 = vmatprep.subr.mxu0 0.0
    %1673 = vmatpush1.msra.mxu0 0.0
    %1674 = vmatprep.subr.mxu0 0.0
    %1675 = vmatpush1.msra.mxu0 0.0
    %1676 = vmatprep.subr.mxu0 0.0
    %1677 = vmatpush1.msra.mxu0 0.0
    %1678 = vmatprep.subr.mxu0 0.0
    %1679 = vmatpush1.msra.mxu0 0.0
    %1680 = vmatprep.mubr.f32.mxu0 0.0
    %1681 = vmatmul.mubr.f32.gmra.mrb[0].mxu0 %v1544
    %v1682 = vpop.f32.mrb[0].mxu0
    %v1683 = vadd.f32 %v934, %v1682
    %v1684 = vpop.f32.mrb[0].mxu0
    %1685 = vdwg.mxu0
    %1686 = vmatprep.subr.mxu0 0.0
    %1687 = vmatpush1.msra.mxu0 %v1007
    %1688 = vmatprep.subr.mxu0 0.0
    %1689 = vmatpush1.msra.mxu0 %v1008
    %1690 = vmatprep.subr.mxu0 0.0
    %1691 = vmatpush1.msra.mxu0 %v1009
    %1692 = vmatprep.subr.mxu0 0.0
    %1693 = vmatpush1.msra.mxu0 %v1010
    %1694 = vmatprep.subr.mxu0 0.0
    %1695 = vmatpush1.msra.mxu0 0.0
    %1696 = vmatprep.subr.mxu0 0.0
    %1697 = vmatpush1.msra.mxu0 0.0
    %1698 = vmatprep.subr.mxu0 0.0
    %1699 = vmatpush1.msra.mxu0 0.0
    %1700 = vmatprep.subr.mxu0 0.0
    %1701 = vmatpush1.msra.mxu0 0.0
    %1702 = vmatprep.subr.mxu0 0.0
    %1703 = vmatpush1.msra.mxu0 0.0
    %1704 = vmatprep.subr.mxu0 0.0
    %1705 = vmatpush1.msra.mxu0 0.0
    %1706 = vmatprep.subr.mxu0 0.0
    %1707 = vmatpush1.msra.mxu0 0.0
    %1708 = vmatprep.subr.mxu0 0.0
    %1709 = vmatpush1.msra.mxu0 0.0
    %1710 = vmatprep.subr.mxu0 0.0
    %1711 = vmatpush1.msra.mxu0 0.0
    %1712 = vmatprep.subr.mxu0 0.0
    %1713 = vmatpush1.msra.mxu0 0.0
    %1714 = vmatprep.subr.mxu0 0.0
    %1715 = vmatpush1.msra.mxu0 0.0
    %1716 = vmatprep.subr.mxu0 0.0
    %1717 = vmatpush1.msra.mxu0 0.0
    %1718 = vmatprep.subr.mxu0 0.0
    %1719 = vmatpush1.msra.mxu0 0.0
    %1720 = vmatprep.subr.mxu0 0.0
    %1721 = vmatpush1.msra.mxu0 0.0
    %1722 = vmatprep.subr.mxu0 0.0
    %1723 = vmatpush1.msra.mxu0 0.0
    %1724 = vmatprep.subr.mxu0 0.0
    %1725 = vmatpush1.msra.mxu0 0.0
    %1726 = vmatprep.subr.mxu0 0.0
    %1727 = vmatpush1.msra.mxu0 0.0
    %1728 = vmatprep.subr.mxu0 0.0
    %1729 = vmatpush1.msra.mxu0 0.0
    %1730 = vmatprep.subr.mxu0 0.0
    %1731 = vmatpush1.msra.mxu0 0.0
    %1732 = vmatprep.subr.mxu0 0.0
    %1733 = vmatpush1.msra.mxu0 0.0
    %1734 = vmatprep.subr.mxu0 0.0
    %1735 = vmatpush1.msra.mxu0 0.0
    %1736 = vmatprep.subr.mxu0 0.0
    %1737 = vmatpush1.msra.mxu0 0.0
    %1738 = vmatprep.subr.mxu0 0.0
    %1739 = vmatpush1.msra.mxu0 0.0
    %1740 = vmatprep.subr.mxu0 0.0
    %1741 = vmatpush1.msra.mxu0 0.0
    %1742 = vmatprep.subr.mxu0 0.0
    %1743 = vmatpush1.msra.mxu0 0.0
    %1744 = vmatprep.subr.mxu0 0.0
    %1745 = vmatpush1.msra.mxu0 0.0
    %1746 = vmatprep.subr.mxu0 0.0
    %1747 = vmatpush1.msra.mxu0 0.0
    %1748 = vmatprep.subr.mxu0 0.0
    %1749 = vmatpush1.msra.mxu0 0.0
    %1750 = vmatprep.mubr.f32.mxu0 0.0
    %1751 = vmatmul.mubr.f32.gmra.mrb[0].mxu0 %v1544
    %v1752 = vpop.f32.mrb[0].mxu0
    %v1753 = vadd.f32 %v1017, %v1752
    %v1754 = vpop.f32.mrb[0].mxu0
    %1755 = vdwg.mxu0
    %v1757 = vrot.slane %v1613, 6
    %v1759 = vadd.f32 %v138, %v1757
    %v1760 = vxor.u32 %v1759, 2147483648
    %v1761 = vmul.f32 %v1760, 1.442695
    %v1762 = vpow.pop %v1761
    %v1763 = vadd.f32 %v1762, 1.0
    %v1764 = vrcp.pop %v1763
    %v1765 = vmul.f32 1.0, %v1764
    %v1767 = vrot.slane %v1683, 6
    %v1769 = vadd.f32 %v224, %v1767
    %v1770 = vxor.u32 %v1769, 2147483648
    %v1771 = vmul.f32 %v1770, 1.442695
    %v1772 = vpow.pop %v1771
    %v1773 = vadd.f32 %v1772, 1.0
    %v1774 = vrcp.pop %v1773
    %v1775 = vmul.f32 1.0, %v1774
    %v1777 = vrot.slane %v1753, 6
    %v1779 = vmul.f32 %v1765, %v1777
    %v1780 = vadd.f32 %v310, %v1779
    %v1781 = vtanh.pop %v1780
    %v1783 = vrot.slane %v1781, 2
    %v1785 = vsub.f32 %v1108, %v1783
    %v1787 = vrot.slane %v1785, 6
    %v1789 = vmul.f32 %v1775, %v1787
    %v1790 = vadd.f32 %v1781, %v1789
    %v1792 = vsel %vm849, %v1377, 0
    %1794 = vmatprep.subr.mxu0 0.0
    %1795 = vmatpush1.msra.mxu0 %v1110
    %1796 = vmatprep.subr.mxu0 0.0
    %1797 = vmatpush1.msra.mxu0 %v1111
    %1798 = vmatprep.subr.mxu0 0.0
    %1799 = vmatpush1.msra.mxu0 %v1112
    %1800 = vmatprep.subr.mxu0 0.0
    %1801 = vmatpush1.msra.mxu0 %v1113
    %1802 = vmatprep.subr.mxu0 0.0
    %1803 = vmatpush1.msra.mxu0 0.0
    %1804 = vmatprep.subr.mxu0 0.0
    %1805 = vmatpush1.msra.mxu0 0.0
    %1806 = vmatprep.subr.mxu0 0.0
    %1807 = vmatpush1.msra.mxu0 0.0
    %1808 = vmatprep.subr.mxu0 0.0
    %1809 = vmatpush1.msra.mxu0 0.0
    %1810 = vmatprep.subr.mxu0 0.0
    %1811 = vmatpush1.msra.mxu0 0.0
    %1812 = vmatprep.subr.mxu0 0.0
    %1813 = vmatpush1.msra.mxu0 0.0
    %1814 = vmatprep.subr.mxu0 0.0
    %1815 = vmatpush1.msra.mxu0 0.0
    %1816 = vmatprep.subr.mxu0 0.0
    %1817 = vmatpush1.msra.mxu0 0.0
    %1818 = vmatprep.subr.mxu0 0.0
    %1819 = vmatpush1.msra.mxu0 0.0
    %1820 = vmatprep.subr.mxu0 0.0
    %1821 = vmatpush1.msra.mxu0 0.0
    %1822 = vmatprep.subr.mxu0 0.0
    %1823 = vmatpush1.msra.mxu0 0.0
    %1824 = vmatprep.subr.mxu0 0.0
    %1825 = vmatpush1.msra.mxu0 0.0
    %1826 = vmatprep.subr.mxu0 0.0
    %1827 = vmatpush1.msra.mxu0 0.0
    %1828 = vmatprep.subr.mxu0 0.0
    %1829 = vmatpush1.msra.mxu0 0.0
    %1830 = vmatprep.subr.mxu0 0.0
    %1831 = vmatpush1.msra.mxu0 0.0
    %1832 = vmatprep.subr.mxu0 0.0
    %1833 = vmatpush1.msra.mxu0 0.0
    %1834 = vmatprep.subr.mxu0 0.0
    %1835 = vmatpush1.msra.mxu0 0.0
    %1836 = vmatprep.subr.mxu0 0.0
    %1837 = vmatpush1.msra.mxu0 0.0
    %1838 = vmatprep.subr.mxu0 0.0
    %1839 = vmatpush1.msra.mxu0 0.0
    %1840 = vmatprep.subr.mxu0 0.0
    %1841 = vmatpush1.msra.mxu0 0.0
    %1842 = vmatprep.subr.mxu0 0.0
    %1843 = vmatpush1.msra.mxu0 0.0
    %1844 = vmatprep.subr.mxu0 0.0
    %1845 = vmatpush1.msra.mxu0 0.0
    %1846 = vmatprep.subr.mxu0 0.0
    %1847 = vmatpush1.msra.mxu0 0.0
    %1848 = vmatprep.subr.mxu0 0.0
    %1849 = vmatpush1.msra.mxu0 0.0
    %1850 = vmatprep.subr.mxu0 0.0
    %1851 = vmatpush1.msra.mxu0 0.0
    %1852 = vmatprep.subr.mxu0 0.0
    %1853 = vmatpush1.msra.mxu0 0.0
    %1854 = vmatprep.subr.mxu0 0.0
    %1855 = vmatpush1.msra.mxu0 0.0
    %1856 = vmatprep.subr.mxu0 0.0
    %1857 = vmatpush1.msra.mxu0 0.0
    %1858 = vmatprep.mubr.f32.mxu0 0.0
    %1859 = vmatmul.mubr.f32.gmra.mrb[0].mxu0 %v1792
    %v1860 = vpop.f32.mrb[0].mxu0
    %v1861 = vadd.f32 %v1120, %v1860
    %v1862 = vpop.f32.mrb[0].mxu0
    %1863 = vdwg.mxu0
    %1864 = vmatprep.subr.mxu0 0.0
    %1865 = vmatpush1.msra.mxu0 %v1193
    %1866 = vmatprep.subr.mxu0 0.0
    %1867 = vmatpush1.msra.mxu0 %v1194
    %1868 = vmatprep.subr.mxu0 0.0
    %1869 = vmatpush1.msra.mxu0 %v1195
    %1870 = vmatprep.subr.mxu0 0.0
    %1871 = vmatpush1.msra.mxu0 %v1196
    %1872 = vmatprep.subr.mxu0 0.0
    %1873 = vmatpush1.msra.mxu0 0.0
    %1874 = vmatprep.subr.mxu0 0.0
    %1875 = vmatpush1.msra.mxu0 0.0
    %1876 = vmatprep.subr.mxu0 0.0
    %1877 = vmatpush1.msra.mxu0 0.0
    %1878 = vmatprep.subr.mxu0 0.0
    %1879 = vmatpush1.msra.mxu0 0.0
    %1880 = vmatprep.subr.mxu0 0.0
    %1881 = vmatpush1.msra.mxu0 0.0
    %1882 = vmatprep.subr.mxu0 0.0
    %1883 = vmatpush1.msra.mxu0 0.0
    %1884 = vmatprep.subr.mxu0 0.0
    %1885 = vmatpush1.msra.mxu0 0.0
    %1886 = vmatprep.subr.mxu0 0.0
    %1887 = vmatpush1.msra.mxu0 0.0
    %1888 = vmatprep.subr.mxu0 0.0
    %1889 = vmatpush1.msra.mxu0 0.0
    %1890 = vmatprep.subr.mxu0 0.0
    %1891 = vmatpush1.msra.mxu0 0.0
    %1892 = vmatprep.subr.mxu0 0.0
    %1893 = vmatpush1.msra.mxu0 0.0
    %1894 = vmatprep.subr.mxu0 0.0
    %1895 = vmatpush1.msra.mxu0 0.0
    %1896 = vmatprep.subr.mxu0 0.0
    %1897 = vmatpush1.msra.mxu0 0.0
    %1898 = vmatprep.subr.mxu0 0.0
    %1899 = vmatpush1.msra.mxu0 0.0
    %1900 = vmatprep.subr.mxu0 0.0
    %1901 = vmatpush1.msra.mxu0 0.0
    %1902 = vmatprep.subr.mxu0 0.0
    %1903 = vmatpush1.msra.mxu0 0.0
    %1904 = vmatprep.subr.mxu0 0.0
    %1905 = vmatpush1.msra.mxu0 0.0
    %1906 = vmatprep.subr.mxu0 0.0
    %1907 = vmatpush1.msra.mxu0 0.0
    %1908 = vmatprep.subr.mxu0 0.0
    %1909 = vmatpush1.msra.mxu0 0.0
    %1910 = vmatprep.subr.mxu0 0.0
    %1911 = vmatpush1.msra.mxu0 0.0
    %1912 = vmatprep.subr.mxu0 0.0
    %1913 = vmatpush1.msra.mxu0 0.0
    %1914 = vmatprep.subr.mxu0 0.0
    %1915 = vmatpush1.msra.mxu0 0.0
    %1916 = vmatprep.subr.mxu0 0.0
    %1917 = vmatpush1.msra.mxu0 0.0
    %1918 = vmatprep.subr.mxu0 0.0
    %1919 = vmatpush1.msra.mxu0 0.0
    %1920 = vmatprep.subr.mxu0 0.0
    %1921 = vmatpush1.msra.mxu0 0.0
    %1922 = vmatprep.subr.mxu0 0.0
    %1923 = vmatpush1.msra.mxu0 0.0
    %1924 = vmatprep.subr.mxu0 0.0
    %1925 = vmatpush1.msra.mxu0 0.0
    %1926 = vmatprep.subr.mxu0 0.0
    %1927 = vmatpush1.msra.mxu0 0.0
    %1928 = vmatprep.mubr.f32.mxu0 0.0
    %1929 = vmatmul.mubr.f32.gmra.mrb[0].mxu0 %v1792
    %v1930 = vpop.f32.mrb[0].mxu0
    %v1931 = vadd.f32 %v1203, %v1930
    %v1932 = vpop.f32.mrb[0].mxu0
    %1933 = vdwg.mxu0
    %1934 = vmatprep.subr.mxu0 0.0
    %1935 = vmatpush1.msra.mxu0 %v1276
    %1936 = vmatprep.subr.mxu0 0.0
    %1937 = vmatpush1.msra.mxu0 %v1277
    %1938 = vmatprep.subr.mxu0 0.0
    %1939 = vmatpush1.msra.mxu0 %v1278
    %1940 = vmatprep.subr.mxu0 0.0
    %1941 = vmatpush1.msra.mxu0 %v1279
    %1942 = vmatprep.subr.mxu0 0.0
    %1943 = vmatpush1.msra.mxu0 0.0
    %1944 = vmatprep.subr.mxu0 0.0
    %1945 = vmatpush1.msra.mxu0 0.0
    %1946 = vmatprep.subr.mxu0 0.0
    %1947 = vmatpush1.msra.mxu0 0.0
    %1948 = vmatprep.subr.mxu0 0.0
    %1949 = vmatpush1.msra.mxu0 0.0
    %1950 = vmatprep.subr.mxu0 0.0
    %1951 = vmatpush1.msra.mxu0 0.0
    %1952 = vmatprep.subr.mxu0 0.0
    %1953 = vmatpush1.msra.mxu0 0.0
    %1954 = vmatprep.subr.mxu0 0.0
    %1955 = vmatpush1.msra.mxu0 0.0
    %1956 = vmatprep.subr.mxu0 0.0
    %1957 = vmatpush1.msra.mxu0 0.0
    %1958 = vmatprep.subr.mxu0 0.0
    %1959 = vmatpush1.msra.mxu0 0.0
    %1960 = vmatprep.subr.mxu0 0.0
    %1961 = vmatpush1.msra.mxu0 0.0
    %1962 = vmatprep.subr.mxu0 0.0
    %1963 = vmatpush1.msra.mxu0 0.0
    %1964 = vmatprep.subr.mxu0 0.0
    %1965 = vmatpush1.msra.mxu0 0.0
    %1966 = vmatprep.subr.mxu0 0.0
    %1967 = vmatpush1.msra.mxu0 0.0
    %1968 = vmatprep.subr.mxu0 0.0
    %1969 = vmatpush1.msra.mxu0 0.0
    %1970 = vmatprep.subr.mxu0 0.0
    %1971 = vmatpush1.msra.mxu0 0.0
    %1972 = vmatprep.subr.mxu0 0.0
    %1973 = vmatpush1.msra.mxu0 0.0
    %1974 = vmatprep.subr.mxu0 0.0
    %1975 = vmatpush1.msra.mxu0 0.0
    %1976 = vmatprep.subr.mxu0 0.0
    %1977 = vmatpush1.msra.mxu0 0.0
    %1978 = vmatprep.subr.mxu0 0.0
    %1979 = vmatpush1.msra.mxu0 0.0
    %1980 = vmatprep.subr.mxu0 0.0
    %1981 = vmatpush1.msra.mxu0 0.0
    %1982 = vmatprep.subr.mxu0 0.0
    %1983 = vmatpush1.msra.mxu0 0.0
    %1984 = vmatprep.subr.mxu0 0.0
    %1985 = vmatpush1.msra.mxu0 0.0
    %1986 = vmatprep.subr.mxu0 0.0
    %1987 = vmatpush1.msra.mxu0 0.0
    %1988 = vmatprep.subr.mxu0 0.0
    %1989 = vmatpush1.msra.mxu0 0.0
    %1990 = vmatprep.subr.mxu0 0.0
    %1991 = vmatpush1.msra.mxu0 0.0
    %1992 = vmatprep.subr.mxu0 0.0
    %1993 = vmatpush1.msra.mxu0 0.0
    %1994 = vmatprep.subr.mxu0 0.0
    %1995 = vmatpush1.msra.mxu0 0.0
    %1996 = vmatprep.subr.mxu0 0.0
    %1997 = vmatpush1.msra.mxu0 0.0
    %1998 = vmatprep.mubr.f32.mxu0 0.0
    %1999 = vmatmul.mubr.f32.gmra.mrb[0].mxu0 %v1792
    %v2000 = vpop.f32.mrb[0].mxu0
    %v2001 = vadd.f32 %v1286, %v2000
    %v2002 = vpop.f32.mrb[0].mxu0
    %2003 = vdwg.mxu0
    %v2005 = vrot.slane %v1861, 6
    %v2007 = vadd.f32 %v402, %v2005
    %v2008 = vxor.u32 %v2007, 2147483648
    %v2009 = vmul.f32 %v2008, 1.442695
    %v2010 = vpow.pop %v2009
    %v2011 = vadd.f32 %v2010, 1.0
    %v2012 = vrcp.pop %v2011
    %v2013 = vmul.f32 1.0, %v2012
    %v2015 = vrot.slane %v1931, 6
    %v2017 = vadd.f32 %v488, %v2015
    %v2018 = vxor.u32 %v2017, 2147483648
    %v2019 = vmul.f32 %v2018, 1.442695
    %v2020 = vpow.pop %v2019
    %v2021 = vadd.f32 %v2020, 1.0
    %v2022 = vrcp.pop %v2021
    %v2023 = vmul.f32 1.0, %v2022
    %v2025 = vrot.slane %v2001, 6
    %v2027 = vmul.f32 %v2013, %v2025
    %v2028 = vadd.f32 %v574, %v2027
    %v2029 = vtanh.pop %v2028
    %v2031 = vrot.slane %v2029, 2
    %v2033 = vsub.f32 %v1377, %v2031
    %v2035 = vrot.slane %v2033, 6
    %v2037 = vmul.f32 %v2023, %v2035
    %v2038 = vadd.f32 %v2029, %v2037
    %vm2039 = vcmp.eq.s32.totalorder %v837, 1
    %v2040 = vsel %vm2039, 1, 0
    %v2041 = vcvt.s32.f32 %v2040
    %v2042 = vmax.f32 %v1790, 0.0
    %v2044 = vrot.slane %v2042, 2
    %v2045 = vsel %vm849, %v2044, 0
    %2047 = vmatprep.subr.mxu0 0.0
    %2048 = vmatpush1.msra.mxu0 %v828
    %2049 = vmatprep.subr.mxu0 0.0
    %2050 = vmatpush1.msra.mxu0 %v829
    %2051 = vmatprep.subr.mxu0 0.0
    %2052 = vmatpush1.msra.mxu0 %v830
    %2053 = vmatprep.subr.mxu0 0.0
    %2054 = vmatpush1.msra.mxu0 %v831
    %2055 = vmatprep.subr.mxu0 0.0
    %2056 = vmatpush1.msra.mxu0 0.0
    %2057 = vmatprep.subr.mxu0 0.0
    %2058 = vmatpush1.msra.mxu0 0.0
    %2059 = vmatprep.subr.mxu0 0.0
    %2060 = vmatpush1.msra.mxu0 0.0
    %2061 = vmatprep.subr.mxu0 0.0
    %2062 = vmatpush1.msra.mxu0 0.0
    %2063 = vmatprep.subr.mxu0 0.0
    %2064 = vmatpush1.msra.mxu0 0.0
    %2065 = vmatprep.subr.mxu0 0.0
    %2066 = vmatpush1.msra.mxu0 0.0
    %2067 = vmatprep.subr.mxu0 0.0
    %2068 = vmatpush1.msra.mxu0 0.0
    %2069 = vmatprep.subr.mxu0 0.0
    %2070 = vmatpush1.msra.mxu0 0.0
    %2071 = vmatprep.subr.mxu0 0.0
    %2072 = vmatpush1.msra.mxu0 0.0
    %2073 = vmatprep.subr.mxu0 0.0
    %2074 = vmatpush1.msra.mxu0 0.0
    %2075 = vmatprep.subr.mxu0 0.0
    %2076 = vmatpush1.msra.mxu0 0.0
    %2077 = vmatprep.subr.mxu0 0.0
    %2078 = vmatpush1.msra.mxu0 0.0
    %2079 = vmatprep.subr.mxu0 0.0
    %2080 = vmatpush1.msra.mxu0 0.0
    %2081 = vmatprep.subr.mxu0 0.0
    %2082 = vmatpush1.msra.mxu0 0.0
    %2083 = vmatprep.subr.mxu0 0.0
    %2084 = vmatpush1.msra.mxu0 0.0
    %2085 = vmatprep.subr.mxu0 0.0
    %2086 = vmatpush1.msra.mxu0 0.0
    %2087 = vmatprep.subr.mxu0 0.0
    %2088 = vmatpush1.msra.mxu0 0.0
    %2089 = vmatprep.subr.mxu0 0.0
    %2090 = vmatpush1.msra.mxu0 0.0
    %2091 = vmatprep.subr.mxu0 0.0
    %2092 = vmatpush1.msra.mxu0 0.0
    %2093 = vmatprep.subr.mxu0 0.0
    %2094 = vmatpush1.msra.mxu0 0.0
    %2095 = vmatprep.subr.mxu0 0.0
    %2096 = vmatpush1.msra.mxu0 0.0
    %2097 = vmatprep.subr.mxu0 0.0
    %2098 = vmatpush1.msra.mxu0 0.0
    %2099 = vmatprep.subr.mxu0 0.0
    %2100 = vmatpush1.msra.mxu0 0.0
    %2101 = vmatprep.subr.mxu0 0.0
    %2102 = vmatpush1.msra.mxu0 0.0
    %2103 = vmatprep.subr.mxu0 0.0
    %2104 = vmatpush1.msra.mxu0 0.0
    %2105 = vmatprep.subr.mxu0 0.0
    %2106 = vmatpush1.msra.mxu0 0.0
    %2107 = vmatprep.subr.mxu0 0.0
    %2108 = vmatpush1.msra.mxu0 0.0
    %2109 = vmatprep.subr.mxu0 0.0
    %2110 = vmatpush1.msra.mxu0 0.0
    %2111 = vmatprep.mubr.f32.mxu0 0.0
    %2112 = vmatmul.mubr.f32.gmra.mrb[0].mxu0 %v2045
    %v2113 = vpop.f32.mrb[0].mxu0
    %v2114 = vadd.f32 0.0, %v2113
    %v2115 = vpop.f32.mrb[0].mxu0
    %2116 = vdwg.mxu0
    %2118 = vset.pattern.permute.xlu0 0
    %2119 = vperm.xlu0 %2118, %v2114
    %v2120 = vpop.permute.xlu0 %2119
    %v2122 = vmul.f32 %v2120, %v2041
    %v2123 = vadd.f32 %v1461, %v2122
    %v2124 = vmax.f32 %v2038, 0.0
    %v2126 = vrot.slane %v2124, 2
    %v2127 = vsel %vm849, %v2126, 0
    %2129 = vmatprep.subr.mxu0 0.0
    %2130 = vmatpush1.msra.mxu0 %v828
    %2131 = vmatprep.subr.mxu0 0.0
    %2132 = vmatpush1.msra.mxu0 %v829
    %2133 = vmatprep.subr.mxu0 0.0
    %2134 = vmatpush1.msra.mxu0 %v830
    %2135 = vmatprep.subr.mxu0 0.0
    %2136 = vmatpush1.msra.mxu0 %v831
    %2137 = vmatprep.subr.mxu0 0.0
    %2138 = vmatpush1.msra.mxu0 0.0
    %2139 = vmatprep.subr.mxu0 0.0
    %2140 = vmatpush1.msra.mxu0 0.0
    %2141 = vmatprep.subr.mxu0 0.0
    %2142 = vmatpush1.msra.mxu0 0.0
    %2143 = vmatprep.subr.mxu0 0.0
    %2144 = vmatpush1.msra.mxu0 0.0
    %2145 = vmatprep.subr.mxu0 0.0
    %2146 = vmatpush1.msra.mxu0 0.0
    %2147 = vmatprep.subr.mxu0 0.0
    %2148 = vmatpush1.msra.mxu0 0.0
    %2149 = vmatprep.subr.mxu0 0.0
    %2150 = vmatpush1.msra.mxu0 0.0
    %2151 = vmatprep.subr.mxu0 0.0
    %2152 = vmatpush1.msra.mxu0 0.0
    %2153 = vmatprep.subr.mxu0 0.0
    %2154 = vmatpush1.msra.mxu0 0.0
    %2155 = vmatprep.subr.mxu0 0.0
    %2156 = vmatpush1.msra.mxu0 0.0
    %2157 = vmatprep.subr.mxu0 0.0
    %2158 = vmatpush1.msra.mxu0 0.0
    %2159 = vmatprep.subr.mxu0 0.0
    %2160 = vmatpush1.msra.mxu0 0.0
    %2161 = vmatprep.subr.mxu0 0.0
    %2162 = vmatpush1.msra.mxu0 0.0
    %2163 = vmatprep.subr.mxu0 0.0
    %2164 = vmatpush1.msra.mxu0 0.0
    %2165 = vmatprep.subr.mxu0 0.0
    %2166 = vmatpush1.msra.mxu0 0.0
    %2167 = vmatprep.subr.mxu0 0.0
    %2168 = vmatpush1.msra.mxu0 0.0
    %2169 = vmatprep.subr.mxu0 0.0
    %2170 = vmatpush1.msra.mxu0 0.0
    %2171 = vmatprep.subr.mxu0 0.0
    %2172 = vmatpush1.msra.mxu0 0.0
    %2173 = vmatprep.subr.mxu0 0.0
    %2174 = vmatpush1.msra.mxu0 0.0
    %2175 = vmatprep.subr.mxu0 0.0
    %2176 = vmatpush1.msra.mxu0 0.0
    %2177 = vmatprep.subr.mxu0 0.0
    %2178 = vmatpush1.msra.mxu0 0.0
    %2179 = vmatprep.subr.mxu0 0.0
    %2180 = vmatpush1.msra.mxu0 0.0
    %2181 = vmatprep.subr.mxu0 0.0
    %2182 = vmatpush1.msra.mxu0 0.0
    %2183 = vmatprep.subr.mxu0 0.0
    %2184 = vmatpush1.msra.mxu0 0.0
    %2185 = vmatprep.subr.mxu0 0.0
    %2186 = vmatpush1.msra.mxu0 0.0
    %2187 = vmatprep.subr.mxu0 0.0
    %2188 = vmatpush1.msra.mxu0 0.0
    %2189 = vmatprep.subr.mxu0 0.0
    %2190 = vmatpush1.msra.mxu0 0.0
    %2191 = vmatprep.subr.mxu0 0.0
    %2192 = vmatpush1.msra.mxu0 0.0
    %2193 = vmatprep.mubr.f32.mxu0 0.0
    %2194 = vmatmul.mubr.f32.gmra.mrb[0].mxu0 %v2127
    %v2195 = vpop.f32.mrb[0].mxu0
    %v2196 = vadd.f32 0.0, %v2195
    %v2197 = vpop.f32.mrb[0].mxu0
    %2198 = vdwg.mxu0
    %2200 = vset.pattern.permute.xlu0 0
    %2201 = vperm.xlu0 %2200, %v2196
    %v2202 = vpop.permute.xlu0 %2201
    %v2204 = vmul.f32 %v2202, %v2041
    %v2205 = vadd.f32 %v1542, %v2204
    %v2207 = vrot.slane %v1790, 2
    %v2208 = vsel %vm849, %v2207, 0
    %2210 = vmatprep.subr.mxu0 0.0
    %2211 = vmatpush1.msra.mxu0 %v838
    %2212 = vmatprep.subr.mxu0 0.0
    %2213 = vmatpush1.msra.mxu0 %v839
    %2214 = vmatprep.subr.mxu0 0.0
    %2215 = vmatpush1.msra.mxu0 %v840
    %2216 = vmatprep.subr.mxu0 0.0
    %2217 = vmatpush1.msra.mxu0 %v841
    %2218 = vmatprep.subr.mxu0 0.0
    %2219 = vmatpush1.msra.mxu0 0.0
    %2220 = vmatprep.subr.mxu0 0.0
    %2221 = vmatpush1.msra.mxu0 0.0
    %2222 = vmatprep.subr.mxu0 0.0
    %2223 = vmatpush1.msra.mxu0 0.0
    %2224 = vmatprep.subr.mxu0 0.0
    %2225 = vmatpush1.msra.mxu0 0.0
    %2226 = vmatprep.subr.mxu0 0.0
    %2227 = vmatpush1.msra.mxu0 0.0
    %2228 = vmatprep.subr.mxu0 0.0
    %2229 = vmatpush1.msra.mxu0 0.0
    %2230 = vmatprep.subr.mxu0 0.0
    %2231 = vmatpush1.msra.mxu0 0.0
    %2232 = vmatprep.subr.mxu0 0.0
    %2233 = vmatpush1.msra.mxu0 0.0
    %2234 = vmatprep.subr.mxu0 0.0
    %2235 = vmatpush1.msra.mxu0 0.0
    %2236 = vmatprep.subr.mxu0 0.0
    %2237 = vmatpush1.msra.mxu0 0.0
    %2238 = vmatprep.subr.mxu0 0.0
    %2239 = vmatpush1.msra.mxu0 0.0
    %2240 = vmatprep.subr.mxu0 0.0
    %2241 = vmatpush1.msra.mxu0 0.0
    %2242 = vmatprep.subr.mxu0 0.0
    %2243 = vmatpush1.msra.mxu0 0.0
    %2244 = vmatprep.subr.mxu0 0.0
    %2245 = vmatpush1.msra.mxu0 0.0
    %2246 = vmatprep.subr.mxu0 0.0
    %2247 = vmatpush1.msra.mxu0 0.0
    %2248 = vmatprep.subr.mxu0 0.0
    %2249 = vmatpush1.msra.mxu0 0.0
    %2250 = vmatprep.subr.mxu0 0.0
    %2251 = vmatpush1.msra.mxu0 0.0
    %2252 = vmatprep.subr.mxu0 0.0
    %2253 = vmatpush1.msra.mxu0 0.0
    %2254 = vmatprep.subr.mxu0 0.0
    %2255 = vmatpush1.msra.mxu0 0.0
    %2256 = vmatprep.subr.mxu0 0.0
    %2257 = vmatpush1.msra.mxu0 0.0
    %2258 = vmatprep.subr.mxu0 0.0
    %2259 = vmatpush1.msra.mxu0 0.0
    %2260 = vmatprep.subr.mxu0 0.0
    %2261 = vmatpush1.msra.mxu0 0.0
    %2262 = vmatprep.subr.mxu0 0.0
    %2263 = vmatpush1.msra.mxu0 0.0
    %2264 = vmatprep.subr.mxu0 0.0
    %2265 = vmatpush1.msra.mxu0 0.0
    %2266 = vmatprep.subr.mxu0 0.0
    %2267 = vmatpush1.msra.mxu0 0.0
    %2268 = vmatprep.subr.mxu0 0.0
    %2269 = vmatpush1.msra.mxu0 0.0
    %2270 = vmatprep.subr.mxu0 0.0
    %2271 = vmatpush1.msra.mxu0 0.0
    %2272 = vmatprep.subr.mxu0 0.0
    %2273 = vmatpush1.msra.mxu0 0.0
    %2274 = vmatprep.mubr.f32.mxu0 0.0
    %2275 = vmatmul.mubr.f32.gmra.mrb[0].mxu0 %v2208
    %v2276 = vpop.f32.mrb[0].mxu0
    %v2277 = vadd.f32 %v847, %v2276
    %v2278 = vpop.f32.mrb[0].mxu0
    %2279 = vdwg.mxu0
    %2280 = vmatprep.subr.mxu0 0.0
    %2281 = vmatpush1.msra.mxu0 %v924
    %2282 = vmatprep.subr.mxu0 0.0
    %2283 = vmatpush1.msra.mxu0 %v925
    %2284 = vmatprep.subr.mxu0 0.0
    %2285 = vmatpush1.msra.mxu0 %v926
    %2286 = vmatprep.subr.mxu0 0.0
    %2287 = vmatpush1.msra.mxu0 %v927
    %2288 = vmatprep.subr.mxu0 0.0
    %2289 = vmatpush1.msra.mxu0 0.0
    %2290 = vmatprep.subr.mxu0 0.0
    %2291 = vmatpush1.msra.mxu0 0.0
    %2292 = vmatprep.subr.mxu0 0.0
    %2293 = vmatpush1.msra.mxu0 0.0
    %2294 = vmatprep.subr.mxu0 0.0
    %2295 = vmatpush1.msra.mxu0 0.0
    %2296 = vmatprep.subr.mxu0 0.0
    %2297 = vmatpush1.msra.mxu0 0.0
    %2298 = vmatprep.subr.mxu0 0.0
    %2299 = vmatpush1.msra.mxu0 0.0
    %2300 = vmatprep.subr.mxu0 0.0
    %2301 = vmatpush1.msra.mxu0 0.0
    %2302 = vmatprep.subr.mxu0 0.0
    %2303 = vmatpush1.msra.mxu0 0.0
    %2304 = vmatprep.subr.mxu0 0.0
    %2305 = vmatpush1.msra.mxu0 0.0
    %2306 = vmatprep.subr.mxu0 0.0
    %2307 = vmatpush1.msra.mxu0 0.0
    %2308 = vmatprep.subr.mxu0 0.0
    %2309 = vmatpush1.msra.mxu0 0.0
    %2310 = vmatprep.subr.mxu0 0.0
    %2311 = vmatpush1.msra.mxu0 0.0
    %2312 = vmatprep.subr.mxu0 0.0
    %2313 = vmatpush1.msra.mxu0 0.0
    %2314 = vmatprep.subr.mxu0 0.0
    %2315 = vmatpush1.msra.mxu0 0.0
    %2316 = vmatprep.subr.mxu0 0.0
    %2317 = vmatpush1.msra.mxu0 0.0
    %2318 = vmatprep.subr.mxu0 0.0
    %2319 = vmatpush1.msra.mxu0 0.0
    %2320 = vmatprep.subr.mxu0 0.0
    %2321 = vmatpush1.msra.mxu0 0.0
    %2322 = vmatprep.subr.mxu0 0.0
    %2323 = vmatpush1.msra.mxu0 0.0
    %2324 = vmatprep.subr.mxu0 0.0
    %2325 = vmatpush1.msra.mxu0 0.0
    %2326 = vmatprep.subr.mxu0 0.0
    %2327 = vmatpush1.msra.mxu0 0.0
    %2328 = vmatprep.subr.mxu0 0.0
    %2329 = vmatpush1.msra.mxu0 0.0
    %2330 = vmatprep.subr.mxu0 0.0
    %2331 = vmatpush1.msra.mxu0 0.0
    %2332 = vmatprep.subr.mxu0 0.0
    %2333 = vmatpush1.msra.mxu0 0.0
    %2334 = vmatprep.subr.mxu0 0.0
    %2335 = vmatpush1.msra.mxu0 0.0
    %2336 = vmatprep.subr.mxu0 0.0
    %2337 = vmatpush1.msra.mxu0 0.0
    %2338 = vmatprep.subr.mxu0 0.0
    %2339 = vmatpush1.msra.mxu0 0.0
    %2340 = vmatprep.subr.mxu0 0.0
    %2341 = vmatpush1.msra.mxu0 0.0
    %2342 = vmatprep.subr.mxu0 0.0
    %2343 = vmatpush1.msra.mxu0 0.0
    %2344 = vmatprep.mubr.f32.mxu0 0.0
    %2345 = vmatmul.mubr.f32.gmra.mrb[0].mxu0 %v2208
    %v2346 = vpop.f32.mrb[0].mxu0
    %v2347 = vadd.f32 %v934, %v2346
    %v2348 = vpop.f32.mrb[0].mxu0
    %2349 = vdwg.mxu0
    %2350 = vmatprep.subr.mxu0 0.0
    %2351 = vmatpush1.msra.mxu0 %v1007
    %2352 = vmatprep.subr.mxu0 0.0
    %2353 = vmatpush1.msra.mxu0 %v1008
    %2354 = vmatprep.subr.mxu0 0.0
    %2355 = vmatpush1.msra.mxu0 %v1009
    %2356 = vmatprep.subr.mxu0 0.0
    %2357 = vmatpush1.msra.mxu0 %v1010
    %2358 = vmatprep.subr.mxu0 0.0
    %2359 = vmatpush1.msra.mxu0 0.0
    %2360 = vmatprep.subr.mxu0 0.0
    %2361 = vmatpush1.msra.mxu0 0.0
    %2362 = vmatprep.subr.mxu0 0.0
    %2363 = vmatpush1.msra.mxu0 0.0
    %2364 = vmatprep.subr.mxu0 0.0
    %2365 = vmatpush1.msra.mxu0 0.0
    %2366 = vmatprep.subr.mxu0 0.0
    %2367 = vmatpush1.msra.mxu0 0.0
    %2368 = vmatprep.subr.mxu0 0.0
    %2369 = vmatpush1.msra.mxu0 0.0
    %2370 = vmatprep.subr.mxu0 0.0
    %2371 = vmatpush1.msra.mxu0 0.0
    %2372 = vmatprep.subr.mxu0 0.0
    %2373 = vmatpush1.msra.mxu0 0.0
    %2374 = vmatprep.subr.mxu0 0.0
    %2375 = vmatpush1.msra.mxu0 0.0
    %2376 = vmatprep.subr.mxu0 0.0
    %2377 = vmatpush1.msra.mxu0 0.0
    %2378 = vmatprep.subr.mxu0 0.0
    %2379 = vmatpush1.msra.mxu0 0.0
    %2380 = vmatprep.subr.mxu0 0.0
    %2381 = vmatpush1.msra.mxu0 0.0
    %2382 = vmatprep.subr.mxu0 0.0
    %2383 = vmatpush1.msra.mxu0 0.0
    %2384 = vmatprep.subr.mxu0 0.0
    %2385 = vmatpush1.msra.mxu0 0.0
    %2386 = vmatprep.subr.mxu0 0.0
    %2387 = vmatpush1.msra.mxu0 0.0
    %2388 = vmatprep.subr.mxu0 0.0
    %2389 = vmatpush1.msra.mxu0 0.0
    %2390 = vmatprep.subr.mxu0 0.0
    %2391 = vmatpush1.msra.mxu0 0.0
    %2392 = vmatprep.subr.mxu0 0.0
    %2393 = vmatpush1.msra.mxu0 0.0
    %2394 = vmatprep.subr.mxu0 0.0
    %2395 = vmatpush1.msra.mxu0 0.0
    %2396 = vmatprep.subr.mxu0 0.0
    %2397 = vmatpush1.msra.mxu0 0.0
    %2398 = vmatprep.subr.mxu0 0.0
    %2399 = vmatpush1.msra.mxu0 0.0
    %2400 = vmatprep.subr.mxu0 0.0
    %2401 = vmatpush1.msra.mxu0 0.0
    %2402 = vmatprep.subr.mxu0 0.0
    %2403 = vmatpush1.msra.mxu0 0.0
    %2404 = vmatprep.subr.mxu0 0.0
    %2405 = vmatpush1.msra.mxu0 0.0
    %2406 = vmatprep.subr.mxu0 0.0
    %2407 = vmatpush1.msra.mxu0 0.0
    %2408 = vmatprep.subr.mxu0 0.0
    %2409 = vmatpush1.msra.mxu0 0.0
    %2410 = vmatprep.subr.mxu0 0.0
    %2411 = vmatpush1.msra.mxu0 0.0
    %2412 = vmatprep.subr.mxu0 0.0
    %2413 = vmatpush1.msra.mxu0 0.0
    %2414 = vmatprep.mubr.f32.mxu0 0.0
    %2415 = vmatmul.mubr.f32.gmra.mrb[0].mxu0 %v2208
    %v2416 = vpop.f32.mrb[0].mxu0
    %v2417 = vadd.f32 %v1017, %v2416
    %v2418 = vpop.f32.mrb[0].mxu0
    %2419 = vdwg.mxu0
    %v2421 = vrot.slane %v2277, 4
    %v2423 = vadd.f32 %v138, %v2421
    %v2424 = vxor.u32 %v2423, 2147483648
    %v2425 = vmul.f32 %v2424, 1.442695
    %v2426 = vpow.pop %v2425
    %v2427 = vadd.f32 %v2426, 1.0
    %v2428 = vrcp.pop %v2427
    %v2429 = vmul.f32 1.0, %v2428
    %v2431 = vrot.slane %v2347, 4
    %v2433 = vadd.f32 %v224, %v2431
    %v2434 = vxor.u32 %v2433, 2147483648
    %v2435 = vmul.f32 %v2434, 1.442695
    %v2436 = vpow.pop %v2435
    %v2437 = vadd.f32 %v2436, 1.0
    %v2438 = vrcp.pop %v2437
    %v2439 = vmul.f32 1.0, %v2438
    %v2441 = vrot.slane %v2417, 4
    %v2443 = vmul.f32 %v2429, %v2441
    %v2444 = vadd.f32 %v310, %v2443
    %v2445 = vtanh.pop %v2444
    %v2447 = vrot.slane %v2445, 2
    %v2449 = vsub.f32 %v1790, %v2447
    %v2451 = vrot.slane %v2449, 6
    %v2453 = vmul.f32 %v2439, %v2451
    %v2454 = vadd.f32 %v2445, %v2453
    %v2456 = vrot.slane %v2038, 2
    %v2457 = vsel %vm849, %v2456, 0
    %2459 = vmatprep.subr.mxu0 0.0
    %2460 = vmatpush1.msra.mxu0 %v1110
    %2461 = vmatprep.subr.mxu0 0.0
    %2462 = vmatpush1.msra.mxu0 %v1111
    %2463 = vmatprep.subr.mxu0 0.0
    %2464 = vmatpush1.msra.mxu0 %v1112
    %2465 = vmatprep.subr.mxu0 0.0
    %2466 = vmatpush1.msra.mxu0 %v1113
    %2467 = vmatprep.subr.mxu0 0.0
    %2468 = vmatpush1.msra.mxu0 0.0
    %2469 = vmatprep.subr.mxu0 0.0
    %2470 = vmatpush1.msra.mxu0 0.0
    %2471 = vmatprep.subr.mxu0 0.0
    %2472 = vmatpush1.msra.mxu0 0.0
    %2473 = vmatprep.subr.mxu0 0.0
    %2474 = vmatpush1.msra.mxu0 0.0
    %2475 = vmatprep.subr.mxu0 0.0
    %2476 = vmatpush1.msra.mxu0 0.0
    %2477 = vmatprep.subr.mxu0 0.0
    %2478 = vmatpush1.msra.mxu0 0.0
    %2479 = vmatprep.subr.mxu0 0.0
    %2480 = vmatpush1.msra.mxu0 0.0
    %2481 = vmatprep.subr.mxu0 0.0
    %2482 = vmatpush1.msra.mxu0 0.0
    %2483 = vmatprep.subr.mxu0 0.0
    %2484 = vmatpush1.msra.mxu0 0.0
    %2485 = vmatprep.subr.mxu0 0.0
    %2486 = vmatpush1.msra.mxu0 0.0
    %2487 = vmatprep.subr.mxu0 0.0
    %2488 = vmatpush1.msra.mxu0 0.0
    %2489 = vmatprep.subr.mxu0 0.0
    %2490 = vmatpush1.msra.mxu0 0.0
    %2491 = vmatprep.subr.mxu0 0.0
    %2492 = vmatpush1.msra.mxu0 0.0
    %2493 = vmatprep.subr.mxu0 0.0
    %2494 = vmatpush1.msra.mxu0 0.0
    %2495 = vmatprep.subr.mxu0 0.0
    %2496 = vmatpush1.msra.mxu0 0.0
    %2497 = vmatprep.subr.mxu0 0.0
    %2498 = vmatpush1.msra.mxu0 0.0
    %2499 = vmatprep.subr.mxu0 0.0
    %2500 = vmatpush1.msra.mxu0 0.0
    %2501 = vmatprep.subr.mxu0 0.0
    %2502 = vmatpush1.msra.mxu0 0.0
    %2503 = vmatprep.subr.mxu0 0.0
    %2504 = vmatpush1.msra.mxu0 0.0
    %2505 = vmatprep.subr.mxu0 0.0
    %2506 = vmatpush1.msra.mxu0 0.0
    %2507 = vmatprep.subr.mxu0 0.0
    %2508 = vmatpush1.msra.mxu0 0.0
    %2509 = vmatprep.subr.mxu0 0.0
    %2510 = vmatpush1.msra.mxu0 0.0
    %2511 = vmatprep.subr.mxu0 0.0
    %2512 = vmatpush1.msra.mxu0 0.0
    %2513 = vmatprep.subr.mxu0 0.0
    %2514 = vmatpush1.msra.mxu0 0.0
    %2515 = vmatprep.subr.mxu0 0.0
    %2516 = vmatpush1.msra.mxu0 0.0
    %2517 = vmatprep.subr.mxu0 0.0
    %2518 = vmatpush1.msra.mxu0 0.0
    %2519 = vmatprep.subr.mxu0 0.0
    %2520 = vmatpush1.msra.mxu0 0.0
    %2521 = vmatprep.subr.mxu0 0.0
    %2522 = vmatpush1.msra.mxu0 0.0
    %2523 = vmatprep.mubr.f32.mxu0 0.0
    %2524 = vmatmul.mubr.f32.gmra.mrb[0].mxu0 %v2457
    %v2525 = vpop.f32.mrb[0].mxu0
    %v2526 = vadd.f32 %v1120, %v2525
    %v2527 = vpop.f32.mrb[0].mxu0
    %2528 = vdwg.mxu0
    %2529 = vmatprep.subr.mxu0 0.0
    %2530 = vmatpush1.msra.mxu0 %v1193
    %2531 = vmatprep.subr.mxu0 0.0
    %2532 = vmatpush1.msra.mxu0 %v1194
    %2533 = vmatprep.subr.mxu0 0.0
    %2534 = vmatpush1.msra.mxu0 %v1195
    %2535 = vmatprep.subr.mxu0 0.0
    %2536 = vmatpush1.msra.mxu0 %v1196
    %2537 = vmatprep.subr.mxu0 0.0
    %2538 = vmatpush1.msra.mxu0 0.0
    %2539 = vmatprep.subr.mxu0 0.0
    %2540 = vmatpush1.msra.mxu0 0.0
    %2541 = vmatprep.subr.mxu0 0.0
    %2542 = vmatpush1.msra.mxu0 0.0
    %2543 = vmatprep.subr.mxu0 0.0
    %2544 = vmatpush1.msra.mxu0 0.0
    %2545 = vmatprep.subr.mxu0 0.0
    %2546 = vmatpush1.msra.mxu0 0.0
    %2547 = vmatprep.subr.mxu0 0.0
    %2548 = vmatpush1.msra.mxu0 0.0
    %2549 = vmatprep.subr.mxu0 0.0
    %2550 = vmatpush1.msra.mxu0 0.0
    %2551 = vmatprep.subr.mxu0 0.0
    %2552 = vmatpush1.msra.mxu0 0.0
    %2553 = vmatprep.subr.mxu0 0.0
    %2554 = vmatpush1.msra.mxu0 0.0
    %2555 = vmatprep.subr.mxu0 0.0
    %2556 = vmatpush1.msra.mxu0 0.0
    %2557 = vmatprep.subr.mxu0 0.0
    %2558 = vmatpush1.msra.mxu0 0.0
    %2559 = vmatprep.subr.mxu0 0.0
    %2560 = vmatpush1.msra.mxu0 0.0
    %2561 = vmatprep.subr.mxu0 0.0
    %2562 = vmatpush1.msra.mxu0 0.0
    %2563 = vmatprep.subr.mxu0 0.0
    %2564 = vmatpush1.msra.mxu0 0.0
    %2565 = vmatprep.subr.mxu0 0.0
    %2566 = vmatpush1.msra.mxu0 0.0
    %2567 = vmatprep.subr.mxu0 0.0
    %2568 = vmatpush1.msra.mxu0 0.0
    %2569 = vmatprep.subr.mxu0 0.0
    %2570 = vmatpush1.msra.mxu0 0.0
    %2571 = vmatprep.subr.mxu0 0.0
    %2572 = vmatpush1.msra.mxu0 0.0
    %2573 = vmatprep.subr.mxu0 0.0
    %2574 = vmatpush1.msra.mxu0 0.0
    %2575 = vmatprep.subr.mxu0 0.0
    %2576 = vmatpush1.msra.mxu0 0.0
    %2577 = vmatprep.subr.mxu0 0.0
    %2578 = vmatpush1.msra.mxu0 0.0
    %2579 = vmatprep.subr.mxu0 0.0
    %2580 = vmatpush1.msra.mxu0 0.0
    %2581 = vmatprep.subr.mxu0 0.0
    %2582 = vmatpush1.msra.mxu0 0.0
    %2583 = vmatprep.subr.mxu0 0.0
    %2584 = vmatpush1.msra.mxu0 0.0
    %2585 = vmatprep.subr.mxu0 0.0
    %2586 = vmatpush1.msra.mxu0 0.0
    %2587 = vmatprep.subr.mxu0 0.0
    %2588 = vmatpush1.msra.mxu0 0.0
    %2589 = vmatprep.subr.mxu0 0.0
    %2590 = vmatpush1.msra.mxu0 0.0
    %2591 = vmatprep.subr.mxu0 0.0
    %2592 = vmatpush1.msra.mxu0 0.0
    %2593 = vmatprep.mubr.f32.mxu0 0.0
    %2594 = vmatmul.mubr.f32.gmra.mrb[0].mxu0 %v2457
    %v2595 = vpop.f32.mrb[0].mxu0
    %v2596 = vadd.f32 %v1203, %v2595
    %v2597 = vpop.f32.mrb[0].mxu0
    %2598 = vdwg.mxu0
    %2599 = vmatprep.subr.mxu0 0.0
    %2600 = vmatpush1.msra.mxu0 %v1276
    %2601 = vmatprep.subr.mxu0 0.0
    %2602 = vmatpush1.msra.mxu0 %v1277
    %2603 = vmatprep.subr.mxu0 0.0
    %2604 = vmatpush1.msra.mxu0 %v1278
    %2605 = vmatprep.subr.mxu0 0.0
    %2606 = vmatpush1.msra.mxu0 %v1279
    %2607 = vmatprep.subr.mxu0 0.0
    %2608 = vmatpush1.msra.mxu0 0.0
    %2609 = vmatprep.subr.mxu0 0.0
    %2610 = vmatpush1.msra.mxu0 0.0
    %2611 = vmatprep.subr.mxu0 0.0
    %2612 = vmatpush1.msra.mxu0 0.0
    %2613 = vmatprep.subr.mxu0 0.0
    %2614 = vmatpush1.msra.mxu0 0.0
    %2615 = vmatprep.subr.mxu0 0.0
    %2616 = vmatpush1.msra.mxu0 0.0
    %2617 = vmatprep.subr.mxu0 0.0
    %2618 = vmatpush1.msra.mxu0 0.0
    %2619 = vmatprep.subr.mxu0 0.0
    %2620 = vmatpush1.msra.mxu0 0.0
    %2621 = vmatprep.subr.mxu0 0.0
    %2622 = vmatpush1.msra.mxu0 0.0
    %2623 = vmatprep.subr.mxu0 0.0
    %2624 = vmatpush1.msra.mxu0 0.0
    %2625 = vmatprep.subr.mxu0 0.0
    %2626 = vmatpush1.msra.mxu0 0.0
    %2627 = vmatprep.subr.mxu0 0.0
    %2628 = vmatpush1.msra.mxu0 0.0
    %2629 = vmatprep.subr.mxu0 0.0
    %2630 = vmatpush1.msra.mxu0 0.0
    %2631 = vmatprep.subr.mxu0 0.0
    %2632 = vmatpush1.msra.mxu0 0.0
    %2633 = vmatprep.subr.mxu0 0.0
    %2634 = vmatpush1.msra.mxu0 0.0
    %2635 = vmatprep.subr.mxu0 0.0
    %2636 = vmatpush1.msra.mxu0 0.0
    %2637 = vmatprep.subr.mxu0 0.0
    %2638 = vmatpush1.msra.mxu0 0.0
    %2639 = vmatprep.subr.mxu0 0.0
    %2640 = vmatpush1.msra.mxu0 0.0
    %2641 = vmatprep.subr.mxu0 0.0
    %2642 = vmatpush1.msra.mxu0 0.0
    %2643 = vmatprep.subr.mxu0 0.0
    %2644 = vmatpush1.msra.mxu0 0.0
    %2645 = vmatprep.subr.mxu0 0.0
    %2646 = vmatpush1.msra.mxu0 0.0
    %2647 = vmatprep.subr.mxu0 0.0
    %2648 = vmatpush1.msra.mxu0 0.0
    %2649 = vmatprep.subr.mxu0 0.0
    %2650 = vmatpush1.msra.mxu0 0.0
    %2651 = vmatprep.subr.mxu0 0.0
    %2652 = vmatpush1.msra.mxu0 0.0
    %2653 = vmatprep.subr.mxu0 0.0
    %2654 = vmatpush1.msra.mxu0 0.0
    %2655 = vmatprep.subr.mxu0 0.0
    %2656 = vmatpush1.msra.mxu0 0.0
    %2657 = vmatprep.subr.mxu0 0.0
    %2658 = vmatpush1.msra.mxu0 0.0
    %2659 = vmatprep.subr.mxu0 0.0
    %2660 = vmatpush1.msra.mxu0 0.0
    %2661 = vmatprep.subr.mxu0 0.0
    %2662 = vmatpush1.msra.mxu0 0.0
    %2663 = vmatprep.mubr.f32.mxu0 0.0
    %2664 = vmatmul.mubr.f32.gmra.mrb[0].mxu0 %v2457
    %v2665 = vpop.f32.mrb[0].mxu0
    %v2666 = vadd.f32 %v1286, %v2665
    %v2667 = vpop.f32.mrb[0].mxu0
    %2668 = vdwg.mxu0
    %v2670 = vrot.slane %v2526, 4
    %v2672 = vadd.f32 %v402, %v2670
    %v2673 = vxor.u32 %v2672, 2147483648
    %v2674 = vmul.f32 %v2673, 1.442695
    %v2675 = vpow.pop %v2674
    %v2676 = vadd.f32 %v2675, 1.0
    %v2677 = vrcp.pop %v2676
    %v2678 = vmul.f32 1.0, %v2677
    %v2680 = vrot.slane %v2596, 4
    %v2682 = vadd.f32 %v488, %v2680
    %v2683 = vxor.u32 %v2682, 2147483648
    %v2684 = vmul.f32 %v2683, 1.442695
    %v2685 = vpow.pop %v2684
    %v2686 = vadd.f32 %v2685, 1.0
    %v2687 = vrcp.pop %v2686
    %v2688 = vmul.f32 1.0, %v2687
    %v2690 = vrot.slane %v2666, 4
    %v2692 = vmul.f32 %v2678, %v2690
    %v2693 = vadd.f32 %v574, %v2692
    %v2694 = vtanh.pop %v2693
    %v2696 = vrot.slane %v2694, 2
    %v2698 = vsub.f32 %v2038, %v2696
    %v2700 = vrot.slane %v2698, 6
    %v2702 = vmul.f32 %v2688, %v2700
    %v2703 = vadd.f32 %v2694, %v2702
    %vm2704 = vcmp.eq.s32.totalorder %v837, 2
    %v2705 = vsel %vm2704, 1, 0
    %v2706 = vcvt.s32.f32 %v2705
    %v2707 = vmax.f32 %v2454, 0.0
    %v2709 = vrot.slane %v2707, 4
    %v2710 = vsel %vm849, %v2709, 0
    %2712 = vmatprep.subr.mxu0 0.0
    %2713 = vmatpush1.msra.mxu0 %v828
    %2714 = vmatprep.subr.mxu0 0.0
    %2715 = vmatpush1.msra.mxu0 %v829
    %2716 = vmatprep.subr.mxu0 0.0
    %2717 = vmatpush1.msra.mxu0 %v830
    %2718 = vmatprep.subr.mxu0 0.0
    %2719 = vmatpush1.msra.mxu0 %v831
    %2720 = vmatprep.subr.mxu0 0.0
    %2721 = vmatpush1.msra.mxu0 0.0
    %2722 = vmatprep.subr.mxu0 0.0
    %2723 = vmatpush1.msra.mxu0 0.0
    %2724 = vmatprep.subr.mxu0 0.0
    %2725 = vmatpush1.msra.mxu0 0.0
    %2726 = vmatprep.subr.mxu0 0.0
    %2727 = vmatpush1.msra.mxu0 0.0
    %2728 = vmatprep.subr.mxu0 0.0
    %2729 = vmatpush1.msra.mxu0 0.0
    %2730 = vmatprep.subr.mxu0 0.0
    %2731 = vmatpush1.msra.mxu0 0.0
    %2732 = vmatprep.subr.mxu0 0.0
    %2733 = vmatpush1.msra.mxu0 0.0
    %2734 = vmatprep.subr.mxu0 0.0
    %2735 = vmatpush1.msra.mxu0 0.0
    %2736 = vmatprep.subr.mxu0 0.0
    %2737 = vmatpush1.msra.mxu0 0.0
    %2738 = vmatprep.subr.mxu0 0.0
    %2739 = vmatpush1.msra.mxu0 0.0
    %2740 = vmatprep.subr.mxu0 0.0
    %2741 = vmatpush1.msra.mxu0 0.0
    %2742 = vmatprep.subr.mxu0 0.0
    %2743 = vmatpush1.msra.mxu0 0.0
    %2744 = vmatprep.subr.mxu0 0.0
    %2745 = vmatpush1.msra.mxu0 0.0
    %2746 = vmatprep.subr.mxu0 0.0
    %2747 = vmatpush1.msra.mxu0 0.0
    %2748 = vmatprep.subr.mxu0 0.0
    %2749 = vmatpush1.msra.mxu0 0.0
    %2750 = vmatprep.subr.mxu0 0.0
    %2751 = vmatpush1.msra.mxu0 0.0
    %2752 = vmatprep.subr.mxu0 0.0
    %2753 = vmatpush1.msra.mxu0 0.0
    %2754 = vmatprep.subr.mxu0 0.0
    %2755 = vmatpush1.msra.mxu0 0.0
    %2756 = vmatprep.subr.mxu0 0.0
    %2757 = vmatpush1.msra.mxu0 0.0
    %2758 = vmatprep.subr.mxu0 0.0
    %2759 = vmatpush1.msra.mxu0 0.0
    %2760 = vmatprep.subr.mxu0 0.0
    %2761 = vmatpush1.msra.mxu0 0.0
    %2762 = vmatprep.subr.mxu0 0.0
    %2763 = vmatpush1.msra.mxu0 0.0
    %2764 = vmatprep.subr.mxu0 0.0
    %2765 = vmatpush1.msra.mxu0 0.0
    %2766 = vmatprep.subr.mxu0 0.0
    %2767 = vmatpush1.msra.mxu0 0.0
    %2768 = vmatprep.subr.mxu0 0.0
    %2769 = vmatpush1.msra.mxu0 0.0
    %2770 = vmatprep.subr.mxu0 0.0
    %2771 = vmatpush1.msra.mxu0 0.0
    %2772 = vmatprep.subr.mxu0 0.0
    %2773 = vmatpush1.msra.mxu0 0.0
    %2774 = vmatprep.subr.mxu0 0.0
    %2775 = vmatpush1.msra.mxu0 0.0
    %2776 = vmatprep.mubr.f32.mxu0 0.0
    %2777 = vmatmul.mubr.f32.gmra.mrb[0].mxu0 %v2710
    %v2778 = vpop.f32.mrb[0].mxu0
    %v2779 = vadd.f32 0.0, %v2778
    %v2780 = vpop.f32.mrb[0].mxu0
    %2781 = vdwg.mxu0
    %2783 = vset.pattern.permute.xlu0 0
    %2784 = vperm.xlu0 %2783, %v2779
    %v2785 = vpop.permute.xlu0 %2784
    %v2787 = vmul.f32 %v2785, %v2706
    %v2788 = vadd.f32 %v2123, %v2787
    %v2789 = vmax.f32 %v2703, 0.0
    %v2791 = vrot.slane %v2789, 4
    %v2792 = vsel %vm849, %v2791, 0
    %2794 = vmatprep.subr.mxu0 0.0
    %2795 = vmatpush1.msra.mxu0 %v828
    %2796 = vmatprep.subr.mxu0 0.0
    %2797 = vmatpush1.msra.mxu0 %v829
    %2798 = vmatprep.subr.mxu0 0.0
    %2799 = vmatpush1.msra.mxu0 %v830
    %2800 = vmatprep.subr.mxu0 0.0
    %2801 = vmatpush1.msra.mxu0 %v831
    %2802 = vmatprep.subr.mxu0 0.0
    %2803 = vmatpush1.msra.mxu0 0.0
    %2804 = vmatprep.subr.mxu0 0.0
    %2805 = vmatpush1.msra.mxu0 0.0
    %2806 = vmatprep.subr.mxu0 0.0
    %2807 = vmatpush1.msra.mxu0 0.0
    %2808 = vmatprep.subr.mxu0 0.0
    %2809 = vmatpush1.msra.mxu0 0.0
    %2810 = vmatprep.subr.mxu0 0.0
    %2811 = vmatpush1.msra.mxu0 0.0
    %2812 = vmatprep.subr.mxu0 0.0
    %2813 = vmatpush1.msra.mxu0 0.0
    %2814 = vmatprep.subr.mxu0 0.0
    %2815 = vmatpush1.msra.mxu0 0.0
    %2816 = vmatprep.subr.mxu0 0.0
    %2817 = vmatpush1.msra.mxu0 0.0
    %2818 = vmatprep.subr.mxu0 0.0
    %2819 = vmatpush1.msra.mxu0 0.0
    %2820 = vmatprep.subr.mxu0 0.0
    %2821 = vmatpush1.msra.mxu0 0.0
    %2822 = vmatprep.subr.mxu0 0.0
    %2823 = vmatpush1.msra.mxu0 0.0
    %2824 = vmatprep.subr.mxu0 0.0
    %2825 = vmatpush1.msra.mxu0 0.0
    %2826 = vmatprep.subr.mxu0 0.0
    %2827 = vmatpush1.msra.mxu0 0.0
    %2828 = vmatprep.subr.mxu0 0.0
    %2829 = vmatpush1.msra.mxu0 0.0
    %2830 = vmatprep.subr.mxu0 0.0
    %2831 = vmatpush1.msra.mxu0 0.0
    %2832 = vmatprep.subr.mxu0 0.0
    %2833 = vmatpush1.msra.mxu0 0.0
    %2834 = vmatprep.subr.mxu0 0.0
    %2835 = vmatpush1.msra.mxu0 0.0
    %2836 = vmatprep.subr.mxu0 0.0
    %2837 = vmatpush1.msra.mxu0 0.0
    %2838 = vmatprep.subr.mxu0 0.0
    %2839 = vmatpush1.msra.mxu0 0.0
    %2840 = vmatprep.subr.mxu0 0.0
    %2841 = vmatpush1.msra.mxu0 0.0
    %2842 = vmatprep.subr.mxu0 0.0
    %2843 = vmatpush1.msra.mxu0 0.0
    %2844 = vmatprep.subr.mxu0 0.0
    %2845 = vmatpush1.msra.mxu0 0.0
    %2846 = vmatprep.subr.mxu0 0.0
    %2847 = vmatpush1.msra.mxu0 0.0
    %2848 = vmatprep.subr.mxu0 0.0
    %2849 = vmatpush1.msra.mxu0 0.0
    %2850 = vmatprep.subr.mxu0 0.0
    %2851 = vmatpush1.msra.mxu0 0.0
    %2852 = vmatprep.subr.mxu0 0.0
    %2853 = vmatpush1.msra.mxu0 0.0
    %2854 = vmatprep.subr.mxu0 0.0
    %2855 = vmatpush1.msra.mxu0 0.0
    %2856 = vmatprep.subr.mxu0 0.0
    %2857 = vmatpush1.msra.mxu0 0.0
    %2858 = vmatprep.mubr.f32.mxu0 0.0
    %2859 = vmatmul.mubr.f32.gmra.mrb[0].mxu0 %v2792
    %v2860 = vpop.f32.mrb[0].mxu0
    %v2861 = vadd.f32 0.0, %v2860
    %v2862 = vpop.f32.mrb[0].mxu0
    %2863 = vdwg.mxu0
    %2865 = vset.pattern.permute.xlu0 0
    %2866 = vperm.xlu0 %2865, %v2861
    %v2867 = vpop.permute.xlu0 %2866
    %v2869 = vmul.f32 %v2867, %v2706
    %v2870 = vadd.f32 %v2205, %v2869
    %v2872 = vrot.slane %v2454, 4
    %v2873 = vsel %vm849, %v2872, 0
    %2875 = vmatprep.subr.mxu0 0.0
    %2876 = vmatpush1.msra.mxu0 %v838
    %2877 = vmatprep.subr.mxu0 0.0
    %2878 = vmatpush1.msra.mxu0 %v839
    %2879 = vmatprep.subr.mxu0 0.0
    %2880 = vmatpush1.msra.mxu0 %v840
    %2881 = vmatprep.subr.mxu0 0.0
    %2882 = vmatpush1.msra.mxu0 %v841
    %2883 = vmatprep.subr.mxu0 0.0
    %2884 = vmatpush1.msra.mxu0 0.0
    %2885 = vmatprep.subr.mxu0 0.0
    %2886 = vmatpush1.msra.mxu0 0.0
    %2887 = vmatprep.subr.mxu0 0.0
    %2888 = vmatpush1.msra.mxu0 0.0
    %2889 = vmatprep.subr.mxu0 0.0
    %2890 = vmatpush1.msra.mxu0 0.0
    %2891 = vmatprep.subr.mxu0 0.0
    %2892 = vmatpush1.msra.mxu0 0.0
    %2893 = vmatprep.subr.mxu0 0.0
    %2894 = vmatpush1.msra.mxu0 0.0
    %2895 = vmatprep.subr.mxu0 0.0
    %2896 = vmatpush1.msra.mxu0 0.0
    %2897 = vmatprep.subr.mxu0 0.0
    %2898 = vmatpush1.msra.mxu0 0.0
    %2899 = vmatprep.subr.mxu0 0.0
    %2900 = vmatpush1.msra.mxu0 0.0
    %2901 = vmatprep.subr.mxu0 0.0
    %2902 = vmatpush1.msra.mxu0 0.0
    %2903 = vmatprep.subr.mxu0 0.0
    %2904 = vmatpush1.msra.mxu0 0.0
    %2905 = vmatprep.subr.mxu0 0.0
    %2906 = vmatpush1.msra.mxu0 0.0
    %2907 = vmatprep.subr.mxu0 0.0
    %2908 = vmatpush1.msra.mxu0 0.0
    %2909 = vmatprep.subr.mxu0 0.0
    %2910 = vmatpush1.msra.mxu0 0.0
    %2911 = vmatprep.subr.mxu0 0.0
    %2912 = vmatpush1.msra.mxu0 0.0
    %2913 = vmatprep.subr.mxu0 0.0
    %2914 = vmatpush1.msra.mxu0 0.0
    %2915 = vmatprep.subr.mxu0 0.0
    %2916 = vmatpush1.msra.mxu0 0.0
    %2917 = vmatprep.subr.mxu0 0.0
    %2918 = vmatpush1.msra.mxu0 0.0
    %2919 = vmatprep.subr.mxu0 0.0
    %2920 = vmatpush1.msra.mxu0 0.0
    %2921 = vmatprep.subr.mxu0 0.0
    %2922 = vmatpush1.msra.mxu0 0.0
    %2923 = vmatprep.subr.mxu0 0.0
    %2924 = vmatpush1.msra.mxu0 0.0
    %2925 = vmatprep.subr.mxu0 0.0
    %2926 = vmatpush1.msra.mxu0 0.0
    %2927 = vmatprep.subr.mxu0 0.0
    %2928 = vmatpush1.msra.mxu0 0.0
    %2929 = vmatprep.subr.mxu0 0.0
    %2930 = vmatpush1.msra.mxu0 0.0
    %2931 = vmatprep.subr.mxu0 0.0
    %2932 = vmatpush1.msra.mxu0 0.0
    %2933 = vmatprep.subr.mxu0 0.0
    %2934 = vmatpush1.msra.mxu0 0.0
    %2935 = vmatprep.subr.mxu0 0.0
    %2936 = vmatpush1.msra.mxu0 0.0
    %2937 = vmatprep.subr.mxu0 0.0
    %2938 = vmatpush1.msra.mxu0 0.0
    %2939 = vmatprep.mubr.f32.mxu0 0.0
    %2940 = vmatmul.mubr.f32.gmra.mrb[0].mxu0 %v2873
    %v2941 = vpop.f32.mrb[0].mxu0
    %v2942 = vadd.f32 %v847, %v2941
    %v2943 = vpop.f32.mrb[0].mxu0
    %2944 = vdwg.mxu0
    %2945 = vmatprep.subr.mxu0 0.0
    %2946 = vmatpush1.msra.mxu0 %v924
    %2947 = vmatprep.subr.mxu0 0.0
    %2948 = vmatpush1.msra.mxu0 %v925
    %2949 = vmatprep.subr.mxu0 0.0
    %2950 = vmatpush1.msra.mxu0 %v926
    %2951 = vmatprep.subr.mxu0 0.0
    %2952 = vmatpush1.msra.mxu0 %v927
    %2953 = vmatprep.subr.mxu0 0.0
    %2954 = vmatpush1.msra.mxu0 0.0
    %2955 = vmatprep.subr.mxu0 0.0
    %2956 = vmatpush1.msra.mxu0 0.0
    %2957 = vmatprep.subr.mxu0 0.0
    %2958 = vmatpush1.msra.mxu0 0.0
    %2959 = vmatprep.subr.mxu0 0.0
    %2960 = vmatpush1.msra.mxu0 0.0
    %2961 = vmatprep.subr.mxu0 0.0
    %2962 = vmatpush1.msra.mxu0 0.0
    %2963 = vmatprep.subr.mxu0 0.0
    %2964 = vmatpush1.msra.mxu0 0.0
    %2965 = vmatprep.subr.mxu0 0.0
    %2966 = vmatpush1.msra.mxu0 0.0
    %2967 = vmatprep.subr.mxu0 0.0
    %2968 = vmatpush1.msra.mxu0 0.0
    %2969 = vmatprep.subr.mxu0 0.0
    %2970 = vmatpush1.msra.mxu0 0.0
    %2971 = vmatprep.subr.mxu0 0.0
    %2972 = vmatpush1.msra.mxu0 0.0
    %2973 = vmatprep.subr.mxu0 0.0
    %2974 = vmatpush1.msra.mxu0 0.0
    %2975 = vmatprep.subr.mxu0 0.0
    %2976 = vmatpush1.msra.mxu0 0.0
    %2977 = vmatprep.subr.mxu0 0.0
    %2978 = vmatpush1.msra.mxu0 0.0
    %2979 = vmatprep.subr.mxu0 0.0
    %2980 = vmatpush1.msra.mxu0 0.0
    %2981 = vmatprep.subr.mxu0 0.0
    %2982 = vmatpush1.msra.mxu0 0.0
    %2983 = vmatprep.subr.mxu0 0.0
    %2984 = vmatpush1.msra.mxu0 0.0
    %2985 = vmatprep.subr.mxu0 0.0
    %2986 = vmatpush1.msra.mxu0 0.0
    %2987 = vmatprep.subr.mxu0 0.0
    %2988 = vmatpush1.msra.mxu0 0.0
    %2989 = vmatprep.subr.mxu0 0.0
    %2990 = vmatpush1.msra.mxu0 0.0
    %2991 = vmatprep.subr.mxu0 0.0
    %2992 = vmatpush1.msra.mxu0 0.0
    %2993 = vmatprep.subr.mxu0 0.0
    %2994 = vmatpush1.msra.mxu0 0.0
    %2995 = vmatprep.subr.mxu0 0.0
    %2996 = vmatpush1.msra.mxu0 0.0
    %2997 = vmatprep.subr.mxu0 0.0
    %2998 = vmatpush1.msra.mxu0 0.0
    %2999 = vmatprep.subr.mxu0 0.0
    %3000 = vmatpush1.msra.mxu0 0.0
    %3001 = vmatprep.subr.mxu0 0.0
    %3002 = vmatpush1.msra.mxu0 0.0
    %3003 = vmatprep.subr.mxu0 0.0
    %3004 = vmatpush1.msra.mxu0 0.0
    %3005 = vmatprep.subr.mxu0 0.0
    %3006 = vmatpush1.msra.mxu0 0.0
    %3007 = vmatprep.subr.mxu0 0.0
    %3008 = vmatpush1.msra.mxu0 0.0
    %3009 = vmatprep.mubr.f32.mxu0 0.0
    %3010 = vmatmul.mubr.f32.gmra.mrb[0].mxu0 %v2873
    %v3011 = vpop.f32.mrb[0].mxu0
    %v3012 = vadd.f32 %v934, %v3011
    %v3013 = vpop.f32.mrb[0].mxu0
    %3014 = vdwg.mxu0
    %3015 = vmatprep.subr.mxu0 0.0
    %3016 = vmatpush1.msra.mxu0 %v1007
    %3017 = vmatprep.subr.mxu0 0.0
    %3018 = vmatpush1.msra.mxu0 %v1008
    %3019 = vmatprep.subr.mxu0 0.0
    %3020 = vmatpush1.msra.mxu0 %v1009
    %3021 = vmatprep.subr.mxu0 0.0
    %3022 = vmatpush1.msra.mxu0 %v1010
    %3023 = vmatprep.subr.mxu0 0.0
    %3024 = vmatpush1.msra.mxu0 0.0
    %3025 = vmatprep.subr.mxu0 0.0
    %3026 = vmatpush1.msra.mxu0 0.0
    %3027 = vmatprep.subr.mxu0 0.0
    %3028 = vmatpush1.msra.mxu0 0.0
    %3029 = vmatprep.subr.mxu0 0.0
    %3030 = vmatpush1.msra.mxu0 0.0
    %3031 = vmatprep.subr.mxu0 0.0
    %3032 = vmatpush1.msra.mxu0 0.0
    %3033 = vmatprep.subr.mxu0 0.0
    %3034 = vmatpush1.msra.mxu0 0.0
    %3035 = vmatprep.subr.mxu0 0.0
    %3036 = vmatpush1.msra.mxu0 0.0
    %3037 = vmatprep.subr.mxu0 0.0
    %3038 = vmatpush1.msra.mxu0 0.0
    %3039 = vmatprep.subr.mxu0 0.0
    %3040 = vmatpush1.msra.mxu0 0.0
    %3041 = vmatprep.subr.mxu0 0.0
    %3042 = vmatpush1.msra.mxu0 0.0
    %3043 = vmatprep.subr.mxu0 0.0
    %3044 = vmatpush1.msra.mxu0 0.0
    %3045 = vmatprep.subr.mxu0 0.0
    %3046 = vmatpush1.msra.mxu0 0.0
    %3047 = vmatprep.subr.mxu0 0.0
    %3048 = vmatpush1.msra.mxu0 0.0
    %3049 = vmatprep.subr.mxu0 0.0
    %3050 = vmatpush1.msra.mxu0 0.0
    %3051 = vmatprep.subr.mxu0 0.0
    %3052 = vmatpush1.msra.mxu0 0.0
    %3053 = vmatprep.subr.mxu0 0.0
    %3054 = vmatpush1.msra.mxu0 0.0
    %3055 = vmatprep.subr.mxu0 0.0
    %3056 = vmatpush1.msra.mxu0 0.0
    %3057 = vmatprep.subr.mxu0 0.0
    %3058 = vmatpush1.msra.mxu0 0.0
    %3059 = vmatprep.subr.mxu0 0.0
    %3060 = vmatpush1.msra.mxu0 0.0
    %3061 = vmatprep.subr.mxu0 0.0
    %3062 = vmatpush1.msra.mxu0 0.0
    %3063 = vmatprep.subr.mxu0 0.0
    %3064 = vmatpush1.msra.mxu0 0.0
    %3065 = vmatprep.subr.mxu0 0.0
    %3066 = vmatpush1.msra.mxu0 0.0
    %3067 = vmatprep.subr.mxu0 0.0
    %3068 = vmatpush1.msra.mxu0 0.0
    %3069 = vmatprep.subr.mxu0 0.0
    %3070 = vmatpush1.msra.mxu0 0.0
    %3071 = vmatprep.subr.mxu0 0.0
    %3072 = vmatpush1.msra.mxu0 0.0
    %3073 = vmatprep.subr.mxu0 0.0
    %3074 = vmatpush1.msra.mxu0 0.0
    %3075 = vmatprep.subr.mxu0 0.0
    %3076 = vmatpush1.msra.mxu0 0.0
    %3077 = vmatprep.subr.mxu0 0.0
    %3078 = vmatpush1.msra.mxu0 0.0
    %3079 = vmatprep.mubr.f32.mxu0 0.0
    %3080 = vmatmul.mubr.f32.gmra.mrb[0].mxu0 %v2873
    %v3081 = vpop.f32.mrb[0].mxu0
    %v3082 = vadd.f32 %v1017, %v3081
    %v3083 = vpop.f32.mrb[0].mxu0
    %3084 = vdwg.mxu0
    %v3086 = vrot.slane %v2942, 2
    %v3088 = vadd.f32 %v138, %v3086
    %v3089 = vxor.u32 %v3088, 2147483648
    %v3090 = vmul.f32 %v3089, 1.442695
    %v3091 = vpow.pop %v3090
    %v3092 = vadd.f32 %v3091, 1.0
    %v3093 = vrcp.pop %v3092
    %v3094 = vmul.f32 1.0, %v3093
    %v3096 = vrot.slane %v3012, 2
    %v3098 = vadd.f32 %v224, %v3096
    %v3099 = vxor.u32 %v3098, 2147483648
    %v3100 = vmul.f32 %v3099, 1.442695
    %v3101 = vpow.pop %v3100
    %v3102 = vadd.f32 %v3101, 1.0
    %v3103 = vrcp.pop %v3102
    %v3104 = vmul.f32 1.0, %v3103
    %v3106 = vrot.slane %v3082, 2
    %v3108 = vmul.f32 %v3094, %v3106
    %v3109 = vadd.f32 %v310, %v3108
    %v3110 = vtanh.pop %v3109
    %v3112 = vrot.slane %v3110, 2
    %v3114 = vsub.f32 %v2454, %v3112
    %v3116 = vrot.slane %v3114, 6
    %v3118 = vmul.f32 %v3104, %v3116
    %v3119 = vadd.f32 %v3110, %v3118
    %v3121 = vrot.slane %v2703, 4
    %v3122 = vsel %vm849, %v3121, 0
    %3124 = vmatprep.subr.mxu0 0.0
    %3125 = vmatpush1.msra.mxu0 %v1110
    %3126 = vmatprep.subr.mxu0 0.0
    %3127 = vmatpush1.msra.mxu0 %v1111
    %3128 = vmatprep.subr.mxu0 0.0
    %3129 = vmatpush1.msra.mxu0 %v1112
    %3130 = vmatprep.subr.mxu0 0.0
    %3131 = vmatpush1.msra.mxu0 %v1113
    %3132 = vmatprep.subr.mxu0 0.0
    %3133 = vmatpush1.msra.mxu0 0.0
    %3134 = vmatprep.subr.mxu0 0.0
    %3135 = vmatpush1.msra.mxu0 0.0
    %3136 = vmatprep.subr.mxu0 0.0
    %3137 = vmatpush1.msra.mxu0 0.0
    %3138 = vmatprep.subr.mxu0 0.0
    %3139 = vmatpush1.msra.mxu0 0.0
    %3140 = vmatprep.subr.mxu0 0.0
    %3141 = vmatpush1.msra.mxu0 0.0
    %3142 = vmatprep.subr.mxu0 0.0
    %3143 = vmatpush1.msra.mxu0 0.0
    %3144 = vmatprep.subr.mxu0 0.0
    %3145 = vmatpush1.msra.mxu0 0.0
    %3146 = vmatprep.subr.mxu0 0.0
    %3147 = vmatpush1.msra.mxu0 0.0
    %3148 = vmatprep.subr.mxu0 0.0
    %3149 = vmatpush1.msra.mxu0 0.0
    %3150 = vmatprep.subr.mxu0 0.0
    %3151 = vmatpush1.msra.mxu0 0.0
    %3152 = vmatprep.subr.mxu0 0.0
    %3153 = vmatpush1.msra.mxu0 0.0
    %3154 = vmatprep.subr.mxu0 0.0
    %3155 = vmatpush1.msra.mxu0 0.0
    %3156 = vmatprep.subr.mxu0 0.0
    %3157 = vmatpush1.msra.mxu0 0.0
    %3158 = vmatprep.subr.mxu0 0.0
    %3159 = vmatpush1.msra.mxu0 0.0
    %3160 = vmatprep.subr.mxu0 0.0
    %3161 = vmatpush1.msra.mxu0 0.0
    %3162 = vmatprep.subr.mxu0 0.0
    %3163 = vmatpush1.msra.mxu0 0.0
    %3164 = vmatprep.subr.mxu0 0.0
    %3165 = vmatpush1.msra.mxu0 0.0
    %3166 = vmatprep.subr.mxu0 0.0
    %3167 = vmatpush1.msra.mxu0 0.0
    %3168 = vmatprep.subr.mxu0 0.0
    %3169 = vmatpush1.msra.mxu0 0.0
    %3170 = vmatprep.subr.mxu0 0.0
    %3171 = vmatpush1.msra.mxu0 0.0
    %3172 = vmatprep.subr.mxu0 0.0
    %3173 = vmatpush1.msra.mxu0 0.0
    %3174 = vmatprep.subr.mxu0 0.0
    %3175 = vmatpush1.msra.mxu0 0.0
    %3176 = vmatprep.subr.mxu0 0.0
    %3177 = vmatpush1.msra.mxu0 0.0
    %3178 = vmatprep.subr.mxu0 0.0
    %3179 = vmatpush1.msra.mxu0 0.0
    %3180 = vmatprep.subr.mxu0 0.0
    %3181 = vmatpush1.msra.mxu0 0.0
    %3182 = vmatprep.subr.mxu0 0.0
    %3183 = vmatpush1.msra.mxu0 0.0
    %3184 = vmatprep.subr.mxu0 0.0
    %3185 = vmatpush1.msra.mxu0 0.0
    %3186 = vmatprep.subr.mxu0 0.0
    %3187 = vmatpush1.msra.mxu0 0.0
    %3188 = vmatprep.mubr.f32.mxu0 0.0
    %3189 = vmatmul.mubr.f32.gmra.mrb[0].mxu0 %v3122
    %v3190 = vpop.f32.mrb[0].mxu0
    %v3191 = vadd.f32 %v1120, %v3190
    %v3192 = vpop.f32.mrb[0].mxu0
    %3193 = vdwg.mxu0
    %3194 = vmatprep.subr.mxu0 0.0
    %3195 = vmatpush1.msra.mxu0 %v1193
    %3196 = vmatprep.subr.mxu0 0.0
    %3197 = vmatpush1.msra.mxu0 %v1194
    %3198 = vmatprep.subr.mxu0 0.0
    %3199 = vmatpush1.msra.mxu0 %v1195
    %3200 = vmatprep.subr.mxu0 0.0
    %3201 = vmatpush1.msra.mxu0 %v1196
    %3202 = vmatprep.subr.mxu0 0.0
    %3203 = vmatpush1.msra.mxu0 0.0
    %3204 = vmatprep.subr.mxu0 0.0
    %3205 = vmatpush1.msra.mxu0 0.0
    %3206 = vmatprep.subr.mxu0 0.0
    %3207 = vmatpush1.msra.mxu0 0.0
    %3208 = vmatprep.subr.mxu0 0.0
    %3209 = vmatpush1.msra.mxu0 0.0
    %3210 = vmatprep.subr.mxu0 0.0
    %3211 = vmatpush1.msra.mxu0 0.0
    %3212 = vmatprep.subr.mxu0 0.0
    %3213 = vmatpush1.msra.mxu0 0.0
    %3214 = vmatprep.subr.mxu0 0.0
    %3215 = vmatpush1.msra.mxu0 0.0
    %3216 = vmatprep.subr.mxu0 0.0
    %3217 = vmatpush1.msra.mxu0 0.0
    %3218 = vmatprep.subr.mxu0 0.0
    %3219 = vmatpush1.msra.mxu0 0.0
    %3220 = vmatprep.subr.mxu0 0.0
    %3221 = vmatpush1.msra.mxu0 0.0
    %3222 = vmatprep.subr.mxu0 0.0
    %3223 = vmatpush1.msra.mxu0 0.0
    %3224 = vmatprep.subr.mxu0 0.0
    %3225 = vmatpush1.msra.mxu0 0.0
    %3226 = vmatprep.subr.mxu0 0.0
    %3227 = vmatpush1.msra.mxu0 0.0
    %3228 = vmatprep.subr.mxu0 0.0
    %3229 = vmatpush1.msra.mxu0 0.0
    %3230 = vmatprep.subr.mxu0 0.0
    %3231 = vmatpush1.msra.mxu0 0.0
    %3232 = vmatprep.subr.mxu0 0.0
    %3233 = vmatpush1.msra.mxu0 0.0
    %3234 = vmatprep.subr.mxu0 0.0
    %3235 = vmatpush1.msra.mxu0 0.0
    %3236 = vmatprep.subr.mxu0 0.0
    %3237 = vmatpush1.msra.mxu0 0.0
    %3238 = vmatprep.subr.mxu0 0.0
    %3239 = vmatpush1.msra.mxu0 0.0
    %3240 = vmatprep.subr.mxu0 0.0
    %3241 = vmatpush1.msra.mxu0 0.0
    %3242 = vmatprep.subr.mxu0 0.0
    %3243 = vmatpush1.msra.mxu0 0.0
    %3244 = vmatprep.subr.mxu0 0.0
    %3245 = vmatpush1.msra.mxu0 0.0
    %3246 = vmatprep.subr.mxu0 0.0
    %3247 = vmatpush1.msra.mxu0 0.0
    %3248 = vmatprep.subr.mxu0 0.0
    %3249 = vmatpush1.msra.mxu0 0.0
    %3250 = vmatprep.subr.mxu0 0.0
    %3251 = vmatpush1.msra.mxu0 0.0
    %3252 = vmatprep.subr.mxu0 0.0
    %3253 = vmatpush1.msra.mxu0 0.0
    %3254 = vmatprep.subr.mxu0 0.0
    %3255 = vmatpush1.msra.mxu0 0.0
    %3256 = vmatprep.subr.mxu0 0.0
    %3257 = vmatpush1.msra.mxu0 0.0
    %3258 = vmatprep.mubr.f32.mxu0 0.0
    %3259 = vmatmul.mubr.f32.gmra.mrb[0].mxu0 %v3122
    %v3260 = vpop.f32.mrb[0].mxu0
    %v3261 = vadd.f32 %v1203, %v3260
    %v3262 = vpop.f32.mrb[0].mxu0
    %3263 = vdwg.mxu0
    %3264 = vmatprep.subr.mxu0 0.0
    %3265 = vmatpush1.msra.mxu0 %v1276
    %3266 = vmatprep.subr.mxu0 0.0
    %3267 = vmatpush1.msra.mxu0 %v1277
    %3268 = vmatprep.subr.mxu0 0.0
    %3269 = vmatpush1.msra.mxu0 %v1278
    %3270 = vmatprep.subr.mxu0 0.0
    %3271 = vmatpush1.msra.mxu0 %v1279
    %3272 = vmatprep.subr.mxu0 0.0
    %3273 = vmatpush1.msra.mxu0 0.0
    %3274 = vmatprep.subr.mxu0 0.0
    %3275 = vmatpush1.msra.mxu0 0.0
    %3276 = vmatprep.subr.mxu0 0.0
    %3277 = vmatpush1.msra.mxu0 0.0
    %3278 = vmatprep.subr.mxu0 0.0
    %3279 = vmatpush1.msra.mxu0 0.0
    %3280 = vmatprep.subr.mxu0 0.0
    %3281 = vmatpush1.msra.mxu0 0.0
    %3282 = vmatprep.subr.mxu0 0.0
    %3283 = vmatpush1.msra.mxu0 0.0
    %3284 = vmatprep.subr.mxu0 0.0
    %3285 = vmatpush1.msra.mxu0 0.0
    %3286 = vmatprep.subr.mxu0 0.0
    %3287 = vmatpush1.msra.mxu0 0.0
    %3288 = vmatprep.subr.mxu0 0.0
    %3289 = vmatpush1.msra.mxu0 0.0
    %3290 = vmatprep.subr.mxu0 0.0
    %3291 = vmatpush1.msra.mxu0 0.0
    %3292 = vmatprep.subr.mxu0 0.0
    %3293 = vmatpush1.msra.mxu0 0.0
    %3294 = vmatprep.subr.mxu0 0.0
    %3295 = vmatpush1.msra.mxu0 0.0
    %3296 = vmatprep.subr.mxu0 0.0
    %3297 = vmatpush1.msra.mxu0 0.0
    %3298 = vmatprep.subr.mxu0 0.0
    %3299 = vmatpush1.msra.mxu0 0.0
    %3300 = vmatprep.subr.mxu0 0.0
    %3301 = vmatpush1.msra.mxu0 0.0
    %3302 = vmatprep.subr.mxu0 0.0
    %3303 = vmatpush1.msra.mxu0 0.0
    %3304 = vmatprep.subr.mxu0 0.0
    %3305 = vmatpush1.msra.mxu0 0.0
    %3306 = vmatprep.subr.mxu0 0.0
    %3307 = vmatpush1.msra.mxu0 0.0
    %3308 = vmatprep.subr.mxu0 0.0
    %3309 = vmatpush1.msra.mxu0 0.0
    %3310 = vmatprep.subr.mxu0 0.0
    %3311 = vmatpush1.msra.mxu0 0.0
    %3312 = vmatprep.subr.mxu0 0.0
    %3313 = vmatpush1.msra.mxu0 0.0
    %3314 = vmatprep.subr.mxu0 0.0
    %3315 = vmatpush1.msra.mxu0 0.0
    %3316 = vmatprep.subr.mxu0 0.0
    %3317 = vmatpush1.msra.mxu0 0.0
    %3318 = vmatprep.subr.mxu0 0.0
    %3319 = vmatpush1.msra.mxu0 0.0
    %3320 = vmatprep.subr.mxu0 0.0
    %3321 = vmatpush1.msra.mxu0 0.0
    %3322 = vmatprep.subr.mxu0 0.0
    %3323 = vmatpush1.msra.mxu0 0.0
    %3324 = vmatprep.subr.mxu0 0.0
    %3325 = vmatpush1.msra.mxu0 0.0
    %3326 = vmatprep.subr.mxu0 0.0
    %3327 = vmatpush1.msra.mxu0 0.0
    %3328 = vmatprep.mubr.f32.mxu0 0.0
    %3329 = vmatmul.mubr.f32.gmra.mrb[0].mxu0 %v3122
    %v3330 = vpop.f32.mrb[0].mxu0
    %v3331 = vadd.f32 %v1286, %v3330
    %v3332 = vpop.f32.mrb[0].mxu0
    %3333 = vdwg.mxu0
    %v3335 = vrot.slane %v3191, 2
    %v3337 = vadd.f32 %v402, %v3335
    %v3338 = vxor.u32 %v3337, 2147483648
    %v3339 = vmul.f32 %v3338, 1.442695
    %v3340 = vpow.pop %v3339
    %v3341 = vadd.f32 %v3340, 1.0
    %v3342 = vrcp.pop %v3341
    %v3343 = vmul.f32 1.0, %v3342
    %v3345 = vrot.slane %v3261, 2
    %v3347 = vadd.f32 %v488, %v3345
    %v3348 = vxor.u32 %v3347, 2147483648
    %v3349 = vmul.f32 %v3348, 1.442695
    %v3350 = vpow.pop %v3349
    %v3351 = vadd.f32 %v3350, 1.0
    %v3352 = vrcp.pop %v3351
    %v3353 = vmul.f32 1.0, %v3352
    %v3355 = vrot.slane %v3331, 2
    %v3357 = vmul.f32 %v3343, %v3355
    %v3358 = vadd.f32 %v574, %v3357
    %v3359 = vtanh.pop %v3358
    %v3361 = vrot.slane %v3359, 2
    %v3363 = vsub.f32 %v2703, %v3361
    %v3365 = vrot.slane %v3363, 6
    %v3367 = vmul.f32 %v3353, %v3365
    %v3368 = vadd.f32 %v3359, %v3367
    %vm3369 = vcmp.eq.s32.totalorder %v837, 3
    %v3370 = vsel %vm3369, 1, 0
    %v3371 = vcvt.s32.f32 %v3370
    %v3372 = vmax.f32 %v3119, 0.0
    %v3374 = vrot.slane %v3372, 6
    %v3375 = vsel %vm849, %v3374, 0
    %3377 = vmatprep.subr.mxu0 0.0
    %3378 = vmatpush1.msra.mxu0 %v828
    %3379 = vmatprep.subr.mxu0 0.0
    %3380 = vmatpush1.msra.mxu0 %v829
    %3381 = vmatprep.subr.mxu0 0.0
    %3382 = vmatpush1.msra.mxu0 %v830
    %3383 = vmatprep.subr.mxu0 0.0
    %3384 = vmatpush1.msra.mxu0 %v831
    %3385 = vmatprep.subr.mxu0 0.0
    %3386 = vmatpush1.msra.mxu0 0.0
    %3387 = vmatprep.subr.mxu0 0.0
    %3388 = vmatpush1.msra.mxu0 0.0
    %3389 = vmatprep.subr.mxu0 0.0
    %3390 = vmatpush1.msra.mxu0 0.0
    %3391 = vmatprep.subr.mxu0 0.0
    %3392 = vmatpush1.msra.mxu0 0.0
    %3393 = vmatprep.subr.mxu0 0.0
    %3394 = vmatpush1.msra.mxu0 0.0
    %3395 = vmatprep.subr.mxu0 0.0
    %3396 = vmatpush1.msra.mxu0 0.0
    %3397 = vmatprep.subr.mxu0 0.0
    %3398 = vmatpush1.msra.mxu0 0.0
    %3399 = vmatprep.subr.mxu0 0.0
    %3400 = vmatpush1.msra.mxu0 0.0
    %3401 = vmatprep.subr.mxu0 0.0
    %3402 = vmatpush1.msra.mxu0 0.0
    %3403 = vmatprep.subr.mxu0 0.0
    %3404 = vmatpush1.msra.mxu0 0.0
    %3405 = vmatprep.subr.mxu0 0.0
    %3406 = vmatpush1.msra.mxu0 0.0
    %3407 = vmatprep.subr.mxu0 0.0
    %3408 = vmatpush1.msra.mxu0 0.0
    %3409 = vmatprep.subr.mxu0 0.0
    %3410 = vmatpush1.msra.mxu0 0.0
    %3411 = vmatprep.subr.mxu0 0.0
    %3412 = vmatpush1.msra.mxu0 0.0
    %3413 = vmatprep.subr.mxu0 0.0
    %3414 = vmatpush1.msra.mxu0 0.0
    %3415 = vmatprep.subr.mxu0 0.0
    %3416 = vmatpush1.msra.mxu0 0.0
    %3417 = vmatprep.subr.mxu0 0.0
    %3418 = vmatpush1.msra.mxu0 0.0
    %3419 = vmatprep.subr.mxu0 0.0
    %3420 = vmatpush1.msra.mxu0 0.0
    %3421 = vmatprep.subr.mxu0 0.0
    %3422 = vmatpush1.msra.mxu0 0.0
    %3423 = vmatprep.subr.mxu0 0.0
    %3424 = vmatpush1.msra.mxu0 0.0
    %3425 = vmatprep.subr.mxu0 0.0
    %3426 = vmatpush1.msra.mxu0 0.0
    %3427 = vmatprep.subr.mxu0 0.0
    %3428 = vmatpush1.msra.mxu0 0.0
    %3429 = vmatprep.subr.mxu0 0.0
    %3430 = vmatpush1.msra.mxu0 0.0
    %3431 = vmatprep.subr.mxu0 0.0
    %3432 = vmatpush1.msra.mxu0 0.0
    %3433 = vmatprep.subr.mxu0 0.0
    %3434 = vmatpush1.msra.mxu0 0.0
    %3435 = vmatprep.subr.mxu0 0.0
    %3436 = vmatpush1.msra.mxu0 0.0
    %3437 = vmatprep.subr.mxu0 0.0
    %3438 = vmatpush1.msra.mxu0 0.0
    %3439 = vmatprep.subr.mxu0 0.0
    %3440 = vmatpush1.msra.mxu0 0.0
    %3441 = vmatprep.mubr.f32.mxu0 0.0
    %3442 = vmatmul.mubr.f32.gmra.mrb[0].mxu0 %v3375
    %v3443 = vpop.f32.mrb[0].mxu0
    %v3444 = vadd.f32 0.0, %v3443
    %v3445 = vpop.f32.mrb[0].mxu0
    %3446 = vdwg.mxu0
    %3448 = vset.pattern.permute.xlu0 0
    %3449 = vperm.xlu0 %3448, %v3444
    %v3450 = vpop.permute.xlu0 %3449
    %v3452 = vmul.f32 %v3450, %v3371
    %v3453 = vadd.f32 %v2788, %v3452
    %v3454 = vmax.f32 %v3368, 0.0
    %v3456 = vrot.slane %v3454, 6
    %v3457 = vsel %vm849, %v3456, 0
    %3459 = vmatprep.subr.mxu0 0.0
    %3460 = vmatpush1.msra.mxu0 %v828
    %3461 = vmatprep.subr.mxu0 0.0
    %3462 = vmatpush1.msra.mxu0 %v829
    %3463 = vmatprep.subr.mxu0 0.0
    %3464 = vmatpush1.msra.mxu0 %v830
    %3465 = vmatprep.subr.mxu0 0.0
    %3466 = vmatpush1.msra.mxu0 %v831
    %3467 = vmatprep.subr.mxu0 0.0
    %3468 = vmatpush1.msra.mxu0 0.0
    %3469 = vmatprep.subr.mxu0 0.0
    %3470 = vmatpush1.msra.mxu0 0.0
    %3471 = vmatprep.subr.mxu0 0.0
    %3472 = vmatpush1.msra.mxu0 0.0
    %3473 = vmatprep.subr.mxu0 0.0
    %3474 = vmatpush1.msra.mxu0 0.0
    %3475 = vmatprep.subr.mxu0 0.0
    %3476 = vmatpush1.msra.mxu0 0.0
    %3477 = vmatprep.subr.mxu0 0.0
    %3478 = vmatpush1.msra.mxu0 0.0
    %3479 = vmatprep.subr.mxu0 0.0
    %3480 = vmatpush1.msra.mxu0 0.0
    %3481 = vmatprep.subr.mxu0 0.0
    %3482 = vmatpush1.msra.mxu0 0.0
    %3483 = vmatprep.subr.mxu0 0.0
    %3484 = vmatpush1.msra.mxu0 0.0
    %3485 = vmatprep.subr.mxu0 0.0
    %3486 = vmatpush1.msra.mxu0 0.0
    %3487 = vmatprep.subr.mxu0 0.0
    %3488 = vmatpush1.msra.mxu0 0.0
    %3489 = vmatprep.subr.mxu0 0.0
    %3490 = vmatpush1.msra.mxu0 0.0
    %3491 = vmatprep.subr.mxu0 0.0
    %3492 = vmatpush1.msra.mxu0 0.0
    %3493 = vmatprep.subr.mxu0 0.0
    %3494 = vmatpush1.msra.mxu0 0.0
    %3495 = vmatprep.subr.mxu0 0.0
    %3496 = vmatpush1.msra.mxu0 0.0
    %3497 = vmatprep.subr.mxu0 0.0
    %3498 = vmatpush1.msra.mxu0 0.0
    %3499 = vmatprep.subr.mxu0 0.0
    %3500 = vmatpush1.msra.mxu0 0.0
    %3501 = vmatprep.subr.mxu0 0.0
    %3502 = vmatpush1.msra.mxu0 0.0
    %3503 = vmatprep.subr.mxu0 0.0
    %3504 = vmatpush1.msra.mxu0 0.0
    %3505 = vmatprep.subr.mxu0 0.0
    %3506 = vmatpush1.msra.mxu0 0.0
    %3507 = vmatprep.subr.mxu0 0.0
    %3508 = vmatpush1.msra.mxu0 0.0
    %3509 = vmatprep.subr.mxu0 0.0
    %3510 = vmatpush1.msra.mxu0 0.0
    %3511 = vmatprep.subr.mxu0 0.0
    %3512 = vmatpush1.msra.mxu0 0.0
    %3513 = vmatprep.subr.mxu0 0.0
    %3514 = vmatpush1.msra.mxu0 0.0
    %3515 = vmatprep.subr.mxu0 0.0
    %3516 = vmatpush1.msra.mxu0 0.0
    %3517 = vmatprep.subr.mxu0 0.0
    %3518 = vmatpush1.msra.mxu0 0.0
    %3519 = vmatprep.subr.mxu0 0.0
    %3520 = vmatpush1.msra.mxu0 0.0
    %3521 = vmatprep.subr.mxu0 0.0
    %3522 = vmatpush1.msra.mxu0 0.0
    %3523 = vmatprep.mubr.f32.mxu0 0.0
    %3524 = vmatmul.mubr.f32.gmra.mrb[0].mxu0 %v3457
    %v3525 = vpop.f32.mrb[0].mxu0
    %v3526 = vadd.f32 0.0, %v3525
    %v3527 = vpop.f32.mrb[0].mxu0
    %3528 = vdwg.mxu0
    %3530 = vset.pattern.permute.xlu0 0
    %3531 = vperm.xlu0 %3530, %v3526
    %v3532 = vpop.permute.xlu0 %3531
    %v3534 = vmul.f32 %v3532, %v3371
    %v3535 = vadd.f32 %v2870, %v3534
    %v3537 = vrot.slane %v3119, 6
    %v3538 = vsel %vm849, %v3537, 0
    %3540 = vmatprep.subr.mxu0 0.0
    %3541 = vmatpush1.msra.mxu0 %v838
    %3542 = vmatprep.subr.mxu0 0.0
    %3543 = vmatpush1.msra.mxu0 %v839
    %3544 = vmatprep.subr.mxu0 0.0
    %3545 = vmatpush1.msra.mxu0 %v840
    %3546 = vmatprep.subr.mxu0 0.0
    %3547 = vmatpush1.msra.mxu0 %v841
    %3548 = vmatprep.subr.mxu0 0.0
    %3549 = vmatpush1.msra.mxu0 0.0
    %3550 = vmatprep.subr.mxu0 0.0
    %3551 = vmatpush1.msra.mxu0 0.0
    %3552 = vmatprep.subr.mxu0 0.0
    %3553 = vmatpush1.msra.mxu0 0.0
    %3554 = vmatprep.subr.mxu0 0.0
    %3555 = vmatpush1.msra.mxu0 0.0
    %3556 = vmatprep.subr.mxu0 0.0
    %3557 = vmatpush1.msra.mxu0 0.0
    %3558 = vmatprep.subr.mxu0 0.0
    %3559 = vmatpush1.msra.mxu0 0.0
    %3560 = vmatprep.subr.mxu0 0.0
    %3561 = vmatpush1.msra.mxu0 0.0
    %3562 = vmatprep.subr.mxu0 0.0
    %3563 = vmatpush1.msra.mxu0 0.0
    %3564 = vmatprep.subr.mxu0 0.0
    %3565 = vmatpush1.msra.mxu0 0.0
    %3566 = vmatprep.subr.mxu0 0.0
    %3567 = vmatpush1.msra.mxu0 0.0
    %3568 = vmatprep.subr.mxu0 0.0
    %3569 = vmatpush1.msra.mxu0 0.0
    %3570 = vmatprep.subr.mxu0 0.0
    %3571 = vmatpush1.msra.mxu0 0.0
    %3572 = vmatprep.subr.mxu0 0.0
    %3573 = vmatpush1.msra.mxu0 0.0
    %3574 = vmatprep.subr.mxu0 0.0
    %3575 = vmatpush1.msra.mxu0 0.0
    %3576 = vmatprep.subr.mxu0 0.0
    %3577 = vmatpush1.msra.mxu0 0.0
    %3578 = vmatprep.subr.mxu0 0.0
    %3579 = vmatpush1.msra.mxu0 0.0
    %3580 = vmatprep.subr.mxu0 0.0
    %3581 = vmatpush1.msra.mxu0 0.0
    %3582 = vmatprep.subr.mxu0 0.0
    %3583 = vmatpush1.msra.mxu0 0.0
    %3584 = vmatprep.subr.mxu0 0.0
    %3585 = vmatpush1.msra.mxu0 0.0
    %3586 = vmatprep.subr.mxu0 0.0
    %3587 = vmatpush1.msra.mxu0 0.0
    %3588 = vmatprep.subr.mxu0 0.0
    %3589 = vmatpush1.msra.mxu0 0.0
    %3590 = vmatprep.subr.mxu0 0.0
    %3591 = vmatpush1.msra.mxu0 0.0
    %3592 = vmatprep.subr.mxu0 0.0
    %3593 = vmatpush1.msra.mxu0 0.0
    %3594 = vmatprep.subr.mxu0 0.0
    %3595 = vmatpush1.msra.mxu0 0.0
    %3596 = vmatprep.subr.mxu0 0.0
    %3597 = vmatpush1.msra.mxu0 0.0
    %3598 = vmatprep.subr.mxu0 0.0
    %3599 = vmatpush1.msra.mxu0 0.0
    %3600 = vmatprep.subr.mxu0 0.0
    %3601 = vmatpush1.msra.mxu0 0.0
    %3602 = vmatprep.subr.mxu0 0.0
    %3603 = vmatpush1.msra.mxu0 0.0
    %3604 = vmatprep.mubr.f32.mxu0 0.0
    %3605 = vmatmul.mubr.f32.gmra.mrb[0].mxu0 %v3538
    %v3606 = vpop.f32.mrb[0].mxu0
    %v3607 = vadd.f32 %v847, %v3606
    %v3608 = vpop.f32.mrb[0].mxu0
    %3609 = vdwg.mxu0
    %3610 = vmatprep.subr.mxu0 0.0
    %3611 = vmatpush1.msra.mxu0 %v924
    %3612 = vmatprep.subr.mxu0 0.0
    %3613 = vmatpush1.msra.mxu0 %v925
    %3614 = vmatprep.subr.mxu0 0.0
    %3615 = vmatpush1.msra.mxu0 %v926
    %3616 = vmatprep.subr.mxu0 0.0
    %3617 = vmatpush1.msra.mxu0 %v927
    %3618 = vmatprep.subr.mxu0 0.0
    %3619 = vmatpush1.msra.mxu0 0.0
    %3620 = vmatprep.subr.mxu0 0.0
    %3621 = vmatpush1.msra.mxu0 0.0
    %3622 = vmatprep.subr.mxu0 0.0
    %3623 = vmatpush1.msra.mxu0 0.0
    %3624 = vmatprep.subr.mxu0 0.0
    %3625 = vmatpush1.msra.mxu0 0.0
    %3626 = vmatprep.subr.mxu0 0.0
    %3627 = vmatpush1.msra.mxu0 0.0
    %3628 = vmatprep.subr.mxu0 0.0
    %3629 = vmatpush1.msra.mxu0 0.0
    %3630 = vmatprep.subr.mxu0 0.0
    %3631 = vmatpush1.msra.mxu0 0.0
    %3632 = vmatprep.subr.mxu0 0.0
    %3633 = vmatpush1.msra.mxu0 0.0
    %3634 = vmatprep.subr.mxu0 0.0
    %3635 = vmatpush1.msra.mxu0 0.0
    %3636 = vmatprep.subr.mxu0 0.0
    %3637 = vmatpush1.msra.mxu0 0.0
    %3638 = vmatprep.subr.mxu0 0.0
    %3639 = vmatpush1.msra.mxu0 0.0
    %3640 = vmatprep.subr.mxu0 0.0
    %3641 = vmatpush1.msra.mxu0 0.0
    %3642 = vmatprep.subr.mxu0 0.0
    %3643 = vmatpush1.msra.mxu0 0.0
    %3644 = vmatprep.subr.mxu0 0.0
    %3645 = vmatpush1.msra.mxu0 0.0
    %3646 = vmatprep.subr.mxu0 0.0
    %3647 = vmatpush1.msra.mxu0 0.0
    %3648 = vmatprep.subr.mxu0 0.0
    %3649 = vmatpush1.msra.mxu0 0.0
    %3650 = vmatprep.subr.mxu0 0.0
    %3651 = vmatpush1.msra.mxu0 0.0
    %3652 = vmatprep.subr.mxu0 0.0
    %3653 = vmatpush1.msra.mxu0 0.0
    %3654 = vmatprep.subr.mxu0 0.0
    %3655 = vmatpush1.msra.mxu0 0.0
    %3656 = vmatprep.subr.mxu0 0.0
    %3657 = vmatpush1.msra.mxu0 0.0
    %3658 = vmatprep.subr.mxu0 0.0
    %3659 = vmatpush1.msra.mxu0 0.0
    %3660 = vmatprep.subr.mxu0 0.0
    %3661 = vmatpush1.msra.mxu0 0.0
    %3662 = vmatprep.subr.mxu0 0.0
    %3663 = vmatpush1.msra.mxu0 0.0
    %3664 = vmatprep.subr.mxu0 0.0
    %3665 = vmatpush1.msra.mxu0 0.0
    %3666 = vmatprep.subr.mxu0 0.0
    %3667 = vmatpush1.msra.mxu0 0.0
    %3668 = vmatprep.subr.mxu0 0.0
    %3669 = vmatpush1.msra.mxu0 0.0
    %3670 = vmatprep.subr.mxu0 0.0
    %3671 = vmatpush1.msra.mxu0 0.0
    %3672 = vmatprep.subr.mxu0 0.0
    %3673 = vmatpush1.msra.mxu0 0.0
    %3674 = vmatprep.mubr.f32.mxu0 0.0
    %3675 = vmatmul.mubr.f32.gmra.mrb[0].mxu0 %v3538
    %v3676 = vpop.f32.mrb[0].mxu0
    %v3677 = vadd.f32 %v934, %v3676
    %v3678 = vpop.f32.mrb[0].mxu0
    %3679 = vdwg.mxu0
    %3680 = vmatprep.subr.mxu0 0.0
    %3681 = vmatpush1.msra.mxu0 %v1007
    %3682 = vmatprep.subr.mxu0 0.0
    %3683 = vmatpush1.msra.mxu0 %v1008
    %3684 = vmatprep.subr.mxu0 0.0
    %3685 = vmatpush1.msra.mxu0 %v1009
    %3686 = vmatprep.subr.mxu0 0.0
    %3687 = vmatpush1.msra.mxu0 %v1010
    %3688 = vmatprep.subr.mxu0 0.0
    %3689 = vmatpush1.msra.mxu0 0.0
    %3690 = vmatprep.subr.mxu0 0.0
    %3691 = vmatpush1.msra.mxu0 0.0
    %3692 = vmatprep.subr.mxu0 0.0
    %3693 = vmatpush1.msra.mxu0 0.0
    %3694 = vmatprep.subr.mxu0 0.0
    %3695 = vmatpush1.msra.mxu0 0.0
    %3696 = vmatprep.subr.mxu0 0.0
    %3697 = vmatpush1.msra.mxu0 0.0
    %3698 = vmatprep.subr.mxu0 0.0
    %3699 = vmatpush1.msra.mxu0 0.0
    %3700 = vmatprep.subr.mxu0 0.0
    %3701 = vmatpush1.msra.mxu0 0.0
    %3702 = vmatprep.subr.mxu0 0.0
    %3703 = vmatpush1.msra.mxu0 0.0
    %3704 = vmatprep.subr.mxu0 0.0
    %3705 = vmatpush1.msra.mxu0 0.0
    %3706 = vmatprep.subr.mxu0 0.0
    %3707 = vmatpush1.msra.mxu0 0.0
    %3708 = vmatprep.subr.mxu0 0.0
    %3709 = vmatpush1.msra.mxu0 0.0
    %3710 = vmatprep.subr.mxu0 0.0
    %3711 = vmatpush1.msra.mxu0 0.0
    %3712 = vmatprep.subr.mxu0 0.0
    %3713 = vmatpush1.msra.mxu0 0.0
    %3714 = vmatprep.subr.mxu0 0.0
    %3715 = vmatpush1.msra.mxu0 0.0
    %3716 = vmatprep.subr.mxu0 0.0
    %3717 = vmatpush1.msra.mxu0 0.0
    %3718 = vmatprep.subr.mxu0 0.0
    %3719 = vmatpush1.msra.mxu0 0.0
    %3720 = vmatprep.subr.mxu0 0.0
    %3721 = vmatpush1.msra.mxu0 0.0
    %3722 = vmatprep.subr.mxu0 0.0
    %3723 = vmatpush1.msra.mxu0 0.0
    %3724 = vmatprep.subr.mxu0 0.0
    %3725 = vmatpush1.msra.mxu0 0.0
    %3726 = vmatprep.subr.mxu0 0.0
    %3727 = vmatpush1.msra.mxu0 0.0
    %3728 = vmatprep.subr.mxu0 0.0
    %3729 = vmatpush1.msra.mxu0 0.0
    %3730 = vmatprep.subr.mxu0 0.0
    %3731 = vmatpush1.msra.mxu0 0.0
    %3732 = vmatprep.subr.mxu0 0.0
    %3733 = vmatpush1.msra.mxu0 0.0
    %3734 = vmatprep.subr.mxu0 0.0
    %3735 = vmatpush1.msra.mxu0 0.0
    %3736 = vmatprep.subr.mxu0 0.0
    %3737 = vmatpush1.msra.mxu0 0.0
    %3738 = vmatprep.subr.mxu0 0.0
    %3739 = vmatpush1.msra.mxu0 0.0
    %3740 = vmatprep.subr.mxu0 0.0
    %3741 = vmatpush1.msra.mxu0 0.0
    %3742 = vmatprep.subr.mxu0 0.0
    %3743 = vmatpush1.msra.mxu0 0.0
    %3744 = vmatprep.mubr.f32.mxu0 0.0
    %3745 = vmatmul.mubr.f32.gmra.mrb[0].mxu0 %v3538
    %v3746 = vpop.f32.mrb[0].mxu0
    %v3747 = vadd.f32 %v1017, %v3746
    %v3748 = vpop.f32.mrb[0].mxu0
    %3749 = vdwg.mxu0
    %v3750 = vadd.f32 %v143, %v3607
    %v3751 = vxor.u32 %v3750, 2147483648
    %v3752 = vmul.f32 %v3751, 1.442695
    %v3753 = vpow.pop %v3752
    %v3754 = vadd.f32 %v3753, 1.0
    %v3755 = vrcp.pop %v3754
    %v3756 = vmul.f32 1.0, %v3755
    %v3757 = vadd.f32 %v229, %v3677
    %v3758 = vxor.u32 %v3757, 2147483648
    %v3759 = vmul.f32 %v3758, 1.442695
    %v3760 = vpow.pop %v3759
    %v3761 = vadd.f32 %v3760, 1.0
    %v3762 = vrcp.pop %v3761
    %v3763 = vmul.f32 1.0, %v3762
    %v3764 = vmul.f32 %v3756, %v3747
    %v3765 = vadd.f32 %v315, %v3764
    %v3766 = vtanh.pop %v3765
    %v3768 = vrot.slane %v3766, 2
    %v3770 = vsub.f32 %v3119, %v3768
    %v3772 = vrot.slane %v3770, 6
    %v3774 = vmul.f32 %v3763, %v3772
    %v3775 = vadd.f32 %v3766, %v3774
    %v3777 = vrot.slane %v3368, 6
    %v3778 = vsel %vm849, %v3777, 0
    %3780 = vmatprep.subr.mxu0 0.0
    %3781 = vmatpush1.msra.mxu0 %v1110
    %3782 = vmatprep.subr.mxu0 0.0
    %3783 = vmatpush1.msra.mxu0 %v1111
    %3784 = vmatprep.subr.mxu0 0.0
    %3785 = vmatpush1.msra.mxu0 %v1112
    %3786 = vmatprep.subr.mxu0 0.0
    %3787 = vmatpush1.msra.mxu0 %v1113
    %3788 = vmatprep.subr.mxu0 0.0
    %3789 = vmatpush1.msra.mxu0 0.0
    %3790 = vmatprep.subr.mxu0 0.0
    %3791 = vmatpush1.msra.mxu0 0.0
    %3792 = vmatprep.subr.mxu0 0.0
    %3793 = vmatpush1.msra.mxu0 0.0
    %3794 = vmatprep.subr.mxu0 0.0
    %3795 = vmatpush1.msra.mxu0 0.0
    %3796 = vmatprep.subr.mxu0 0.0
    %3797 = vmatpush1.msra.mxu0 0.0
    %3798 = vmatprep.subr.mxu0 0.0
    %3799 = vmatpush1.msra.mxu0 0.0
    %3800 = vmatprep.subr.mxu0 0.0
    %3801 = vmatpush1.msra.mxu0 0.0
    %3802 = vmatprep.subr.mxu0 0.0
    %3803 = vmatpush1.msra.mxu0 0.0
    %3804 = vmatprep.subr.mxu0 0.0
    %3805 = vmatpush1.msra.mxu0 0.0
    %3806 = vmatprep.subr.mxu0 0.0
    %3807 = vmatpush1.msra.mxu0 0.0
    %3808 = vmatprep.subr.mxu0 0.0
    %3809 = vmatpush1.msra.mxu0 0.0
    %3810 = vmatprep.subr.mxu0 0.0
    %3811 = vmatpush1.msra.mxu0 0.0
    %3812 = vmatprep.subr.mxu0 0.0
    %3813 = vmatpush1.msra.mxu0 0.0
    %3814 = vmatprep.subr.mxu0 0.0
    %3815 = vmatpush1.msra.mxu0 0.0
    %3816 = vmatprep.subr.mxu0 0.0
    %3817 = vmatpush1.msra.mxu0 0.0
    %3818 = vmatprep.subr.mxu0 0.0
    %3819 = vmatpush1.msra.mxu0 0.0
    %3820 = vmatprep.subr.mxu0 0.0
    %3821 = vmatpush1.msra.mxu0 0.0
    %3822 = vmatprep.subr.mxu0 0.0
    %3823 = vmatpush1.msra.mxu0 0.0
    %3824 = vmatprep.subr.mxu0 0.0
    %3825 = vmatpush1.msra.mxu0 0.0
    %3826 = vmatprep.subr.mxu0 0.0
    %3827 = vmatpush1.msra.mxu0 0.0
    %3828 = vmatprep.subr.mxu0 0.0
    %3829 = vmatpush1.msra.mxu0 0.0
    %3830 = vmatprep.subr.mxu0 0.0
    %3831 = vmatpush1.msra.mxu0 0.0
    %3832 = vmatprep.subr.mxu0 0.0
    %3833 = vmatpush1.msra.mxu0 0.0
    %3834 = vmatprep.subr.mxu0 0.0
    %3835 = vmatpush1.msra.mxu0 0.0
    %3836 = vmatprep.subr.mxu0 0.0
    %3837 = vmatpush1.msra.mxu0 0.0
    %3838 = vmatprep.subr.mxu0 0.0
    %3839 = vmatpush1.msra.mxu0 0.0
    %3840 = vmatprep.subr.mxu0 0.0
    %3841 = vmatpush1.msra.mxu0 0.0
    %3842 = vmatprep.subr.mxu0 0.0
    %3843 = vmatpush1.msra.mxu0 0.0
    %3844 = vmatprep.mubr.f32.mxu0 0.0
    %3845 = vmatmul.mubr.f32.gmra.mrb[0].mxu0 %v3778
    %v3846 = vpop.f32.mrb[0].mxu0
    %v3847 = vadd.f32 %v1120, %v3846
    %v3848 = vpop.f32.mrb[0].mxu0
    %3849 = vdwg.mxu0
    %3850 = vmatprep.subr.mxu0 0.0
    %3851 = vmatpush1.msra.mxu0 %v1193
    %3852 = vmatprep.subr.mxu0 0.0
    %3853 = vmatpush1.msra.mxu0 %v1194
    %3854 = vmatprep.subr.mxu0 0.0
    %3855 = vmatpush1.msra.mxu0 %v1195
    %3856 = vmatprep.subr.mxu0 0.0
    %3857 = vmatpush1.msra.mxu0 %v1196
    %3858 = vmatprep.subr.mxu0 0.0
    %3859 = vmatpush1.msra.mxu0 0.0
    %3860 = vmatprep.subr.mxu0 0.0
    %3861 = vmatpush1.msra.mxu0 0.0
    %3862 = vmatprep.subr.mxu0 0.0
    %3863 = vmatpush1.msra.mxu0 0.0
    %3864 = vmatprep.subr.mxu0 0.0
    %3865 = vmatpush1.msra.mxu0 0.0
    %3866 = vmatprep.subr.mxu0 0.0
    %3867 = vmatpush1.msra.mxu0 0.0
    %3868 = vmatprep.subr.mxu0 0.0
    %3869 = vmatpush1.msra.mxu0 0.0
    %3870 = vmatprep.subr.mxu0 0.0
    %3871 = vmatpush1.msra.mxu0 0.0
    %3872 = vmatprep.subr.mxu0 0.0
    %3873 = vmatpush1.msra.mxu0 0.0
    %3874 = vmatprep.subr.mxu0 0.0
    %3875 = vmatpush1.msra.mxu0 0.0
    %3876 = vmatprep.subr.mxu0 0.0
    %3877 = vmatpush1.msra.mxu0 0.0
    %3878 = vmatprep.subr.mxu0 0.0
    %3879 = vmatpush1.msra.mxu0 0.0
    %3880 = vmatprep.subr.mxu0 0.0
    %3881 = vmatpush1.msra.mxu0 0.0
    %3882 = vmatprep.subr.mxu0 0.0
    %3883 = vmatpush1.msra.mxu0 0.0
    %3884 = vmatprep.subr.mxu0 0.0
    %3885 = vmatpush1.msra.mxu0 0.0
    %3886 = vmatprep.subr.mxu0 0.0
    %3887 = vmatpush1.msra.mxu0 0.0
    %3888 = vmatprep.subr.mxu0 0.0
    %3889 = vmatpush1.msra.mxu0 0.0
    %3890 = vmatprep.subr.mxu0 0.0
    %3891 = vmatpush1.msra.mxu0 0.0
    %3892 = vmatprep.subr.mxu0 0.0
    %3893 = vmatpush1.msra.mxu0 0.0
    %3894 = vmatprep.subr.mxu0 0.0
    %3895 = vmatpush1.msra.mxu0 0.0
    %3896 = vmatprep.subr.mxu0 0.0
    %3897 = vmatpush1.msra.mxu0 0.0
    %3898 = vmatprep.subr.mxu0 0.0
    %3899 = vmatpush1.msra.mxu0 0.0
    %3900 = vmatprep.subr.mxu0 0.0
    %3901 = vmatpush1.msra.mxu0 0.0
    %3902 = vmatprep.subr.mxu0 0.0
    %3903 = vmatpush1.msra.mxu0 0.0
    %3904 = vmatprep.subr.mxu0 0.0
    %3905 = vmatpush1.msra.mxu0 0.0
    %3906 = vmatprep.subr.mxu0 0.0
    %3907 = vmatpush1.msra.mxu0 0.0
    %3908 = vmatprep.subr.mxu0 0.0
    %3909 = vmatpush1.msra.mxu0 0.0
    %3910 = vmatprep.subr.mxu0 0.0
    %3911 = vmatpush1.msra.mxu0 0.0
    %3912 = vmatprep.subr.mxu0 0.0
    %3913 = vmatpush1.msra.mxu0 0.0
    %3914 = vmatprep.mubr.f32.mxu0 0.0
    %3915 = vmatmul.mubr.f32.gmra.mrb[0].mxu0 %v3778
    %v3916 = vpop.f32.mrb[0].mxu0
    %v3917 = vadd.f32 %v1203, %v3916
    %v3918 = vpop.f32.mrb[0].mxu0
    %3919 = vdwg.mxu0
    %3920 = vmatprep.subr.mxu0 0.0
    %3921 = vmatpush1.msra.mxu0 %v1276
    %3922 = vmatprep.subr.mxu0 0.0
    %3923 = vmatpush1.msra.mxu0 %v1277
    %3924 = vmatprep.subr.mxu0 0.0
    %3925 = vmatpush1.msra.mxu0 %v1278
    %3926 = vmatprep.subr.mxu0 0.0
    %3927 = vmatpush1.msra.mxu0 %v1279
    %3928 = vmatprep.subr.mxu0 0.0
    %3929 = vmatpush1.msra.mxu0 0.0
    %3930 = vmatprep.subr.mxu0 0.0
    %3931 = vmatpush1.msra.mxu0 0.0
    %3932 = vmatprep.subr.mxu0 0.0
    %3933 = vmatpush1.msra.mxu0 0.0
    %3934 = vmatprep.subr.mxu0 0.0
    %3935 = vmatpush1.msra.mxu0 0.0
    %3936 = vmatprep.subr.mxu0 0.0
    %3937 = vmatpush1.msra.mxu0 0.0
    %3938 = vmatprep.subr.mxu0 0.0
    %3939 = vmatpush1.msra.mxu0 0.0
    %3940 = vmatprep.subr.mxu0 0.0
    %3941 = vmatpush1.msra.mxu0 0.0
    %3942 = vmatprep.subr.mxu0 0.0
    %3943 = vmatpush1.msra.mxu0 0.0
    %3944 = vmatprep.subr.mxu0 0.0
    %3945 = vmatpush1.msra.mxu0 0.0
    %3946 = vmatprep.subr.mxu0 0.0
    %3947 = vmatpush1.msra.mxu0 0.0
    %3948 = vmatprep.subr.mxu0 0.0
    %3949 = vmatpush1.msra.mxu0 0.0
    %3950 = vmatprep.subr.mxu0 0.0
    %3951 = vmatpush1.msra.mxu0 0.0
    %3952 = vmatprep.subr.mxu0 0.0
    %3953 = vmatpush1.msra.mxu0 0.0
    %3954 = vmatprep.subr.mxu0 0.0
    %3955 = vmatpush1.msra.mxu0 0.0
    %3956 = vmatprep.subr.mxu0 0.0
    %3957 = vmatpush1.msra.mxu0 0.0
    %3958 = vmatprep.subr.mxu0 0.0
    %3959 = vmatpush1.msra.mxu0 0.0
    %3960 = vmatprep.subr.mxu0 0.0
    %3961 = vmatpush1.msra.mxu0 0.0
    %3962 = vmatprep.subr.mxu0 0.0
    %3963 = vmatpush1.msra.mxu0 0.0
    %3964 = vmatprep.subr.mxu0 0.0
    %3965 = vmatpush1.msra.mxu0 0.0
    %3966 = vmatprep.subr.mxu0 0.0
    %3967 = vmatpush1.msra.mxu0 0.0
    %3968 = vmatprep.subr.mxu0 0.0
    %3969 = vmatpush1.msra.mxu0 0.0
    %3970 = vmatprep.subr.mxu0 0.0
    %3971 = vmatpush1.msra.mxu0 0.0
    %3972 = vmatprep.subr.mxu0 0.0
    %3973 = vmatpush1.msra.mxu0 0.0
    %3974 = vmatprep.subr.mxu0 0.0
    %3975 = vmatpush1.msra.mxu0 0.0
    %3976 = vmatprep.subr.mxu0 0.0
    %3977 = vmatpush1.msra.mxu0 0.0
    %3978 = vmatprep.subr.mxu0 0.0
    %3979 = vmatpush1.msra.mxu0 0.0
    %3980 = vmatprep.subr.mxu0 0.0
    %3981 = vmatpush1.msra.mxu0 0.0
    %3982 = vmatprep.subr.mxu0 0.0
    %3983 = vmatpush1.msra.mxu0 0.0
    %3984 = vmatprep.mubr.f32.mxu0 0.0
    %3985 = vmatmul.mubr.f32.gmra.mrb[0].mxu0 %v3778
    %v3986 = vpop.f32.mrb[0].mxu0
    %v3987 = vadd.f32 %v1286, %v3986
    %v3988 = vpop.f32.mrb[0].mxu0
    %3989 = vdwg.mxu0
    %v3990 = vadd.f32 %v407, %v3847
    %v3991 = vxor.u32 %v3990, 2147483648
    %v3992 = vmul.f32 %v3991, 1.442695
    %v3993 = vpow.pop %v3992
    %v3994 = vadd.f32 %v3993, 1.0
    %v3995 = vrcp.pop %v3994
    %v3996 = vmul.f32 1.0, %v3995
    %v3997 = vadd.f32 %v493, %v3917
    %v3998 = vxor.u32 %v3997, 2147483648
    %v3999 = vmul.f32 %v3998, 1.442695
    %v4000 = vpow.pop %v3999
    %v4001 = vadd.f32 %v4000, 1.0
    %v4002 = vrcp.pop %v4001
    %v4003 = vmul.f32 1.0, %v4002
    %v4004 = vmul.f32 %v3996, %v3987
    %v4005 = vadd.f32 %v579, %v4004
    %v4006 = vtanh.pop %v4005
    %v4008 = vrot.slane %v4006, 2
    %v4010 = vsub.f32 %v3368, %v4008
    %v4012 = vrot.slane %v4010, 6
    %v4014 = vmul.f32 %v4003, %v4012
    %v4015 = vadd.f32 %v4006, %v4014
    %vm4016 = vcmp.eq.s32.totalorder %v837, 4
    %v4017 = vsel %vm4016, 1, 0
    %v4018 = vcvt.s32.f32 %v4017
    %v4019 = vmax.f32 %v3775, 0.0
    %v4021 = vsel %vm849, %v4019, 0
    %4023 = vmatprep.subr.mxu0 0.0
    %4024 = vmatpush1.msra.mxu0 %v828
    %4025 = vmatprep.subr.mxu0 0.0
    %4026 = vmatpush1.msra.mxu0 %v829
    %4027 = vmatprep.subr.mxu0 0.0
    %4028 = vmatpush1.msra.mxu0 %v830
    %4029 = vmatprep.subr.mxu0 0.0
    %4030 = vmatpush1.msra.mxu0 %v831
    %4031 = vmatprep.subr.mxu0 0.0
    %4032 = vmatpush1.msra.mxu0 0.0
    %4033 = vmatprep.subr.mxu0 0.0
    %4034 = vmatpush1.msra.mxu0 0.0
    %4035 = vmatprep.subr.mxu0 0.0
    %4036 = vmatpush1.msra.mxu0 0.0
    %4037 = vmatprep.subr.mxu0 0.0
    %4038 = vmatpush1.msra.mxu0 0.0
    %4039 = vmatprep.subr.mxu0 0.0
    %4040 = vmatpush1.msra.mxu0 0.0
    %4041 = vmatprep.subr.mxu0 0.0
    %4042 = vmatpush1.msra.mxu0 0.0
    %4043 = vmatprep.subr.mxu0 0.0
    %4044 = vmatpush1.msra.mxu0 0.0
    %4045 = vmatprep.subr.mxu0 0.0
    %4046 = vmatpush1.msra.mxu0 0.0
    %4047 = vmatprep.subr.mxu0 0.0
    %4048 = vmatpush1.msra.mxu0 0.0
    %4049 = vmatprep.subr.mxu0 0.0
    %4050 = vmatpush1.msra.mxu0 0.0
    %4051 = vmatprep.subr.mxu0 0.0
    %4052 = vmatpush1.msra.mxu0 0.0
    %4053 = vmatprep.subr.mxu0 0.0
    %4054 = vmatpush1.msra.mxu0 0.0
    %4055 = vmatprep.subr.mxu0 0.0
    %4056 = vmatpush1.msra.mxu0 0.0
    %4057 = vmatprep.subr.mxu0 0.0
    %4058 = vmatpush1.msra.mxu0 0.0
    %4059 = vmatprep.subr.mxu0 0.0
    %4060 = vmatpush1.msra.mxu0 0.0
    %4061 = vmatprep.subr.mxu0 0.0
    %4062 = vmatpush1.msra.mxu0 0.0
    %4063 = vmatprep.subr.mxu0 0.0
    %4064 = vmatpush1.msra.mxu0 0.0
    %4065 = vmatprep.subr.mxu0 0.0
    %4066 = vmatpush1.msra.mxu0 0.0
    %4067 = vmatprep.subr.mxu0 0.0
    %4068 = vmatpush1.msra.mxu0 0.0
    %4069 = vmatprep.subr.mxu0 0.0
    %4070 = vmatpush1.msra.mxu0 0.0
    %4071 = vmatprep.subr.mxu0 0.0
    %4072 = vmatpush1.msra.mxu0 0.0
    %4073 = vmatprep.subr.mxu0 0.0
    %4074 = vmatpush1.msra.mxu0 0.0
    %4075 = vmatprep.subr.mxu0 0.0
    %4076 = vmatpush1.msra.mxu0 0.0
    %4077 = vmatprep.subr.mxu0 0.0
    %4078 = vmatpush1.msra.mxu0 0.0
    %4079 = vmatprep.subr.mxu0 0.0
    %4080 = vmatpush1.msra.mxu0 0.0
    %4081 = vmatprep.subr.mxu0 0.0
    %4082 = vmatpush1.msra.mxu0 0.0
    %4083 = vmatprep.subr.mxu0 0.0
    %4084 = vmatpush1.msra.mxu0 0.0
    %4085 = vmatprep.subr.mxu0 0.0
    %4086 = vmatpush1.msra.mxu0 0.0
    %4087 = vmatprep.mubr.f32.mxu0 0.0
    %4088 = vmatmul.mubr.f32.gmra.mrb[0].mxu0 %v4021
    %v4089 = vpop.f32.mrb[0].mxu0
    %v4090 = vadd.f32 0.0, %v4089
    %v4091 = vpop.f32.mrb[0].mxu0
    %4092 = vdwg.mxu0
    %4094 = vset.pattern.permute.xlu0 0
    %4095 = vperm.xlu0 %4094, %v4090
    %v4096 = vpop.permute.xlu0 %4095
    %v4098 = vmul.f32 %v4096, %v4018
    %v4099 = vadd.f32 %v3453, %v4098
    %v4100 = vmax.f32 %v4015, 0.0
    %v4102 = vsel %vm849, %v4100, 0
    %4104 = vmatprep.subr.mxu0 0.0
    %4105 = vmatpush1.msra.mxu0 %v828
    %4106 = vmatprep.subr.mxu0 0.0
    %4107 = vmatpush1.msra.mxu0 %v829
    %4108 = vmatprep.subr.mxu0 0.0
    %4109 = vmatpush1.msra.mxu0 %v830
    %4110 = vmatprep.subr.mxu0 0.0
    %4111 = vmatpush1.msra.mxu0 %v831
    %4112 = vmatprep.subr.mxu0 0.0
    %4113 = vmatpush1.msra.mxu0 0.0
    %4114 = vmatprep.subr.mxu0 0.0
    %4115 = vmatpush1.msra.mxu0 0.0
    %4116 = vmatprep.subr.mxu0 0.0
    %4117 = vmatpush1.msra.mxu0 0.0
    %4118 = vmatprep.subr.mxu0 0.0
    %4119 = vmatpush1.msra.mxu0 0.0
    %4120 = vmatprep.subr.mxu0 0.0
    %4121 = vmatpush1.msra.mxu0 0.0
    %4122 = vmatprep.subr.mxu0 0.0
    %4123 = vmatpush1.msra.mxu0 0.0
    %4124 = vmatprep.subr.mxu0 0.0
    %4125 = vmatpush1.msra.mxu0 0.0
    %4126 = vmatprep.subr.mxu0 0.0
    %4127 = vmatpush1.msra.mxu0 0.0
    %4128 = vmatprep.subr.mxu0 0.0
    %4129 = vmatpush1.msra.mxu0 0.0
    %4130 = vmatprep.subr.mxu0 0.0
    %4131 = vmatpush1.msra.mxu0 0.0
    %4132 = vmatprep.subr.mxu0 0.0
    %4133 = vmatpush1.msra.mxu0 0.0
    %4134 = vmatprep.subr.mxu0 0.0
    %4135 = vmatpush1.msra.mxu0 0.0
    %4136 = vmatprep.subr.mxu0 0.0
    %4137 = vmatpush1.msra.mxu0 0.0
    %4138 = vmatprep.subr.mxu0 0.0
    %4139 = vmatpush1.msra.mxu0 0.0
    %4140 = vmatprep.subr.mxu0 0.0
    %4141 = vmatpush1.msra.mxu0 0.0
    %4142 = vmatprep.subr.mxu0 0.0
    %4143 = vmatpush1.msra.mxu0 0.0
    %4144 = vmatprep.subr.mxu0 0.0
    %4145 = vmatpush1.msra.mxu0 0.0
    %4146 = vmatprep.subr.mxu0 0.0
    %4147 = vmatpush1.msra.mxu0 0.0
    %4148 = vmatprep.subr.mxu0 0.0
    %4149 = vmatpush1.msra.mxu0 0.0
    %4150 = vmatprep.subr.mxu0 0.0
    %4151 = vmatpush1.msra.mxu0 0.0
    %4152 = vmatprep.subr.mxu0 0.0
    %4153 = vmatpush1.msra.mxu0 0.0
    %4154 = vmatprep.subr.mxu0 0.0
    %4155 = vmatpush1.msra.mxu0 0.0
    %4156 = vmatprep.subr.mxu0 0.0
    %4157 = vmatpush1.msra.mxu0 0.0
    %4158 = vmatprep.subr.mxu0 0.0
    %4159 = vmatpush1.msra.mxu0 0.0
    %4160 = vmatprep.subr.mxu0 0.0
    %4161 = vmatpush1.msra.mxu0 0.0
    %4162 = vmatprep.subr.mxu0 0.0
    %4163 = vmatpush1.msra.mxu0 0.0
    %4164 = vmatprep.subr.mxu0 0.0
    %4165 = vmatpush1.msra.mxu0 0.0
    %4166 = vmatprep.subr.mxu0 0.0
    %4167 = vmatpush1.msra.mxu0 0.0
    %4168 = vmatprep.mubr.f32.mxu0 0.0
    %4169 = vmatmul.mubr.f32.gmra.mrb[0].mxu0 %v4102
    %v4170 = vpop.f32.mrb[0].mxu0
    %v4171 = vadd.f32 0.0, %v4170
    %v4172 = vpop.f32.mrb[0].mxu0
    %4173 = vdwg.mxu0
    %4175 = vset.pattern.permute.xlu0 0
    %4176 = vperm.xlu0 %4175, %v4171
    %v4177 = vpop.permute.xlu0 %4176
    %v4179 = vmul.f32 %v4177, %v4018
    %v4180 = vadd.f32 %v3535, %v4179
    %v4182 = vsel %vm849, %v3775, 0
    %4184 = vmatprep.subr.mxu0 0.0
    %4185 = vmatpush1.msra.mxu0 %v838
    %4186 = vmatprep.subr.mxu0 0.0
    %4187 = vmatpush1.msra.mxu0 %v839
    %4188 = vmatprep.subr.mxu0 0.0
    %4189 = vmatpush1.msra.mxu0 %v840
    %4190 = vmatprep.subr.mxu0 0.0
    %4191 = vmatpush1.msra.mxu0 %v841
    %4192 = vmatprep.subr.mxu0 0.0
    %4193 = vmatpush1.msra.mxu0 0.0
    %4194 = vmatprep.subr.mxu0 0.0
    %4195 = vmatpush1.msra.mxu0 0.0
    %4196 = vmatprep.subr.mxu0 0.0
    %4197 = vmatpush1.msra.mxu0 0.0
    %4198 = vmatprep.subr.mxu0 0.0
    %4199 = vmatpush1.msra.mxu0 0.0
    %4200 = vmatprep.subr.mxu0 0.0
    %4201 = vmatpush1.msra.mxu0 0.0
    %4202 = vmatprep.subr.mxu0 0.0
    %4203 = vmatpush1.msra.mxu0 0.0
    %4204 = vmatprep.subr.mxu0 0.0
    %4205 = vmatpush1.msra.mxu0 0.0
    %4206 = vmatprep.subr.mxu0 0.0
    %4207 = vmatpush1.msra.mxu0 0.0
    %4208 = vmatprep.subr.mxu0 0.0
    %4209 = vmatpush1.msra.mxu0 0.0
    %4210 = vmatprep.subr.mxu0 0.0
    %4211 = vmatpush1.msra.mxu0 0.0
    %4212 = vmatprep.subr.mxu0 0.0
    %4213 = vmatpush1.msra.mxu0 0.0
    %4214 = vmatprep.subr.mxu0 0.0
    %4215 = vmatpush1.msra.mxu0 0.0
    %4216 = vmatprep.subr.mxu0 0.0
    %4217 = vmatpush1.msra.mxu0 0.0
    %4218 = vmatprep.subr.mxu0 0.0
    %4219 = vmatpush1.msra.mxu0 0.0
    %4220 = vmatprep.subr.mxu0 0.0
    %4221 = vmatpush1.msra.mxu0 0.0
    %4222 = vmatprep.subr.mxu0 0.0
    %4223 = vmatpush1.msra.mxu0 0.0
    %4224 = vmatprep.subr.mxu0 0.0
    %4225 = vmatpush1.msra.mxu0 0.0
    %4226 = vmatprep.subr.mxu0 0.0
    %4227 = vmatpush1.msra.mxu0 0.0
    %4228 = vmatprep.subr.mxu0 0.0
    %4229 = vmatpush1.msra.mxu0 0.0
    %4230 = vmatprep.subr.mxu0 0.0
    %4231 = vmatpush1.msra.mxu0 0.0
    %4232 = vmatprep.subr.mxu0 0.0
    %4233 = vmatpush1.msra.mxu0 0.0
    %4234 = vmatprep.subr.mxu0 0.0
    %4235 = vmatpush1.msra.mxu0 0.0
    %4236 = vmatprep.subr.mxu0 0.0
    %4237 = vmatpush1.msra.mxu0 0.0
    %4238 = vmatprep.subr.mxu0 0.0
    %4239 = vmatpush1.msra.mxu0 0.0
    %4240 = vmatprep.subr.mxu0 0.0
    %4241 = vmatpush1.msra.mxu0 0.0
    %4242 = vmatprep.subr.mxu0 0.0
    %4243 = vmatpush1.msra.mxu0 0.0
    %4244 = vmatprep.subr.mxu0 0.0
    %4245 = vmatpush1.msra.mxu0 0.0
    %4246 = vmatprep.subr.mxu0 0.0
    %4247 = vmatpush1.msra.mxu0 0.0
    %4248 = vmatprep.mubr.f32.mxu0 0.0
    %4249 = vmatmul.mubr.f32.gmra.mrb[0].mxu0 %v4182
    %v4250 = vpop.f32.mrb[0].mxu0
    %v4251 = vadd.f32 %v847, %v4250
    %v4252 = vpop.f32.mrb[0].mxu0
    %4253 = vdwg.mxu0
    %4254 = vmatprep.subr.mxu0 0.0
    %4255 = vmatpush1.msra.mxu0 %v924
    %4256 = vmatprep.subr.mxu0 0.0
    %4257 = vmatpush1.msra.mxu0 %v925
    %4258 = vmatprep.subr.mxu0 0.0
    %4259 = vmatpush1.msra.mxu0 %v926
    %4260 = vmatprep.subr.mxu0 0.0
    %4261 = vmatpush1.msra.mxu0 %v927
    %4262 = vmatprep.subr.mxu0 0.0
    %4263 = vmatpush1.msra.mxu0 0.0
    %4264 = vmatprep.subr.mxu0 0.0
    %4265 = vmatpush1.msra.mxu0 0.0
    %4266 = vmatprep.subr.mxu0 0.0
    %4267 = vmatpush1.msra.mxu0 0.0
    %4268 = vmatprep.subr.mxu0 0.0
    %4269 = vmatpush1.msra.mxu0 0.0
    %4270 = vmatprep.subr.mxu0 0.0
    %4271 = vmatpush1.msra.mxu0 0.0
    %4272 = vmatprep.subr.mxu0 0.0
    %4273 = vmatpush1.msra.mxu0 0.0
    %4274 = vmatprep.subr.mxu0 0.0
    %4275 = vmatpush1.msra.mxu0 0.0
    %4276 = vmatprep.subr.mxu0 0.0
    %4277 = vmatpush1.msra.mxu0 0.0
    %4278 = vmatprep.subr.mxu0 0.0
    %4279 = vmatpush1.msra.mxu0 0.0
    %4280 = vmatprep.subr.mxu0 0.0
    %4281 = vmatpush1.msra.mxu0 0.0
    %4282 = vmatprep.subr.mxu0 0.0
    %4283 = vmatpush1.msra.mxu0 0.0
    %4284 = vmatprep.subr.mxu0 0.0
    %4285 = vmatpush1.msra.mxu0 0.0
    %4286 = vmatprep.subr.mxu0 0.0
    %4287 = vmatpush1.msra.mxu0 0.0
    %4288 = vmatprep.subr.mxu0 0.0
    %4289 = vmatpush1.msra.mxu0 0.0
    %4290 = vmatprep.subr.mxu0 0.0
    %4291 = vmatpush1.msra.mxu0 0.0
    %4292 = vmatprep.subr.mxu0 0.0
    %4293 = vmatpush1.msra.mxu0 0.0
    %4294 = vmatprep.subr.mxu0 0.0
    %4295 = vmatpush1.msra.mxu0 0.0
    %4296 = vmatprep.subr.mxu0 0.0
    %4297 = vmatpush1.msra.mxu0 0.0
    %4298 = vmatprep.subr.mxu0 0.0
    %4299 = vmatpush1.msra.mxu0 0.0
    %4300 = vmatprep.subr.mxu0 0.0
    %4301 = vmatpush1.msra.mxu0 0.0
    %4302 = vmatprep.subr.mxu0 0.0
    %4303 = vmatpush1.msra.mxu0 0.0
    %4304 = vmatprep.subr.mxu0 0.0
    %4305 = vmatpush1.msra.mxu0 0.0
    %4306 = vmatprep.subr.mxu0 0.0
    %4307 = vmatpush1.msra.mxu0 0.0
    %4308 = vmatprep.subr.mxu0 0.0
    %4309 = vmatpush1.msra.mxu0 0.0
    %4310 = vmatprep.subr.mxu0 0.0
    %4311 = vmatpush1.msra.mxu0 0.0
    %4312 = vmatprep.subr.mxu0 0.0
    %4313 = vmatpush1.msra.mxu0 0.0
    %4314 = vmatprep.subr.mxu0 0.0
    %4315 = vmatpush1.msra.mxu0 0.0
    %4316 = vmatprep.subr.mxu0 0.0
    %4317 = vmatpush1.msra.mxu0 0.0
    %4318 = vmatprep.mubr.f32.mxu0 0.0
    %4319 = vmatmul.mubr.f32.gmra.mrb[0].mxu0 %v4182
    %v4320 = vpop.f32.mrb[0].mxu0
    %v4321 = vadd.f32 %v934, %v4320
    %v4322 = vpop.f32.mrb[0].mxu0
    %4323 = vdwg.mxu0
    %4324 = vmatprep.subr.mxu0 0.0
    %4325 = vmatpush1.msra.mxu0 %v1007
    %4326 = vmatprep.subr.mxu0 0.0
    %4327 = vmatpush1.msra.mxu0 %v1008
    %4328 = vmatprep.subr.mxu0 0.0
    %4329 = vmatpush1.msra.mxu0 %v1009
    %4330 = vmatprep.subr.mxu0 0.0
    %4331 = vmatpush1.msra.mxu0 %v1010
    %4332 = vmatprep.subr.mxu0 0.0
    %4333 = vmatpush1.msra.mxu0 0.0
    %4334 = vmatprep.subr.mxu0 0.0
    %4335 = vmatpush1.msra.mxu0 0.0
    %4336 = vmatprep.subr.mxu0 0.0
    %4337 = vmatpush1.msra.mxu0 0.0
    %4338 = vmatprep.subr.mxu0 0.0
    %4339 = vmatpush1.msra.mxu0 0.0
    %4340 = vmatprep.subr.mxu0 0.0
    %4341 = vmatpush1.msra.mxu0 0.0
    %4342 = vmatprep.subr.mxu0 0.0
    %4343 = vmatpush1.msra.mxu0 0.0
    %4344 = vmatprep.subr.mxu0 0.0
    %4345 = vmatpush1.msra.mxu0 0.0
    %4346 = vmatprep.subr.mxu0 0.0
    %4347 = vmatpush1.msra.mxu0 0.0
    %4348 = vmatprep.subr.mxu0 0.0
    %4349 = vmatpush1.msra.mxu0 0.0
    %4350 = vmatprep.subr.mxu0 0.0
    %4351 = vmatpush1.msra.mxu0 0.0
    %4352 = vmatprep.subr.mxu0 0.0
    %4353 = vmatpush1.msra.mxu0 0.0
    %4354 = vmatprep.subr.mxu0 0.0
    %4355 = vmatpush1.msra.mxu0 0.0
    %4356 = vmatprep.subr.mxu0 0.0
    %4357 = vmatpush1.msra.mxu0 0.0
    %4358 = vmatprep.subr.mxu0 0.0
    %4359 = vmatpush1.msra.mxu0 0.0
    %4360 = vmatprep.subr.mxu0 0.0
    %4361 = vmatpush1.msra.mxu0 0.0
    %4362 = vmatprep.subr.mxu0 0.0
    %4363 = vmatpush1.msra.mxu0 0.0
    %4364 = vmatprep.subr.mxu0 0.0
    %4365 = vmatpush1.msra.mxu0 0.0
    %4366 = vmatprep.subr.mxu0 0.0
    %4367 = vmatpush1.msra.mxu0 0.0
    %4368 = vmatprep.subr.mxu0 0.0
    %4369 = vmatpush1.msra.mxu0 0.0
    %4370 = vmatprep.subr.mxu0 0.0
    %4371 = vmatpush1.msra.mxu0 0.0
    %4372 = vmatprep.subr.mxu0 0.0
    %4373 = vmatpush1.msra.mxu0 0.0
    %4374 = vmatprep.subr.mxu0 0.0
    %4375 = vmatpush1.msra.mxu0 0.0
    %4376 = vmatprep.subr.mxu0 0.0
    %4377 = vmatpush1.msra.mxu0 0.0
    %4378 = vmatprep.subr.mxu0 0.0
    %4379 = vmatpush1.msra.mxu0 0.0
    %4380 = vmatprep.subr.mxu0 0.0
    %4381 = vmatpush1.msra.mxu0 0.0
    %4382 = vmatprep.subr.mxu0 0.0
    %4383 = vmatpush1.msra.mxu0 0.0
    %4384 = vmatprep.subr.mxu0 0.0
    %4385 = vmatpush1.msra.mxu0 0.0
    %4386 = vmatprep.subr.mxu0 0.0
    %4387 = vmatpush1.msra.mxu0 0.0
    %4388 = vmatprep.mubr.f32.mxu0 0.0
    %4389 = vmatmul.mubr.f32.gmra.mrb[0].mxu0 %v4182
    %v4390 = vpop.f32.mrb[0].mxu0
    %v4391 = vadd.f32 %v1017, %v4390
    %v4392 = vpop.f32.mrb[0].mxu0
    %4393 = vdwg.mxu0
    %v4395 = vrot.slane %v4251, 6
    %v4397 = vadd.f32 %v143, %v4395
    %v4398 = vxor.u32 %v4397, 2147483648
    %v4399 = vmul.f32 %v4398, 1.442695
    %v4400 = vpow.pop %v4399
    %v4401 = vadd.f32 %v4400, 1.0
    %v4402 = vrcp.pop %v4401
    %v4403 = vmul.f32 1.0, %v4402
    %v4405 = vrot.slane %v4321, 6
    %v4407 = vadd.f32 %v229, %v4405
    %v4408 = vxor.u32 %v4407, 2147483648
    %v4409 = vmul.f32 %v4408, 1.442695
    %v4410 = vpow.pop %v4409
    %v4411 = vadd.f32 %v4410, 1.0
    %v4412 = vrcp.pop %v4411
    %v4413 = vmul.f32 1.0, %v4412
    %v4415 = vrot.slane %v4391, 6
    %v4417 = vmul.f32 %v4403, %v4415
    %v4418 = vadd.f32 %v315, %v4417
    %v4419 = vtanh.pop %v4418
    %v4421 = vrot.slane %v4419, 2
    %v4423 = vsub.f32 %v3775, %v4421
    %v4425 = vrot.slane %v4423, 6
    %v4427 = vmul.f32 %v4413, %v4425
    %v4428 = vadd.f32 %v4419, %v4427
    %v4430 = vsel %vm849, %v4015, 0
    %4432 = vmatprep.subr.mxu0 0.0
    %4433 = vmatpush1.msra.mxu0 %v1110
    %4434 = vmatprep.subr.mxu0 0.0
    %4435 = vmatpush1.msra.mxu0 %v1111
    %4436 = vmatprep.subr.mxu0 0.0
    %4437 = vmatpush1.msra.mxu0 %v1112
    %4438 = vmatprep.subr.mxu0 0.0
    %4439 = vmatpush1.msra.mxu0 %v1113
    %4440 = vmatprep.subr.mxu0 0.0
    %4441 = vmatpush1.msra.mxu0 0.0
    %4442 = vmatprep.subr.mxu0 0.0
    %4443 = vmatpush1.msra.mxu0 0.0
    %4444 = vmatprep.subr.mxu0 0.0
    %4445 = vmatpush1.msra.mxu0 0.0
    %4446 = vmatprep.subr.mxu0 0.0
    %4447 = vmatpush1.msra.mxu0 0.0
    %4448 = vmatprep.subr.mxu0 0.0
    %4449 = vmatpush1.msra.mxu0 0.0
    %4450 = vmatprep.subr.mxu0 0.0
    %4451 = vmatpush1.msra.mxu0 0.0
    %4452 = vmatprep.subr.mxu0 0.0
    %4453 = vmatpush1.msra.mxu0 0.0
    %4454 = vmatprep.subr.mxu0 0.0
    %4455 = vmatpush1.msra.mxu0 0.0
    %4456 = vmatprep.subr.mxu0 0.0
    %4457 = vmatpush1.msra.mxu0 0.0
    %4458 = vmatprep.subr.mxu0 0.0
    %4459 = vmatpush1.msra.mxu0 0.0
    %4460 = vmatprep.subr.mxu0 0.0
    %4461 = vmatpush1.msra.mxu0 0.0
    %4462 = vmatprep.subr.mxu0 0.0
    %4463 = vmatpush1.msra.mxu0 0.0
    %4464 = vmatprep.subr.mxu0 0.0
    %4465 = vmatpush1.msra.mxu0 0.0
    %4466 = vmatprep.subr.mxu0 0.0
    %4467 = vmatpush1.msra.mxu0 0.0
    %4468 = vmatprep.subr.mxu0 0.0
    %4469 = vmatpush1.msra.mxu0 0.0
    %4470 = vmatprep.subr.mxu0 0.0
    %4471 = vmatpush1.msra.mxu0 0.0
    %4472 = vmatprep.subr.mxu0 0.0
    %4473 = vmatpush1.msra.mxu0 0.0
    %4474 = vmatprep.subr.mxu0 0.0
    %4475 = vmatpush1.msra.mxu0 0.0
    %4476 = vmatprep.subr.mxu0 0.0
    %4477 = vmatpush1.msra.mxu0 0.0
    %4478 = vmatprep.subr.mxu0 0.0
    %4479 = vmatpush1.msra.mxu0 0.0
    %4480 = vmatprep.subr.mxu0 0.0
    %4481 = vmatpush1.msra.mxu0 0.0
    %4482 = vmatprep.subr.mxu0 0.0
    %4483 = vmatpush1.msra.mxu0 0.0
    %4484 = vmatprep.subr.mxu0 0.0
    %4485 = vmatpush1.msra.mxu0 0.0
    %4486 = vmatprep.subr.mxu0 0.0
    %4487 = vmatpush1.msra.mxu0 0.0
    %4488 = vmatprep.subr.mxu0 0.0
    %4489 = vmatpush1.msra.mxu0 0.0
    %4490 = vmatprep.subr.mxu0 0.0
    %4491 = vmatpush1.msra.mxu0 0.0
    %4492 = vmatprep.subr.mxu0 0.0
    %4493 = vmatpush1.msra.mxu0 0.0
    %4494 = vmatprep.subr.mxu0 0.0
    %4495 = vmatpush1.msra.mxu0 0.0
    %4496 = vmatprep.mubr.f32.mxu0 0.0
    %4497 = vmatmul.mubr.f32.gmra.mrb[0].mxu0 %v4430
    %v4498 = vpop.f32.mrb[0].mxu0
    %v4499 = vadd.f32 %v1120, %v4498
    %v4500 = vpop.f32.mrb[0].mxu0
    %4501 = vdwg.mxu0
    %4502 = vmatprep.subr.mxu0 0.0
    %4503 = vmatpush1.msra.mxu0 %v1193
    %4504 = vmatprep.subr.mxu0 0.0
    %4505 = vmatpush1.msra.mxu0 %v1194
    %4506 = vmatprep.subr.mxu0 0.0
    %4507 = vmatpush1.msra.mxu0 %v1195
    %4508 = vmatprep.subr.mxu0 0.0
    %4509 = vmatpush1.msra.mxu0 %v1196
    %4510 = vmatprep.subr.mxu0 0.0
    %4511 = vmatpush1.msra.mxu0 0.0
    %4512 = vmatprep.subr.mxu0 0.0
    %4513 = vmatpush1.msra.mxu0 0.0
    %4514 = vmatprep.subr.mxu0 0.0
    %4515 = vmatpush1.msra.mxu0 0.0
    %4516 = vmatprep.subr.mxu0 0.0
    %4517 = vmatpush1.msra.mxu0 0.0
    %4518 = vmatprep.subr.mxu0 0.0
    %4519 = vmatpush1.msra.mxu0 0.0
    %4520 = vmatprep.subr.mxu0 0.0
    %4521 = vmatpush1.msra.mxu0 0.0
    %4522 = vmatprep.subr.mxu0 0.0
    %4523 = vmatpush1.msra.mxu0 0.0
    %4524 = vmatprep.subr.mxu0 0.0
    %4525 = vmatpush1.msra.mxu0 0.0
    %4526 = vmatprep.subr.mxu0 0.0
    %4527 = vmatpush1.msra.mxu0 0.0
    %4528 = vmatprep.subr.mxu0 0.0
    %4529 = vmatpush1.msra.mxu0 0.0
    %4530 = vmatprep.subr.mxu0 0.0
    %4531 = vmatpush1.msra.mxu0 0.0
    %4532 = vmatprep.subr.mxu0 0.0
    %4533 = vmatpush1.msra.mxu0 0.0
    %4534 = vmatprep.subr.mxu0 0.0
    %4535 = vmatpush1.msra.mxu0 0.0
    %4536 = vmatprep.subr.mxu0 0.0
    %4537 = vmatpush1.msra.mxu0 0.0
    %4538 = vmatprep.subr.mxu0 0.0
    %4539 = vmatpush1.msra.mxu0 0.0
    %4540 = vmatprep.subr.mxu0 0.0
    %4541 = vmatpush1.msra.mxu0 0.0
    %4542 = vmatprep.subr.mxu0 0.0
    %4543 = vmatpush1.msra.mxu0 0.0
    %4544 = vmatprep.subr.mxu0 0.0
    %4545 = vmatpush1.msra.mxu0 0.0
    %4546 = vmatprep.subr.mxu0 0.0
    %4547 = vmatpush1.msra.mxu0 0.0
    %4548 = vmatprep.subr.mxu0 0.0
    %4549 = vmatpush1.msra.mxu0 0.0
    %4550 = vmatprep.subr.mxu0 0.0
    %4551 = vmatpush1.msra.mxu0 0.0
    %4552 = vmatprep.subr.mxu0 0.0
    %4553 = vmatpush1.msra.mxu0 0.0
    %4554 = vmatprep.subr.mxu0 0.0
    %4555 = vmatpush1.msra.mxu0 0.0
    %4556 = vmatprep.subr.mxu0 0.0
    %4557 = vmatpush1.msra.mxu0 0.0
    %4558 = vmatprep.subr.mxu0 0.0
    %4559 = vmatpush1.msra.mxu0 0.0
    %4560 = vmatprep.subr.mxu0 0.0
    %4561 = vmatpush1.msra.mxu0 0.0
    %4562 = vmatprep.subr.mxu0 0.0
    %4563 = vmatpush1.msra.mxu0 0.0
    %4564 = vmatprep.subr.mxu0 0.0
    %4565 = vmatpush1.msra.mxu0 0.0
    %4566 = vmatprep.mubr.f32.mxu0 0.0
    %4567 = vmatmul.mubr.f32.gmra.mrb[0].mxu0 %v4430
    %v4568 = vpop.f32.mrb[0].mxu0
    %v4569 = vadd.f32 %v1203, %v4568
    %v4570 = vpop.f32.mrb[0].mxu0
    %4571 = vdwg.mxu0
    %4572 = vmatprep.subr.mxu0 0.0
    %4573 = vmatpush1.msra.mxu0 %v1276
    %4574 = vmatprep.subr.mxu0 0.0
    %4575 = vmatpush1.msra.mxu0 %v1277
    %4576 = vmatprep.subr.mxu0 0.0
    %4577 = vmatpush1.msra.mxu0 %v1278
    %4578 = vmatprep.subr.mxu0 0.0
    %4579 = vmatpush1.msra.mxu0 %v1279
    %4580 = vmatprep.subr.mxu0 0.0
    %4581 = vmatpush1.msra.mxu0 0.0
    %4582 = vmatprep.subr.mxu0 0.0
    %4583 = vmatpush1.msra.mxu0 0.0
    %4584 = vmatprep.subr.mxu0 0.0
    %4585 = vmatpush1.msra.mxu0 0.0
    %4586 = vmatprep.subr.mxu0 0.0
    %4587 = vmatpush1.msra.mxu0 0.0
    %4588 = vmatprep.subr.mxu0 0.0
    %4589 = vmatpush1.msra.mxu0 0.0
    %4590 = vmatprep.subr.mxu0 0.0
    %4591 = vmatpush1.msra.mxu0 0.0
    %4592 = vmatprep.subr.mxu0 0.0
    %4593 = vmatpush1.msra.mxu0 0.0
    %4594 = vmatprep.subr.mxu0 0.0
    %4595 = vmatpush1.msra.mxu0 0.0
    %4596 = vmatprep.subr.mxu0 0.0
    %4597 = vmatpush1.msra.mxu0 0.0
    %4598 = vmatprep.subr.mxu0 0.0
    %4599 = vmatpush1.msra.mxu0 0.0
    %4600 = vmatprep.subr.mxu0 0.0
    %4601 = vmatpush1.msra.mxu0 0.0
    %4602 = vmatprep.subr.mxu0 0.0
    %4603 = vmatpush1.msra.mxu0 0.0
    %4604 = vmatprep.subr.mxu0 0.0
    %4605 = vmatpush1.msra.mxu0 0.0
    %4606 = vmatprep.subr.mxu0 0.0
    %4607 = vmatpush1.msra.mxu0 0.0
    %4608 = vmatprep.subr.mxu0 0.0
    %4609 = vmatpush1.msra.mxu0 0.0
    %4610 = vmatprep.subr.mxu0 0.0
    %4611 = vmatpush1.msra.mxu0 0.0
    %4612 = vmatprep.subr.mxu0 0.0
    %4613 = vmatpush1.msra.mxu0 0.0
    %4614 = vmatprep.subr.mxu0 0.0
    %4615 = vmatpush1.msra.mxu0 0.0
    %4616 = vmatprep.subr.mxu0 0.0
    %4617 = vmatpush1.msra.mxu0 0.0
    %4618 = vmatprep.subr.mxu0 0.0
    %4619 = vmatpush1.msra.mxu0 0.0
    %4620 = vmatprep.subr.mxu0 0.0
    %4621 = vmatpush1.msra.mxu0 0.0
    %4622 = vmatprep.subr.mxu0 0.0
    %4623 = vmatpush1.msra.mxu0 0.0
    %4624 = vmatprep.subr.mxu0 0.0
    %4625 = vmatpush1.msra.mxu0 0.0
    %4626 = vmatprep.subr.mxu0 0.0
    %4627 = vmatpush1.msra.mxu0 0.0
    %4628 = vmatprep.subr.mxu0 0.0
    %4629 = vmatpush1.msra.mxu0 0.0
    %4630 = vmatprep.subr.mxu0 0.0
    %4631 = vmatpush1.msra.mxu0 0.0
    %4632 = vmatprep.subr.mxu0 0.0
    %4633 = vmatpush1.msra.mxu0 0.0
    %4634 = vmatprep.subr.mxu0 0.0
    %4635 = vmatpush1.msra.mxu0 0.0
    %4636 = vmatprep.mubr.f32.mxu0 0.0
    %4637 = vmatmul.mubr.f32.gmra.mrb[0].mxu0 %v4430
    %v4638 = vpop.f32.mrb[0].mxu0
    %v4639 = vadd.f32 %v1286, %v4638
    %v4640 = vpop.f32.mrb[0].mxu0
    %4641 = vdwg.mxu0
    %v4643 = vrot.slane %v4499, 6
    %v4645 = vadd.f32 %v407, %v4643
    %v4646 = vxor.u32 %v4645, 2147483648
    %v4647 = vmul.f32 %v4646, 1.442695
    %v4648 = vpow.pop %v4647
    %v4649 = vadd.f32 %v4648, 1.0
    %v4650 = vrcp.pop %v4649
    %v4651 = vmul.f32 1.0, %v4650
    %v4653 = vrot.slane %v4569, 6
    %v4655 = vadd.f32 %v493, %v4653
    %v4656 = vxor.u32 %v4655, 2147483648
    %v4657 = vmul.f32 %v4656, 1.442695
    %v4658 = vpow.pop %v4657
    %v4659 = vadd.f32 %v4658, 1.0
    %v4660 = vrcp.pop %v4659
    %v4661 = vmul.f32 1.0, %v4660
    %v4663 = vrot.slane %v4639, 6
    %v4665 = vmul.f32 %v4651, %v4663
    %v4666 = vadd.f32 %v579, %v4665
    %v4667 = vtanh.pop %v4666
    %v4669 = vrot.slane %v4667, 2
    %v4671 = vsub.f32 %v4015, %v4669
    %v4673 = vrot.slane %v4671, 6
    %v4675 = vmul.f32 %v4661, %v4673
    %v4676 = vadd.f32 %v4667, %v4675
    %vm4677 = vcmp.eq.s32.totalorder %v837, 5
    %v4678 = vsel %vm4677, 1, 0
    %v4679 = vcvt.s32.f32 %v4678
    %v4680 = vmax.f32 %v4428, 0.0
    %v4682 = vrot.slane %v4680, 2
    %v4683 = vsel %vm849, %v4682, 0
    %4685 = vmatprep.subr.mxu0 0.0
    %4686 = vmatpush1.msra.mxu0 %v828
    %4687 = vmatprep.subr.mxu0 0.0
    %4688 = vmatpush1.msra.mxu0 %v829
    %4689 = vmatprep.subr.mxu0 0.0
    %4690 = vmatpush1.msra.mxu0 %v830
    %4691 = vmatprep.subr.mxu0 0.0
    %4692 = vmatpush1.msra.mxu0 %v831
    %4693 = vmatprep.subr.mxu0 0.0
    %4694 = vmatpush1.msra.mxu0 0.0
    %4695 = vmatprep.subr.mxu0 0.0
    %4696 = vmatpush1.msra.mxu0 0.0
    %4697 = vmatprep.subr.mxu0 0.0
    %4698 = vmatpush1.msra.mxu0 0.0
    %4699 = vmatprep.subr.mxu0 0.0
    %4700 = vmatpush1.msra.mxu0 0.0
    %4701 = vmatprep.subr.mxu0 0.0
    %4702 = vmatpush1.msra.mxu0 0.0
    %4703 = vmatprep.subr.mxu0 0.0
    %4704 = vmatpush1.msra.mxu0 0.0
    %4705 = vmatprep.subr.mxu0 0.0
    %4706 = vmatpush1.msra.mxu0 0.0
    %4707 = vmatprep.subr.mxu0 0.0
    %4708 = vmatpush1.msra.mxu0 0.0
    %4709 = vmatprep.subr.mxu0 0.0
    %4710 = vmatpush1.msra.mxu0 0.0
    %4711 = vmatprep.subr.mxu0 0.0
    %4712 = vmatpush1.msra.mxu0 0.0
    %4713 = vmatprep.subr.mxu0 0.0
    %4714 = vmatpush1.msra.mxu0 0.0
    %4715 = vmatprep.subr.mxu0 0.0
    %4716 = vmatpush1.msra.mxu0 0.0
    %4717 = vmatprep.subr.mxu0 0.0
    %4718 = vmatpush1.msra.mxu0 0.0
    %4719 = vmatprep.subr.mxu0 0.0
    %4720 = vmatpush1.msra.mxu0 0.0
    %4721 = vmatprep.subr.mxu0 0.0
    %4722 = vmatpush1.msra.mxu0 0.0
    %4723 = vmatprep.subr.mxu0 0.0
    %4724 = vmatpush1.msra.mxu0 0.0
    %4725 = vmatprep.subr.mxu0 0.0
    %4726 = vmatpush1.msra.mxu0 0.0
    %4727 = vmatprep.subr.mxu0 0.0
    %4728 = vmatpush1.msra.mxu0 0.0
    %4729 = vmatprep.subr.mxu0 0.0
    %4730 = vmatpush1.msra.mxu0 0.0
    %4731 = vmatprep.subr.mxu0 0.0
    %4732 = vmatpush1.msra.mxu0 0.0
    %4733 = vmatprep.subr.mxu0 0.0
    %4734 = vmatpush1.msra.mxu0 0.0
    %4735 = vmatprep.subr.mxu0 0.0
    %4736 = vmatpush1.msra.mxu0 0.0
    %4737 = vmatprep.subr.mxu0 0.0
    %4738 = vmatpush1.msra.mxu0 0.0
    %4739 = vmatprep.subr.mxu0 0.0
    %4740 = vmatpush1.msra.mxu0 0.0
    %4741 = vmatprep.subr.mxu0 0.0
    %4742 = vmatpush1.msra.mxu0 0.0
    %4743 = vmatprep.subr.mxu0 0.0
    %4744 = vmatpush1.msra.mxu0 0.0
    %4745 = vmatprep.subr.mxu0 0.0
    %4746 = vmatpush1.msra.mxu0 0.0
    %4747 = vmatprep.subr.mxu0 0.0
    %4748 = vmatpush1.msra.mxu0 0.0
    %4749 = vmatprep.mubr.f32.mxu0 0.0
    %4750 = vmatmul.mubr.f32.gmra.mrb[0].mxu0 %v4683
    %v4751 = vpop.f32.mrb[0].mxu0
    %v4752 = vadd.f32 0.0, %v4751
    %v4753 = vpop.f32.mrb[0].mxu0
    %4754 = vdwg.mxu0
    %4756 = vset.pattern.permute.xlu0 0
    %4757 = vperm.xlu0 %4756, %v4752
    %v4758 = vpop.permute.xlu0 %4757
    %v4760 = vmul.f32 %v4758, %v4679
    %v4761 = vadd.f32 %v4099, %v4760
    %v4762 = vmax.f32 %v4676, 0.0
    %v4764 = vrot.slane %v4762, 2
    %v4765 = vsel %vm849, %v4764, 0
    %4767 = vmatprep.subr.mxu0 0.0
    %4768 = vmatpush1.msra.mxu0 %v828
    %4769 = vmatprep.subr.mxu0 0.0
    %4770 = vmatpush1.msra.mxu0 %v829
    %4771 = vmatprep.subr.mxu0 0.0
    %4772 = vmatpush1.msra.mxu0 %v830
    %4773 = vmatprep.subr.mxu0 0.0
    %4774 = vmatpush1.msra.mxu0 %v831
    %4775 = vmatprep.subr.mxu0 0.0
    %4776 = vmatpush1.msra.mxu0 0.0
    %4777 = vmatprep.subr.mxu0 0.0
    %4778 = vmatpush1.msra.mxu0 0.0
    %4779 = vmatprep.subr.mxu0 0.0
    %4780 = vmatpush1.msra.mxu0 0.0
    %4781 = vmatprep.subr.mxu0 0.0
    %4782 = vmatpush1.msra.mxu0 0.0
    %4783 = vmatprep.subr.mxu0 0.0
    %4784 = vmatpush1.msra.mxu0 0.0
    %4785 = vmatprep.subr.mxu0 0.0
    %4786 = vmatpush1.msra.mxu0 0.0
    %4787 = vmatprep.subr.mxu0 0.0
    %4788 = vmatpush1.msra.mxu0 0.0
    %4789 = vmatprep.subr.mxu0 0.0
    %4790 = vmatpush1.msra.mxu0 0.0
    %4791 = vmatprep.subr.mxu0 0.0
    %4792 = vmatpush1.msra.mxu0 0.0
    %4793 = vmatprep.subr.mxu0 0.0
    %4794 = vmatpush1.msra.mxu0 0.0
    %4795 = vmatprep.subr.mxu0 0.0
    %4796 = vmatpush1.msra.mxu0 0.0
    %4797 = vmatprep.subr.mxu0 0.0
    %4798 = vmatpush1.msra.mxu0 0.0
    %4799 = vmatprep.subr.mxu0 0.0
    %4800 = vmatpush1.msra.mxu0 0.0
    %4801 = vmatprep.subr.mxu0 0.0
    %4802 = vmatpush1.msra.mxu0 0.0
    %4803 = vmatprep.subr.mxu0 0.0
    %4804 = vmatpush1.msra.mxu0 0.0
    %4805 = vmatprep.subr.mxu0 0.0
    %4806 = vmatpush1.msra.mxu0 0.0
    %4807 = vmatprep.subr.mxu0 0.0
    %4808 = vmatpush1.msra.mxu0 0.0
    %4809 = vmatprep.subr.mxu0 0.0
    %4810 = vmatpush1.msra.mxu0 0.0
    %4811 = vmatprep.subr.mxu0 0.0
    %4812 = vmatpush1.msra.mxu0 0.0
    %4813 = vmatprep.subr.mxu0 0.0
    %4814 = vmatpush1.msra.mxu0 0.0
    %4815 = vmatprep.subr.mxu0 0.0
    %4816 = vmatpush1.msra.mxu0 0.0
    %4817 = vmatprep.subr.mxu0 0.0
    %4818 = vmatpush1.msra.mxu0 0.0
    %4819 = vmatprep.subr.mxu0 0.0
    %4820 = vmatpush1.msra.mxu0 0.0
    %4821 = vmatprep.subr.mxu0 0.0
    %4822 = vmatpush1.msra.mxu0 0.0
    %4823 = vmatprep.subr.mxu0 0.0
    %4824 = vmatpush1.msra.mxu0 0.0
    %4825 = vmatprep.subr.mxu0 0.0
    %4826 = vmatpush1.msra.mxu0 0.0
    %4827 = vmatprep.subr.mxu0 0.0
    %4828 = vmatpush1.msra.mxu0 0.0
    %4829 = vmatprep.subr.mxu0 0.0
    %4830 = vmatpush1.msra.mxu0 0.0
    %4831 = vmatprep.mubr.f32.mxu0 0.0
    %4832 = vmatmul.mubr.f32.gmra.mrb[0].mxu0 %v4765
    %v4833 = vpop.f32.mrb[0].mxu0
    %v4834 = vadd.f32 0.0, %v4833
    %v4835 = vpop.f32.mrb[0].mxu0
    %4836 = vdwg.mxu0
    %4838 = vset.pattern.permute.xlu0 0
    %4839 = vperm.xlu0 %4838, %v4834
    %v4840 = vpop.permute.xlu0 %4839
    %v4842 = vmul.f32 %v4840, %v4679
    %v4843 = vadd.f32 %v4180, %v4842
    %v4845 = vrot.slane %v4428, 2
    %v4846 = vsel %vm849, %v4845, 0
    %4848 = vmatprep.subr.mxu0 0.0
    %4849 = vmatpush1.msra.mxu0 %v838
    %4850 = vmatprep.subr.mxu0 0.0
    %4851 = vmatpush1.msra.mxu0 %v839
    %4852 = vmatprep.subr.mxu0 0.0
    %4853 = vmatpush1.msra.mxu0 %v840
    %4854 = vmatprep.subr.mxu0 0.0
    %4855 = vmatpush1.msra.mxu0 %v841
    %4856 = vmatprep.subr.mxu0 0.0
    %4857 = vmatpush1.msra.mxu0 0.0
    %4858 = vmatprep.subr.mxu0 0.0
    %4859 = vmatpush1.msra.mxu0 0.0
    %4860 = vmatprep.subr.mxu0 0.0
    %4861 = vmatpush1.msra.mxu0 0.0
    %4862 = vmatprep.subr.mxu0 0.0
    %4863 = vmatpush1.msra.mxu0 0.0
    %4864 = vmatprep.subr.mxu0 0.0
    %4865 = vmatpush1.msra.mxu0 0.0
    %4866 = vmatprep.subr.mxu0 0.0
    %4867 = vmatpush1.msra.mxu0 0.0
    %4868 = vmatprep.subr.mxu0 0.0
    %4869 = vmatpush1.msra.mxu0 0.0
    %4870 = vmatprep.subr.mxu0 0.0
    %4871 = vmatpush1.msra.mxu0 0.0
    %4872 = vmatprep.subr.mxu0 0.0
    %4873 = vmatpush1.msra.mxu0 0.0
    %4874 = vmatprep.subr.mxu0 0.0
    %4875 = vmatpush1.msra.mxu0 0.0
    %4876 = vmatprep.subr.mxu0 0.0
    %4877 = vmatpush1.msra.mxu0 0.0
    %4878 = vmatprep.subr.mxu0 0.0
    %4879 = vmatpush1.msra.mxu0 0.0
    %4880 = vmatprep.subr.mxu0 0.0
    %4881 = vmatpush1.msra.mxu0 0.0
    %4882 = vmatprep.subr.mxu0 0.0
    %4883 = vmatpush1.msra.mxu0 0.0
    %4884 = vmatprep.subr.mxu0 0.0
    %4885 = vmatpush1.msra.mxu0 0.0
    %4886 = vmatprep.subr.mxu0 0.0
    %4887 = vmatpush1.msra.mxu0 0.0
    %4888 = vmatprep.subr.mxu0 0.0
    %4889 = vmatpush1.msra.mxu0 0.0
    %4890 = vmatprep.subr.mxu0 0.0
    %4891 = vmatpush1.msra.mxu0 0.0
    %4892 = vmatprep.subr.mxu0 0.0
    %4893 = vmatpush1.msra.mxu0 0.0
    %4894 = vmatprep.subr.mxu0 0.0
    %4895 = vmatpush1.msra.mxu0 0.0
    %4896 = vmatprep.subr.mxu0 0.0
    %4897 = vmatpush1.msra.mxu0 0.0
    %4898 = vmatprep.subr.mxu0 0.0
    %4899 = vmatpush1.msra.mxu0 0.0
    %4900 = vmatprep.subr.mxu0 0.0
    %4901 = vmatpush1.msra.mxu0 0.0
    %4902 = vmatprep.subr.mxu0 0.0
    %4903 = vmatpush1.msra.mxu0 0.0
    %4904 = vmatprep.subr.mxu0 0.0
    %4905 = vmatpush1.msra.mxu0 0.0
    %4906 = vmatprep.subr.mxu0 0.0
    %4907 = vmatpush1.msra.mxu0 0.0
    %4908 = vmatprep.subr.mxu0 0.0
    %4909 = vmatpush1.msra.mxu0 0.0
    %4910 = vmatprep.subr.mxu0 0.0
    %4911 = vmatpush1.msra.mxu0 0.0
    %4912 = vmatprep.mubr.f32.mxu0 0.0
    %4913 = vmatmul.mubr.f32.gmra.mrb[0].mxu0 %v4846
    %v4914 = vpop.f32.mrb[0].mxu0
    %v4915 = vadd.f32 %v847, %v4914
    %v4916 = vpop.f32.mrb[0].mxu0
    %4917 = vdwg.mxu0
    %4918 = vmatprep.subr.mxu0 0.0
    %4919 = vmatpush1.msra.mxu0 %v924
    %4920 = vmatprep.subr.mxu0 0.0
    %4921 = vmatpush1.msra.mxu0 %v925
    %4922 = vmatprep.subr.mxu0 0.0
    %4923 = vmatpush1.msra.mxu0 %v926
    %4924 = vmatprep.subr.mxu0 0.0
    %4925 = vmatpush1.msra.mxu0 %v927
    %4926 = vmatprep.subr.mxu0 0.0
    %4927 = vmatpush1.msra.mxu0 0.0
    %4928 = vmatprep.subr.mxu0 0.0
    %4929 = vmatpush1.msra.mxu0 0.0
    %4930 = vmatprep.subr.mxu0 0.0
    %4931 = vmatpush1.msra.mxu0 0.0
    %4932 = vmatprep.subr.mxu0 0.0
    %4933 = vmatpush1.msra.mxu0 0.0
    %4934 = vmatprep.subr.mxu0 0.0
    %4935 = vmatpush1.msra.mxu0 0.0
    %4936 = vmatprep.subr.mxu0 0.0
    %4937 = vmatpush1.msra.mxu0 0.0
    %4938 = vmatprep.subr.mxu0 0.0
    %4939 = vmatpush1.msra.mxu0 0.0
    %4940 = vmatprep.subr.mxu0 0.0
    %4941 = vmatpush1.msra.mxu0 0.0
    %4942 = vmatprep.subr.mxu0 0.0
    %4943 = vmatpush1.msra.mxu0 0.0
    %4944 = vmatprep.subr.mxu0 0.0
    %4945 = vmatpush1.msra.mxu0 0.0
    %4946 = vmatprep.subr.mxu0 0.0
    %4947 = vmatpush1.msra.mxu0 0.0
    %4948 = vmatprep.subr.mxu0 0.0
    %4949 = vmatpush1.msra.mxu0 0.0
    %4950 = vmatprep.subr.mxu0 0.0
    %4951 = vmatpush1.msra.mxu0 0.0
    %4952 = vmatprep.subr.mxu0 0.0
    %4953 = vmatpush1.msra.mxu0 0.0
    %4954 = vmatprep.subr.mxu0 0.0
    %4955 = vmatpush1.msra.mxu0 0.0
    %4956 = vmatprep.subr.mxu0 0.0
    %4957 = vmatpush1.msra.mxu0 0.0
    %4958 = vmatprep.subr.mxu0 0.0
    %4959 = vmatpush1.msra.mxu0 0.0
    %4960 = vmatprep.subr.mxu0 0.0
    %4961 = vmatpush1.msra.mxu0 0.0
    %4962 = vmatprep.subr.mxu0 0.0
    %4963 = vmatpush1.msra.mxu0 0.0
    %4964 = vmatprep.subr.mxu0 0.0
    %4965 = vmatpush1.msra.mxu0 0.0
    %4966 = vmatprep.subr.mxu0 0.0
    %4967 = vmatpush1.msra.mxu0 0.0
    %4968 = vmatprep.subr.mxu0 0.0
    %4969 = vmatpush1.msra.mxu0 0.0
    %4970 = vmatprep.subr.mxu0 0.0
    %4971 = vmatpush1.msra.mxu0 0.0
    %4972 = vmatprep.subr.mxu0 0.0
    %4973 = vmatpush1.msra.mxu0 0.0
    %4974 = vmatprep.subr.mxu0 0.0
    %4975 = vmatpush1.msra.mxu0 0.0
    %4976 = vmatprep.subr.mxu0 0.0
    %4977 = vmatpush1.msra.mxu0 0.0
    %4978 = vmatprep.subr.mxu0 0.0
    %4979 = vmatpush1.msra.mxu0 0.0
    %4980 = vmatprep.subr.mxu0 0.0
    %4981 = vmatpush1.msra.mxu0 0.0
    %4982 = vmatprep.mubr.f32.mxu0 0.0
    %4983 = vmatmul.mubr.f32.gmra.mrb[0].mxu0 %v4846
    %v4984 = vpop.f32.mrb[0].mxu0
    %v4985 = vadd.f32 %v934, %v4984
    %v4986 = vpop.f32.mrb[0].mxu0
    %4987 = vdwg.mxu0
    %4988 = vmatprep.subr.mxu0 0.0
    %4989 = vmatpush1.msra.mxu0 %v1007
    %4990 = vmatprep.subr.mxu0 0.0
    %4991 = vmatpush1.msra.mxu0 %v1008
    %4992 = vmatprep.subr.mxu0 0.0
    %4993 = vmatpush1.msra.mxu0 %v1009
    %4994 = vmatprep.subr.mxu0 0.0
    %4995 = vmatpush1.msra.mxu0 %v1010
    %4996 = vmatprep.subr.mxu0 0.0
    %4997 = vmatpush1.msra.mxu0 0.0
    %4998 = vmatprep.subr.mxu0 0.0
    %4999 = vmatpush1.msra.mxu0 0.0
    %5000 = vmatprep.subr.mxu0 0.0
    %5001 = vmatpush1.msra.mxu0 0.0
    %5002 = vmatprep.subr.mxu0 0.0
    %5003 = vmatpush1.msra.mxu0 0.0
    %5004 = vmatprep.subr.mxu0 0.0
    %5005 = vmatpush1.msra.mxu0 0.0
    %5006 = vmatprep.subr.mxu0 0.0
    %5007 = vmatpush1.msra.mxu0 0.0
    %5008 = vmatprep.subr.mxu0 0.0
    %5009 = vmatpush1.msra.mxu0 0.0
    %5010 = vmatprep.subr.mxu0 0.0
    %5011 = vmatpush1.msra.mxu0 0.0
    %5012 = vmatprep.subr.mxu0 0.0
    %5013 = vmatpush1.msra.mxu0 0.0
    %5014 = vmatprep.subr.mxu0 0.0
    %5015 = vmatpush1.msra.mxu0 0.0
    %5016 = vmatprep.subr.mxu0 0.0
    %5017 = vmatpush1.msra.mxu0 0.0
    %5018 = vmatprep.subr.mxu0 0.0
    %5019 = vmatpush1.msra.mxu0 0.0
    %5020 = vmatprep.subr.mxu0 0.0
    %5021 = vmatpush1.msra.mxu0 0.0
    %5022 = vmatprep.subr.mxu0 0.0
    %5023 = vmatpush1.msra.mxu0 0.0
    %5024 = vmatprep.subr.mxu0 0.0
    %5025 = vmatpush1.msra.mxu0 0.0
    %5026 = vmatprep.subr.mxu0 0.0
    %5027 = vmatpush1.msra.mxu0 0.0
    %5028 = vmatprep.subr.mxu0 0.0
    %5029 = vmatpush1.msra.mxu0 0.0
    %5030 = vmatprep.subr.mxu0 0.0
    %5031 = vmatpush1.msra.mxu0 0.0
    %5032 = vmatprep.subr.mxu0 0.0
    %5033 = vmatpush1.msra.mxu0 0.0
    %5034 = vmatprep.subr.mxu0 0.0
    %5035 = vmatpush1.msra.mxu0 0.0
    %5036 = vmatprep.subr.mxu0 0.0
    %5037 = vmatpush1.msra.mxu0 0.0
    %5038 = vmatprep.subr.mxu0 0.0
    %5039 = vmatpush1.msra.mxu0 0.0
    %5040 = vmatprep.subr.mxu0 0.0
    %5041 = vmatpush1.msra.mxu0 0.0
    %5042 = vmatprep.subr.mxu0 0.0
    %5043 = vmatpush1.msra.mxu0 0.0
    %5044 = vmatprep.subr.mxu0 0.0
    %5045 = vmatpush1.msra.mxu0 0.0
    %5046 = vmatprep.subr.mxu0 0.0
    %5047 = vmatpush1.msra.mxu0 0.0
    %5048 = vmatprep.subr.mxu0 0.0
    %5049 = vmatpush1.msra.mxu0 0.0
    %5050 = vmatprep.subr.mxu0 0.0
    %5051 = vmatpush1.msra.mxu0 0.0
    %5052 = vmatprep.mubr.f32.mxu0 0.0
    %5053 = vmatmul.mubr.f32.gmra.mrb[0].mxu0 %v4846
    %v5054 = vpop.f32.mrb[0].mxu0
    %v5055 = vadd.f32 %v1017, %v5054
    %v5056 = vpop.f32.mrb[0].mxu0
    %5057 = vdwg.mxu0
    %v5059 = vrot.slane %v4915, 4
    %v5061 = vadd.f32 %v143, %v5059
    %v5062 = vxor.u32 %v5061, 2147483648
    %v5063 = vmul.f32 %v5062, 1.442695
    %v5064 = vpow.pop %v5063
    %v5065 = vadd.f32 %v5064, 1.0
    %v5066 = vrcp.pop %v5065
    %v5067 = vmul.f32 1.0, %v5066
    %v5069 = vrot.slane %v4985, 4
    %v5071 = vadd.f32 %v229, %v5069
    %v5072 = vxor.u32 %v5071, 2147483648
    %v5073 = vmul.f32 %v5072, 1.442695
    %v5074 = vpow.pop %v5073
    %v5075 = vadd.f32 %v5074, 1.0
    %v5076 = vrcp.pop %v5075
    %v5077 = vmul.f32 1.0, %v5076
    %v5079 = vrot.slane %v5055, 4
    %v5081 = vmul.f32 %v5067, %v5079
    %v5082 = vadd.f32 %v315, %v5081
    %v5083 = vtanh.pop %v5082
    %v5085 = vrot.slane %v5083, 2
    %v5087 = vsub.f32 %v4428, %v5085
    %v5089 = vrot.slane %v5087, 6
    %v5091 = vmul.f32 %v5077, %v5089
    %v5092 = vadd.f32 %v5083, %v5091
    %v5094 = vrot.slane %v4676, 2
    %v5095 = vsel %vm849, %v5094, 0
    %5097 = vmatprep.subr.mxu0 0.0
    %5098 = vmatpush1.msra.mxu0 %v1110
    %5099 = vmatprep.subr.mxu0 0.0
    %5100 = vmatpush1.msra.mxu0 %v1111
    %5101 = vmatprep.subr.mxu0 0.0
    %5102 = vmatpush1.msra.mxu0 %v1112
    %5103 = vmatprep.subr.mxu0 0.0
    %5104 = vmatpush1.msra.mxu0 %v1113
    %5105 = vmatprep.subr.mxu0 0.0
    %5106 = vmatpush1.msra.mxu0 0.0
    %5107 = vmatprep.subr.mxu0 0.0
    %5108 = vmatpush1.msra.mxu0 0.0
    %5109 = vmatprep.subr.mxu0 0.0
    %5110 = vmatpush1.msra.mxu0 0.0
    %5111 = vmatprep.subr.mxu0 0.0
    %5112 = vmatpush1.msra.mxu0 0.0
    %5113 = vmatprep.subr.mxu0 0.0
    %5114 = vmatpush1.msra.mxu0 0.0
    %5115 = vmatprep.subr.mxu0 0.0
    %5116 = vmatpush1.msra.mxu0 0.0
    %5117 = vmatprep.subr.mxu0 0.0
    %5118 = vmatpush1.msra.mxu0 0.0
    %5119 = vmatprep.subr.mxu0 0.0
    %5120 = vmatpush1.msra.mxu0 0.0
    %5121 = vmatprep.subr.mxu0 0.0
    %5122 = vmatpush1.msra.mxu0 0.0
    %5123 = vmatprep.subr.mxu0 0.0
    %5124 = vmatpush1.msra.mxu0 0.0
    %5125 = vmatprep.subr.mxu0 0.0
    %5126 = vmatpush1.msra.mxu0 0.0
    %5127 = vmatprep.subr.mxu0 0.0
    %5128 = vmatpush1.msra.mxu0 0.0
    %5129 = vmatprep.subr.mxu0 0.0
    %5130 = vmatpush1.msra.mxu0 0.0
    %5131 = vmatprep.subr.mxu0 0.0
    %5132 = vmatpush1.msra.mxu0 0.0
    %5133 = vmatprep.subr.mxu0 0.0
    %5134 = vmatpush1.msra.mxu0 0.0
    %5135 = vmatprep.subr.mxu0 0.0
    %5136 = vmatpush1.msra.mxu0 0.0
    %5137 = vmatprep.subr.mxu0 0.0
    %5138 = vmatpush1.msra.mxu0 0.0
    %5139 = vmatprep.subr.mxu0 0.0
    %5140 = vmatpush1.msra.mxu0 0.0
    %5141 = vmatprep.subr.mxu0 0.0
    %5142 = vmatpush1.msra.mxu0 0.0
    %5143 = vmatprep.subr.mxu0 0.0
    %5144 = vmatpush1.msra.mxu0 0.0
    %5145 = vmatprep.subr.mxu0 0.0
    %5146 = vmatpush1.msra.mxu0 0.0
    %5147 = vmatprep.subr.mxu0 0.0
    %5148 = vmatpush1.msra.mxu0 0.0
    %5149 = vmatprep.subr.mxu0 0.0
    %5150 = vmatpush1.msra.mxu0 0.0
    %5151 = vmatprep.subr.mxu0 0.0
    %5152 = vmatpush1.msra.mxu0 0.0
    %5153 = vmatprep.subr.mxu0 0.0
    %5154 = vmatpush1.msra.mxu0 0.0
    %5155 = vmatprep.subr.mxu0 0.0
    %5156 = vmatpush1.msra.mxu0 0.0
    %5157 = vmatprep.subr.mxu0 0.0
    %5158 = vmatpush1.msra.mxu0 0.0
    %5159 = vmatprep.subr.mxu0 0.0
    %5160 = vmatpush1.msra.mxu0 0.0
    %5161 = vmatprep.mubr.f32.mxu0 0.0
    %5162 = vmatmul.mubr.f32.gmra.mrb[0].mxu0 %v5095
    %v5163 = vpop.f32.mrb[0].mxu0
    %v5164 = vadd.f32 %v1120, %v5163
    %v5165 = vpop.f32.mrb[0].mxu0
    %5166 = vdwg.mxu0
    %5167 = vmatprep.subr.mxu0 0.0
    %5168 = vmatpush1.msra.mxu0 %v1193
    %5169 = vmatprep.subr.mxu0 0.0
    %5170 = vmatpush1.msra.mxu0 %v1194
    %5171 = vmatprep.subr.mxu0 0.0
    %5172 = vmatpush1.msra.mxu0 %v1195
    %5173 = vmatprep.subr.mxu0 0.0
    %5174 = vmatpush1.msra.mxu0 %v1196
    %5175 = vmatprep.subr.mxu0 0.0
    %5176 = vmatpush1.msra.mxu0 0.0
    %5177 = vmatprep.subr.mxu0 0.0
    %5178 = vmatpush1.msra.mxu0 0.0
    %5179 = vmatprep.subr.mxu0 0.0
    %5180 = vmatpush1.msra.mxu0 0.0
    %5181 = vmatprep.subr.mxu0 0.0
    %5182 = vmatpush1.msra.mxu0 0.0
    %5183 = vmatprep.subr.mxu0 0.0
    %5184 = vmatpush1.msra.mxu0 0.0
    %5185 = vmatprep.subr.mxu0 0.0
    %5186 = vmatpush1.msra.mxu0 0.0
    %5187 = vmatprep.subr.mxu0 0.0
    %5188 = vmatpush1.msra.mxu0 0.0
    %5189 = vmatprep.subr.mxu0 0.0
    %5190 = vmatpush1.msra.mxu0 0.0
    %5191 = vmatprep.subr.mxu0 0.0
    %5192 = vmatpush1.msra.mxu0 0.0
    %5193 = vmatprep.subr.mxu0 0.0
    %5194 = vmatpush1.msra.mxu0 0.0
    %5195 = vmatprep.subr.mxu0 0.0
    %5196 = vmatpush1.msra.mxu0 0.0
    %5197 = vmatprep.subr.mxu0 0.0
    %5198 = vmatpush1.msra.mxu0 0.0
    %5199 = vmatprep.subr.mxu0 0.0
    %5200 = vmatpush1.msra.mxu0 0.0
    %5201 = vmatprep.subr.mxu0 0.0
    %5202 = vmatpush1.msra.mxu0 0.0
    %5203 = vmatprep.subr.mxu0 0.0
    %5204 = vmatpush1.msra.mxu0 0.0
    %5205 = vmatprep.subr.mxu0 0.0
    %5206 = vmatpush1.msra.mxu0 0.0
    %5207 = vmatprep.subr.mxu0 0.0
    %5208 = vmatpush1.msra.mxu0 0.0
    %5209 = vmatprep.subr.mxu0 0.0
    %5210 = vmatpush1.msra.mxu0 0.0
    %5211 = vmatprep.subr.mxu0 0.0
    %5212 = vmatpush1.msra.mxu0 0.0
    %5213 = vmatprep.subr.mxu0 0.0
    %5214 = vmatpush1.msra.mxu0 0.0
    %5215 = vmatprep.subr.mxu0 0.0
    %5216 = vmatpush1.msra.mxu0 0.0
    %5217 = vmatprep.subr.mxu0 0.0
    %5218 = vmatpush1.msra.mxu0 0.0
    %5219 = vmatprep.subr.mxu0 0.0
    %5220 = vmatpush1.msra.mxu0 0.0
    %5221 = vmatprep.subr.mxu0 0.0
    %5222 = vmatpush1.msra.mxu0 0.0
    %5223 = vmatprep.subr.mxu0 0.0
    %5224 = vmatpush1.msra.mxu0 0.0
    %5225 = vmatprep.subr.mxu0 0.0
    %5226 = vmatpush1.msra.mxu0 0.0
    %5227 = vmatprep.subr.mxu0 0.0
    %5228 = vmatpush1.msra.mxu0 0.0
    %5229 = vmatprep.subr.mxu0 0.0
    %5230 = vmatpush1.msra.mxu0 0.0
    %5231 = vmatprep.mubr.f32.mxu0 0.0
    %5232 = vmatmul.mubr.f32.gmra.mrb[0].mxu0 %v5095
    %v5233 = vpop.f32.mrb[0].mxu0
    %v5234 = vadd.f32 %v1203, %v5233
    %v5235 = vpop.f32.mrb[0].mxu0
    %5236 = vdwg.mxu0
    %5237 = vmatprep.subr.mxu0 0.0
    %5238 = vmatpush1.msra.mxu0 %v1276
    %5239 = vmatprep.subr.mxu0 0.0
    %5240 = vmatpush1.msra.mxu0 %v1277
    %5241 = vmatprep.subr.mxu0 0.0
    %5242 = vmatpush1.msra.mxu0 %v1278
    %5243 = vmatprep.subr.mxu0 0.0
    %5244 = vmatpush1.msra.mxu0 %v1279
    %5245 = vmatprep.subr.mxu0 0.0
    %5246 = vmatpush1.msra.mxu0 0.0
    %5247 = vmatprep.subr.mxu0 0.0
    %5248 = vmatpush1.msra.mxu0 0.0
    %5249 = vmatprep.subr.mxu0 0.0
    %5250 = vmatpush1.msra.mxu0 0.0
    %5251 = vmatprep.subr.mxu0 0.0
    %5252 = vmatpush1.msra.mxu0 0.0
    %5253 = vmatprep.subr.mxu0 0.0
    %5254 = vmatpush1.msra.mxu0 0.0
    %5255 = vmatprep.subr.mxu0 0.0
    %5256 = vmatpush1.msra.mxu0 0.0
    %5257 = vmatprep.subr.mxu0 0.0
    %5258 = vmatpush1.msra.mxu0 0.0
    %5259 = vmatprep.subr.mxu0 0.0
    %5260 = vmatpush1.msra.mxu0 0.0
    %5261 = vmatprep.subr.mxu0 0.0
    %5262 = vmatpush1.msra.mxu0 0.0
    %5263 = vmatprep.subr.mxu0 0.0
    %5264 = vmatpush1.msra.mxu0 0.0
    %5265 = vmatprep.subr.mxu0 0.0
    %5266 = vmatpush1.msra.mxu0 0.0
    %5267 = vmatprep.subr.mxu0 0.0
    %5268 = vmatpush1.msra.mxu0 0.0
    %5269 = vmatprep.subr.mxu0 0.0
    %5270 = vmatpush1.msra.mxu0 0.0
    %5271 = vmatprep.subr.mxu0 0.0
    %5272 = vmatpush1.msra.mxu0 0.0
    %5273 = vmatprep.subr.mxu0 0.0
    %5274 = vmatpush1.msra.mxu0 0.0
    %5275 = vmatprep.subr.mxu0 0.0
    %5276 = vmatpush1.msra.mxu0 0.0
    %5277 = vmatprep.subr.mxu0 0.0
    %5278 = vmatpush1.msra.mxu0 0.0
    %5279 = vmatprep.subr.mxu0 0.0
    %5280 = vmatpush1.msra.mxu0 0.0
    %5281 = vmatprep.subr.mxu0 0.0
    %5282 = vmatpush1.msra.mxu0 0.0
    %5283 = vmatprep.subr.mxu0 0.0
    %5284 = vmatpush1.msra.mxu0 0.0
    %5285 = vmatprep.subr.mxu0 0.0
    %5286 = vmatpush1.msra.mxu0 0.0
    %5287 = vmatprep.subr.mxu0 0.0
    %5288 = vmatpush1.msra.mxu0 0.0
    %5289 = vmatprep.subr.mxu0 0.0
    %5290 = vmatpush1.msra.mxu0 0.0
    %5291 = vmatprep.subr.mxu0 0.0
    %5292 = vmatpush1.msra.mxu0 0.0
    %5293 = vmatprep.subr.mxu0 0.0
    %5294 = vmatpush1.msra.mxu0 0.0
    %5295 = vmatprep.subr.mxu0 0.0
    %5296 = vmatpush1.msra.mxu0 0.0
    %5297 = vmatprep.subr.mxu0 0.0
    %5298 = vmatpush1.msra.mxu0 0.0
    %5299 = vmatprep.subr.mxu0 0.0
    %5300 = vmatpush1.msra.mxu0 0.0
    %5301 = vmatprep.mubr.f32.mxu0 0.0
    %5302 = vmatmul.mubr.f32.gmra.mrb[0].mxu0 %v5095
    %v5303 = vpop.f32.mrb[0].mxu0
    %v5304 = vadd.f32 %v1286, %v5303
    %v5305 = vpop.f32.mrb[0].mxu0
    %5306 = vdwg.mxu0
    %v5308 = vrot.slane %v5164, 4
    %v5310 = vadd.f32 %v407, %v5308
    %v5311 = vxor.u32 %v5310, 2147483648
    %v5312 = vmul.f32 %v5311, 1.442695
    %v5313 = vpow.pop %v5312
    %v5314 = vadd.f32 %v5313, 1.0
    %v5315 = vrcp.pop %v5314
    %v5316 = vmul.f32 1.0, %v5315
    %v5318 = vrot.slane %v5234, 4
    %v5320 = vadd.f32 %v493, %v5318
    %v5321 = vxor.u32 %v5320, 2147483648
    %v5322 = vmul.f32 %v5321, 1.442695
    %v5323 = vpow.pop %v5322
    %v5324 = vadd.f32 %v5323, 1.0
    %v5325 = vrcp.pop %v5324
    %v5326 = vmul.f32 1.0, %v5325
    %v5328 = vrot.slane %v5304, 4
    %v5330 = vmul.f32 %v5316, %v5328
    %v5331 = vadd.f32 %v579, %v5330
    %v5332 = vtanh.pop %v5331
    %v5334 = vrot.slane %v5332, 2
    %v5336 = vsub.f32 %v4676, %v5334
    %v5338 = vrot.slane %v5336, 6
    %v5340 = vmul.f32 %v5326, %v5338
    %v5341 = vadd.f32 %v5332, %v5340
    %vm5342 = vcmp.eq.s32.totalorder %v837, 6
    %v5343 = vsel %vm5342, 1, 0
    %v5344 = vcvt.s32.f32 %v5343
    %v5345 = vmax.f32 %v5092, 0.0
    %v5347 = vrot.slane %v5345, 4
    %v5348 = vsel %vm849, %v5347, 0
    %5350 = vmatprep.subr.mxu0 0.0
    %5351 = vmatpush1.msra.mxu0 %v828
    %5352 = vmatprep.subr.mxu0 0.0
    %5353 = vmatpush1.msra.mxu0 %v829
    %5354 = vmatprep.subr.mxu0 0.0
    %5355 = vmatpush1.msra.mxu0 %v830
    %5356 = vmatprep.subr.mxu0 0.0
    %5357 = vmatpush1.msra.mxu0 %v831
    %5358 = vmatprep.subr.mxu0 0.0
    %5359 = vmatpush1.msra.mxu0 0.0
    %5360 = vmatprep.subr.mxu0 0.0
    %5361 = vmatpush1.msra.mxu0 0.0
    %5362 = vmatprep.subr.mxu0 0.0
    %5363 = vmatpush1.msra.mxu0 0.0
    %5364 = vmatprep.subr.mxu0 0.0
    %5365 = vmatpush1.msra.mxu0 0.0
    %5366 = vmatprep.subr.mxu0 0.0
    %5367 = vmatpush1.msra.mxu0 0.0
    %5368 = vmatprep.subr.mxu0 0.0
    %5369 = vmatpush1.msra.mxu0 0.0
    %5370 = vmatprep.subr.mxu0 0.0
    %5371 = vmatpush1.msra.mxu0 0.0
    %5372 = vmatprep.subr.mxu0 0.0
    %5373 = vmatpush1.msra.mxu0 0.0
    %5374 = vmatprep.subr.mxu0 0.0
    %5375 = vmatpush1.msra.mxu0 0.0
    %5376 = vmatprep.subr.mxu0 0.0
    %5377 = vmatpush1.msra.mxu0 0.0
    %5378 = vmatprep.subr.mxu0 0.0
    %5379 = vmatpush1.msra.mxu0 0.0
    %5380 = vmatprep.subr.mxu0 0.0
    %5381 = vmatpush1.msra.mxu0 0.0
    %5382 = vmatprep.subr.mxu0 0.0
    %5383 = vmatpush1.msra.mxu0 0.0
    %5384 = vmatprep.subr.mxu0 0.0
    %5385 = vmatpush1.msra.mxu0 0.0
    %5386 = vmatprep.subr.mxu0 0.0
    %5387 = vmatpush1.msra.mxu0 0.0
    %5388 = vmatprep.subr.mxu0 0.0
    %5389 = vmatpush1.msra.mxu0 0.0
    %5390 = vmatprep.subr.mxu0 0.0
    %5391 = vmatpush1.msra.mxu0 0.0
    %5392 = vmatprep.subr.mxu0 0.0
    %5393 = vmatpush1.msra.mxu0 0.0
    %5394 = vmatprep.subr.mxu0 0.0
    %5395 = vmatpush1.msra.mxu0 0.0
    %5396 = vmatprep.subr.mxu0 0.0
    %5397 = vmatpush1.msra.mxu0 0.0
    %5398 = vmatprep.subr.mxu0 0.0
    %5399 = vmatpush1.msra.mxu0 0.0
    %5400 = vmatprep.subr.mxu0 0.0
    %5401 = vmatpush1.msra.mxu0 0.0
    %5402 = vmatprep.subr.mxu0 0.0
    %5403 = vmatpush1.msra.mxu0 0.0
    %5404 = vmatprep.subr.mxu0 0.0
    %5405 = vmatpush1.msra.mxu0 0.0
    %5406 = vmatprep.subr.mxu0 0.0
    %5407 = vmatpush1.msra.mxu0 0.0
    %5408 = vmatprep.subr.mxu0 0.0
    %5409 = vmatpush1.msra.mxu0 0.0
    %5410 = vmatprep.subr.mxu0 0.0
    %5411 = vmatpush1.msra.mxu0 0.0
    %5412 = vmatprep.subr.mxu0 0.0
    %5413 = vmatpush1.msra.mxu0 0.0
    %5414 = vmatprep.mubr.f32.mxu0 0.0
    %5415 = vmatmul.mubr.f32.gmra.mrb[0].mxu0 %v5348
    %v5416 = vpop.f32.mrb[0].mxu0
    %v5417 = vadd.f32 0.0, %v5416
    %v5418 = vpop.f32.mrb[0].mxu0
    %5419 = vdwg.mxu0
    %5421 = vset.pattern.permute.xlu0 0
    %5422 = vperm.xlu0 %5421, %v5417
    %v5423 = vpop.permute.xlu0 %5422
    %v5425 = vmul.f32 %v5423, %v5344
    %v5426 = vadd.f32 %v4761, %v5425
    %v5427 = vmax.f32 %v5341, 0.0
    %v5429 = vrot.slane %v5427, 4
    %v5430 = vsel %vm849, %v5429, 0
    %5432 = vmatprep.subr.mxu0 0.0
    %5433 = vmatpush1.msra.mxu0 %v828
    %5434 = vmatprep.subr.mxu0 0.0
    %5435 = vmatpush1.msra.mxu0 %v829
    %5436 = vmatprep.subr.mxu0 0.0
    %5437 = vmatpush1.msra.mxu0 %v830
    %5438 = vmatprep.subr.mxu0 0.0
    %5439 = vmatpush1.msra.mxu0 %v831
    %5440 = vmatprep.subr.mxu0 0.0
    %5441 = vmatpush1.msra.mxu0 0.0
    %5442 = vmatprep.subr.mxu0 0.0
    %5443 = vmatpush1.msra.mxu0 0.0
    %5444 = vmatprep.subr.mxu0 0.0
    %5445 = vmatpush1.msra.mxu0 0.0
    %5446 = vmatprep.subr.mxu0 0.0
    %5447 = vmatpush1.msra.mxu0 0.0
    %5448 = vmatprep.subr.mxu0 0.0
    %5449 = vmatpush1.msra.mxu0 0.0
    %5450 = vmatprep.subr.mxu0 0.0
    %5451 = vmatpush1.msra.mxu0 0.0
    %5452 = vmatprep.subr.mxu0 0.0
    %5453 = vmatpush1.msra.mxu0 0.0
    %5454 = vmatprep.subr.mxu0 0.0
    %5455 = vmatpush1.msra.mxu0 0.0
    %5456 = vmatprep.subr.mxu0 0.0
    %5457 = vmatpush1.msra.mxu0 0.0
    %5458 = vmatprep.subr.mxu0 0.0
    %5459 = vmatpush1.msra.mxu0 0.0
    %5460 = vmatprep.subr.mxu0 0.0
    %5461 = vmatpush1.msra.mxu0 0.0
    %5462 = vmatprep.subr.mxu0 0.0
    %5463 = vmatpush1.msra.mxu0 0.0
    %5464 = vmatprep.subr.mxu0 0.0
    %5465 = vmatpush1.msra.mxu0 0.0
    %5466 = vmatprep.subr.mxu0 0.0
    %5467 = vmatpush1.msra.mxu0 0.0
    %5468 = vmatprep.subr.mxu0 0.0
    %5469 = vmatpush1.msra.mxu0 0.0
    %5470 = vmatprep.subr.mxu0 0.0
    %5471 = vmatpush1.msra.mxu0 0.0
    %5472 = vmatprep.subr.mxu0 0.0
    %5473 = vmatpush1.msra.mxu0 0.0
    %5474 = vmatprep.subr.mxu0 0.0
    %5475 = vmatpush1.msra.mxu0 0.0
    %5476 = vmatprep.subr.mxu0 0.0
    %5477 = vmatpush1.msra.mxu0 0.0
    %5478 = vmatprep.subr.mxu0 0.0
    %5479 = vmatpush1.msra.mxu0 0.0
    %5480 = vmatprep.subr.mxu0 0.0
    %5481 = vmatpush1.msra.mxu0 0.0
    %5482 = vmatprep.subr.mxu0 0.0
    %5483 = vmatpush1.msra.mxu0 0.0
    %5484 = vmatprep.subr.mxu0 0.0
    %5485 = vmatpush1.msra.mxu0 0.0
    %5486 = vmatprep.subr.mxu0 0.0
    %5487 = vmatpush1.msra.mxu0 0.0
    %5488 = vmatprep.subr.mxu0 0.0
    %5489 = vmatpush1.msra.mxu0 0.0
    %5490 = vmatprep.subr.mxu0 0.0
    %5491 = vmatpush1.msra.mxu0 0.0
    %5492 = vmatprep.subr.mxu0 0.0
    %5493 = vmatpush1.msra.mxu0 0.0
    %5494 = vmatprep.subr.mxu0 0.0
    %5495 = vmatpush1.msra.mxu0 0.0
    %5496 = vmatprep.mubr.f32.mxu0 0.0
    %5497 = vmatmul.mubr.f32.gmra.mrb[0].mxu0 %v5430
    %v5498 = vpop.f32.mrb[0].mxu0
    %v5499 = vadd.f32 0.0, %v5498
    %v5500 = vpop.f32.mrb[0].mxu0
    %5501 = vdwg.mxu0
    %5503 = vset.pattern.permute.xlu0 0
    %5504 = vperm.xlu0 %5503, %v5499
    %v5505 = vpop.permute.xlu0 %5504
    %v5507 = vmul.f32 %v5505, %v5344
    %v5508 = vadd.f32 %v4843, %v5507
    %v5510 = vrot.slane %v5092, 4
    %v5511 = vsel %vm849, %v5510, 0
    %5513 = vmatprep.subr.mxu0 0.0
    %5514 = vmatpush1.msra.mxu0 %v838
    %5515 = vmatprep.subr.mxu0 0.0
    %5516 = vmatpush1.msra.mxu0 %v839
    %5517 = vmatprep.subr.mxu0 0.0
    %5518 = vmatpush1.msra.mxu0 %v840
    %5519 = vmatprep.subr.mxu0 0.0
    %5520 = vmatpush1.msra.mxu0 %v841
    %5521 = vmatprep.subr.mxu0 0.0
    %5522 = vmatpush1.msra.mxu0 0.0
    %5523 = vmatprep.subr.mxu0 0.0
    %5524 = vmatpush1.msra.mxu0 0.0
    %5525 = vmatprep.subr.mxu0 0.0
    %5526 = vmatpush1.msra.mxu0 0.0
    %5527 = vmatprep.subr.mxu0 0.0
    %5528 = vmatpush1.msra.mxu0 0.0
    %5529 = vmatprep.subr.mxu0 0.0
    %5530 = vmatpush1.msra.mxu0 0.0
    %5531 = vmatprep.subr.mxu0 0.0
    %5532 = vmatpush1.msra.mxu0 0.0
    %5533 = vmatprep.subr.mxu0 0.0
    %5534 = vmatpush1.msra.mxu0 0.0
    %5535 = vmatprep.subr.mxu0 0.0
    %5536 = vmatpush1.msra.mxu0 0.0
    %5537 = vmatprep.subr.mxu0 0.0
    %5538 = vmatpush1.msra.mxu0 0.0
    %5539 = vmatprep.subr.mxu0 0.0
    %5540 = vmatpush1.msra.mxu0 0.0
    %5541 = vmatprep.subr.mxu0 0.0
    %5542 = vmatpush1.msra.mxu0 0.0
    %5543 = vmatprep.subr.mxu0 0.0
    %5544 = vmatpush1.msra.mxu0 0.0
    %5545 = vmatprep.subr.mxu0 0.0
    %5546 = vmatpush1.msra.mxu0 0.0
    %5547 = vmatprep.subr.mxu0 0.0
    %5548 = vmatpush1.msra.mxu0 0.0
    %5549 = vmatprep.subr.mxu0 0.0
    %5550 = vmatpush1.msra.mxu0 0.0
    %5551 = vmatprep.subr.mxu0 0.0
    %5552 = vmatpush1.msra.mxu0 0.0
    %5553 = vmatprep.subr.mxu0 0.0
    %5554 = vmatpush1.msra.mxu0 0.0
    %5555 = vmatprep.subr.mxu0 0.0
    %5556 = vmatpush1.msra.mxu0 0.0
    %5557 = vmatprep.subr.mxu0 0.0
    %5558 = vmatpush1.msra.mxu0 0.0
    %5559 = vmatprep.subr.mxu0 0.0
    %5560 = vmatpush1.msra.mxu0 0.0
    %5561 = vmatprep.subr.mxu0 0.0
    %5562 = vmatpush1.msra.mxu0 0.0
    %5563 = vmatprep.subr.mxu0 0.0
    %5564 = vmatpush1.msra.mxu0 0.0
    %5565 = vmatprep.subr.mxu0 0.0
    %5566 = vmatpush1.msra.mxu0 0.0
    %5567 = vmatprep.subr.mxu0 0.0
    %5568 = vmatpush1.msra.mxu0 0.0
    %5569 = vmatprep.subr.mxu0 0.0
    %5570 = vmatpush1.msra.mxu0 0.0
    %5571 = vmatprep.subr.mxu0 0.0
    %5572 = vmatpush1.msra.mxu0 0.0
    %5573 = vmatprep.subr.mxu0 0.0
    %5574 = vmatpush1.msra.mxu0 0.0
    %5575 = vmatprep.subr.mxu0 0.0
    %5576 = vmatpush1.msra.mxu0 0.0
    %5577 = vmatprep.mubr.f32.mxu0 0.0
    %5578 = vmatmul.mubr.f32.gmra.mrb[0].mxu0 %v5511
    %v5579 = vpop.f32.mrb[0].mxu0
    %v5580 = vadd.f32 %v847, %v5579
    %v5581 = vpop.f32.mrb[0].mxu0
    %5582 = vdwg.mxu0
    %5583 = vmatprep.subr.mxu0 0.0
    %5584 = vmatpush1.msra.mxu0 %v924
    %5585 = vmatprep.subr.mxu0 0.0
    %5586 = vmatpush1.msra.mxu0 %v925
    %5587 = vmatprep.subr.mxu0 0.0
    %5588 = vmatpush1.msra.mxu0 %v926
    %5589 = vmatprep.subr.mxu0 0.0
    %5590 = vmatpush1.msra.mxu0 %v927
    %5591 = vmatprep.subr.mxu0 0.0
    %5592 = vmatpush1.msra.mxu0 0.0
    %5593 = vmatprep.subr.mxu0 0.0
    %5594 = vmatpush1.msra.mxu0 0.0
    %5595 = vmatprep.subr.mxu0 0.0
    %5596 = vmatpush1.msra.mxu0 0.0
    %5597 = vmatprep.subr.mxu0 0.0
    %5598 = vmatpush1.msra.mxu0 0.0
    %5599 = vmatprep.subr.mxu0 0.0
    %5600 = vmatpush1.msra.mxu0 0.0
    %5601 = vmatprep.subr.mxu0 0.0
    %5602 = vmatpush1.msra.mxu0 0.0
    %5603 = vmatprep.subr.mxu0 0.0
    %5604 = vmatpush1.msra.mxu0 0.0
    %5605 = vmatprep.subr.mxu0 0.0
    %5606 = vmatpush1.msra.mxu0 0.0
    %5607 = vmatprep.subr.mxu0 0.0
    %5608 = vmatpush1.msra.mxu0 0.0
    %5609 = vmatprep.subr.mxu0 0.0
    %5610 = vmatpush1.msra.mxu0 0.0
    %5611 = vmatprep.subr.mxu0 0.0
    %5612 = vmatpush1.msra.mxu0 0.0
    %5613 = vmatprep.subr.mxu0 0.0
    %5614 = vmatpush1.msra.mxu0 0.0
    %5615 = vmatprep.subr.mxu0 0.0
    %5616 = vmatpush1.msra.mxu0 0.0
    %5617 = vmatprep.subr.mxu0 0.0
    %5618 = vmatpush1.msra.mxu0 0.0
    %5619 = vmatprep.subr.mxu0 0.0
    %5620 = vmatpush1.msra.mxu0 0.0
    %5621 = vmatprep.subr.mxu0 0.0
    %5622 = vmatpush1.msra.mxu0 0.0
    %5623 = vmatprep.subr.mxu0 0.0
    %5624 = vmatpush1.msra.mxu0 0.0
    %5625 = vmatprep.subr.mxu0 0.0
    %5626 = vmatpush1.msra.mxu0 0.0
    %5627 = vmatprep.subr.mxu0 0.0
    %5628 = vmatpush1.msra.mxu0 0.0
    %5629 = vmatprep.subr.mxu0 0.0
    %5630 = vmatpush1.msra.mxu0 0.0
    %5631 = vmatprep.subr.mxu0 0.0
    %5632 = vmatpush1.msra.mxu0 0.0
    %5633 = vmatprep.subr.mxu0 0.0
    %5634 = vmatpush1.msra.mxu0 0.0
    %5635 = vmatprep.subr.mxu0 0.0
    %5636 = vmatpush1.msra.mxu0 0.0
    %5637 = vmatprep.subr.mxu0 0.0
    %5638 = vmatpush1.msra.mxu0 0.0
    %5639 = vmatprep.subr.mxu0 0.0
    %5640 = vmatpush1.msra.mxu0 0.0
    %5641 = vmatprep.subr.mxu0 0.0
    %5642 = vmatpush1.msra.mxu0 0.0
    %5643 = vmatprep.subr.mxu0 0.0
    %5644 = vmatpush1.msra.mxu0 0.0
    %5645 = vmatprep.subr.mxu0 0.0
    %5646 = vmatpush1.msra.mxu0 0.0
    %5647 = vmatprep.mubr.f32.mxu0 0.0
    %5648 = vmatmul.mubr.f32.gmra.mrb[0].mxu0 %v5511
    %v5649 = vpop.f32.mrb[0].mxu0
    %v5650 = vadd.f32 %v934, %v5649
    %v5651 = vpop.f32.mrb[0].mxu0
    %5652 = vdwg.mxu0
    %5653 = vmatprep.subr.mxu0 0.0
    %5654 = vmatpush1.msra.mxu0 %v1007
    %5655 = vmatprep.subr.mxu0 0.0
    %5656 = vmatpush1.msra.mxu0 %v1008
    %5657 = vmatprep.subr.mxu0 0.0
    %5658 = vmatpush1.msra.mxu0 %v1009
    %5659 = vmatprep.subr.mxu0 0.0
    %5660 = vmatpush1.msra.mxu0 %v1010
    %5661 = vmatprep.subr.mxu0 0.0
    %5662 = vmatpush1.msra.mxu0 0.0
    %5663 = vmatprep.subr.mxu0 0.0
    %5664 = vmatpush1.msra.mxu0 0.0
    %5665 = vmatprep.subr.mxu0 0.0
    %5666 = vmatpush1.msra.mxu0 0.0
    %5667 = vmatprep.subr.mxu0 0.0
    %5668 = vmatpush1.msra.mxu0 0.0
    %5669 = vmatprep.subr.mxu0 0.0
    %5670 = vmatpush1.msra.mxu0 0.0
    %5671 = vmatprep.subr.mxu0 0.0
    %5672 = vmatpush1.msra.mxu0 0.0
    %5673 = vmatprep.subr.mxu0 0.0
    %5674 = vmatpush1.msra.mxu0 0.0
    %5675 = vmatprep.subr.mxu0 0.0
    %5676 = vmatpush1.msra.mxu0 0.0
    %5677 = vmatprep.subr.mxu0 0.0
    %5678 = vmatpush1.msra.mxu0 0.0
    %5679 = vmatprep.subr.mxu0 0.0
    %5680 = vmatpush1.msra.mxu0 0.0
    %5681 = vmatprep.subr.mxu0 0.0
    %5682 = vmatpush1.msra.mxu0 0.0
    %5683 = vmatprep.subr.mxu0 0.0
    %5684 = vmatpush1.msra.mxu0 0.0
    %5685 = vmatprep.subr.mxu0 0.0
    %5686 = vmatpush1.msra.mxu0 0.0
    %5687 = vmatprep.subr.mxu0 0.0
    %5688 = vmatpush1.msra.mxu0 0.0
    %5689 = vmatprep.subr.mxu0 0.0
    %5690 = vmatpush1.msra.mxu0 0.0
    %5691 = vmatprep.subr.mxu0 0.0
    %5692 = vmatpush1.msra.mxu0 0.0
    %5693 = vmatprep.subr.mxu0 0.0
    %5694 = vmatpush1.msra.mxu0 0.0
    %5695 = vmatprep.subr.mxu0 0.0
    %5696 = vmatpush1.msra.mxu0 0.0
    %5697 = vmatprep.subr.mxu0 0.0
    %5698 = vmatpush1.msra.mxu0 0.0
    %5699 = vmatprep.subr.mxu0 0.0
    %5700 = vmatpush1.msra.mxu0 0.0
    %5701 = vmatprep.subr.mxu0 0.0
    %5702 = vmatpush1.msra.mxu0 0.0
    %5703 = vmatprep.subr.mxu0 0.0
    %5704 = vmatpush1.msra.mxu0 0.0
    %5705 = vmatprep.subr.mxu0 0.0
    %5706 = vmatpush1.msra.mxu0 0.0
    %5707 = vmatprep.subr.mxu0 0.0
    %5708 = vmatpush1.msra.mxu0 0.0
    %5709 = vmatprep.subr.mxu0 0.0
    %5710 = vmatpush1.msra.mxu0 0.0
    %5711 = vmatprep.subr.mxu0 0.0
    %5712 = vmatpush1.msra.mxu0 0.0
    %5713 = vmatprep.subr.mxu0 0.0
    %5714 = vmatpush1.msra.mxu0 0.0
    %5715 = vmatprep.subr.mxu0 0.0
    %5716 = vmatpush1.msra.mxu0 0.0
    %5717 = vmatprep.mubr.f32.mxu0 0.0
    %5718 = vmatmul.mubr.f32.gmra.mrb[0].mxu0 %v5511
    %v5719 = vpop.f32.mrb[0].mxu0
    %v5720 = vadd.f32 %v1017, %v5719
    %v5721 = vpop.f32.mrb[0].mxu0
    %5722 = vdwg.mxu0
    %v5724 = vrot.slane %v5580, 2
    %v5726 = vadd.f32 %v143, %v5724
    %v5727 = vxor.u32 %v5726, 2147483648
    %v5728 = vmul.f32 %v5727, 1.442695
    %v5729 = vpow.pop %v5728
    %v5730 = vadd.f32 %v5729, 1.0
    %v5731 = vrcp.pop %v5730
    %v5732 = vmul.f32 1.0, %v5731
    %v5734 = vrot.slane %v5650, 2
    %v5736 = vadd.f32 %v229, %v5734
    %v5737 = vxor.u32 %v5736, 2147483648
    %v5738 = vmul.f32 %v5737, 1.442695
    %v5739 = vpow.pop %v5738
    %v5740 = vadd.f32 %v5739, 1.0
    %v5741 = vrcp.pop %v5740
    %v5742 = vmul.f32 1.0, %v5741
    %v5744 = vrot.slane %v5720, 2
    %v5746 = vmul.f32 %v5732, %v5744
    %v5747 = vadd.f32 %v315, %v5746
    %v5748 = vtanh.pop %v5747
    %v5750 = vrot.slane %v5748, 2
    %v5752 = vsub.f32 %v5092, %v5750
    %v5754 = vrot.slane %v5752, 6
    %v5756 = vmul.f32 %v5742, %v5754
    %v5757 = vadd.f32 %v5748, %v5756
    %v5759 = vrot.slane %v5341, 4
    %v5760 = vsel %vm849, %v5759, 0
    %5762 = vmatprep.subr.mxu0 0.0
    %5763 = vmatpush1.msra.mxu0 %v1110
    %5764 = vmatprep.subr.mxu0 0.0
    %5765 = vmatpush1.msra.mxu0 %v1111
    %5766 = vmatprep.subr.mxu0 0.0
    %5767 = vmatpush1.msra.mxu0 %v1112
    %5768 = vmatprep.subr.mxu0 0.0
    %5769 = vmatpush1.msra.mxu0 %v1113
    %5770 = vmatprep.subr.mxu0 0.0
    %5771 = vmatpush1.msra.mxu0 0.0
    %5772 = vmatprep.subr.mxu0 0.0
    %5773 = vmatpush1.msra.mxu0 0.0
    %5774 = vmatprep.subr.mxu0 0.0
    %5775 = vmatpush1.msra.mxu0 0.0
    %5776 = vmatprep.subr.mxu0 0.0
    %5777 = vmatpush1.msra.mxu0 0.0
    %5778 = vmatprep.subr.mxu0 0.0
    %5779 = vmatpush1.msra.mxu0 0.0
    %5780 = vmatprep.subr.mxu0 0.0
    %5781 = vmatpush1.msra.mxu0 0.0
    %5782 = vmatprep.subr.mxu0 0.0
    %5783 = vmatpush1.msra.mxu0 0.0
    %5784 = vmatprep.subr.mxu0 0.0
    %5785 = vmatpush1.msra.mxu0 0.0
    %5786 = vmatprep.subr.mxu0 0.0
    %5787 = vmatpush1.msra.mxu0 0.0
    %5788 = vmatprep.subr.mxu0 0.0
    %5789 = vmatpush1.msra.mxu0 0.0
    %5790 = vmatprep.subr.mxu0 0.0
    %5791 = vmatpush1.msra.mxu0 0.0
    %5792 = vmatprep.subr.mxu0 0.0
    %5793 = vmatpush1.msra.mxu0 0.0
    %5794 = vmatprep.subr.mxu0 0.0
    %5795 = vmatpush1.msra.mxu0 0.0
    %5796 = vmatprep.subr.mxu0 0.0
    %5797 = vmatpush1.msra.mxu0 0.0
    %5798 = vmatprep.subr.mxu0 0.0
    %5799 = vmatpush1.msra.mxu0 0.0
    %5800 = vmatprep.subr.mxu0 0.0
    %5801 = vmatpush1.msra.mxu0 0.0
    %5802 = vmatprep.subr.mxu0 0.0
    %5803 = vmatpush1.msra.mxu0 0.0
    %5804 = vmatprep.subr.mxu0 0.0
    %5805 = vmatpush1.msra.mxu0 0.0
    %5806 = vmatprep.subr.mxu0 0.0
    %5807 = vmatpush1.msra.mxu0 0.0
    %5808 = vmatprep.subr.mxu0 0.0
    %5809 = vmatpush1.msra.mxu0 0.0
    %5810 = vmatprep.subr.mxu0 0.0
    %5811 = vmatpush1.msra.mxu0 0.0
    %5812 = vmatprep.subr.mxu0 0.0
    %5813 = vmatpush1.msra.mxu0 0.0
    %5814 = vmatprep.subr.mxu0 0.0
    %5815 = vmatpush1.msra.mxu0 0.0
    %5816 = vmatprep.subr.mxu0 0.0
    %5817 = vmatpush1.msra.mxu0 0.0
    %5818 = vmatprep.subr.mxu0 0.0
    %5819 = vmatpush1.msra.mxu0 0.0
    %5820 = vmatprep.subr.mxu0 0.0
    %5821 = vmatpush1.msra.mxu0 0.0
    %5822 = vmatprep.subr.mxu0 0.0
    %5823 = vmatpush1.msra.mxu0 0.0
    %5824 = vmatprep.subr.mxu0 0.0
    %5825 = vmatpush1.msra.mxu0 0.0
    %5826 = vmatprep.mubr.f32.mxu0 0.0
    %5827 = vmatmul.mubr.f32.gmra.mrb[0].mxu0 %v5760
    %v5828 = vpop.f32.mrb[0].mxu0
    %v5829 = vadd.f32 %v1120, %v5828
    %v5830 = vpop.f32.mrb[0].mxu0
    %5831 = vdwg.mxu0
    %5832 = vmatprep.subr.mxu0 0.0
    %5833 = vmatpush1.msra.mxu0 %v1193
    %5834 = vmatprep.subr.mxu0 0.0
    %5835 = vmatpush1.msra.mxu0 %v1194
    %5836 = vmatprep.subr.mxu0 0.0
    %5837 = vmatpush1.msra.mxu0 %v1195
    %5838 = vmatprep.subr.mxu0 0.0
    %5839 = vmatpush1.msra.mxu0 %v1196
    %5840 = vmatprep.subr.mxu0 0.0
    %5841 = vmatpush1.msra.mxu0 0.0
    %5842 = vmatprep.subr.mxu0 0.0
    %5843 = vmatpush1.msra.mxu0 0.0
    %5844 = vmatprep.subr.mxu0 0.0
    %5845 = vmatpush1.msra.mxu0 0.0
    %5846 = vmatprep.subr.mxu0 0.0
    %5847 = vmatpush1.msra.mxu0 0.0
    %5848 = vmatprep.subr.mxu0 0.0
    %5849 = vmatpush1.msra.mxu0 0.0
    %5850 = vmatprep.subr.mxu0 0.0
    %5851 = vmatpush1.msra.mxu0 0.0
    %5852 = vmatprep.subr.mxu0 0.0
    %5853 = vmatpush1.msra.mxu0 0.0
    %5854 = vmatprep.subr.mxu0 0.0
    %5855 = vmatpush1.msra.mxu0 0.0
    %5856 = vmatprep.subr.mxu0 0.0
    %5857 = vmatpush1.msra.mxu0 0.0
    %5858 = vmatprep.subr.mxu0 0.0
    %5859 = vmatpush1.msra.mxu0 0.0
    %5860 = vmatprep.subr.mxu0 0.0
    %5861 = vmatpush1.msra.mxu0 0.0
    %5862 = vmatprep.subr.mxu0 0.0
    %5863 = vmatpush1.msra.mxu0 0.0
    %5864 = vmatprep.subr.mxu0 0.0
    %5865 = vmatpush1.msra.mxu0 0.0
    %5866 = vmatprep.subr.mxu0 0.0
    %5867 = vmatpush1.msra.mxu0 0.0
    %5868 = vmatprep.subr.mxu0 0.0
    %5869 = vmatpush1.msra.mxu0 0.0
    %5870 = vmatprep.subr.mxu0 0.0
    %5871 = vmatpush1.msra.mxu0 0.0
    %5872 = vmatprep.subr.mxu0 0.0
    %5873 = vmatpush1.msra.mxu0 0.0
    %5874 = vmatprep.subr.mxu0 0.0
    %5875 = vmatpush1.msra.mxu0 0.0
    %5876 = vmatprep.subr.mxu0 0.0
    %5877 = vmatpush1.msra.mxu0 0.0
    %5878 = vmatprep.subr.mxu0 0.0
    %5879 = vmatpush1.msra.mxu0 0.0
    %5880 = vmatprep.subr.mxu0 0.0
    %5881 = vmatpush1.msra.mxu0 0.0
    %5882 = vmatprep.subr.mxu0 0.0
    %5883 = vmatpush1.msra.mxu0 0.0
    %5884 = vmatprep.subr.mxu0 0.0
    %5885 = vmatpush1.msra.mxu0 0.0
    %5886 = vmatprep.subr.mxu0 0.0
    %5887 = vmatpush1.msra.mxu0 0.0
    %5888 = vmatprep.subr.mxu0 0.0
    %5889 = vmatpush1.msra.mxu0 0.0
    %5890 = vmatprep.subr.mxu0 0.0
    %5891 = vmatpush1.msra.mxu0 0.0
    %5892 = vmatprep.subr.mxu0 0.0
    %5893 = vmatpush1.msra.mxu0 0.0
    %5894 = vmatprep.subr.mxu0 0.0
    %5895 = vmatpush1.msra.mxu0 0.0
    %5896 = vmatprep.mubr.f32.mxu0 0.0
    %5897 = vmatmul.mubr.f32.gmra.mrb[0].mxu0 %v5760
    %v5898 = vpop.f32.mrb[0].mxu0
    %v5899 = vadd.f32 %v1203, %v5898
    %v5900 = vpop.f32.mrb[0].mxu0
    %5901 = vdwg.mxu0
    %5902 = vmatprep.subr.mxu0 0.0
    %5903 = vmatpush1.msra.mxu0 %v1276
    %5904 = vmatprep.subr.mxu0 0.0
    %5905 = vmatpush1.msra.mxu0 %v1277
    %5906 = vmatprep.subr.mxu0 0.0
    %5907 = vmatpush1.msra.mxu0 %v1278
    %5908 = vmatprep.subr.mxu0 0.0
    %5909 = vmatpush1.msra.mxu0 %v1279
    %5910 = vmatprep.subr.mxu0 0.0
    %5911 = vmatpush1.msra.mxu0 0.0
    %5912 = vmatprep.subr.mxu0 0.0
    %5913 = vmatpush1.msra.mxu0 0.0
    %5914 = vmatprep.subr.mxu0 0.0
    %5915 = vmatpush1.msra.mxu0 0.0
    %5916 = vmatprep.subr.mxu0 0.0
    %5917 = vmatpush1.msra.mxu0 0.0
    %5918 = vmatprep.subr.mxu0 0.0
    %5919 = vmatpush1.msra.mxu0 0.0
    %5920 = vmatprep.subr.mxu0 0.0
    %5921 = vmatpush1.msra.mxu0 0.0
    %5922 = vmatprep.subr.mxu0 0.0
    %5923 = vmatpush1.msra.mxu0 0.0
    %5924 = vmatprep.subr.mxu0 0.0
    %5925 = vmatpush1.msra.mxu0 0.0
    %5926 = vmatprep.subr.mxu0 0.0
    %5927 = vmatpush1.msra.mxu0 0.0
    %5928 = vmatprep.subr.mxu0 0.0
    %5929 = vmatpush1.msra.mxu0 0.0
    %5930 = vmatprep.subr.mxu0 0.0
    %5931 = vmatpush1.msra.mxu0 0.0
    %5932 = vmatprep.subr.mxu0 0.0
    %5933 = vmatpush1.msra.mxu0 0.0
    %5934 = vmatprep.subr.mxu0 0.0
    %5935 = vmatpush1.msra.mxu0 0.0
    %5936 = vmatprep.subr.mxu0 0.0
    %5937 = vmatpush1.msra.mxu0 0.0
    %5938 = vmatprep.subr.mxu0 0.0
    %5939 = vmatpush1.msra.mxu0 0.0
    %5940 = vmatprep.subr.mxu0 0.0
    %5941 = vmatpush1.msra.mxu0 0.0
    %5942 = vmatprep.subr.mxu0 0.0
    %5943 = vmatpush1.msra.mxu0 0.0
    %5944 = vmatprep.subr.mxu0 0.0
    %5945 = vmatpush1.msra.mxu0 0.0
    %5946 = vmatprep.subr.mxu0 0.0
    %5947 = vmatpush1.msra.mxu0 0.0
    %5948 = vmatprep.subr.mxu0 0.0
    %5949 = vmatpush1.msra.mxu0 0.0
    %5950 = vmatprep.subr.mxu0 0.0
    %5951 = vmatpush1.msra.mxu0 0.0
    %5952 = vmatprep.subr.mxu0 0.0
    %5953 = vmatpush1.msra.mxu0 0.0
    %5954 = vmatprep.subr.mxu0 0.0
    %5955 = vmatpush1.msra.mxu0 0.0
    %5956 = vmatprep.subr.mxu0 0.0
    %5957 = vmatpush1.msra.mxu0 0.0
    %5958 = vmatprep.subr.mxu0 0.0
    %5959 = vmatpush1.msra.mxu0 0.0
    %5960 = vmatprep.subr.mxu0 0.0
    %5961 = vmatpush1.msra.mxu0 0.0
    %5962 = vmatprep.subr.mxu0 0.0
    %5963 = vmatpush1.msra.mxu0 0.0
    %5964 = vmatprep.subr.mxu0 0.0
    %5965 = vmatpush1.msra.mxu0 0.0
    %5966 = vmatprep.mubr.f32.mxu0 0.0
    %5967 = vmatmul.mubr.f32.gmra.mrb[0].mxu0 %v5760
    %v5968 = vpop.f32.mrb[0].mxu0
    %v5969 = vadd.f32 %v1286, %v5968
    %v5970 = vpop.f32.mrb[0].mxu0
    %5971 = vdwg.mxu0
    %v5973 = vrot.slane %v5829, 2
    %v5975 = vadd.f32 %v407, %v5973
    %v5976 = vxor.u32 %v5975, 2147483648
    %v5977 = vmul.f32 %v5976, 1.442695
    %v5978 = vpow.pop %v5977
    %v5979 = vadd.f32 %v5978, 1.0
    %v5980 = vrcp.pop %v5979
    %v5981 = vmul.f32 1.0, %v5980
    %v5983 = vrot.slane %v5899, 2
    %v5985 = vadd.f32 %v493, %v5983
    %v5986 = vxor.u32 %v5985, 2147483648
    %v5987 = vmul.f32 %v5986, 1.442695
    %v5988 = vpow.pop %v5987
    %v5989 = vadd.f32 %v5988, 1.0
    %v5990 = vrcp.pop %v5989
    %v5991 = vmul.f32 1.0, %v5990
    %v5993 = vrot.slane %v5969, 2
    %v5995 = vmul.f32 %v5981, %v5993
    %v5996 = vadd.f32 %v579, %v5995
    %v5997 = vtanh.pop %v5996
    %v5999 = vrot.slane %v5997, 2
    %v6001 = vsub.f32 %v5341, %v5999
    %v6003 = vrot.slane %v6001, 6
    %v6005 = vmul.f32 %v5991, %v6003
    %v6006 = vadd.f32 %v5997, %v6005
    %vm6007 = vcmp.eq.s32.totalorder %v837, 7
    %v6008 = vsel %vm6007, 1, 0
    %v6009 = vcvt.s32.f32 %v6008
    %v6010 = vmax.f32 %v5757, 0.0
    %v6012 = vrot.slane %v6010, 6
    %v6013 = vsel %vm849, %v6012, 0
    %6015 = vmatprep.subr.mxu0 0.0
    %6016 = vmatpush1.msra.mxu0 %v828
    %6017 = vmatprep.subr.mxu0 0.0
    %6018 = vmatpush1.msra.mxu0 %v829
    %6019 = vmatprep.subr.mxu0 0.0
    %6020 = vmatpush1.msra.mxu0 %v830
    %6021 = vmatprep.subr.mxu0 0.0
    %6022 = vmatpush1.msra.mxu0 %v831
    %6023 = vmatprep.subr.mxu0 0.0
    %6024 = vmatpush1.msra.mxu0 0.0
    %6025 = vmatprep.subr.mxu0 0.0
    %6026 = vmatpush1.msra.mxu0 0.0
    %6027 = vmatprep.subr.mxu0 0.0
    %6028 = vmatpush1.msra.mxu0 0.0
    %6029 = vmatprep.subr.mxu0 0.0
    %6030 = vmatpush1.msra.mxu0 0.0
    %6031 = vmatprep.subr.mxu0 0.0
    %6032 = vmatpush1.msra.mxu0 0.0
    %6033 = vmatprep.subr.mxu0 0.0
    %6034 = vmatpush1.msra.mxu0 0.0
    %6035 = vmatprep.subr.mxu0 0.0
    %6036 = vmatpush1.msra.mxu0 0.0
    %6037 = vmatprep.subr.mxu0 0.0
    %6038 = vmatpush1.msra.mxu0 0.0
    %6039 = vmatprep.subr.mxu0 0.0
    %6040 = vmatpush1.msra.mxu0 0.0
    %6041 = vmatprep.subr.mxu0 0.0
    %6042 = vmatpush1.msra.mxu0 0.0
    %6043 = vmatprep.subr.mxu0 0.0
    %6044 = vmatpush1.msra.mxu0 0.0
    %6045 = vmatprep.subr.mxu0 0.0
    %6046 = vmatpush1.msra.mxu0 0.0
    %6047 = vmatprep.subr.mxu0 0.0
    %6048 = vmatpush1.msra.mxu0 0.0
    %6049 = vmatprep.subr.mxu0 0.0
    %6050 = vmatpush1.msra.mxu0 0.0
    %6051 = vmatprep.subr.mxu0 0.0
    %6052 = vmatpush1.msra.mxu0 0.0
    %6053 = vmatprep.subr.mxu0 0.0
    %6054 = vmatpush1.msra.mxu0 0.0
    %6055 = vmatprep.subr.mxu0 0.0
    %6056 = vmatpush1.msra.mxu0 0.0
    %6057 = vmatprep.subr.mxu0 0.0
    %6058 = vmatpush1.msra.mxu0 0.0
    %6059 = vmatprep.subr.mxu0 0.0
    %6060 = vmatpush1.msra.mxu0 0.0
    %6061 = vmatprep.subr.mxu0 0.0
    %6062 = vmatpush1.msra.mxu0 0.0
    %6063 = vmatprep.subr.mxu0 0.0
    %6064 = vmatpush1.msra.mxu0 0.0
    %6065 = vmatprep.subr.mxu0 0.0
    %6066 = vmatpush1.msra.mxu0 0.0
    %6067 = vmatprep.subr.mxu0 0.0
    %6068 = vmatpush1.msra.mxu0 0.0
    %6069 = vmatprep.subr.mxu0 0.0
    %6070 = vmatpush1.msra.mxu0 0.0
    %6071 = vmatprep.subr.mxu0 0.0
    %6072 = vmatpush1.msra.mxu0 0.0
    %6073 = vmatprep.subr.mxu0 0.0
    %6074 = vmatpush1.msra.mxu0 0.0
    %6075 = vmatprep.subr.mxu0 0.0
    %6076 = vmatpush1.msra.mxu0 0.0
    %6077 = vmatprep.subr.mxu0 0.0
    %6078 = vmatpush1.msra.mxu0 0.0
    %6079 = vmatprep.mubr.f32.mxu0 0.0
    %6080 = vmatmul.mubr.f32.gmra.mrb[0].mxu0 %v6013
    %v6081 = vpop.f32.mrb[0].mxu0
    %v6082 = vadd.f32 0.0, %v6081
    %v6083 = vpop.f32.mrb[0].mxu0
    %6084 = vdwg.mxu0
    %6086 = vset.pattern.permute.xlu0 0
    %6087 = vperm.xlu0 %6086, %v6082
    %v6088 = vpop.permute.xlu0 %6087
    %v6090 = vmul.f32 %v6088, %v6009
    %v6091 = vadd.f32 %v5426, %v6090
    %v6092 = vmax.f32 %v6006, 0.0
    %v6094 = vrot.slane %v6092, 6
    %v6095 = vsel %vm849, %v6094, 0
    %6097 = vmatprep.subr.mxu0 0.0
    %6098 = vmatpush1.msra.mxu0 %v828
    %6099 = vmatprep.subr.mxu0 0.0
    %6100 = vmatpush1.msra.mxu0 %v829
    %6101 = vmatprep.subr.mxu0 0.0
    %6102 = vmatpush1.msra.mxu0 %v830
    %6103 = vmatprep.subr.mxu0 0.0
    %6104 = vmatpush1.msra.mxu0 %v831
    %6105 = vmatprep.subr.mxu0 0.0
    %6106 = vmatpush1.msra.mxu0 0.0
    %6107 = vmatprep.subr.mxu0 0.0
    %6108 = vmatpush1.msra.mxu0 0.0
    %6109 = vmatprep.subr.mxu0 0.0
    %6110 = vmatpush1.msra.mxu0 0.0
    %6111 = vmatprep.subr.mxu0 0.0
    %6112 = vmatpush1.msra.mxu0 0.0
    %6113 = vmatprep.subr.mxu0 0.0
    %6114 = vmatpush1.msra.mxu0 0.0
    %6115 = vmatprep.subr.mxu0 0.0
    %6116 = vmatpush1.msra.mxu0 0.0
    %6117 = vmatprep.subr.mxu0 0.0
    %6118 = vmatpush1.msra.mxu0 0.0
    %6119 = vmatprep.subr.mxu0 0.0
    %6120 = vmatpush1.msra.mxu0 0.0
    %6121 = vmatprep.subr.mxu0 0.0
    %6122 = vmatpush1.msra.mxu0 0.0
    %6123 = vmatprep.subr.mxu0 0.0
    %6124 = vmatpush1.msra.mxu0 0.0
    %6125 = vmatprep.subr.mxu0 0.0
    %6126 = vmatpush1.msra.mxu0 0.0
    %6127 = vmatprep.subr.mxu0 0.0
    %6128 = vmatpush1.msra.mxu0 0.0
    %6129 = vmatprep.subr.mxu0 0.0
    %6130 = vmatpush1.msra.mxu0 0.0
    %6131 = vmatprep.subr.mxu0 0.0
    %6132 = vmatpush1.msra.mxu0 0.0
    %6133 = vmatprep.subr.mxu0 0.0
    %6134 = vmatpush1.msra.mxu0 0.0
    %6135 = vmatprep.subr.mxu0 0.0
    %6136 = vmatpush1.msra.mxu0 0.0
    %6137 = vmatprep.subr.mxu0 0.0
    %6138 = vmatpush1.msra.mxu0 0.0
    %6139 = vmatprep.subr.mxu0 0.0
    %6140 = vmatpush1.msra.mxu0 0.0
    %6141 = vmatprep.subr.mxu0 0.0
    %6142 = vmatpush1.msra.mxu0 0.0
    %6143 = vmatprep.subr.mxu0 0.0
    %6144 = vmatpush1.msra.mxu0 0.0
    %6145 = vmatprep.subr.mxu0 0.0
    %6146 = vmatpush1.msra.mxu0 0.0
    %6147 = vmatprep.subr.mxu0 0.0
    %6148 = vmatpush1.msra.mxu0 0.0
    %6149 = vmatprep.subr.mxu0 0.0
    %6150 = vmatpush1.msra.mxu0 0.0
    %6151 = vmatprep.subr.mxu0 0.0
    %6152 = vmatpush1.msra.mxu0 0.0
    %6153 = vmatprep.subr.mxu0 0.0
    %6154 = vmatpush1.msra.mxu0 0.0
    %6155 = vmatprep.subr.mxu0 0.0
    %6156 = vmatpush1.msra.mxu0 0.0
    %6157 = vmatprep.subr.mxu0 0.0
    %6158 = vmatpush1.msra.mxu0 0.0
    %6159 = vmatprep.subr.mxu0 0.0
    %6160 = vmatpush1.msra.mxu0 0.0
    %6161 = vmatprep.mubr.f32.mxu0 0.0
    %6162 = vmatmul.mubr.f32.gmra.mrb[0].mxu0 %v6095
    %v6163 = vpop.f32.mrb[0].mxu0
    %v6164 = vadd.f32 0.0, %v6163
    %v6165 = vpop.f32.mrb[0].mxu0
    %6166 = vdwg.mxu0
    %6168 = vset.pattern.permute.xlu0 0
    %6169 = vperm.xlu0 %6168, %v6164
    %v6170 = vpop.permute.xlu0 %6169
    %v6172 = vmul.f32 %v6170, %v6009
    %v6173 = vadd.f32 %v5508, %v6172
    %v6174 = vld [vmem:[%s7] sm:$0xff]
    %v6175 = vld [vmem:[%s7 + $0x8] sm:$0xff]
    %v6176 = vld [vmem:[%s7 + $0x10] sm:$0xff]
    %v6177 = vld [vmem:[%s7 + $0x18] sm:$0xff]
    %v6178 = vld [vmem:[%s8] sm:$0xff]
    %v6179 = vld [vmem:[%s8 + $0x8] sm:$0xff]
    %v6180 = vld [vmem:[%s8 + $0x10] sm:$0xff]
    %v6181 = vld [vmem:[%s8 + $0x18] sm:$0xff]
    %v6183 = vrot.slane %v6006, 6
    %v6184 = vsel %vm849, %v6183, 0
    %6186 = vmatprep.subr.mxu0 0.0
    %6187 = vmatpush1.msra.mxu0 %v6178
    %6188 = vmatprep.subr.mxu0 0.0
    %6189 = vmatpush1.msra.mxu0 %v6179
    %6190 = vmatprep.subr.mxu0 0.0
    %6191 = vmatpush1.msra.mxu0 %v6180
    %6192 = vmatprep.subr.mxu0 0.0
    %6193 = vmatpush1.msra.mxu0 %v6181
    %6194 = vmatprep.subr.mxu0 0.0
    %6195 = vmatpush1.msra.mxu0 0.0
    %6196 = vmatprep.subr.mxu0 0.0
    %6197 = vmatpush1.msra.mxu0 0.0
    %6198 = vmatprep.subr.mxu0 0.0
    %6199 = vmatpush1.msra.mxu0 0.0
    %6200 = vmatprep.subr.mxu0 0.0
    %6201 = vmatpush1.msra.mxu0 0.0
    %6202 = vmatprep.subr.mxu0 0.0
    %6203 = vmatpush1.msra.mxu0 0.0
    %6204 = vmatprep.subr.mxu0 0.0
    %6205 = vmatpush1.msra.mxu0 0.0
    %6206 = vmatprep.subr.mxu0 0.0
    %6207 = vmatpush1.msra.mxu0 0.0
    %6208 = vmatprep.subr.mxu0 0.0
    %6209 = vmatpush1.msra.mxu0 0.0
    %6210 = vmatprep.subr.mxu0 0.0
    %6211 = vmatpush1.msra.mxu0 0.0
    %6212 = vmatprep.subr.mxu0 0.0
    %6213 = vmatpush1.msra.mxu0 0.0
    %6214 = vmatprep.subr.mxu0 0.0
    %6215 = vmatpush1.msra.mxu0 0.0
    %6216 = vmatprep.subr.mxu0 0.0
    %6217 = vmatpush1.msra.mxu0 0.0
    %6218 = vmatprep.subr.mxu0 0.0
    %6219 = vmatpush1.msra.mxu0 0.0
    %6220 = vmatprep.subr.mxu0 0.0
    %6221 = vmatpush1.msra.mxu0 0.0
    %6222 = vmatprep.subr.mxu0 0.0
    %6223 = vmatpush1.msra.mxu0 0.0
    %6224 = vmatprep.subr.mxu0 0.0
    %6225 = vmatpush1.msra.mxu0 0.0
    %6226 = vmatprep.subr.mxu0 0.0
    %6227 = vmatpush1.msra.mxu0 0.0
    %6228 = vmatprep.subr.mxu0 0.0
    %6229 = vmatpush1.msra.mxu0 0.0
    %6230 = vmatprep.subr.mxu0 0.0
    %6231 = vmatpush1.msra.mxu0 0.0
    %6232 = vmatprep.subr.mxu0 0.0
    %6233 = vmatpush1.msra.mxu0 0.0
    %6234 = vmatprep.subr.mxu0 0.0
    %6235 = vmatpush1.msra.mxu0 0.0
    %6236 = vmatprep.subr.mxu0 0.0
    %6237 = vmatpush1.msra.mxu0 0.0
    %6238 = vmatprep.subr.mxu0 0.0
    %6239 = vmatpush1.msra.mxu0 0.0
    %6240 = vmatprep.subr.mxu0 0.0
    %6241 = vmatpush1.msra.mxu0 0.0
    %6242 = vmatprep.subr.mxu0 0.0
    %6243 = vmatpush1.msra.mxu0 0.0
    %6244 = vmatprep.subr.mxu0 0.0
    %6245 = vmatpush1.msra.mxu0 0.0
    %6246 = vmatprep.subr.mxu0 0.0
    %6247 = vmatpush1.msra.mxu0 0.0
    %6248 = vmatprep.subr.mxu0 0.0
    %6249 = vmatpush1.msra.mxu0 0.0
    %6250 = vmatprep.mubr.f32.mxu0 0.0
    %6251 = vmatmul.mubr.f32.gmra.mrb[0].mxu0 %v6184
    %v6252 = vpop.f32.mrb[0].mxu0
    %v6253 = vadd.f32 0.0, %v6252
    %v6254 = vpop.f32.mrb[0].mxu0
    %6255 = vdwg.mxu0
    %v6257 = vrot.slane %v5757, 6
    %v6258 = vsel %vm849, %v6257, 0
    %6260 = vmatprep.subr.mxu0 0.0
    %6261 = vmatpush1.msra.mxu0 %v6174
    %6262 = vmatprep.subr.mxu0 0.0
    %6263 = vmatpush1.msra.mxu0 %v6175
    %6264 = vmatprep.subr.mxu0 0.0
    %6265 = vmatpush1.msra.mxu0 %v6176
    %6266 = vmatprep.subr.mxu0 0.0
    %6267 = vmatpush1.msra.mxu0 %v6177
    %6268 = vmatprep.subr.mxu0 0.0
    %6269 = vmatpush1.msra.mxu0 0.0
    %6270 = vmatprep.subr.mxu0 0.0
    %6271 = vmatpush1.msra.mxu0 0.0
    %6272 = vmatprep.subr.mxu0 0.0
    %6273 = vmatpush1.msra.mxu0 0.0
    %6274 = vmatprep.subr.mxu0 0.0
    %6275 = vmatpush1.msra.mxu0 0.0
    %6276 = vmatprep.subr.mxu0 0.0
    %6277 = vmatpush1.msra.mxu0 0.0
    %6278 = vmatprep.subr.mxu0 0.0
    %6279 = vmatpush1.msra.mxu0 0.0
    %6280 = vmatprep.subr.mxu0 0.0
    %6281 = vmatpush1.msra.mxu0 0.0
    %6282 = vmatprep.subr.mxu0 0.0
    %6283 = vmatpush1.msra.mxu0 0.0
    %6284 = vmatprep.subr.mxu0 0.0
    %6285 = vmatpush1.msra.mxu0 0.0
    %6286 = vmatprep.subr.mxu0 0.0
    %6287 = vmatpush1.msra.mxu0 0.0
    %6288 = vmatprep.subr.mxu0 0.0
    %6289 = vmatpush1.msra.mxu0 0.0
    %6290 = vmatprep.subr.mxu0 0.0
    %6291 = vmatpush1.msra.mxu0 0.0
    %6292 = vmatprep.subr.mxu0 0.0
    %6293 = vmatpush1.msra.mxu0 0.0
    %6294 = vmatprep.subr.mxu0 0.0
    %6295 = vmatpush1.msra.mxu0 0.0
    %6296 = vmatprep.subr.mxu0 0.0
    %6297 = vmatpush1.msra.mxu0 0.0
    %6298 = vmatprep.subr.mxu0 0.0
    %6299 = vmatpush1.msra.mxu0 0.0
    %6300 = vmatprep.subr.mxu0 0.0
    %6301 = vmatpush1.msra.mxu0 0.0
    %6302 = vmatprep.subr.mxu0 0.0
    %6303 = vmatpush1.msra.mxu0 0.0
    %6304 = vmatprep.subr.mxu0 0.0
    %6305 = vmatpush1.msra.mxu0 0.0
    %6306 = vmatprep.subr.mxu0 0.0
    %6307 = vmatpush1.msra.mxu0 0.0
    %6308 = vmatprep.subr.mxu0 0.0
    %6309 = vmatpush1.msra.mxu0 0.0
    %6310 = vmatprep.subr.mxu0 0.0
    %6311 = vmatpush1.msra.mxu0 0.0
    %6312 = vmatprep.subr.mxu0 0.0
    %6313 = vmatpush1.msra.mxu0 0.0
    %6314 = vmatprep.subr.mxu0 0.0
    %6315 = vmatpush1.msra.mxu0 0.0
    %6316 = vmatprep.subr.mxu0 0.0
    %6317 = vmatpush1.msra.mxu0 0.0
    %6318 = vmatprep.subr.mxu0 0.0
    %6319 = vmatpush1.msra.mxu0 0.0
    %6320 = vmatprep.subr.mxu0 0.0
    %6321 = vmatpush1.msra.mxu0 0.0
    %6322 = vmatprep.subr.mxu0 0.0
    %6323 = vmatpush1.msra.mxu0 0.0
    %6324 = vmatprep.mubr.f32.mxu0 0.0
    %6325 = vmatmul.mubr.f32.gmra.mrb[0].mxu0 %v6258
    %v6326 = vpop.f32.mrb[0].mxu0
    %v6327 = vadd.f32 %v6253, %v6326
    %v6328 = vpop.f32.mrb[0].mxu0
    %6329 = vdwg.mxu0
    %v6330 = vld [vmem:[%s9] sm:$0x1]
    %v6332 = vlaneseq
    %v6333 = vshrl.u32 %v6332, 7
    %v6334 = vsub.s32 0, %v6333
    %v6335 = vrot.slane %v6330, %v6334
    %v6337 = vadd.f32 %v6327, %v6335
    %v6338 = vtanh.pop %v6337
    %s6339 = scalar_lea.vmem %s4, 192
    %v6340 = vld [vmem:[%s6339] sm:$0xff]
    %v6341 = vld [vmem:[%s6339 + $0x8] sm:$0xff]
    %v6342 = vld [vmem:[%s6339 + $0x10] sm:$0xff]
    %v6343 = vld [vmem:[%s6339 + $0x18] sm:$0xff]
    %s6344 = scalar_lea.vmem %s6, 6
    %v6345 = vld [vmem:[%s6344] sm:$0x1]
    %v6347 = vlaneseq
    %v6348 = vshrl.u32 %v6347, 7
    %v6349 = vsub.s32 0, %v6348
    %v6350 = vrot.slane %v6345, %v6349
    %v6353 = vsel %vm849, %v6338, 0
    %6355 = vmatprep.subr.mxu0 0.0
    %6356 = vmatpush1.msra.mxu0 %v6340
    %6357 = vmatprep.subr.mxu0 0.0
    %6358 = vmatpush1.msra.mxu0 %v6341
    %6359 = vmatprep.subr.mxu0 0.0
    %6360 = vmatpush1.msra.mxu0 %v6342
    %6361 = vmatprep.subr.mxu0 0.0
    %6362 = vmatpush1.msra.mxu0 %v6343
    %6363 = vmatprep.subr.mxu0 0.0
    %6364 = vmatpush1.msra.mxu0 0.0
    %6365 = vmatprep.subr.mxu0 0.0
    %6366 = vmatpush1.msra.mxu0 0.0
    %6367 = vmatprep.subr.mxu0 0.0
    %6368 = vmatpush1.msra.mxu0 0.0
    %6369 = vmatprep.subr.mxu0 0.0
    %6370 = vmatpush1.msra.mxu0 0.0
    %6371 = vmatprep.subr.mxu0 0.0
    %6372 = vmatpush1.msra.mxu0 0.0
    %6373 = vmatprep.subr.mxu0 0.0
    %6374 = vmatpush1.msra.mxu0 0.0
    %6375 = vmatprep.subr.mxu0 0.0
    %6376 = vmatpush1.msra.mxu0 0.0
    %6377 = vmatprep.subr.mxu0 0.0
    %6378 = vmatpush1.msra.mxu0 0.0
    %6379 = vmatprep.subr.mxu0 0.0
    %6380 = vmatpush1.msra.mxu0 0.0
    %6381 = vmatprep.subr.mxu0 0.0
    %6382 = vmatpush1.msra.mxu0 0.0
    %6383 = vmatprep.subr.mxu0 0.0
    %6384 = vmatpush1.msra.mxu0 0.0
    %6385 = vmatprep.subr.mxu0 0.0
    %6386 = vmatpush1.msra.mxu0 0.0
    %6387 = vmatprep.subr.mxu0 0.0
    %6388 = vmatpush1.msra.mxu0 0.0
    %6389 = vmatprep.subr.mxu0 0.0
    %6390 = vmatpush1.msra.mxu0 0.0
    %6391 = vmatprep.subr.mxu0 0.0
    %6392 = vmatpush1.msra.mxu0 0.0
    %6393 = vmatprep.subr.mxu0 0.0
    %6394 = vmatpush1.msra.mxu0 0.0
    %6395 = vmatprep.subr.mxu0 0.0
    %6396 = vmatpush1.msra.mxu0 0.0
    %6397 = vmatprep.subr.mxu0 0.0
    %6398 = vmatpush1.msra.mxu0 0.0
    %6399 = vmatprep.subr.mxu0 0.0
    %6400 = vmatpush1.msra.mxu0 0.0
    %6401 = vmatprep.subr.mxu0 0.0
    %6402 = vmatpush1.msra.mxu0 0.0
    %6403 = vmatprep.subr.mxu0 0.0
    %6404 = vmatpush1.msra.mxu0 0.0
    %6405 = vmatprep.subr.mxu0 0.0
    %6406 = vmatpush1.msra.mxu0 0.0
    %6407 = vmatprep.subr.mxu0 0.0
    %6408 = vmatpush1.msra.mxu0 0.0
    %6409 = vmatprep.subr.mxu0 0.0
    %6410 = vmatpush1.msra.mxu0 0.0
    %6411 = vmatprep.subr.mxu0 0.0
    %6412 = vmatpush1.msra.mxu0 0.0
    %6413 = vmatprep.subr.mxu0 0.0
    %6414 = vmatpush1.msra.mxu0 0.0
    %6415 = vmatprep.subr.mxu0 0.0
    %6416 = vmatpush1.msra.mxu0 0.0
    %6417 = vmatprep.subr.mxu0 0.0
    %6418 = vmatpush1.msra.mxu0 0.0
    %6419 = vmatprep.mubr.f32.mxu0 0.0
    %6420 = vmatmul.mubr.f32.gmra.mrb[0].mxu0 %v6353
    %v6421 = vpop.f32.mrb[0].mxu0
    %v6422 = vadd.f32 %v6350, %v6421
    %v6423 = vpop.f32.mrb[0].mxu0
    %6424 = vdwg.mxu0
    %s6425 = scalar_lea.vmem %s4, 224
    %v6426 = vld [vmem:[%s6425] sm:$0xff]
    %v6427 = vld [vmem:[%s6425 + $0x8] sm:$0xff]
    %v6428 = vld [vmem:[%s6425 + $0x10] sm:$0xff]
    %v6429 = vld [vmem:[%s6425 + $0x18] sm:$0xff]
    %s6430 = scalar_lea.vmem %s6, 7
    %v6431 = vld [vmem:[%s6430] sm:$0x1]
    %v6433 = vlaneseq
    %v6434 = vshrl.u32 %v6433, 7
    %v6435 = vsub.s32 0, %v6434
    %v6436 = vrot.slane %v6431, %v6435
    %6438 = vmatprep.subr.mxu0 0.0
    %6439 = vmatpush1.msra.mxu0 %v6426
    %6440 = vmatprep.subr.mxu0 0.0
    %6441 = vmatpush1.msra.mxu0 %v6427
    %6442 = vmatprep.subr.mxu0 0.0
    %6443 = vmatpush1.msra.mxu0 %v6428
    %6444 = vmatprep.subr.mxu0 0.0
    %6445 = vmatpush1.msra.mxu0 %v6429
    %6446 = vmatprep.subr.mxu0 0.0
    %6447 = vmatpush1.msra.mxu0 0.0
    %6448 = vmatprep.subr.mxu0 0.0
    %6449 = vmatpush1.msra.mxu0 0.0
    %6450 = vmatprep.subr.mxu0 0.0
    %6451 = vmatpush1.msra.mxu0 0.0
    %6452 = vmatprep.subr.mxu0 0.0
    %6453 = vmatpush1.msra.mxu0 0.0
    %6454 = vmatprep.subr.mxu0 0.0
    %6455 = vmatpush1.msra.mxu0 0.0
    %6456 = vmatprep.subr.mxu0 0.0
    %6457 = vmatpush1.msra.mxu0 0.0
    %6458 = vmatprep.subr.mxu0 0.0
    %6459 = vmatpush1.msra.mxu0 0.0
    %6460 = vmatprep.subr.mxu0 0.0
    %6461 = vmatpush1.msra.mxu0 0.0
    %6462 = vmatprep.subr.mxu0 0.0
    %6463 = vmatpush1.msra.mxu0 0.0
    %6464 = vmatprep.subr.mxu0 0.0
    %6465 = vmatpush1.msra.mxu0 0.0
    %6466 = vmatprep.subr.mxu0 0.0
    %6467 = vmatpush1.msra.mxu0 0.0
    %6468 = vmatprep.subr.mxu0 0.0
    %6469 = vmatpush1.msra.mxu0 0.0
    %6470 = vmatprep.subr.mxu0 0.0
    %6471 = vmatpush1.msra.mxu0 0.0
    %6472 = vmatprep.subr.mxu0 0.0
    %6473 = vmatpush1.msra.mxu0 0.0
    %6474 = vmatprep.subr.mxu0 0.0
    %6475 = vmatpush1.msra.mxu0 0.0
    %6476 = vmatprep.subr.mxu0 0.0
    %6477 = vmatpush1.msra.mxu0 0.0
    %6478 = vmatprep.subr.mxu0 0.0
    %6479 = vmatpush1.msra.mxu0 0.0
    %6480 = vmatprep.subr.mxu0 0.0
    %6481 = vmatpush1.msra.mxu0 0.0
    %6482 = vmatprep.subr.mxu0 0.0
    %6483 = vmatpush1.msra.mxu0 0.0
    %6484 = vmatprep.subr.mxu0 0.0
    %6485 = vmatpush1.msra.mxu0 0.0
    %6486 = vmatprep.subr.mxu0 0.0
    %6487 = vmatpush1.msra.mxu0 0.0
    %6488 = vmatprep.subr.mxu0 0.0
    %6489 = vmatpush1.msra.mxu0 0.0
    %6490 = vmatprep.subr.mxu0 0.0
    %6491 = vmatpush1.msra.mxu0 0.0
    %6492 = vmatprep.subr.mxu0 0.0
    %6493 = vmatpush1.msra.mxu0 0.0
    %6494 = vmatprep.subr.mxu0 0.0
    %6495 = vmatpush1.msra.mxu0 0.0
    %6496 = vmatprep.subr.mxu0 0.0
    %6497 = vmatpush1.msra.mxu0 0.0
    %6498 = vmatprep.subr.mxu0 0.0
    %6499 = vmatpush1.msra.mxu0 0.0
    %6500 = vmatprep.subr.mxu0 0.0
    %6501 = vmatpush1.msra.mxu0 0.0
    %6502 = vmatprep.mubr.f32.mxu0 0.0
    %6503 = vmatmul.mubr.f32.gmra.mrb[0].mxu0 %v6353
    %v6504 = vpop.f32.mrb[0].mxu0
    %v6505 = vadd.f32 %v6436, %v6504
    %v6506 = vpop.f32.mrb[0].mxu0
    %6507 = vdwg.mxu0
    %s6508 = scalar_lea.vmem %s4, 256
    %v6509 = vld [vmem:[%s6508] sm:$0xff]
    %v6510 = vld [vmem:[%s6508 + $0x8] sm:$0xff]
    %v6511 = vld [vmem:[%s6508 + $0x10] sm:$0xff]
    %v6512 = vld [vmem:[%s6508 + $0x18] sm:$0xff]
    %s6513 = scalar_lea.vmem %s6, 8
    %v6514 = vld [vmem:[%s6513] sm:$0x1]
    %v6516 = vlaneseq
    %v6517 = vshrl.u32 %v6516, 7
    %v6518 = vsub.s32 0, %v6517
    %v6519 = vrot.slane %v6514, %v6518
    %6521 = vmatprep.subr.mxu0 0.0
    %6522 = vmatpush1.msra.mxu0 %v6509
    %6523 = vmatprep.subr.mxu0 0.0
    %6524 = vmatpush1.msra.mxu0 %v6510
    %6525 = vmatprep.subr.mxu0 0.0
    %6526 = vmatpush1.msra.mxu0 %v6511
    %6527 = vmatprep.subr.mxu0 0.0
    %6528 = vmatpush1.msra.mxu0 %v6512
    %6529 = vmatprep.subr.mxu0 0.0
    %6530 = vmatpush1.msra.mxu0 0.0
    %6531 = vmatprep.subr.mxu0 0.0
    %6532 = vmatpush1.msra.mxu0 0.0
    %6533 = vmatprep.subr.mxu0 0.0
    %6534 = vmatpush1.msra.mxu0 0.0
    %6535 = vmatprep.subr.mxu0 0.0
    %6536 = vmatpush1.msra.mxu0 0.0
    %6537 = vmatprep.subr.mxu0 0.0
    %6538 = vmatpush1.msra.mxu0 0.0
    %6539 = vmatprep.subr.mxu0 0.0
    %6540 = vmatpush1.msra.mxu0 0.0
    %6541 = vmatprep.subr.mxu0 0.0
    %6542 = vmatpush1.msra.mxu0 0.0
    %6543 = vmatprep.subr.mxu0 0.0
    %6544 = vmatpush1.msra.mxu0 0.0
    %6545 = vmatprep.subr.mxu0 0.0
    %6546 = vmatpush1.msra.mxu0 0.0
    %6547 = vmatprep.subr.mxu0 0.0
    %6548 = vmatpush1.msra.mxu0 0.0
    %6549 = vmatprep.subr.mxu0 0.0
    %6550 = vmatpush1.msra.mxu0 0.0
    %6551 = vmatprep.subr.mxu0 0.0
    %6552 = vmatpush1.msra.mxu0 0.0
    %6553 = vmatprep.subr.mxu0 0.0
    %6554 = vmatpush1.msra.mxu0 0.0
    %6555 = vmatprep.subr.mxu0 0.0
    %6556 = vmatpush1.msra.mxu0 0.0
    %6557 = vmatprep.subr.mxu0 0.0
    %6558 = vmatpush1.msra.mxu0 0.0
    %6559 = vmatprep.subr.mxu0 0.0
    %6560 = vmatpush1.msra.mxu0 0.0
    %6561 = vmatprep.subr.mxu0 0.0
    %6562 = vmatpush1.msra.mxu0 0.0
    %6563 = vmatprep.subr.mxu0 0.0
    %6564 = vmatpush1.msra.mxu0 0.0
    %6565 = vmatprep.subr.mxu0 0.0
    %6566 = vmatpush1.msra.mxu0 0.0
    %6567 = vmatprep.subr.mxu0 0.0
    %6568 = vmatpush1.msra.mxu0 0.0
    %6569 = vmatprep.subr.mxu0 0.0
    %6570 = vmatpush1.msra.mxu0 0.0
    %6571 = vmatprep.subr.mxu0 0.0
    %6572 = vmatpush1.msra.mxu0 0.0
    %6573 = vmatprep.subr.mxu0 0.0
    %6574 = vmatpush1.msra.mxu0 0.0
    %6575 = vmatprep.subr.mxu0 0.0
    %6576 = vmatpush1.msra.mxu0 0.0
    %6577 = vmatprep.subr.mxu0 0.0
    %6578 = vmatpush1.msra.mxu0 0.0
    %6579 = vmatprep.subr.mxu0 0.0
    %6580 = vmatpush1.msra.mxu0 0.0
    %6581 = vmatprep.subr.mxu0 0.0
    %6582 = vmatpush1.msra.mxu0 0.0
    %6583 = vmatprep.subr.mxu0 0.0
    %6584 = vmatpush1.msra.mxu0 0.0
    %6585 = vmatprep.mubr.f32.mxu0 0.0
    %6586 = vmatmul.mubr.f32.gmra.mrb[0].mxu0 %v6353
    %v6587 = vpop.f32.mrb[0].mxu0
    %v6588 = vadd.f32 %v6519, %v6587
    %v6589 = vpop.f32.mrb[0].mxu0
    %6590 = vdwg.mxu0
    %v6591 = vadd.f32 %v663, %v6422
    %v6592 = vxor.u32 %v6591, 2147483648
    %v6593 = vmul.f32 %v6592, 1.442695
    %v6594 = vpow.pop %v6593
    %v6595 = vadd.f32 %v6594, 1.0
    %v6596 = vrcp.pop %v6595
    %v6597 = vmul.f32 1.0, %v6596
    %v6598 = vadd.f32 %v744, %v6505
    %v6599 = vxor.u32 %v6598, 2147483648
    %v6600 = vmul.f32 %v6599, 1.442695
    %v6601 = vpow.pop %v6600
    %v6602 = vadd.f32 %v6601, 1.0
    %v6603 = vrcp.pop %v6602
    %v6604 = vmul.f32 1.0, %v6603
    %v6605 = vmul.f32 %v6597, %v6588
    %v6606 = vadd.f32 %v825, %v6605
    %v6607 = vtanh.pop %v6606
    %v6608 = vsub.f32 %v6338, %v6607
    %v6609 = vmul.f32 %v6604, %v6608
    %v6610 = vadd.f32 %v6607, %v6609
    %v6611 = vmax.f32 %v6610, 0.0
    %v6613 = vsel %vm849, %v6611, 0
    %6615 = vmatprep.subr.mxu0 0.0
    %6616 = vmatpush1.msra.mxu0 %v832
    %6617 = vmatprep.subr.mxu0 0.0
    %6618 = vmatpush1.msra.mxu0 %v833
    %6619 = vmatprep.subr.mxu0 0.0
    %6620 = vmatpush1.msra.mxu0 %v834
    %6621 = vmatprep.subr.mxu0 0.0
    %6622 = vmatpush1.msra.mxu0 %v835
    %6623 = vmatprep.subr.mxu0 0.0
    %6624 = vmatpush1.msra.mxu0 0.0
    %6625 = vmatprep.subr.mxu0 0.0
    %6626 = vmatpush1.msra.mxu0 0.0
    %6627 = vmatprep.subr.mxu0 0.0
    %6628 = vmatpush1.msra.mxu0 0.0
    %6629 = vmatprep.subr.mxu0 0.0
    %6630 = vmatpush1.msra.mxu0 0.0
    %6631 = vmatprep.subr.mxu0 0.0
    %6632 = vmatpush1.msra.mxu0 0.0
    %6633 = vmatprep.subr.mxu0 0.0
    %6634 = vmatpush1.msra.mxu0 0.0
    %6635 = vmatprep.subr.mxu0 0.0
    %6636 = vmatpush1.msra.mxu0 0.0
    %6637 = vmatprep.subr.mxu0 0.0
    %6638 = vmatpush1.msra.mxu0 0.0
    %6639 = vmatprep.subr.mxu0 0.0
    %6640 = vmatpush1.msra.mxu0 0.0
    %6641 = vmatprep.subr.mxu0 0.0
    %6642 = vmatpush1.msra.mxu0 0.0
    %6643 = vmatprep.subr.mxu0 0.0
    %6644 = vmatpush1.msra.mxu0 0.0
    %6645 = vmatprep.subr.mxu0 0.0
    %6646 = vmatpush1.msra.mxu0 0.0
    %6647 = vmatprep.subr.mxu0 0.0
    %6648 = vmatpush1.msra.mxu0 0.0
    %6649 = vmatprep.subr.mxu0 0.0
    %6650 = vmatpush1.msra.mxu0 0.0
    %6651 = vmatprep.subr.mxu0 0.0
    %6652 = vmatpush1.msra.mxu0 0.0
    %6653 = vmatprep.subr.mxu0 0.0
    %6654 = vmatpush1.msra.mxu0 0.0
    %6655 = vmatprep.subr.mxu0 0.0
    %6656 = vmatpush1.msra.mxu0 0.0
    %6657 = vmatprep.subr.mxu0 0.0
    %6658 = vmatpush1.msra.mxu0 0.0
    %6659 = vmatprep.subr.mxu0 0.0
    %6660 = vmatpush1.msra.mxu0 0.0
    %6661 = vmatprep.subr.mxu0 0.0
    %6662 = vmatpush1.msra.mxu0 0.0
    %6663 = vmatprep.subr.mxu0 0.0
    %6664 = vmatpush1.msra.mxu0 0.0
    %6665 = vmatprep.subr.mxu0 0.0
    %6666 = vmatpush1.msra.mxu0 0.0
    %6667 = vmatprep.subr.mxu0 0.0
    %6668 = vmatpush1.msra.mxu0 0.0
    %6669 = vmatprep.subr.mxu0 0.0
    %6670 = vmatpush1.msra.mxu0 0.0
    %6671 = vmatprep.subr.mxu0 0.0
    %6672 = vmatpush1.msra.mxu0 0.0
    %6673 = vmatprep.subr.mxu0 0.0
    %6674 = vmatpush1.msra.mxu0 0.0
    %6675 = vmatprep.subr.mxu0 0.0
    %6676 = vmatpush1.msra.mxu0 0.0
    %6677 = vmatprep.subr.mxu0 0.0
    %6678 = vmatpush1.msra.mxu0 0.0
    %6679 = vmatprep.mubr.f32.mxu0 0.0
    %6680 = vmatmul.mubr.f32.gmra.mrb[0].mxu0 %v6613
    %v6681 = vpop.f32.mrb[0].mxu0
    %v6682 = vadd.f32 0.0, %v6681
    %v6683 = vpop.f32.mrb[0].mxu0
    %6684 = vdwg.mxu0
    %6686 = vset.pattern.permute.xlu0 0
    %6687 = vperm.xlu0 %6686, %v6682
    %v6688 = vpop.permute.xlu0 %6687
    %v6690 = vmul.f32 %v6688, %v1380
    %v6691 = vadd.f32 %v6690, 0.0
    %v6693 = vsel %vm849, %v6610, 0
    %6695 = vmatprep.subr.mxu0 0.0
    %6696 = vmatpush1.msra.mxu0 %v6340
    %6697 = vmatprep.subr.mxu0 0.0
    %6698 = vmatpush1.msra.mxu0 %v6341
    %6699 = vmatprep.subr.mxu0 0.0
    %6700 = vmatpush1.msra.mxu0 %v6342
    %6701 = vmatprep.subr.mxu0 0.0
    %6702 = vmatpush1.msra.mxu0 %v6343
    %6703 = vmatprep.subr.mxu0 0.0
    %6704 = vmatpush1.msra.mxu0 0.0
    %6705 = vmatprep.subr.mxu0 0.0
    %6706 = vmatpush1.msra.mxu0 0.0
    %6707 = vmatprep.subr.mxu0 0.0
    %6708 = vmatpush1.msra.mxu0 0.0
    %6709 = vmatprep.subr.mxu0 0.0
    %6710 = vmatpush1.msra.mxu0 0.0
    %6711 = vmatprep.subr.mxu0 0.0
    %6712 = vmatpush1.msra.mxu0 0.0
    %6713 = vmatprep.subr.mxu0 0.0
    %6714 = vmatpush1.msra.mxu0 0.0
    %6715 = vmatprep.subr.mxu0 0.0
    %6716 = vmatpush1.msra.mxu0 0.0
    %6717 = vmatprep.subr.mxu0 0.0
    %6718 = vmatpush1.msra.mxu0 0.0
    %6719 = vmatprep.subr.mxu0 0.0
    %6720 = vmatpush1.msra.mxu0 0.0
    %6721 = vmatprep.subr.mxu0 0.0
    %6722 = vmatpush1.msra.mxu0 0.0
    %6723 = vmatprep.subr.mxu0 0.0
    %6724 = vmatpush1.msra.mxu0 0.0
    %6725 = vmatprep.subr.mxu0 0.0
    %6726 = vmatpush1.msra.mxu0 0.0
    %6727 = vmatprep.subr.mxu0 0.0
    %6728 = vmatpush1.msra.mxu0 0.0
    %6729 = vmatprep.subr.mxu0 0.0
    %6730 = vmatpush1.msra.mxu0 0.0
    %6731 = vmatprep.subr.mxu0 0.0
    %6732 = vmatpush1.msra.mxu0 0.0
    %6733 = vmatprep.subr.mxu0 0.0
    %6734 = vmatpush1.msra.mxu0 0.0
    %6735 = vmatprep.subr.mxu0 0.0
    %6736 = vmatpush1.msra.mxu0 0.0
    %6737 = vmatprep.subr.mxu0 0.0
    %6738 = vmatpush1.msra.mxu0 0.0
    %6739 = vmatprep.subr.mxu0 0.0
    %6740 = vmatpush1.msra.mxu0 0.0
    %6741 = vmatprep.subr.mxu0 0.0
    %6742 = vmatpush1.msra.mxu0 0.0
    %6743 = vmatprep.subr.mxu0 0.0
    %6744 = vmatpush1.msra.mxu0 0.0
    %6745 = vmatprep.subr.mxu0 0.0
    %6746 = vmatpush1.msra.mxu0 0.0
    %6747 = vmatprep.subr.mxu0 0.0
    %6748 = vmatpush1.msra.mxu0 0.0
    %6749 = vmatprep.subr.mxu0 0.0
    %6750 = vmatpush1.msra.mxu0 0.0
    %6751 = vmatprep.subr.mxu0 0.0
    %6752 = vmatpush1.msra.mxu0 0.0
    %6753 = vmatprep.subr.mxu0 0.0
    %6754 = vmatpush1.msra.mxu0 0.0
    %6755 = vmatprep.subr.mxu0 0.0
    %6756 = vmatpush1.msra.mxu0 0.0
    %6757 = vmatprep.subr.mxu0 0.0
    %6758 = vmatpush1.msra.mxu0 0.0
    %6759 = vmatprep.mubr.f32.mxu0 0.0
    %6760 = vmatmul.mubr.f32.gmra.mrb[0].mxu0 %v6693
    %v6761 = vpop.f32.mrb[0].mxu0
    %v6762 = vadd.f32 %v6350, %v6761
    %v6763 = vpop.f32.mrb[0].mxu0
    %6764 = vdwg.mxu0
    %6765 = vmatprep.subr.mxu0 0.0
    %6766 = vmatpush1.msra.mxu0 %v6426
    %6767 = vmatprep.subr.mxu0 0.0
    %6768 = vmatpush1.msra.mxu0 %v6427
    %6769 = vmatprep.subr.mxu0 0.0
    %6770 = vmatpush1.msra.mxu0 %v6428
    %6771 = vmatprep.subr.mxu0 0.0
    %6772 = vmatpush1.msra.mxu0 %v6429
    %6773 = vmatprep.subr.mxu0 0.0
    %6774 = vmatpush1.msra.mxu0 0.0
    %6775 = vmatprep.subr.mxu0 0.0
    %6776 = vmatpush1.msra.mxu0 0.0
    %6777 = vmatprep.subr.mxu0 0.0
    %6778 = vmatpush1.msra.mxu0 0.0
    %6779 = vmatprep.subr.mxu0 0.0
    %6780 = vmatpush1.msra.mxu0 0.0
    %6781 = vmatprep.subr.mxu0 0.0
    %6782 = vmatpush1.msra.mxu0 0.0
    %6783 = vmatprep.subr.mxu0 0.0
    %6784 = vmatpush1.msra.mxu0 0.0
    %6785 = vmatprep.subr.mxu0 0.0
    %6786 = vmatpush1.msra.mxu0 0.0
    %6787 = vmatprep.subr.mxu0 0.0
    %6788 = vmatpush1.msra.mxu0 0.0
    %6789 = vmatprep.subr.mxu0 0.0
    %6790 = vmatpush1.msra.mxu0 0.0
    %6791 = vmatprep.subr.mxu0 0.0
    %6792 = vmatpush1.msra.mxu0 0.0
    %6793 = vmatprep.subr.mxu0 0.0
    %6794 = vmatpush1.msra.mxu0 0.0
    %6795 = vmatprep.subr.mxu0 0.0
    %6796 = vmatpush1.msra.mxu0 0.0
    %6797 = vmatprep.subr.mxu0 0.0
    %6798 = vmatpush1.msra.mxu0 0.0
    %6799 = vmatprep.subr.mxu0 0.0
    %6800 = vmatpush1.msra.mxu0 0.0
    %6801 = vmatprep.subr.mxu0 0.0
    %6802 = vmatpush1.msra.mxu0 0.0
    %6803 = vmatprep.subr.mxu0 0.0
    %6804 = vmatpush1.msra.mxu0 0.0
    %6805 = vmatprep.subr.mxu0 0.0
    %6806 = vmatpush1.msra.mxu0 0.0
    %6807 = vmatprep.subr.mxu0 0.0
    %6808 = vmatpush1.msra.mxu0 0.0
    %6809 = vmatprep.subr.mxu0 0.0
    %6810 = vmatpush1.msra.mxu0 0.0
    %6811 = vmatprep.subr.mxu0 0.0
    %6812 = vmatpush1.msra.mxu0 0.0
    %6813 = vmatprep.subr.mxu0 0.0
    %6814 = vmatpush1.msra.mxu0 0.0
    %6815 = vmatprep.subr.mxu0 0.0
    %6816 = vmatpush1.msra.mxu0 0.0
    %6817 = vmatprep.subr.mxu0 0.0
    %6818 = vmatpush1.msra.mxu0 0.0
    %6819 = vmatprep.subr.mxu0 0.0
    %6820 = vmatpush1.msra.mxu0 0.0
    %6821 = vmatprep.subr.mxu0 0.0
    %6822 = vmatpush1.msra.mxu0 0.0
    %6823 = vmatprep.subr.mxu0 0.0
    %6824 = vmatpush1.msra.mxu0 0.0
    %6825 = vmatprep.subr.mxu0 0.0
    %6826 = vmatpush1.msra.mxu0 0.0
    %6827 = vmatprep.subr.mxu0 0.0
    %6828 = vmatpush1.msra.mxu0 0.0
    %6829 = vmatprep.mubr.f32.mxu0 0.0
    %6830 = vmatmul.mubr.f32.gmra.mrb[0].mxu0 %v6693
    %v6831 = vpop.f32.mrb[0].mxu0
    %v6832 = vadd.f32 %v6436, %v6831
    %v6833 = vpop.f32.mrb[0].mxu0
    %6834 = vdwg.mxu0
    %6835 = vmatprep.subr.mxu0 0.0
    %6836 = vmatpush1.msra.mxu0 %v6509
    %6837 = vmatprep.subr.mxu0 0.0
    %6838 = vmatpush1.msra.mxu0 %v6510
    %6839 = vmatprep.subr.mxu0 0.0
    %6840 = vmatpush1.msra.mxu0 %v6511
    %6841 = vmatprep.subr.mxu0 0.0
    %6842 = vmatpush1.msra.mxu0 %v6512
    %6843 = vmatprep.subr.mxu0 0.0
    %6844 = vmatpush1.msra.mxu0 0.0
    %6845 = vmatprep.subr.mxu0 0.0
    %6846 = vmatpush1.msra.mxu0 0.0
    %6847 = vmatprep.subr.mxu0 0.0
    %6848 = vmatpush1.msra.mxu0 0.0
    %6849 = vmatprep.subr.mxu0 0.0
    %6850 = vmatpush1.msra.mxu0 0.0
    %6851 = vmatprep.subr.mxu0 0.0
    %6852 = vmatpush1.msra.mxu0 0.0
    %6853 = vmatprep.subr.mxu0 0.0
    %6854 = vmatpush1.msra.mxu0 0.0
    %6855 = vmatprep.subr.mxu0 0.0
    %6856 = vmatpush1.msra.mxu0 0.0
    %6857 = vmatprep.subr.mxu0 0.0
    %6858 = vmatpush1.msra.mxu0 0.0
    %6859 = vmatprep.subr.mxu0 0.0
    %6860 = vmatpush1.msra.mxu0 0.0
    %6861 = vmatprep.subr.mxu0 0.0
    %6862 = vmatpush1.msra.mxu0 0.0
    %6863 = vmatprep.subr.mxu0 0.0
    %6864 = vmatpush1.msra.mxu0 0.0
    %6865 = vmatprep.subr.mxu0 0.0
    %6866 = vmatpush1.msra.mxu0 0.0
    %6867 = vmatprep.subr.mxu0 0.0
    %6868 = vmatpush1.msra.mxu0 0.0
    %6869 = vmatprep.subr.mxu0 0.0
    %6870 = vmatpush1.msra.mxu0 0.0
    %6871 = vmatprep.subr.mxu0 0.0
    %6872 = vmatpush1.msra.mxu0 0.0
    %6873 = vmatprep.subr.mxu0 0.0
    %6874 = vmatpush1.msra.mxu0 0.0
    %6875 = vmatprep.subr.mxu0 0.0
    %6876 = vmatpush1.msra.mxu0 0.0
    %6877 = vmatprep.subr.mxu0 0.0
    %6878 = vmatpush1.msra.mxu0 0.0
    %6879 = vmatprep.subr.mxu0 0.0
    %6880 = vmatpush1.msra.mxu0 0.0
    %6881 = vmatprep.subr.mxu0 0.0
    %6882 = vmatpush1.msra.mxu0 0.0
    %6883 = vmatprep.subr.mxu0 0.0
    %6884 = vmatpush1.msra.mxu0 0.0
    %6885 = vmatprep.subr.mxu0 0.0
    %6886 = vmatpush1.msra.mxu0 0.0
    %6887 = vmatprep.subr.mxu0 0.0
    %6888 = vmatpush1.msra.mxu0 0.0
    %6889 = vmatprep.subr.mxu0 0.0
    %6890 = vmatpush1.msra.mxu0 0.0
    %6891 = vmatprep.subr.mxu0 0.0
    %6892 = vmatpush1.msra.mxu0 0.0
    %6893 = vmatprep.subr.mxu0 0.0
    %6894 = vmatpush1.msra.mxu0 0.0
    %6895 = vmatprep.subr.mxu0 0.0
    %6896 = vmatpush1.msra.mxu0 0.0
    %6897 = vmatprep.subr.mxu0 0.0
    %6898 = vmatpush1.msra.mxu0 0.0
    %6899 = vmatprep.mubr.f32.mxu0 0.0
    %6900 = vmatmul.mubr.f32.gmra.mrb[0].mxu0 %v6693
    %v6901 = vpop.f32.mrb[0].mxu0
    %v6902 = vadd.f32 %v6519, %v6901
    %v6903 = vpop.f32.mrb[0].mxu0
    %6904 = vdwg.mxu0
    %v6906 = vrot.slane %v6762, 6
    %v6908 = vadd.f32 %v663, %v6906
    %v6909 = vxor.u32 %v6908, 2147483648
    %v6910 = vmul.f32 %v6909, 1.442695
    %v6911 = vpow.pop %v6910
    %v6912 = vadd.f32 %v6911, 1.0
    %v6913 = vrcp.pop %v6912
    %v6914 = vmul.f32 1.0, %v6913
    %v6916 = vrot.slane %v6832, 6
    %v6918 = vadd.f32 %v744, %v6916
    %v6919 = vxor.u32 %v6918, 2147483648
    %v6920 = vmul.f32 %v6919, 1.442695
    %v6921 = vpow.pop %v6920
    %v6922 = vadd.f32 %v6921, 1.0
    %v6923 = vrcp.pop %v6922
    %v6924 = vmul.f32 1.0, %v6923
    %v6926 = vrot.slane %v6902, 6
    %v6928 = vmul.f32 %v6914, %v6926
    %v6929 = vadd.f32 %v825, %v6928
    %v6930 = vtanh.pop %v6929
    %v6932 = vrot.slane %v6930, 2
    %v6934 = vsub.f32 %v6610, %v6932
    %v6936 = vrot.slane %v6934, 6
    %v6938 = vmul.f32 %v6924, %v6936
    %v6939 = vadd.f32 %v6930, %v6938
    %v6940 = vmax.f32 %v6939, 0.0
    %v6942 = vrot.slane %v6940, 2
    %v6943 = vsel %vm849, %v6942, 0
    %6945 = vmatprep.subr.mxu0 0.0
    %6946 = vmatpush1.msra.mxu0 %v832
    %6947 = vmatprep.subr.mxu0 0.0
    %6948 = vmatpush1.msra.mxu0 %v833
    %6949 = vmatprep.subr.mxu0 0.0
    %6950 = vmatpush1.msra.mxu0 %v834
    %6951 = vmatprep.subr.mxu0 0.0
    %6952 = vmatpush1.msra.mxu0 %v835
    %6953 = vmatprep.subr.mxu0 0.0
    %6954 = vmatpush1.msra.mxu0 0.0
    %6955 = vmatprep.subr.mxu0 0.0
    %6956 = vmatpush1.msra.mxu0 0.0
    %6957 = vmatprep.subr.mxu0 0.0
    %6958 = vmatpush1.msra.mxu0 0.0
    %6959 = vmatprep.subr.mxu0 0.0
    %6960 = vmatpush1.msra.mxu0 0.0
    %6961 = vmatprep.subr.mxu0 0.0
    %6962 = vmatpush1.msra.mxu0 0.0
    %6963 = vmatprep.subr.mxu0 0.0
    %6964 = vmatpush1.msra.mxu0 0.0
    %6965 = vmatprep.subr.mxu0 0.0
    %6966 = vmatpush1.msra.mxu0 0.0
    %6967 = vmatprep.subr.mxu0 0.0
    %6968 = vmatpush1.msra.mxu0 0.0
    %6969 = vmatprep.subr.mxu0 0.0
    %6970 = vmatpush1.msra.mxu0 0.0
    %6971 = vmatprep.subr.mxu0 0.0
    %6972 = vmatpush1.msra.mxu0 0.0
    %6973 = vmatprep.subr.mxu0 0.0
    %6974 = vmatpush1.msra.mxu0 0.0
    %6975 = vmatprep.subr.mxu0 0.0
    %6976 = vmatpush1.msra.mxu0 0.0
    %6977 = vmatprep.subr.mxu0 0.0
    %6978 = vmatpush1.msra.mxu0 0.0
    %6979 = vmatprep.subr.mxu0 0.0
    %6980 = vmatpush1.msra.mxu0 0.0
    %6981 = vmatprep.subr.mxu0 0.0
    %6982 = vmatpush1.msra.mxu0 0.0
    %6983 = vmatprep.subr.mxu0 0.0
    %6984 = vmatpush1.msra.mxu0 0.0
    %6985 = vmatprep.subr.mxu0 0.0
    %6986 = vmatpush1.msra.mxu0 0.0
    %6987 = vmatprep.subr.mxu0 0.0
    %6988 = vmatpush1.msra.mxu0 0.0
    %6989 = vmatprep.subr.mxu0 0.0
    %6990 = vmatpush1.msra.mxu0 0.0
    %6991 = vmatprep.subr.mxu0 0.0
    %6992 = vmatpush1.msra.mxu0 0.0
    %6993 = vmatprep.subr.mxu0 0.0
    %6994 = vmatpush1.msra.mxu0 0.0
    %6995 = vmatprep.subr.mxu0 0.0
    %6996 = vmatpush1.msra.mxu0 0.0
    %6997 = vmatprep.subr.mxu0 0.0
    %6998 = vmatpush1.msra.mxu0 0.0
    %6999 = vmatprep.subr.mxu0 0.0
    %7000 = vmatpush1.msra.mxu0 0.0
    %7001 = vmatprep.subr.mxu0 0.0
    %7002 = vmatpush1.msra.mxu0 0.0
    %7003 = vmatprep.subr.mxu0 0.0
    %7004 = vmatpush1.msra.mxu0 0.0
    %7005 = vmatprep.subr.mxu0 0.0
    %7006 = vmatpush1.msra.mxu0 0.0
    %7007 = vmatprep.subr.mxu0 0.0
    %7008 = vmatpush1.msra.mxu0 0.0
    %7009 = vmatprep.mubr.f32.mxu0 0.0
    %7010 = vmatmul.mubr.f32.gmra.mrb[0].mxu0 %v6943
    %v7011 = vpop.f32.mrb[0].mxu0
    %v7012 = vadd.f32 0.0, %v7011
    %v7013 = vpop.f32.mrb[0].mxu0
    %7014 = vdwg.mxu0
    %7016 = vset.pattern.permute.xlu0 0
    %7017 = vperm.xlu0 %7016, %v7012
    %v7018 = vpop.permute.xlu0 %7017
    %v7020 = vmul.f32 %v7018, %v2041
    %v7021 = vadd.f32 %v6691, %v7020
    %v7023 = vrot.slane %v6939, 2
    %v7024 = vsel %vm849, %v7023, 0
    %7026 = vmatprep.subr.mxu0 0.0
    %7027 = vmatpush1.msra.mxu0 %v6340
    %7028 = vmatprep.subr.mxu0 0.0
    %7029 = vmatpush1.msra.mxu0 %v6341
    %7030 = vmatprep.subr.mxu0 0.0
    %7031 = vmatpush1.msra.mxu0 %v6342
    %7032 = vmatprep.subr.mxu0 0.0
    %7033 = vmatpush1.msra.mxu0 %v6343
    %7034 = vmatprep.subr.mxu0 0.0
    %7035 = vmatpush1.msra.mxu0 0.0
    %7036 = vmatprep.subr.mxu0 0.0
    %7037 = vmatpush1.msra.mxu0 0.0
    %7038 = vmatprep.subr.mxu0 0.0
    %7039 = vmatpush1.msra.mxu0 0.0
    %7040 = vmatprep.subr.mxu0 0.0
    %7041 = vmatpush1.msra.mxu0 0.0
    %7042 = vmatprep.subr.mxu0 0.0
    %7043 = vmatpush1.msra.mxu0 0.0
    %7044 = vmatprep.subr.mxu0 0.0
    %7045 = vmatpush1.msra.mxu0 0.0
    %7046 = vmatprep.subr.mxu0 0.0
    %7047 = vmatpush1.msra.mxu0 0.0
    %7048 = vmatprep.subr.mxu0 0.0
    %7049 = vmatpush1.msra.mxu0 0.0
    %7050 = vmatprep.subr.mxu0 0.0
    %7051 = vmatpush1.msra.mxu0 0.0
    %7052 = vmatprep.subr.mxu0 0.0
    %7053 = vmatpush1.msra.mxu0 0.0
    %7054 = vmatprep.subr.mxu0 0.0
    %7055 = vmatpush1.msra.mxu0 0.0
    %7056 = vmatprep.subr.mxu0 0.0
    %7057 = vmatpush1.msra.mxu0 0.0
    %7058 = vmatprep.subr.mxu0 0.0
    %7059 = vmatpush1.msra.mxu0 0.0
    %7060 = vmatprep.subr.mxu0 0.0
    %7061 = vmatpush1.msra.mxu0 0.0
    %7062 = vmatprep.subr.mxu0 0.0
    %7063 = vmatpush1.msra.mxu0 0.0
    %7064 = vmatprep.subr.mxu0 0.0
    %7065 = vmatpush1.msra.mxu0 0.0
    %7066 = vmatprep.subr.mxu0 0.0
    %7067 = vmatpush1.msra.mxu0 0.0
    %7068 = vmatprep.subr.mxu0 0.0
    %7069 = vmatpush1.msra.mxu0 0.0
    %7070 = vmatprep.subr.mxu0 0.0
    %7071 = vmatpush1.msra.mxu0 0.0
    %7072 = vmatprep.subr.mxu0 0.0
    %7073 = vmatpush1.msra.mxu0 0.0
    %7074 = vmatprep.subr.mxu0 0.0
    %7075 = vmatpush1.msra.mxu0 0.0
    %7076 = vmatprep.subr.mxu0 0.0
    %7077 = vmatpush1.msra.mxu0 0.0
    %7078 = vmatprep.subr.mxu0 0.0
    %7079 = vmatpush1.msra.mxu0 0.0
    %7080 = vmatprep.subr.mxu0 0.0
    %7081 = vmatpush1.msra.mxu0 0.0
    %7082 = vmatprep.subr.mxu0 0.0
    %7083 = vmatpush1.msra.mxu0 0.0
    %7084 = vmatprep.subr.mxu0 0.0
    %7085 = vmatpush1.msra.mxu0 0.0
    %7086 = vmatprep.subr.mxu0 0.0
    %7087 = vmatpush1.msra.mxu0 0.0
    %7088 = vmatprep.subr.mxu0 0.0
    %7089 = vmatpush1.msra.mxu0 0.0
    %7090 = vmatprep.mubr.f32.mxu0 0.0
    %7091 = vmatmul.mubr.f32.gmra.mrb[0].mxu0 %v7024
    %v7092 = vpop.f32.mrb[0].mxu0
    %v7093 = vadd.f32 %v6350, %v7092
    %v7094 = vpop.f32.mrb[0].mxu0
    %7095 = vdwg.mxu0
    %7096 = vmatprep.subr.mxu0 0.0
    %7097 = vmatpush1.msra.mxu0 %v6426
    %7098 = vmatprep.subr.mxu0 0.0
    %7099 = vmatpush1.msra.mxu0 %v6427
    %7100 = vmatprep.subr.mxu0 0.0
    %7101 = vmatpush1.msra.mxu0 %v6428
    %7102 = vmatprep.subr.mxu0 0.0
    %7103 = vmatpush1.msra.mxu0 %v6429
    %7104 = vmatprep.subr.mxu0 0.0
    %7105 = vmatpush1.msra.mxu0 0.0
    %7106 = vmatprep.subr.mxu0 0.0
    %7107 = vmatpush1.msra.mxu0 0.0
    %7108 = vmatprep.subr.mxu0 0.0
    %7109 = vmatpush1.msra.mxu0 0.0
    %7110 = vmatprep.subr.mxu0 0.0
    %7111 = vmatpush1.msra.mxu0 0.0
    %7112 = vmatprep.subr.mxu0 0.0
    %7113 = vmatpush1.msra.mxu0 0.0
    %7114 = vmatprep.subr.mxu0 0.0
    %7115 = vmatpush1.msra.mxu0 0.0
    %7116 = vmatprep.subr.mxu0 0.0
    %7117 = vmatpush1.msra.mxu0 0.0
    %7118 = vmatprep.subr.mxu0 0.0
    %7119 = vmatpush1.msra.mxu0 0.0
    %7120 = vmatprep.subr.mxu0 0.0
    %7121 = vmatpush1.msra.mxu0 0.0
    %7122 = vmatprep.subr.mxu0 0.0
    %7123 = vmatpush1.msra.mxu0 0.0
    %7124 = vmatprep.subr.mxu0 0.0
    %7125 = vmatpush1.msra.mxu0 0.0
    %7126 = vmatprep.subr.mxu0 0.0
    %7127 = vmatpush1.msra.mxu0 0.0
    %7128 = vmatprep.subr.mxu0 0.0
    %7129 = vmatpush1.msra.mxu0 0.0
    %7130 = vmatprep.subr.mxu0 0.0
    %7131 = vmatpush1.msra.mxu0 0.0
    %7132 = vmatprep.subr.mxu0 0.0
    %7133 = vmatpush1.msra.mxu0 0.0
    %7134 = vmatprep.subr.mxu0 0.0
    %7135 = vmatpush1.msra.mxu0 0.0
    %7136 = vmatprep.subr.mxu0 0.0
    %7137 = vmatpush1.msra.mxu0 0.0
    %7138 = vmatprep.subr.mxu0 0.0
    %7139 = vmatpush1.msra.mxu0 0.0
    %7140 = vmatprep.subr.mxu0 0.0
    %7141 = vmatpush1.msra.mxu0 0.0
    %7142 = vmatprep.subr.mxu0 0.0
    %7143 = vmatpush1.msra.mxu0 0.0
    %7144 = vmatprep.subr.mxu0 0.0
    %7145 = vmatpush1.msra.mxu0 0.0
    %7146 = vmatprep.subr.mxu0 0.0
    %7147 = vmatpush1.msra.mxu0 0.0
    %7148 = vmatprep.subr.mxu0 0.0
    %7149 = vmatpush1.msra.mxu0 0.0
    %7150 = vmatprep.subr.mxu0 0.0
    %7151 = vmatpush1.msra.mxu0 0.0
    %7152 = vmatprep.subr.mxu0 0.0
    %7153 = vmatpush1.msra.mxu0 0.0
    %7154 = vmatprep.subr.mxu0 0.0
    %7155 = vmatpush1.msra.mxu0 0.0
    %7156 = vmatprep.subr.mxu0 0.0
    %7157 = vmatpush1.msra.mxu0 0.0
    %7158 = vmatprep.subr.mxu0 0.0
    %7159 = vmatpush1.msra.mxu0 0.0
    %7160 = vmatprep.mubr.f32.mxu0 0.0
    %7161 = vmatmul.mubr.f32.gmra.mrb[0].mxu0 %v7024
    %v7162 = vpop.f32.mrb[0].mxu0
    %v7163 = vadd.f32 %v6436, %v7162
    %v7164 = vpop.f32.mrb[0].mxu0
    %7165 = vdwg.mxu0
    %7166 = vmatprep.subr.mxu0 0.0
    %7167 = vmatpush1.msra.mxu0 %v6509
    %7168 = vmatprep.subr.mxu0 0.0
    %7169 = vmatpush1.msra.mxu0 %v6510
    %7170 = vmatprep.subr.mxu0 0.0
    %7171 = vmatpush1.msra.mxu0 %v6511
    %7172 = vmatprep.subr.mxu0 0.0
    %7173 = vmatpush1.msra.mxu0 %v6512
    %7174 = vmatprep.subr.mxu0 0.0
    %7175 = vmatpush1.msra.mxu0 0.0
    %7176 = vmatprep.subr.mxu0 0.0
    %7177 = vmatpush1.msra.mxu0 0.0
    %7178 = vmatprep.subr.mxu0 0.0
    %7179 = vmatpush1.msra.mxu0 0.0
    %7180 = vmatprep.subr.mxu0 0.0
    %7181 = vmatpush1.msra.mxu0 0.0
    %7182 = vmatprep.subr.mxu0 0.0
    %7183 = vmatpush1.msra.mxu0 0.0
    %7184 = vmatprep.subr.mxu0 0.0
    %7185 = vmatpush1.msra.mxu0 0.0
    %7186 = vmatprep.subr.mxu0 0.0
    %7187 = vmatpush1.msra.mxu0 0.0
    %7188 = vmatprep.subr.mxu0 0.0
    %7189 = vmatpush1.msra.mxu0 0.0
    %7190 = vmatprep.subr.mxu0 0.0
    %7191 = vmatpush1.msra.mxu0 0.0
    %7192 = vmatprep.subr.mxu0 0.0
    %7193 = vmatpush1.msra.mxu0 0.0
    %7194 = vmatprep.subr.mxu0 0.0
    %7195 = vmatpush1.msra.mxu0 0.0
    %7196 = vmatprep.subr.mxu0 0.0
    %7197 = vmatpush1.msra.mxu0 0.0
    %7198 = vmatprep.subr.mxu0 0.0
    %7199 = vmatpush1.msra.mxu0 0.0
    %7200 = vmatprep.subr.mxu0 0.0
    %7201 = vmatpush1.msra.mxu0 0.0
    %7202 = vmatprep.subr.mxu0 0.0
    %7203 = vmatpush1.msra.mxu0 0.0
    %7204 = vmatprep.subr.mxu0 0.0
    %7205 = vmatpush1.msra.mxu0 0.0
    %7206 = vmatprep.subr.mxu0 0.0
    %7207 = vmatpush1.msra.mxu0 0.0
    %7208 = vmatprep.subr.mxu0 0.0
    %7209 = vmatpush1.msra.mxu0 0.0
    %7210 = vmatprep.subr.mxu0 0.0
    %7211 = vmatpush1.msra.mxu0 0.0
    %7212 = vmatprep.subr.mxu0 0.0
    %7213 = vmatpush1.msra.mxu0 0.0
    %7214 = vmatprep.subr.mxu0 0.0
    %7215 = vmatpush1.msra.mxu0 0.0
    %7216 = vmatprep.subr.mxu0 0.0
    %7217 = vmatpush1.msra.mxu0 0.0
    %7218 = vmatprep.subr.mxu0 0.0
    %7219 = vmatpush1.msra.mxu0 0.0
    %7220 = vmatprep.subr.mxu0 0.0
    %7221 = vmatpush1.msra.mxu0 0.0
    %7222 = vmatprep.subr.mxu0 0.0
    %7223 = vmatpush1.msra.mxu0 0.0
    %7224 = vmatprep.subr.mxu0 0.0
    %7225 = vmatpush1.msra.mxu0 0.0
    %7226 = vmatprep.subr.mxu0 0.0
    %7227 = vmatpush1.msra.mxu0 0.0
    %7228 = vmatprep.subr.mxu0 0.0
    %7229 = vmatpush1.msra.mxu0 0.0
    %7230 = vmatprep.mubr.f32.mxu0 0.0
    %7231 = vmatmul.mubr.f32.gmra.mrb[0].mxu0 %v7024
    %v7232 = vpop.f32.mrb[0].mxu0
    %v7233 = vadd.f32 %v6519, %v7232
    %v7234 = vpop.f32.mrb[0].mxu0
    %7235 = vdwg.mxu0
    %v7237 = vrot.slane %v7093, 4
    %v7239 = vadd.f32 %v663, %v7237
    %v7240 = vxor.u32 %v7239, 2147483648
    %v7241 = vmul.f32 %v7240, 1.442695
    %v7242 = vpow.pop %v7241
    %v7243 = vadd.f32 %v7242, 1.0
    %v7244 = vrcp.pop %v7243
    %v7245 = vmul.f32 1.0, %v7244
    %v7247 = vrot.slane %v7163, 4
    %v7249 = vadd.f32 %v744, %v7247
    %v7250 = vxor.u32 %v7249, 2147483648
    %v7251 = vmul.f32 %v7250, 1.442695
    %v7252 = vpow.pop %v7251
    %v7253 = vadd.f32 %v7252, 1.0
    %v7254 = vrcp.pop %v7253
    %v7255 = vmul.f32 1.0, %v7254
    %v7257 = vrot.slane %v7233, 4
    %v7259 = vmul.f32 %v7245, %v7257
    %v7260 = vadd.f32 %v825, %v7259
    %v7261 = vtanh.pop %v7260
    %v7263 = vrot.slane %v7261, 2
    %v7265 = vsub.f32 %v6939, %v7263
    %v7267 = vrot.slane %v7265, 6
    %v7269 = vmul.f32 %v7255, %v7267
    %v7270 = vadd.f32 %v7261, %v7269
    %v7271 = vmax.f32 %v7270, 0.0
    %v7273 = vrot.slane %v7271, 4
    %v7274 = vsel %vm849, %v7273, 0
    %7276 = vmatprep.subr.mxu0 0.0
    %7277 = vmatpush1.msra.mxu0 %v832
    %7278 = vmatprep.subr.mxu0 0.0
    %7279 = vmatpush1.msra.mxu0 %v833
    %7280 = vmatprep.subr.mxu0 0.0
    %7281 = vmatpush1.msra.mxu0 %v834
    %7282 = vmatprep.subr.mxu0 0.0
    %7283 = vmatpush1.msra.mxu0 %v835
    %7284 = vmatprep.subr.mxu0 0.0
    %7285 = vmatpush1.msra.mxu0 0.0
    %7286 = vmatprep.subr.mxu0 0.0
    %7287 = vmatpush1.msra.mxu0 0.0
    %7288 = vmatprep.subr.mxu0 0.0
    %7289 = vmatpush1.msra.mxu0 0.0
    %7290 = vmatprep.subr.mxu0 0.0
    %7291 = vmatpush1.msra.mxu0 0.0
    %7292 = vmatprep.subr.mxu0 0.0
    %7293 = vmatpush1.msra.mxu0 0.0
    %7294 = vmatprep.subr.mxu0 0.0
    %7295 = vmatpush1.msra.mxu0 0.0
    %7296 = vmatprep.subr.mxu0 0.0
    %7297 = vmatpush1.msra.mxu0 0.0
    %7298 = vmatprep.subr.mxu0 0.0
    %7299 = vmatpush1.msra.mxu0 0.0
    %7300 = vmatprep.subr.mxu0 0.0
    %7301 = vmatpush1.msra.mxu0 0.0
    %7302 = vmatprep.subr.mxu0 0.0
    %7303 = vmatpush1.msra.mxu0 0.0
    %7304 = vmatprep.subr.mxu0 0.0
    %7305 = vmatpush1.msra.mxu0 0.0
    %7306 = vmatprep.subr.mxu0 0.0
    %7307 = vmatpush1.msra.mxu0 0.0
    %7308 = vmatprep.subr.mxu0 0.0
    %7309 = vmatpush1.msra.mxu0 0.0
    %7310 = vmatprep.subr.mxu0 0.0
    %7311 = vmatpush1.msra.mxu0 0.0
    %7312 = vmatprep.subr.mxu0 0.0
    %7313 = vmatpush1.msra.mxu0 0.0
    %7314 = vmatprep.subr.mxu0 0.0
    %7315 = vmatpush1.msra.mxu0 0.0
    %7316 = vmatprep.subr.mxu0 0.0
    %7317 = vmatpush1.msra.mxu0 0.0
    %7318 = vmatprep.subr.mxu0 0.0
    %7319 = vmatpush1.msra.mxu0 0.0
    %7320 = vmatprep.subr.mxu0 0.0
    %7321 = vmatpush1.msra.mxu0 0.0
    %7322 = vmatprep.subr.mxu0 0.0
    %7323 = vmatpush1.msra.mxu0 0.0
    %7324 = vmatprep.subr.mxu0 0.0
    %7325 = vmatpush1.msra.mxu0 0.0
    %7326 = vmatprep.subr.mxu0 0.0
    %7327 = vmatpush1.msra.mxu0 0.0
    %7328 = vmatprep.subr.mxu0 0.0
    %7329 = vmatpush1.msra.mxu0 0.0
    %7330 = vmatprep.subr.mxu0 0.0
    %7331 = vmatpush1.msra.mxu0 0.0
    %7332 = vmatprep.subr.mxu0 0.0
    %7333 = vmatpush1.msra.mxu0 0.0
    %7334 = vmatprep.subr.mxu0 0.0
    %7335 = vmatpush1.msra.mxu0 0.0
    %7336 = vmatprep.subr.mxu0 0.0
    %7337 = vmatpush1.msra.mxu0 0.0
    %7338 = vmatprep.subr.mxu0 0.0
    %7339 = vmatpush1.msra.mxu0 0.0
    %7340 = vmatprep.mubr.f32.mxu0 0.0
    %7341 = vmatmul.mubr.f32.gmra.mrb[0].mxu0 %v7274
    %v7342 = vpop.f32.mrb[0].mxu0
    %v7343 = vadd.f32 0.0, %v7342
    %v7344 = vpop.f32.mrb[0].mxu0
    %7345 = vdwg.mxu0
    %7347 = vset.pattern.permute.xlu0 0
    %7348 = vperm.xlu0 %7347, %v7343
    %v7349 = vpop.permute.xlu0 %7348
    %v7351 = vmul.f32 %v7349, %v2706
    %v7352 = vadd.f32 %v7021, %v7351
    %v7354 = vrot.slane %v7270, 4
    %v7355 = vsel %vm849, %v7354, 0
    %7357 = vmatprep.subr.mxu0 0.0
    %7358 = vmatpush1.msra.mxu0 %v6340
    %7359 = vmatprep.subr.mxu0 0.0
    %7360 = vmatpush1.msra.mxu0 %v6341
    %7361 = vmatprep.subr.mxu0 0.0
    %7362 = vmatpush1.msra.mxu0 %v6342
    %7363 = vmatprep.subr.mxu0 0.0
    %7364 = vmatpush1.msra.mxu0 %v6343
    %7365 = vmatprep.subr.mxu0 0.0
    %7366 = vmatpush1.msra.mxu0 0.0
    %7367 = vmatprep.subr.mxu0 0.0
    %7368 = vmatpush1.msra.mxu0 0.0
    %7369 = vmatprep.subr.mxu0 0.0
    %7370 = vmatpush1.msra.mxu0 0.0
    %7371 = vmatprep.subr.mxu0 0.0
    %7372 = vmatpush1.msra.mxu0 0.0
    %7373 = vmatprep.subr.mxu0 0.0
    %7374 = vmatpush1.msra.mxu0 0.0
    %7375 = vmatprep.subr.mxu0 0.0
    %7376 = vmatpush1.msra.mxu0 0.0
    %7377 = vmatprep.subr.mxu0 0.0
    %7378 = vmatpush1.msra.mxu0 0.0
    %7379 = vmatprep.subr.mxu0 0.0
    %7380 = vmatpush1.msra.mxu0 0.0
    %7381 = vmatprep.subr.mxu0 0.0
    %7382 = vmatpush1.msra.mxu0 0.0
    %7383 = vmatprep.subr.mxu0 0.0
    %7384 = vmatpush1.msra.mxu0 0.0
    %7385 = vmatprep.subr.mxu0 0.0
    %7386 = vmatpush1.msra.mxu0 0.0
    %7387 = vmatprep.subr.mxu0 0.0
    %7388 = vmatpush1.msra.mxu0 0.0
    %7389 = vmatprep.subr.mxu0 0.0
    %7390 = vmatpush1.msra.mxu0 0.0
    %7391 = vmatprep.subr.mxu0 0.0
    %7392 = vmatpush1.msra.mxu0 0.0
    %7393 = vmatprep.subr.mxu0 0.0
    %7394 = vmatpush1.msra.mxu0 0.0
    %7395 = vmatprep.subr.mxu0 0.0
    %7396 = vmatpush1.msra.mxu0 0.0
    %7397 = vmatprep.subr.mxu0 0.0
    %7398 = vmatpush1.msra.mxu0 0.0
    %7399 = vmatprep.subr.mxu0 0.0
    %7400 = vmatpush1.msra.mxu0 0.0
    %7401 = vmatprep.subr.mxu0 0.0
    %7402 = vmatpush1.msra.mxu0 0.0
    %7403 = vmatprep.subr.mxu0 0.0
    %7404 = vmatpush1.msra.mxu0 0.0
    %7405 = vmatprep.subr.mxu0 0.0
    %7406 = vmatpush1.msra.mxu0 0.0
    %7407 = vmatprep.subr.mxu0 0.0
    %7408 = vmatpush1.msra.mxu0 0.0
    %7409 = vmatprep.subr.mxu0 0.0
    %7410 = vmatpush1.msra.mxu0 0.0
    %7411 = vmatprep.subr.mxu0 0.0
    %7412 = vmatpush1.msra.mxu0 0.0
    %7413 = vmatprep.subr.mxu0 0.0
    %7414 = vmatpush1.msra.mxu0 0.0
    %7415 = vmatprep.subr.mxu0 0.0
    %7416 = vmatpush1.msra.mxu0 0.0
    %7417 = vmatprep.subr.mxu0 0.0
    %7418 = vmatpush1.msra.mxu0 0.0
    %7419 = vmatprep.subr.mxu0 0.0
    %7420 = vmatpush1.msra.mxu0 0.0
    %7421 = vmatprep.mubr.f32.mxu0 0.0
    %7422 = vmatmul.mubr.f32.gmra.mrb[0].mxu0 %v7355
    %v7423 = vpop.f32.mrb[0].mxu0
    %v7424 = vadd.f32 %v6350, %v7423
    %v7425 = vpop.f32.mrb[0].mxu0
    %7426 = vdwg.mxu0
    %7427 = vmatprep.subr.mxu0 0.0
    %7428 = vmatpush1.msra.mxu0 %v6426
    %7429 = vmatprep.subr.mxu0 0.0
    %7430 = vmatpush1.msra.mxu0 %v6427
    %7431 = vmatprep.subr.mxu0 0.0
    %7432 = vmatpush1.msra.mxu0 %v6428
    %7433 = vmatprep.subr.mxu0 0.0
    %7434 = vmatpush1.msra.mxu0 %v6429
    %7435 = vmatprep.subr.mxu0 0.0
    %7436 = vmatpush1.msra.mxu0 0.0
    %7437 = vmatprep.subr.mxu0 0.0
    %7438 = vmatpush1.msra.mxu0 0.0
    %7439 = vmatprep.subr.mxu0 0.0
    %7440 = vmatpush1.msra.mxu0 0.0
    %7441 = vmatprep.subr.mxu0 0.0
    %7442 = vmatpush1.msra.mxu0 0.0
    %7443 = vmatprep.subr.mxu0 0.0
    %7444 = vmatpush1.msra.mxu0 0.0
    %7445 = vmatprep.subr.mxu0 0.0
    %7446 = vmatpush1.msra.mxu0 0.0
    %7447 = vmatprep.subr.mxu0 0.0
    %7448 = vmatpush1.msra.mxu0 0.0
    %7449 = vmatprep.subr.mxu0 0.0
    %7450 = vmatpush1.msra.mxu0 0.0
    %7451 = vmatprep.subr.mxu0 0.0
    %7452 = vmatpush1.msra.mxu0 0.0
    %7453 = vmatprep.subr.mxu0 0.0
    %7454 = vmatpush1.msra.mxu0 0.0
    %7455 = vmatprep.subr.mxu0 0.0
    %7456 = vmatpush1.msra.mxu0 0.0
    %7457 = vmatprep.subr.mxu0 0.0
    %7458 = vmatpush1.msra.mxu0 0.0
    %7459 = vmatprep.subr.mxu0 0.0
    %7460 = vmatpush1.msra.mxu0 0.0
    %7461 = vmatprep.subr.mxu0 0.0
    %7462 = vmatpush1.msra.mxu0 0.0
    %7463 = vmatprep.subr.mxu0 0.0
    %7464 = vmatpush1.msra.mxu0 0.0
    %7465 = vmatprep.subr.mxu0 0.0
    %7466 = vmatpush1.msra.mxu0 0.0
    %7467 = vmatprep.subr.mxu0 0.0
    %7468 = vmatpush1.msra.mxu0 0.0
    %7469 = vmatprep.subr.mxu0 0.0
    %7470 = vmatpush1.msra.mxu0 0.0
    %7471 = vmatprep.subr.mxu0 0.0
    %7472 = vmatpush1.msra.mxu0 0.0
    %7473 = vmatprep.subr.mxu0 0.0
    %7474 = vmatpush1.msra.mxu0 0.0
    %7475 = vmatprep.subr.mxu0 0.0
    %7476 = vmatpush1.msra.mxu0 0.0
    %7477 = vmatprep.subr.mxu0 0.0
    %7478 = vmatpush1.msra.mxu0 0.0
    %7479 = vmatprep.subr.mxu0 0.0
    %7480 = vmatpush1.msra.mxu0 0.0
    %7481 = vmatprep.subr.mxu0 0.0
    %7482 = vmatpush1.msra.mxu0 0.0
    %7483 = vmatprep.subr.mxu0 0.0
    %7484 = vmatpush1.msra.mxu0 0.0
    %7485 = vmatprep.subr.mxu0 0.0
    %7486 = vmatpush1.msra.mxu0 0.0
    %7487 = vmatprep.subr.mxu0 0.0
    %7488 = vmatpush1.msra.mxu0 0.0
    %7489 = vmatprep.subr.mxu0 0.0
    %7490 = vmatpush1.msra.mxu0 0.0
    %7491 = vmatprep.mubr.f32.mxu0 0.0
    %7492 = vmatmul.mubr.f32.gmra.mrb[0].mxu0 %v7355
    %v7493 = vpop.f32.mrb[0].mxu0
    %v7494 = vadd.f32 %v6436, %v7493
    %v7495 = vpop.f32.mrb[0].mxu0
    %7496 = vdwg.mxu0
    %7497 = vmatprep.subr.mxu0 0.0
    %7498 = vmatpush1.msra.mxu0 %v6509
    %7499 = vmatprep.subr.mxu0 0.0
    %7500 = vmatpush1.msra.mxu0 %v6510
    %7501 = vmatprep.subr.mxu0 0.0
    %7502 = vmatpush1.msra.mxu0 %v6511
    %7503 = vmatprep.subr.mxu0 0.0
    %7504 = vmatpush1.msra.mxu0 %v6512
    %7505 = vmatprep.subr.mxu0 0.0
    %7506 = vmatpush1.msra.mxu0 0.0
    %7507 = vmatprep.subr.mxu0 0.0
    %7508 = vmatpush1.msra.mxu0 0.0
    %7509 = vmatprep.subr.mxu0 0.0
    %7510 = vmatpush1.msra.mxu0 0.0
    %7511 = vmatprep.subr.mxu0 0.0
    %7512 = vmatpush1.msra.mxu0 0.0
    %7513 = vmatprep.subr.mxu0 0.0
    %7514 = vmatpush1.msra.mxu0 0.0
    %7515 = vmatprep.subr.mxu0 0.0
    %7516 = vmatpush1.msra.mxu0 0.0
    %7517 = vmatprep.subr.mxu0 0.0
    %7518 = vmatpush1.msra.mxu0 0.0
    %7519 = vmatprep.subr.mxu0 0.0
    %7520 = vmatpush1.msra.mxu0 0.0
    %7521 = vmatprep.subr.mxu0 0.0
    %7522 = vmatpush1.msra.mxu0 0.0
    %7523 = vmatprep.subr.mxu0 0.0
    %7524 = vmatpush1.msra.mxu0 0.0
    %7525 = vmatprep.subr.mxu0 0.0
    %7526 = vmatpush1.msra.mxu0 0.0
    %7527 = vmatprep.subr.mxu0 0.0
    %7528 = vmatpush1.msra.mxu0 0.0
    %7529 = vmatprep.subr.mxu0 0.0
    %7530 = vmatpush1.msra.mxu0 0.0
    %7531 = vmatprep.subr.mxu0 0.0
    %7532 = vmatpush1.msra.mxu0 0.0
    %7533 = vmatprep.subr.mxu0 0.0
    %7534 = vmatpush1.msra.mxu0 0.0
    %7535 = vmatprep.subr.mxu0 0.0
    %7536 = vmatpush1.msra.mxu0 0.0
    %7537 = vmatprep.subr.mxu0 0.0
    %7538 = vmatpush1.msra.mxu0 0.0
    %7539 = vmatprep.subr.mxu0 0.0
    %7540 = vmatpush1.msra.mxu0 0.0
    %7541 = vmatprep.subr.mxu0 0.0
    %7542 = vmatpush1.msra.mxu0 0.0
    %7543 = vmatprep.subr.mxu0 0.0
    %7544 = vmatpush1.msra.mxu0 0.0
    %7545 = vmatprep.subr.mxu0 0.0
    %7546 = vmatpush1.msra.mxu0 0.0
    %7547 = vmatprep.subr.mxu0 0.0
    %7548 = vmatpush1.msra.mxu0 0.0
    %7549 = vmatprep.subr.mxu0 0.0
    %7550 = vmatpush1.msra.mxu0 0.0
    %7551 = vmatprep.subr.mxu0 0.0
    %7552 = vmatpush1.msra.mxu0 0.0
    %7553 = vmatprep.subr.mxu0 0.0
    %7554 = vmatpush1.msra.mxu0 0.0
    %7555 = vmatprep.subr.mxu0 0.0
    %7556 = vmatpush1.msra.mxu0 0.0
    %7557 = vmatprep.subr.mxu0 0.0
    %7558 = vmatpush1.msra.mxu0 0.0
    %7559 = vmatprep.subr.mxu0 0.0
    %7560 = vmatpush1.msra.mxu0 0.0
    %7561 = vmatprep.mubr.f32.mxu0 0.0
    %7562 = vmatmul.mubr.f32.gmra.mrb[0].mxu0 %v7355
    %v7563 = vpop.f32.mrb[0].mxu0
    %v7564 = vadd.f32 %v6519, %v7563
    %v7565 = vpop.f32.mrb[0].mxu0
    %7566 = vdwg.mxu0
    %v7568 = vrot.slane %v7424, 2
    %v7570 = vadd.f32 %v663, %v7568
    %v7571 = vxor.u32 %v7570, 2147483648
    %v7572 = vmul.f32 %v7571, 1.442695
    %v7573 = vpow.pop %v7572
    %v7574 = vadd.f32 %v7573, 1.0
    %v7575 = vrcp.pop %v7574
    %v7576 = vmul.f32 1.0, %v7575
    %v7578 = vrot.slane %v7494, 2
    %v7580 = vadd.f32 %v744, %v7578
    %v7581 = vxor.u32 %v7580, 2147483648
    %v7582 = vmul.f32 %v7581, 1.442695
    %v7583 = vpow.pop %v7582
    %v7584 = vadd.f32 %v7583, 1.0
    %v7585 = vrcp.pop %v7584
    %v7586 = vmul.f32 1.0, %v7585
    %v7588 = vrot.slane %v7564, 2
    %v7590 = vmul.f32 %v7576, %v7588
    %v7591 = vadd.f32 %v825, %v7590
    %v7592 = vtanh.pop %v7591
    %v7594 = vrot.slane %v7592, 2
    %v7596 = vsub.f32 %v7270, %v7594
    %v7598 = vrot.slane %v7596, 6
    %v7600 = vmul.f32 %v7586, %v7598
    %v7601 = vadd.f32 %v7592, %v7600
    %v7602 = vmax.f32 %v7601, 0.0
    %v7604 = vrot.slane %v7602, 6
    %v7605 = vsel %vm849, %v7604, 0
    %7607 = vmatprep.subr.mxu0 0.0
    %7608 = vmatpush1.msra.mxu0 %v832
    %7609 = vmatprep.subr.mxu0 0.0
    %7610 = vmatpush1.msra.mxu0 %v833
    %7611 = vmatprep.subr.mxu0 0.0
    %7612 = vmatpush1.msra.mxu0 %v834
    %7613 = vmatprep.subr.mxu0 0.0
    %7614 = vmatpush1.msra.mxu0 %v835
    %7615 = vmatprep.subr.mxu0 0.0
    %7616 = vmatpush1.msra.mxu0 0.0
    %7617 = vmatprep.subr.mxu0 0.0
    %7618 = vmatpush1.msra.mxu0 0.0
    %7619 = vmatprep.subr.mxu0 0.0
    %7620 = vmatpush1.msra.mxu0 0.0
    %7621 = vmatprep.subr.mxu0 0.0
    %7622 = vmatpush1.msra.mxu0 0.0
    %7623 = vmatprep.subr.mxu0 0.0
    %7624 = vmatpush1.msra.mxu0 0.0
    %7625 = vmatprep.subr.mxu0 0.0
    %7626 = vmatpush1.msra.mxu0 0.0
    %7627 = vmatprep.subr.mxu0 0.0
    %7628 = vmatpush1.msra.mxu0 0.0
    %7629 = vmatprep.subr.mxu0 0.0
    %7630 = vmatpush1.msra.mxu0 0.0
    %7631 = vmatprep.subr.mxu0 0.0
    %7632 = vmatpush1.msra.mxu0 0.0
    %7633 = vmatprep.subr.mxu0 0.0
    %7634 = vmatpush1.msra.mxu0 0.0
    %7635 = vmatprep.subr.mxu0 0.0
    %7636 = vmatpush1.msra.mxu0 0.0
    %7637 = vmatprep.subr.mxu0 0.0
    %7638 = vmatpush1.msra.mxu0 0.0
    %7639 = vmatprep.subr.mxu0 0.0
    %7640 = vmatpush1.msra.mxu0 0.0
    %7641 = vmatprep.subr.mxu0 0.0
    %7642 = vmatpush1.msra.mxu0 0.0
    %7643 = vmatprep.subr.mxu0 0.0
    %7644 = vmatpush1.msra.mxu0 0.0
    %7645 = vmatprep.subr.mxu0 0.0
    %7646 = vmatpush1.msra.mxu0 0.0
    %7647 = vmatprep.subr.mxu0 0.0
    %7648 = vmatpush1.msra.mxu0 0.0
    %7649 = vmatprep.subr.mxu0 0.0
    %7650 = vmatpush1.msra.mxu0 0.0
    %7651 = vmatprep.subr.mxu0 0.0
    %7652 = vmatpush1.msra.mxu0 0.0
    %7653 = vmatprep.subr.mxu0 0.0
    %7654 = vmatpush1.msra.mxu0 0.0
    %7655 = vmatprep.subr.mxu0 0.0
    %7656 = vmatpush1.msra.mxu0 0.0
    %7657 = vmatprep.subr.mxu0 0.0
    %7658 = vmatpush1.msra.mxu0 0.0
    %7659 = vmatprep.subr.mxu0 0.0
    %7660 = vmatpush1.msra.mxu0 0.0
    %7661 = vmatprep.subr.mxu0 0.0
    %7662 = vmatpush1.msra.mxu0 0.0
    %7663 = vmatprep.subr.mxu0 0.0
    %7664 = vmatpush1.msra.mxu0 0.0
    %7665 = vmatprep.subr.mxu0 0.0
    %7666 = vmatpush1.msra.mxu0 0.0
    %7667 = vmatprep.subr.mxu0 0.0
    %7668 = vmatpush1.msra.mxu0 0.0
    %7669 = vmatprep.subr.mxu0 0.0
    %7670 = vmatpush1.msra.mxu0 0.0
    %7671 = vmatprep.mubr.f32.mxu0 0.0
    %7672 = vmatmul.mubr.f32.gmra.mrb[0].mxu0 %v7605
    %v7673 = vpop.f32.mrb[0].mxu0
    %v7674 = vadd.f32 0.0, %v7673
    %v7675 = vpop.f32.mrb[0].mxu0
    %7676 = vdwg.mxu0
    %7678 = vset.pattern.permute.xlu0 0
    %7679 = vperm.xlu0 %7678, %v7674
    %v7680 = vpop.permute.xlu0 %7679
    %v7682 = vmul.f32 %v7680, %v3371
    %v7683 = vadd.f32 %v7352, %v7682
    %v7684 = vld [vmem:[#allocation2] sm:$0x1]
    %v7685 = vlaneseq
    %v7686 = vshrl.u32 %v7685, 7
    %v7687 = vsub.s32 0, %v7686
    %v7688 = vrot.slane %v7683, %v7687
    %7690 = vbcast.lane.b32.xlu0 %v7688, 256
    %v7691 = vpop.permute.xlu0 %7690
    %v7692 = vlaneseq
    %v7693 = vshrl.u32 %v7692, 7
    %v7694 = vsub.s32 1, %v7693
    %v7695 = vrot.slane %v7683, %v7694
    %7697 = vbcast.lane.b32.xlu0 %v7695, 256
    %v7698 = vpop.permute.xlu0 %7697
    %v7701 = vunpack.c.l.s4 1966171168
    %v7702 = vunpack.c.0.s8 %v7701
    %v7703 = vlaneseq
    %v7704 = vshrl.u32 %v7703, 7
    %v7705 = vsub.s32 %v7702, %v7704
    %v7706 = vrot.slane %v6091, %v7705
    %v7707 = vcombine.high %v7706, %v7706
    %v7709 = vunpack.c.l.s4 1966171168
    %v7710 = vunpack.c.0.s8 %v7709
    %v7711 = vlaneseq
    %v7712 = vshrl.u32 %v7711, 7
    %v7713 = vsub.s32 %v7710, %v7712
    %v7714 = vrot.slane %v7706, %v7713
    %v7716 = vunpack.c.l.s4 1966171168
    %v7717 = vunpack.c.0.s8 %v7716
    %v7718 = vlaneseq
    %v7719 = vshrl.u32 %v7718, 7
    %v7720 = vsub.s32 %v7717, %v7719
    %v7721 = vrot.slane %v7707, %v7720
    %v7722 = vlaneseq
    %v7723 = vshrl.u32 %v7722, 7
    %v7724 = vsub.s32 0, %v7723
    %v7725 = vrot.slane %v7714, %v7724
    %v7726 = vlaneseq
    %v7727 = vshrl.u32 %v7726, 7
    %v7728 = vsub.s32 0, %v7727
    %v7729 = vrot.slane %v7721, %v7728
    %v7732 = vadd.f32 %v7691, %v7725
    %v7733 = vadd.f32 %v7698, %v7729
    %v7735 = vlaneseq
    %v7736 = vshrl.u32 %v7735, 7
    %v7737 = vsub.s32 0, %v7736
    %v7738 = vrot.slane %v7684, %v7737
    %7739 = vset.pattern.permute.xlu0 0
    %7740 = vperm.xlu0 %7739, %v7738
    %v7741 = vpop.permute.xlu0 %7740
    %v7743 = vadd.f32 %v7732, %v7741
    %v7744 = vadd.f32 %v7733, %v7741
    %vm7745 = vcmask 60416
    %7746 = vst.msk [vmem:[#allocation3] sm:$0xf] %vm7745, %v7743
    %7747 = vst.msk [vmem:[#allocation3 + $0x4] sm:$0xf] %vm7745, %v7744
    %v7750 = vunpack.c.l.s4 1966171168
    %v7751 = vunpack.c.0.s8 %v7750
    %v7752 = vlaneseq
    %v7753 = vshrl.u32 %v7752, 7
    %v7754 = vsub.s32 %v7751, %v7753
    %v7755 = vrot.slane %v6173, %v7754
    %v7756 = vcombine.high %v7755, %v7755
    %v7758 = vunpack.c.l.s4 1966171168
    %v7759 = vunpack.c.0.s8 %v7758
    %v7760 = vlaneseq
    %v7761 = vshrl.u32 %v7760, 7
    %v7762 = vsub.s32 %v7759, %v7761
    %v7763 = vrot.slane %v7755, %v7762
    %v7765 = vunpack.c.l.s4 1966171168
    %v7766 = vunpack.c.0.s8 %v7765
    %v7767 = vlaneseq
    %v7768 = vshrl.u32 %v7767, 7
    %v7769 = vsub.s32 %v7766, %v7768
    %v7770 = vrot.slane %v7756, %v7769
    %v7771 = vlaneseq
    %v7772 = vshrl.u32 %v7771, 7
    %v7773 = vsub.s32 0, %v7772
    %v7774 = vrot.slane %v7763, %v7773
    %v7775 = vlaneseq
    %v7776 = vshrl.u32 %v7775, 7
    %v7777 = vsub.s32 0, %v7776
    %v7778 = vrot.slane %v7770, %v7777
    %v7781 = vadd.f32 %v7691, %v7774
    %v7782 = vadd.f32 %v7698, %v7778
    %v7783 = vadd.f32 %v7781, %v7741
    %v7784 = vadd.f32 %v7782, %v7741
    %7785 = vst.msk [vmem:[#allocation5] sm:$0xf] %vm7745, %v7783
    %7786 = vst.msk [vmem:[#allocation5 + $0x4] sm:$0xf] %vm7745, %v7784
    // Predicated region
    $region54: #{seq2seq_point_ce_forward.1} parent=1 // pred_check
      _
    $region55: #{seq2seq_point_ce_forward.1} parent=1 // pred_check_branch
      %7788 = sbr.rel (0) target = $region57
    $region56: #{seq2seq_point_ce_forward.1} parent=1 // pred_region
      %s7790 = ssub.s32 128, 128
      %7791 = vsyncadd [#allocation4], %s7790
      %s7792 = sshll.u32 [#allocation3], 4
      %s7793 = int_to_ptr.vmem [resolvable:$true] %s7792
      %7798 = dma.vmem_to_hbm [thread:$0]  %s7793, 128, %s13, [#allocation4], 64, 64, 4
    $region57: #{seq2seq_point_ce_forward.1} parent=1 // pred_fallthru
      _
    // Predicated region
    $region58: #{seq2seq_point_ce_forward.1} parent=1 // pred_check
      _
    $region59: #{seq2seq_point_ce_forward.1} parent=1 // pred_check_branch
      %7800 = sbr.rel (0) target = $region61
    $region60: #{seq2seq_point_ce_forward.1} parent=1 // pred_region
      %s7802 = ssub.s32 128, 128
      %7803 = vsyncadd [#allocation6], %s7802
      %s7804 = sshll.u32 [#allocation5], 4
      %s7805 = int_to_ptr.vmem [resolvable:$true] %s7804
      %7810 = dma.vmem_to_hbm [thread:$0]  %s7805, 128, %s14, [#allocation6], 64, 64, 4
    $region61: #{seq2seq_point_ce_forward.1} parent=1 // pred_fallthru
      _
    // Predicated region
    $region62: #{seq2seq_point_ce_forward.1} parent=1 // pred_check
      _
    $region63: #{seq2seq_point_ce_forward.1} parent=1 // pred_check_branch
      %7812 = sbr.rel (0) target = $region65
    $region64: #{seq2seq_point_ce_forward.1} parent=1 // pred_region
      %7813 = dma.done [#allocation4], 128
    $region65: #{seq2seq_point_ce_forward.1} parent=1 // pred_fallthru
      _
    // Predicated region
    $region66: #{seq2seq_point_ce_forward.1} parent=1 // pred_check
      _
    $region67: #{seq2seq_point_ce_forward.1} parent=1 // pred_check_branch
      %7815 = sbr.rel (0) target = $region69
    $region68: #{seq2seq_point_ce_forward.1} parent=1 // pred_region
      %7816 = dma.done [#allocation6], 128
    $region69: #{seq2seq_point_ce_forward.1} parent=1 // pred_fallthru
      _
    %7817 = vsyncpa [#allocation4], 1
    %7818 = vsyncpa [#allocation6], 1

</llo_original>
